<compile_context>
chip_gen: v5e
topology: v5e:2x2
jax: 0.10.0
libtpu: 0.0.40
codegen_flags: <defaults>
</compile_context>

<pallas_src>
import jax
import jax.numpy as jnp
from jax import lax
from jax.experimental import pallas as pl
from jax.experimental.pallas import tpu as pltpu


# ------------------------- in-kernel building blocks -------------------------

def _conv_valid(x, w_ref, b_ref, kh, kw):
    """VALID convolution on an (H, W, NB, Cin) VMEM-resident value.

    One MXU dot over the full grid, taps folded into output columns:
      part[p, t*cout+co] = sum_ci x[p, ci] * W[co, ci, di_t, dj_t]
    then the conv output is the sum of kh*kw shifted slices of `part`.
    All reshapes are layout-trivial (NB % 8 == 0, last dim unchanged); tap
    extraction slices the lane dim at multiples of cout and never crosses a
    128-lane tile boundary for these sizes.

    w_ref: (Cin, kh*kw*cout), column order (kh, kw, cout).  b_ref: (1, cout).
    Returns (H-kh+1, W-kw+1, NB, cout) float32 (bias added, no activation).
    """
    H, W, NB, Cin = x.shape
    cout = w_ref.shape[1] // (kh * kw)
    OH, OW = H - kh + 1, W - kw + 1

    part = jnp.dot(x.reshape(H * W * NB, Cin), w_ref[...],
                   preferred_element_type=jnp.float32)          # (H*W*NB, kh*kw*cout)
    part = part.reshape(H, W, NB, kh * kw * cout)

    acc = None
    for di in range(kh):
        for dj in range(kw):
            t = di * kw + dj
            sl = part[di:di + OH, dj:dj + OW, :, t * cout:(t + 1) * cout]
            acc = sl if acc is None else acc + sl
    return acc + b_ref[...]


def _maxpool_3x3_s2(y):
    """MaxPool((3,3), stride=2), floor mode, on (H, W, NB, C) with H, W even.

    Vectorized: 9 shifted slices; stride-2 subsampling is done with
    leading-dim-only reshapes (layout-trivial); result is a single value,
    no partial stores anywhere.
    """
    H, W, NB, C = y.shape
    PH, PW = (H - 3) // 2 + 1, (W - 3) // 2 + 1
    out = None
    for dh in range(3):
        rows = y[dh:dh + 2 * PH]                          # (2*PH, W, NB, C)
        rows = rows.reshape(PH, 2, W, NB, C)[:, 0]        # rows dh, dh+2, ...
        for dw in range(3):
            win = rows[:, dw:dw + 2 * PW]                 # (PH, 2*PW, NB, C)
            win = win.reshape(PH, PW, 2, NB, C)[:, :, 0]  # cols dw, dw+2, ...
            out = win if out is None else jnp.maximum(out, win)
    return out


def _net_kernel(x_ref, w1_ref, b1_ref, w2_ref, b2_ref, w3_ref, b3_ref, o_ref):
    # Entire network fused; every intermediate stays in VMEM/vregs.
    x = x_ref[...]                                                  # (H, W, NB, 3)
    y1 = jnp.maximum(_conv_valid(x, w1_ref, b1_ref, 3, 3), 0.0)     # conv1 + ReLU
    p = _maxpool_3x3_s2(y1)                                         # pool 3x3 s2
    y2 = jnp.maximum(_conv_valid(p, w2_ref, b2_ref, 4, 4), 0.0)     # conv2 + ReLU
    o_ref[...] = _conv_valid(y2, w3_ref, b3_ref, 1, 1)              # conv3 (1x1)


# ------------------------------- host wrappers -------------------------------

def _to_cols(w_oihw):
    """PyTorch OIHW conv weight -> (Cin, KH*KW*Cout), column order (kh, kw, co)."""
    co, ci, kh, kw = w_oihw.shape
    return jnp.transpose(w_oihw, (1, 2, 3, 0)).reshape(ci, kh * kw * co)


def _prep_params(params):
    (w1, b1), (w2, b2), (w3, b3) = params
    return (_to_cols(w1), b1.reshape(1, -1),
            _to_cols(w2), b2.reshape(1, -1),
            _to_cols(w3), b3.reshape(1, -1))


@jax.jit
def net_forward(x_nchw, params):
    n, c, h, w = x_nchw.shape
    assert h % 2 == 0 and w % 2 == 0, "fused pool path assumes even conv1 output"
    w1c, b1, w2c, b2, w3c, b3 = _prep_params(params)

    # NCHW -> HWNC, batch zero-padded to a sublane multiple (8) so every
    # in-kernel flatten/unflatten reshape is layout-trivial.
    nb = -(-n // 8) * 8
    x = jnp.transpose(x_nchw, (2, 3, 0, 1))
    x = jnp.pad(x, ((0, 0), (0, 0), (0, nb - n), (0, 0)))

    oh1, ow1 = h - 2, w - 2                      # conv1 output
    ph, pw = (oh1 - 3) // 2 + 1, (ow1 - 3) // 2 + 1   # pooled
    oh2, ow2 = ph - 3, pw - 3                    # conv2/conv3 output

    out = pl.pallas_call(
        _net_kernel,
        out_shape=jax.ShapeDtypeStruct((oh2, ow2, nb, 2), jnp.float32),
        in_specs=[pl.BlockSpec(memory_space=pltpu.MemorySpace.VMEM)] * 7,
        out_specs=pl.BlockSpec(memory_space=pltpu.MemorySpace.VMEM),
    )(x, w1c, b1, w2c, b2, w3c, b3)

    out = out[:, :, :n, :]                       # drop batch padding (HWNC)
    return jnp.transpose(out, (2, 3, 0, 1))      # -> NCHW


def reference_forward(x_nchw, params):
    """Pure-JAX reference (lax conv / reduce_window) for verification."""
    (w1, b1), (w2, b2), (w3, b3) = params
    dn = ('NCHW', 'OIHW', 'NCHW')
    hp = lax.Precision.HIGHEST
    y = lax.conv_general_dilated(x_nchw, w1, (1, 1), 'VALID',
                                 dimension_numbers=dn, precision=hp)
    y = jnp.maximum(y + b1[None, :, None, None], 0.0)
    y = lax.reduce_window(y, -jnp.inf, lax.max, (1, 1, 3, 3), (1, 1, 2, 2), 'VALID')
    y = lax.conv_general_dilated(y, w2, (1, 1), 'VALID',
                                 dimension_numbers=dn, precision=hp)
    y = jnp.maximum(y + b2[None, :, None, None], 0.0)
    y = lax.conv_general_dilated(y, w3, (1, 1), 'VALID',
                                 dimension_numbers=dn, precision=hp)
    return y + b3[None, :, None, None]


def init_params(key):
    """Deterministic synthetic params with the PyTorch module's shapes (OIHW)."""
    ks = jax.random.split(key, 6)
    w1 = jax.random.normal(ks[0], (16, 3, 3, 3), jnp.float32) / (3 * 3 * 3) ** 0.5
    b1 = 0.1 * jax.random.normal(ks[1], (16,), jnp.float32)
    w2 = jax.random.normal(ks[2], (16, 16, 4, 4), jnp.float32) / (16 * 4 * 4) ** 0.5
    b2 = 0.1 * jax.random.normal(ks[3], (16,), jnp.float32)
    w3 = jax.random.normal(ks[4], (2, 16, 1, 1), jnp.float32) / 16 ** 0.5
    b3 = 0.1 * jax.random.normal(ks[5], (2,), jnp.float32)
    return ((w1, b1), (w2, b2), (w3, b3))


if __name__ == "__main__":
    key = jax.random.PRNGKey(0)
    k_x, k_p = jax.random.split(key)
    x = jax.random.normal(k_x, (2, 3, 16, 16), jnp.float32)  # NCHW, like PyTorch
    params = init_params(k_p)

    out = jax.block_until_ready(net_forward(x, params))
    ref = jax.block_until_ready(reference_forward(x, params))

    assert out.shape == (2, 2, 3, 3), out.shape
    assert jnp.allclose(out, ref, atol=1e-3, rtol=1e-3), \
        f"max abs err {jnp.max(jnp.abs(out - ref))}"
    print("KERNEL_OK")
</pallas_src>

<mosaic_0001>
module attributes {stable_mosaic.version = 11 : i64} {
  func.func @_net_kernel(%arg0: memref<16x16x8x3xf32, #tpu.memory_space<vmem>>, %arg1: memref<3x144xf32, #tpu.memory_space<vmem>>, %arg2: memref<1x16xf32, #tpu.memory_space<vmem>>, %arg3: memref<16x256xf32, #tpu.memory_space<vmem>>, %arg4: memref<1x16xf32, #tpu.memory_space<vmem>>, %arg5: memref<16x2xf32, #tpu.memory_space<vmem>>, %arg6: memref<1x2xf32, #tpu.memory_space<vmem>>, %arg7: memref<3x3x8x2xf32, #tpu.memory_space<vmem>>) attributes {dimension_semantics = [], scalar_prefetch = 0 : i64, scratch_operands = 0 : i64, tpu.core_type = #tpu.core_type<tc>} {
    %c0 = arith.constant 0 : index
    %c0_0 = arith.constant 0 : index
    %c0_1 = arith.constant 0 : index
    %c0_2 = arith.constant 0 : index
    %0 = vector.load %arg0[%c0, %c0_0, %c0_1, %c0_2] : memref<16x16x8x3xf32, #tpu.memory_space<vmem>>, vector<16x16x8x3xf32>
    %1 = vector.shape_cast %0 : vector<16x16x8x3xf32> to vector<2048x3xf32>
    %c0_3 = arith.constant 0 : index
    %c0_4 = arith.constant 0 : index
    %2 = vector.load %arg1[%c0_3, %c0_4] : memref<3x144xf32, #tpu.memory_space<vmem>>, vector<3x144xf32>
    %cst = arith.constant dense<0.000000e+00> : vector<2048x144xf32>
    %3 = tpu.matmul %1, %2, %cst {dimension_numbers = #tpu.dot_dimension_numbers<[1], [0], [0], [1], [0, 0, 1, 1], [], []>} : vector<2048x3xf32>, vector<3x144xf32>, vector<2048x144xf32> -> vector<2048x144xf32>
    %4 = vector.shape_cast %3 : vector<2048x144xf32> to vector<16x16x8x144xf32>
    %5 = vector.extract_strided_slice %4 {offsets = [0, 0, 0, 0], sizes = [14, 14, 8, 16], strides = [1, 1, 1, 1]} : vector<16x16x8x144xf32> to vector<14x14x8x16xf32>
    %6 = vector.extract_strided_slice %4 {offsets = [0, 1, 0, 16], sizes = [14, 14, 8, 16], strides = [1, 1, 1, 1]} : vector<16x16x8x144xf32> to vector<14x14x8x16xf32>
    %7 = arith.addf %5, %6 : vector<14x14x8x16xf32>
    %8 = vector.extract_strided_slice %4 {offsets = [0, 2, 0, 32], sizes = [14, 14, 8, 16], strides = [1, 1, 1, 1]} : vector<16x16x8x144xf32> to vector<14x14x8x16xf32>
    %9 = arith.addf %7, %8 : vector<14x14x8x16xf32>
    %10 = vector.extract_strided_slice %4 {offsets = [1, 0, 0, 48], sizes = [14, 14, 8, 16], strides = [1, 1, 1, 1]} : vector<16x16x8x144xf32> to vector<14x14x8x16xf32>
    %11 = arith.addf %9, %10 : vector<14x14x8x16xf32>
    %12 = vector.extract_strided_slice %4 {offsets = [1, 1, 0, 64], sizes = [14, 14, 8, 16], strides = [1, 1, 1, 1]} : vector<16x16x8x144xf32> to vector<14x14x8x16xf32>
    %13 = arith.addf %11, %12 : vector<14x14x8x16xf32>
    %14 = vector.extract_strided_slice %4 {offsets = [1, 2, 0, 80], sizes = [14, 14, 8, 16], strides = [1, 1, 1, 1]} : vector<16x16x8x144xf32> to vector<14x14x8x16xf32>
    %15 = arith.addf %13, %14 : vector<14x14x8x16xf32>
    %16 = vector.extract_strided_slice %4 {offsets = [2, 0, 0, 96], sizes = [14, 14, 8, 16], strides = [1, 1, 1, 1]} : vector<16x16x8x144xf32> to vector<14x14x8x16xf32>
    %17 = arith.addf %15, %16 : vector<14x14x8x16xf32>
    %18 = vector.extract_strided_slice %4 {offsets = [2, 1, 0, 112], sizes = [14, 14, 8, 16], strides = [1, 1, 1, 1]} : vector<16x16x8x144xf32> to vector<14x14x8x16xf32>
    %19 = arith.addf %17, %18 : vector<14x14x8x16xf32>
    %20 = vector.extract_strided_slice %4 {offsets = [2, 2, 0, 128], sizes = [14, 14, 8, 16], strides = [1, 1, 1, 1]} : vector<16x16x8x144xf32> to vector<14x14x8x16xf32>
    %21 = arith.addf %19, %20 : vector<14x14x8x16xf32>
    %c0_5 = arith.constant 0 : index
    %c0_6 = arith.constant 0 : index
    %22 = vector.load %arg2[%c0_5, %c0_6] : memref<1x16xf32, #tpu.memory_space<vmem>>, vector<1x16xf32>
    %23 = vector.shape_cast %22 : vector<1x16xf32> to vector<1x1x1x16xf32>
    %24 = vector.broadcast %23 : vector<1x1x1x16xf32> to vector<14x14x8x16xf32>
    %25 = arith.addf %21, %24 : vector<14x14x8x16xf32>
    %cst_7 = arith.constant 0.000000e+00 : f32
    %26 = vector.broadcast %cst_7 : f32 to vector<14x14x8x16xf32>
    %27 = arith.maximumf %25, %26 : vector<14x14x8x16xf32>
    %28 = vector.extract_strided_slice %27 {offsets = [0, 0, 0, 0], sizes = [12, 14, 8, 16], strides = [1, 1, 1, 1]} : vector<14x14x8x16xf32> to vector<12x14x8x16xf32>
    %29 = vector.shape_cast %28 : vector<12x14x8x16xf32> to vector<6x2x14x8x16xf32>
    %30 = vector.extract_strided_slice %29 {offsets = [0, 0, 0, 0, 0], sizes = [6, 1, 14, 8, 16], strides = [1, 1, 1, 1, 1]} : vector<6x2x14x8x16xf32> to vector<6x1x14x8x16xf32>
    %31 = vector.shape_cast %30 : vector<6x1x14x8x16xf32> to vector<6x14x8x16xf32>
    %32 = vector.extract_strided_slice %31 {offsets = [0, 0, 0, 0], sizes = [6, 12, 8, 16], strides = [1, 1, 1, 1]} : vector<6x14x8x16xf32> to vector<6x12x8x16xf32>
    %33 = vector.shape_cast %32 : vector<6x12x8x16xf32> to vector<6x6x2x8x16xf32>
    %34 = vector.extract_strided_slice %33 {offsets = [0, 0, 0, 0, 0], sizes = [6, 6, 1, 8, 16], strides = [1, 1, 1, 1, 1]} : vector<6x6x2x8x16xf32> to vector<6x6x1x8x16xf32>
    %35 = vector.shape_cast %34 : vector<6x6x1x8x16xf32> to vector<6x6x8x16xf32>
    %36 = vector.extract_strided_slice %31 {offsets = [0, 1, 0, 0], sizes = [6, 12, 8, 16], strides = [1, 1, 1, 1]} : vector<6x14x8x16xf32> to vector<6x12x8x16xf32>
    %37 = vector.shape_cast %36 : vector<6x12x8x16xf32> to vector<6x6x2x8x16xf32>
    %38 = vector.extract_strided_slice %37 {offsets = [0, 0, 0, 0, 0], sizes = [6, 6, 1, 8, 16], strides = [1, 1, 1, 1, 1]} : vector<6x6x2x8x16xf32> to vector<6x6x1x8x16xf32>
    %39 = vector.shape_cast %38 : vector<6x6x1x8x16xf32> to vector<6x6x8x16xf32>
    %40 = arith.maximumf %35, %39 : vector<6x6x8x16xf32>
    %41 = vector.extract_strided_slice %31 {offsets = [0, 2, 0, 0], sizes = [6, 12, 8, 16], strides = [1, 1, 1, 1]} : vector<6x14x8x16xf32> to vector<6x12x8x16xf32>
    %42 = vector.shape_cast %41 : vector<6x12x8x16xf32> to vector<6x6x2x8x16xf32>
    %43 = vector.extract_strided_slice %42 {offsets = [0, 0, 0, 0, 0], sizes = [6, 6, 1, 8, 16], strides = [1, 1, 1, 1, 1]} : vector<6x6x2x8x16xf32> to vector<6x6x1x8x16xf32>
    %44 = vector.shape_cast %43 : vector<6x6x1x8x16xf32> to vector<6x6x8x16xf32>
    %45 = arith.maximumf %40, %44 : vector<6x6x8x16xf32>
    %46 = vector.extract_strided_slice %27 {offsets = [1, 0, 0, 0], sizes = [12, 14, 8, 16], strides = [1, 1, 1, 1]} : vector<14x14x8x16xf32> to vector<12x14x8x16xf32>
    %47 = vector.shape_cast %46 : vector<12x14x8x16xf32> to vector<6x2x14x8x16xf32>
    %48 = vector.extract_strided_slice %47 {offsets = [0, 0, 0, 0, 0], sizes = [6, 1, 14, 8, 16], strides = [1, 1, 1, 1, 1]} : vector<6x2x14x8x16xf32> to vector<6x1x14x8x16xf32>
    %49 = vector.shape_cast %48 : vector<6x1x14x8x16xf32> to vector<6x14x8x16xf32>
    %50 = vector.extract_strided_slice %49 {offsets = [0, 0, 0, 0], sizes = [6, 12, 8, 16], strides = [1, 1, 1, 1]} : vector<6x14x8x16xf32> to vector<6x12x8x16xf32>
    %51 = vector.shape_cast %50 : vector<6x12x8x16xf32> to vector<6x6x2x8x16xf32>
    %52 = vector.extract_strided_slice %51 {offsets = [0, 0, 0, 0, 0], sizes = [6, 6, 1, 8, 16], strides = [1, 1, 1, 1, 1]} : vector<6x6x2x8x16xf32> to vector<6x6x1x8x16xf32>
    %53 = vector.shape_cast %52 : vector<6x6x1x8x16xf32> to vector<6x6x8x16xf32>
    %54 = arith.maximumf %45, %53 : vector<6x6x8x16xf32>
    %55 = vector.extract_strided_slice %49 {offsets = [0, 1, 0, 0], sizes = [6, 12, 8, 16], strides = [1, 1, 1, 1]} : vector<6x14x8x16xf32> to vector<6x12x8x16xf32>
    %56 = vector.shape_cast %55 : vector<6x12x8x16xf32> to vector<6x6x2x8x16xf32>
    %57 = vector.extract_strided_slice %56 {offsets = [0, 0, 0, 0, 0], sizes = [6, 6, 1, 8, 16], strides = [1, 1, 1, 1, 1]} : vector<6x6x2x8x16xf32> to vector<6x6x1x8x16xf32>
    %58 = vector.shape_cast %57 : vector<6x6x1x8x16xf32> to vector<6x6x8x16xf32>
    %59 = arith.maximumf %54, %58 : vector<6x6x8x16xf32>
    %60 = vector.extract_strided_slice %49 {offsets = [0, 2, 0, 0], sizes = [6, 12, 8, 16], strides = [1, 1, 1, 1]} : vector<6x14x8x16xf32> to vector<6x12x8x16xf32>
    %61 = vector.shape_cast %60 : vector<6x12x8x16xf32> to vector<6x6x2x8x16xf32>
    %62 = vector.extract_strided_slice %61 {offsets = [0, 0, 0, 0, 0], sizes = [6, 6, 1, 8, 16], strides = [1, 1, 1, 1, 1]} : vector<6x6x2x8x16xf32> to vector<6x6x1x8x16xf32>
    %63 = vector.shape_cast %62 : vector<6x6x1x8x16xf32> to vector<6x6x8x16xf32>
    %64 = arith.maximumf %59, %63 : vector<6x6x8x16xf32>
    %65 = vector.extract_strided_slice %27 {offsets = [2, 0, 0, 0], sizes = [12, 14, 8, 16], strides = [1, 1, 1, 1]} : vector<14x14x8x16xf32> to vector<12x14x8x16xf32>
    %66 = vector.shape_cast %65 : vector<12x14x8x16xf32> to vector<6x2x14x8x16xf32>
    %67 = vector.extract_strided_slice %66 {offsets = [0, 0, 0, 0, 0], sizes = [6, 1, 14, 8, 16], strides = [1, 1, 1, 1, 1]} : vector<6x2x14x8x16xf32> to vector<6x1x14x8x16xf32>
    %68 = vector.shape_cast %67 : vector<6x1x14x8x16xf32> to vector<6x14x8x16xf32>
    %69 = vector.extract_strided_slice %68 {offsets = [0, 0, 0, 0], sizes = [6, 12, 8, 16], strides = [1, 1, 1, 1]} : vector<6x14x8x16xf32> to vector<6x12x8x16xf32>
    %70 = vector.shape_cast %69 : vector<6x12x8x16xf32> to vector<6x6x2x8x16xf32>
    %71 = vector.extract_strided_slice %70 {offsets = [0, 0, 0, 0, 0], sizes = [6, 6, 1, 8, 16], strides = [1, 1, 1, 1, 1]} : vector<6x6x2x8x16xf32> to vector<6x6x1x8x16xf32>
    %72 = vector.shape_cast %71 : vector<6x6x1x8x16xf32> to vector<6x6x8x16xf32>
    %73 = arith.maximumf %64, %72 : vector<6x6x8x16xf32>
    %74 = vector.extract_strided_slice %68 {offsets = [0, 1, 0, 0], sizes = [6, 12, 8, 16], strides = [1, 1, 1, 1]} : vector<6x14x8x16xf32> to vector<6x12x8x16xf32>
    %75 = vector.shape_cast %74 : vector<6x12x8x16xf32> to vector<6x6x2x8x16xf32>
    %76 = vector.extract_strided_slice %75 {offsets = [0, 0, 0, 0, 0], sizes = [6, 6, 1, 8, 16], strides = [1, 1, 1, 1, 1]} : vector<6x6x2x8x16xf32> to vector<6x6x1x8x16xf32>
    %77 = vector.shape_cast %76 : vector<6x6x1x8x16xf32> to vector<6x6x8x16xf32>
    %78 = arith.maximumf %73, %77 : vector<6x6x8x16xf32>
    %79 = vector.extract_strided_slice %68 {offsets = [0, 2, 0, 0], sizes = [6, 12, 8, 16], strides = [1, 1, 1, 1]} : vector<6x14x8x16xf32> to vector<6x12x8x16xf32>
    %80 = vector.shape_cast %79 : vector<6x12x8x16xf32> to vector<6x6x2x8x16xf32>
    %81 = vector.extract_strided_slice %80 {offsets = [0, 0, 0, 0, 0], sizes = [6, 6, 1, 8, 16], strides = [1, 1, 1, 1, 1]} : vector<6x6x2x8x16xf32> to vector<6x6x1x8x16xf32>
    %82 = vector.shape_cast %81 : vector<6x6x1x8x16xf32> to vector<6x6x8x16xf32>
    %83 = arith.maximumf %78, %82 : vector<6x6x8x16xf32>
    %84 = vector.shape_cast %83 : vector<6x6x8x16xf32> to vector<288x16xf32>
    %c0_8 = arith.constant 0 : index
    %c0_9 = arith.constant 0 : index
    %85 = vector.load %arg3[%c0_8, %c0_9] : memref<16x256xf32, #tpu.memory_space<vmem>>, vector<16x256xf32>
    %cst_10 = arith.constant dense<0.000000e+00> : vector<288x256xf32>
    %86 = tpu.matmul %84, %85, %cst_10 {dimension_numbers = #tpu.dot_dimension_numbers<[1], [0], [0], [1], [0, 0, 1, 1], [], []>} : vector<288x16xf32>, vector<16x256xf32>, vector<288x256xf32> -> vector<288x256xf32>
    %87 = vector.shape_cast %86 : vector<288x256xf32> to vector<6x6x8x256xf32>
    %88 = vector.extract_strided_slice %87 {offsets = [0, 0, 0, 0], sizes = [3, 3, 8, 16], strides = [1, 1, 1, 1]} : vector<6x6x8x256xf32> to vector<3x3x8x16xf32>
    %89 = vector.extract_strided_slice %87 {offsets = [0, 1, 0, 16], sizes = [3, 3, 8, 16], strides = [1, 1, 1, 1]} : vector<6x6x8x256xf32> to vector<3x3x8x16xf32>
    %90 = arith.addf %88, %89 : vector<3x3x8x16xf32>
    %91 = vector.extract_strided_slice %87 {offsets = [0, 2, 0, 32], sizes = [3, 3, 8, 16], strides = [1, 1, 1, 1]} : vector<6x6x8x256xf32> to vector<3x3x8x16xf32>
    %92 = arith.addf %90, %91 : vector<3x3x8x16xf32>
    %93 = vector.extract_strided_slice %87 {offsets = [0, 3, 0, 48], sizes = [3, 3, 8, 16], strides = [1, 1, 1, 1]} : vector<6x6x8x256xf32> to vector<3x3x8x16xf32>
    %94 = arith.addf %92, %93 : vector<3x3x8x16xf32>
    %95 = vector.extract_strided_slice %87 {offsets = [1, 0, 0, 64], sizes = [3, 3, 8, 16], strides = [1, 1, 1, 1]} : vector<6x6x8x256xf32> to vector<3x3x8x16xf32>
    %96 = arith.addf %94, %95 : vector<3x3x8x16xf32>
    %97 = vector.extract_strided_slice %87 {offsets = [1, 1, 0, 80], sizes = [3, 3, 8, 16], strides = [1, 1, 1, 1]} : vector<6x6x8x256xf32> to vector<3x3x8x16xf32>
    %98 = arith.addf %96, %97 : vector<3x3x8x16xf32>
    %99 = vector.extract_strided_slice %87 {offsets = [1, 2, 0, 96], sizes = [3, 3, 8, 16], strides = [1, 1, 1, 1]} : vector<6x6x8x256xf32> to vector<3x3x8x16xf32>
    %100 = arith.addf %98, %99 : vector<3x3x8x16xf32>
    %101 = vector.extract_strided_slice %87 {offsets = [1, 3, 0, 112], sizes = [3, 3, 8, 16], strides = [1, 1, 1, 1]} : vector<6x6x8x256xf32> to vector<3x3x8x16xf32>
    %102 = arith.addf %100, %101 : vector<3x3x8x16xf32>
    %103 = vector.extract_strided_slice %87 {offsets = [2, 0, 0, 128], sizes = [3, 3, 8, 16], strides = [1, 1, 1, 1]} : vector<6x6x8x256xf32> to vector<3x3x8x16xf32>
    %104 = arith.addf %102, %103 : vector<3x3x8x16xf32>
    %105 = vector.extract_strided_slice %87 {offsets = [2, 1, 0, 144], sizes = [3, 3, 8, 16], strides = [1, 1, 1, 1]} : vector<6x6x8x256xf32> to vector<3x3x8x16xf32>
    %106 = arith.addf %104, %105 : vector<3x3x8x16xf32>
    %107 = vector.extract_strided_slice %87 {offsets = [2, 2, 0, 160], sizes = [3, 3, 8, 16], strides = [1, 1, 1, 1]} : vector<6x6x8x256xf32> to vector<3x3x8x16xf32>
    %108 = arith.addf %106, %107 : vector<3x3x8x16xf32>
    %109 = vector.extract_strided_slice %87 {offsets = [2, 3, 0, 176], sizes = [3, 3, 8, 16], strides = [1, 1, 1, 1]} : vector<6x6x8x256xf32> to vector<3x3x8x16xf32>
    %110 = arith.addf %108, %109 : vector<3x3x8x16xf32>
    %111 = vector.extract_strided_slice %87 {offsets = [3, 0, 0, 192], sizes = [3, 3, 8, 16], strides = [1, 1, 1, 1]} : vector<6x6x8x256xf32> to vector<3x3x8x16xf32>
    %112 = arith.addf %110, %111 : vector<3x3x8x16xf32>
    %113 = vector.extract_strided_slice %87 {offsets = [3, 1, 0, 208], sizes = [3, 3, 8, 16], strides = [1, 1, 1, 1]} : vector<6x6x8x256xf32> to vector<3x3x8x16xf32>
    %114 = arith.addf %112, %113 : vector<3x3x8x16xf32>
    %115 = vector.extract_strided_slice %87 {offsets = [3, 2, 0, 224], sizes = [3, 3, 8, 16], strides = [1, 1, 1, 1]} : vector<6x6x8x256xf32> to vector<3x3x8x16xf32>
    %116 = arith.addf %114, %115 : vector<3x3x8x16xf32>
    %117 = vector.extract_strided_slice %87 {offsets = [3, 3, 0, 240], sizes = [3, 3, 8, 16], strides = [1, 1, 1, 1]} : vector<6x6x8x256xf32> to vector<3x3x8x16xf32>
    %118 = arith.addf %116, %117 : vector<3x3x8x16xf32>
    %c0_11 = arith.constant 0 : index
    %c0_12 = arith.constant 0 : index
    %119 = vector.load %arg4[%c0_11, %c0_12] : memref<1x16xf32, #tpu.memory_space<vmem>>, vector<1x16xf32>
    %120 = vector.shape_cast %119 : vector<1x16xf32> to vector<1x1x1x16xf32>
    %121 = vector.broadcast %120 : vector<1x1x1x16xf32> to vector<3x3x8x16xf32>
    %122 = arith.addf %118, %121 : vector<3x3x8x16xf32>
    %cst_13 = arith.constant 0.000000e+00 : f32
    %123 = vector.broadcast %cst_13 : f32 to vector<3x3x8x16xf32>
    %124 = arith.maximumf %122, %123 : vector<3x3x8x16xf32>
    %125 = vector.shape_cast %124 : vector<3x3x8x16xf32> to vector<72x16xf32>
    %c0_14 = arith.constant 0 : index
    %c0_15 = arith.constant 0 : index
    %126 = vector.load %arg5[%c0_14, %c0_15] : memref<16x2xf32, #tpu.memory_space<vmem>>, vector<16x2xf32>
    %cst_16 = arith.constant dense<0.000000e+00> : vector<72x2xf32>
    %127 = tpu.matmul %125, %126, %cst_16 {dimension_numbers = #tpu.dot_dimension_numbers<[1], [0], [0], [1], [0, 0, 1, 1], [], []>} : vector<72x16xf32>, vector<16x2xf32>, vector<72x2xf32> -> vector<72x2xf32>
    %128 = vector.shape_cast %127 : vector<72x2xf32> to vector<3x3x8x2xf32>
    %c0_17 = arith.constant 0 : index
    %c0_18 = arith.constant 0 : index
    %129 = vector.load %arg6[%c0_17, %c0_18] : memref<1x2xf32, #tpu.memory_space<vmem>>, vector<1x2xf32>
    %130 = vector.shape_cast %129 : vector<1x2xf32> to vector<1x1x1x2xf32>
    %131 = vector.broadcast %130 : vector<1x1x1x2xf32> to vector<3x3x8x2xf32>
    %132 = arith.addf %128, %131 : vector<3x3x8x2xf32>
    %c0_19 = arith.constant 0 : index
    %c0_20 = arith.constant 0 : index
    %c0_21 = arith.constant 0 : index
    %c0_22 = arith.constant 0 : index
    %133 = vector.load %arg7[%c0_19, %c0_20, %c0_21, %c0_22] : memref<3x3x8x2xf32, #tpu.memory_space<vmem>>, vector<3x3x8x2xf32>
    tpu.vector_store %arg7[%c0_19, %c0_20, %c0_21, %c0_22], %132 {strides = array<i32>} : memref<3x3x8x2xf32, #tpu.memory_space<vmem>>, vector<3x3x8x2xf32>,
    return
  }
}

</mosaic_0001>

<llo_original>
// kernel: net_forward.1
$region0: #{net_forward.1}
  #allocation0 [shape = 'u32[]', space=smem, size = 0x4, offset = 0x4, fixed_abs, tag = 'smem constant byte address 0x4 - core index']
  #allocation1 [shape = 'u32[72,128]{1,0:T(1,128)}', space=vmem, size = 0x9000, scoped, tag = 'internal scratch']
  %s0 = inlined_call_operand.vmem [shape: f32[16,16,8,3], index: 0, kind: input, shape index: {}]
  %s1 = inlined_call_operand.vmem [shape: f32[3,144], index: 1, kind: input, shape index: {}]
  %s2 = inlined_call_operand.vmem [shape: f32[1,16], index: 2, kind: input, shape index: {}]
  %s3 = inlined_call_operand.vmem [shape: f32[16,256], index: 3, kind: input, shape index: {}]
  %s4 = inlined_call_operand.vmem [shape: f32[1,16], index: 4, kind: input, shape index: {}]
  %s5 = inlined_call_operand.vmem [shape: f32[16,2], index: 5, kind: input, shape index: {}]
  %s6 = inlined_call_operand.vmem [shape: f32[1,2], index: 6, kind: input, shape index: {}]
  %s7 = inlined_call_operand.vmem [shape: f32[3,3,8,2], index: 7, kind: output, shape index: {}]
  %s8 = sld [smem:[#allocation0]]
  $region38: #{net_forward.1} parent=0
    _
  %s10 = ssub.s32 1, %s8
  %s11 = scalar_select 0, %s10, %s8
  // Predicated region
  $region2: #{net_forward.1} parent=0 // pred_check
    _
  $region3: #{net_forward.1} parent=0 // pred_check_branch
    %13 = sbr.rel (0) target = $region5
  $region4: #{net_forward.1} parent=0 // pred_region
    _
  $region5: #{net_forward.1} parent=0 // pred_fallthru
    _
  // Predicated region
  $region6: #{net_forward.1} parent=0 // pred_check
    _
  $region7: #{net_forward.1} parent=0 // pred_check_branch
    %15 = sbr.rel (0) target = $region9
  $region8: #{net_forward.1} parent=0 // pred_region
    _
  $region9: #{net_forward.1} parent=0 // pred_fallthru
    _
  // Predicated region
  $region10: #{net_forward.1} parent=0 // pred_check
    _
  $region11: #{net_forward.1} parent=0 // pred_check_branch
    %17 = sbr.rel (0) target = $region13
  $region12: #{net_forward.1} parent=0 // pred_region
    _
  $region13: #{net_forward.1} parent=0 // pred_fallthru
    _
  // Predicated region
  $region14: #{net_forward.1} parent=0 // pred_check
    _
  $region15: #{net_forward.1} parent=0 // pred_check_branch
    %19 = sbr.rel (0) target = $region17
  $region16: #{net_forward.1} parent=0 // pred_region
    _
  $region17: #{net_forward.1} parent=0 // pred_fallthru
    _
  // Predicated region
  $region18: #{net_forward.1} parent=0 // pred_check
    _
  $region19: #{net_forward.1} parent=0 // pred_check_branch
    %21 = sbr.rel (0) target = $region21
  $region20: #{net_forward.1} parent=0 // pred_region
    _
  $region21: #{net_forward.1} parent=0 // pred_fallthru
    _
  // Predicated region
  $region22: #{net_forward.1} parent=0 // pred_check
    _
  $region23: #{net_forward.1} parent=0 // pred_check_branch
    %23 = sbr.rel (0) target = $region25
  $region24: #{net_forward.1} parent=0 // pred_region
    _
  $region25: #{net_forward.1} parent=0 // pred_fallthru
    _
  // Predicated region
  $region26: #{net_forward.1} parent=0 // pred_check
    _
  $region27: #{net_forward.1} parent=0 // pred_check_branch
    %25 = sbr.rel (0) target = $region29
  $region28: #{net_forward.1} parent=0 // pred_region
    _
  $region29: #{net_forward.1} parent=0 // pred_fallthru
    _
  %v26 = vld [vmem:[%s0] sm:$0xff]
  %v27 = vld [vmem:[%s0 + $0x8] sm:$0xff]
  %v28 = vld [vmem:[%s0 + $0x10] sm:$0xff]
  %v29 = vld [vmem:[%s0 + $0x18] sm:$0xff]
  %v30 = vld [vmem:[%s0 + $0x20] sm:$0xff]
  %v31 = vld [vmem:[%s0 + $0x28] sm:$0xff]
  %v32 = vld [vmem:[%s0 + $0x30] sm:$0xff]
  %v33 = vld [vmem:[%s0 + $0x38] sm:$0xff]
  %v34 = vld [vmem:[%s0 + $0x40] sm:$0xff]
  %v35 = vld [vmem:[%s0 + $0x48] sm:$0xff]
  %v36 = vld [vmem:[%s0 + $0x50] sm:$0xff]
  %v37 = vld [vmem:[%s0 + $0x58] sm:$0xff]
  %v38 = vld [vmem:[%s0 + $0x60] sm:$0xff]
  %v39 = vld [vmem:[%s0 + $0x68] sm:$0xff]
  %v40 = vld [vmem:[%s0 + $0x70] sm:$0xff]
  %v41 = vld [vmem:[%s0 + $0x78] sm:$0xff]
  %v42 = vld [vmem:[%s0 + $0x80] sm:$0xff]
  %v43 = vld [vmem:[%s0 + $0x88] sm:$0xff]
  %v44 = vld [vmem:[%s0 + $0x90] sm:$0xff]
  %v45 = vld [vmem:[%s0 + $0x98] sm:$0xff]
  %v46 = vld [vmem:[%s0 + $0xa0] sm:$0xff]
  %v47 = vld [vmem:[%s0 + $0xa8] sm:$0xff]
  %v48 = vld [vmem:[%s0 + $0xb0] sm:$0xff]
  %v49 = vld [vmem:[%s0 + $0xb8] sm:$0xff]
  %v50 = vld [vmem:[%s0 + $0xc0] sm:$0xff]
  %v51 = vld [vmem:[%s0 + $0xc8] sm:$0xff]
  %v52 = vld [vmem:[%s0 + $0xd0] sm:$0xff]
  %v53 = vld [vmem:[%s0 + $0xd8] sm:$0xff]
  %v54 = vld [vmem:[%s0 + $0xe0] sm:$0xff]
  %v55 = vld [vmem:[%s0 + $0xe8] sm:$0xff]
  %v56 = vld [vmem:[%s0 + $0xf0] sm:$0xff]
  %v57 = vld [vmem:[%s0 + $0xf8] sm:$0xff]
  %v58 = vld [vmem:[%s0 + $0x100] sm:$0xff]
  %v59 = vld [vmem:[%s0 + $0x108] sm:$0xff]
  %v60 = vld [vmem:[%s0 + $0x110] sm:$0xff]
  %v61 = vld [vmem:[%s0 + $0x118] sm:$0xff]
  %v62 = vld [vmem:[%s0 + $0x120] sm:$0xff]
  %v63 = vld [vmem:[%s0 + $0x128] sm:$0xff]
  %v64 = vld [vmem:[%s0 + $0x130] sm:$0xff]
  %v65 = vld [vmem:[%s0 + $0x138] sm:$0xff]
  %v66 = vld [vmem:[%s0 + $0x140] sm:$0xff]
  %v67 = vld [vmem:[%s0 + $0x148] sm:$0xff]
  %v68 = vld [vmem:[%s0 + $0x150] sm:$0xff]
  %v69 = vld [vmem:[%s0 + $0x158] sm:$0xff]
  %v70 = vld [vmem:[%s0 + $0x160] sm:$0xff]
  %v71 = vld [vmem:[%s0 + $0x168] sm:$0xff]
  %v72 = vld [vmem:[%s0 + $0x170] sm:$0xff]
  %v73 = vld [vmem:[%s0 + $0x178] sm:$0xff]
  %v74 = vld [vmem:[%s0 + $0x180] sm:$0xff]
  %v75 = vld [vmem:[%s0 + $0x188] sm:$0xff]
  %v76 = vld [vmem:[%s0 + $0x190] sm:$0xff]
  %v77 = vld [vmem:[%s0 + $0x198] sm:$0xff]
  %v78 = vld [vmem:[%s0 + $0x1a0] sm:$0xff]
  %v79 = vld [vmem:[%s0 + $0x1a8] sm:$0xff]
  %v80 = vld [vmem:[%s0 + $0x1b0] sm:$0xff]
  %v81 = vld [vmem:[%s0 + $0x1b8] sm:$0xff]
  %v82 = vld [vmem:[%s0 + $0x1c0] sm:$0xff]
  %v83 = vld [vmem:[%s0 + $0x1c8] sm:$0xff]
  %v84 = vld [vmem:[%s0 + $0x1d0] sm:$0xff]
  %v85 = vld [vmem:[%s0 + $0x1d8] sm:$0xff]
  %v86 = vld [vmem:[%s0 + $0x1e0] sm:$0xff]
  %v87 = vld [vmem:[%s0 + $0x1e8] sm:$0xff]
  %v88 = vld [vmem:[%s0 + $0x1f0] sm:$0xff]
  %v89 = vld [vmem:[%s0 + $0x1f8] sm:$0xff]
  %v90 = vld [vmem:[%s0 + $0x200] sm:$0xff]
  %v91 = vld [vmem:[%s0 + $0x208] sm:$0xff]
  %v92 = vld [vmem:[%s0 + $0x210] sm:$0xff]
  %v93 = vld [vmem:[%s0 + $0x218] sm:$0xff]
  %v94 = vld [vmem:[%s0 + $0x220] sm:$0xff]
  %v95 = vld [vmem:[%s0 + $0x228] sm:$0xff]
  %v96 = vld [vmem:[%s0 + $0x230] sm:$0xff]
  %v97 = vld [vmem:[%s0 + $0x238] sm:$0xff]
  %v98 = vld [vmem:[%s0 + $0x240] sm:$0xff]
  %v99 = vld [vmem:[%s0 + $0x248] sm:$0xff]
  %v100 = vld [vmem:[%s0 + $0x250] sm:$0xff]
  %v101 = vld [vmem:[%s0 + $0x258] sm:$0xff]
  %v102 = vld [vmem:[%s0 + $0x260] sm:$0xff]
  %v103 = vld [vmem:[%s0 + $0x268] sm:$0xff]
  %v104 = vld [vmem:[%s0 + $0x270] sm:$0xff]
  %v105 = vld [vmem:[%s0 + $0x278] sm:$0xff]
  %v106 = vld [vmem:[%s0 + $0x280] sm:$0xff]
  %v107 = vld [vmem:[%s0 + $0x288] sm:$0xff]
  %v108 = vld [vmem:[%s0 + $0x290] sm:$0xff]
  %v109 = vld [vmem:[%s0 + $0x298] sm:$0xff]
  %v110 = vld [vmem:[%s0 + $0x2a0] sm:$0xff]
  %v111 = vld [vmem:[%s0 + $0x2a8] sm:$0xff]
  %v112 = vld [vmem:[%s0 + $0x2b0] sm:$0xff]
  %v113 = vld [vmem:[%s0 + $0x2b8] sm:$0xff]
  %v114 = vld [vmem:[%s0 + $0x2c0] sm:$0xff]
  %v115 = vld [vmem:[%s0 + $0x2c8] sm:$0xff]
  %v116 = vld [vmem:[%s0 + $0x2d0] sm:$0xff]
  %v117 = vld [vmem:[%s0 + $0x2d8] sm:$0xff]
  %v118 = vld [vmem:[%s0 + $0x2e0] sm:$0xff]
  %v119 = vld [vmem:[%s0 + $0x2e8] sm:$0xff]
  %v120 = vld [vmem:[%s0 + $0x2f0] sm:$0xff]
  %v121 = vld [vmem:[%s0 + $0x2f8] sm:$0xff]
  %v122 = vld [vmem:[%s0 + $0x300] sm:$0xff]
  %v123 = vld [vmem:[%s0 + $0x308] sm:$0xff]
  %v124 = vld [vmem:[%s0 + $0x310] sm:$0xff]
  %v125 = vld [vmem:[%s0 + $0x318] sm:$0xff]
  %v126 = vld [vmem:[%s0 + $0x320] sm:$0xff]
  %v127 = vld [vmem:[%s0 + $0x328] sm:$0xff]
  %v128 = vld [vmem:[%s0 + $0x330] sm:$0xff]
  %v129 = vld [vmem:[%s0 + $0x338] sm:$0xff]
  %v130 = vld [vmem:[%s0 + $0x340] sm:$0xff]
  %v131 = vld [vmem:[%s0 + $0x348] sm:$0xff]
  %v132 = vld [vmem:[%s0 + $0x350] sm:$0xff]
  %v133 = vld [vmem:[%s0 + $0x358] sm:$0xff]
  %v134 = vld [vmem:[%s0 + $0x360] sm:$0xff]
  %v135 = vld [vmem:[%s0 + $0x368] sm:$0xff]
  %v136 = vld [vmem:[%s0 + $0x370] sm:$0xff]
  %v137 = vld [vmem:[%s0 + $0x378] sm:$0xff]
  %v138 = vld [vmem:[%s0 + $0x380] sm:$0xff]
  %v139 = vld [vmem:[%s0 + $0x388] sm:$0xff]
  %v140 = vld [vmem:[%s0 + $0x390] sm:$0xff]
  %v141 = vld [vmem:[%s0 + $0x398] sm:$0xff]
  %v142 = vld [vmem:[%s0 + $0x3a0] sm:$0xff]
  %v143 = vld [vmem:[%s0 + $0x3a8] sm:$0xff]
  %v144 = vld [vmem:[%s0 + $0x3b0] sm:$0xff]
  %v145 = vld [vmem:[%s0 + $0x3b8] sm:$0xff]
  %v146 = vld [vmem:[%s0 + $0x3c0] sm:$0xff]
  %v147 = vld [vmem:[%s0 + $0x3c8] sm:$0xff]
  %v148 = vld [vmem:[%s0 + $0x3d0] sm:$0xff]
  %v149 = vld [vmem:[%s0 + $0x3d8] sm:$0xff]
  %v150 = vld [vmem:[%s0 + $0x3e0] sm:$0xff]
  %v151 = vld [vmem:[%s0 + $0x3e8] sm:$0xff]
  %v152 = vld [vmem:[%s0 + $0x3f0] sm:$0xff]
  %v153 = vld [vmem:[%s0 + $0x3f8] sm:$0xff]
  %v154 = vld [vmem:[%s0 + $0x400] sm:$0xff]
  %v155 = vld [vmem:[%s0 + $0x408] sm:$0xff]
  %v156 = vld [vmem:[%s0 + $0x410] sm:$0xff]
  %v157 = vld [vmem:[%s0 + $0x418] sm:$0xff]
  %v158 = vld [vmem:[%s0 + $0x420] sm:$0xff]
  %v159 = vld [vmem:[%s0 + $0x428] sm:$0xff]
  %v160 = vld [vmem:[%s0 + $0x430] sm:$0xff]
  %v161 = vld [vmem:[%s0 + $0x438] sm:$0xff]
  %v162 = vld [vmem:[%s0 + $0x440] sm:$0xff]
  %v163 = vld [vmem:[%s0 + $0x448] sm:$0xff]
  %v164 = vld [vmem:[%s0 + $0x450] sm:$0xff]
  %v165 = vld [vmem:[%s0 + $0x458] sm:$0xff]
  %v166 = vld [vmem:[%s0 + $0x460] sm:$0xff]
  %v167 = vld [vmem:[%s0 + $0x468] sm:$0xff]
  %v168 = vld [vmem:[%s0 + $0x470] sm:$0xff]
  %v169 = vld [vmem:[%s0 + $0x478] sm:$0xff]
  %v170 = vld [vmem:[%s0 + $0x480] sm:$0xff]
  %v171 = vld [vmem:[%s0 + $0x488] sm:$0xff]
  %v172 = vld [vmem:[%s0 + $0x490] sm:$0xff]
  %v173 = vld [vmem:[%s0 + $0x498] sm:$0xff]
  %v174 = vld [vmem:[%s0 + $0x4a0] sm:$0xff]
  %v175 = vld [vmem:[%s0 + $0x4a8] sm:$0xff]
  %v176 = vld [vmem:[%s0 + $0x4b0] sm:$0xff]
  %v177 = vld [vmem:[%s0 + $0x4b8] sm:$0xff]
  %v178 = vld [vmem:[%s0 + $0x4c0] sm:$0xff]
  %v179 = vld [vmem:[%s0 + $0x4c8] sm:$0xff]
  %v180 = vld [vmem:[%s0 + $0x4d0] sm:$0xff]
  %v181 = vld [vmem:[%s0 + $0x4d8] sm:$0xff]
  %v182 = vld [vmem:[%s0 + $0x4e0] sm:$0xff]
  %v183 = vld [vmem:[%s0 + $0x4e8] sm:$0xff]
  %v184 = vld [vmem:[%s0 + $0x4f0] sm:$0xff]
  %v185 = vld [vmem:[%s0 + $0x4f8] sm:$0xff]
  %v186 = vld [vmem:[%s0 + $0x500] sm:$0xff]
  %v187 = vld [vmem:[%s0 + $0x508] sm:$0xff]
  %v188 = vld [vmem:[%s0 + $0x510] sm:$0xff]
  %v189 = vld [vmem:[%s0 + $0x518] sm:$0xff]
  %v190 = vld [vmem:[%s0 + $0x520] sm:$0xff]
  %v191 = vld [vmem:[%s0 + $0x528] sm:$0xff]
  %v192 = vld [vmem:[%s0 + $0x530] sm:$0xff]
  %v193 = vld [vmem:[%s0 + $0x538] sm:$0xff]
  %v194 = vld [vmem:[%s0 + $0x540] sm:$0xff]
  %v195 = vld [vmem:[%s0 + $0x548] sm:$0xff]
  %v196 = vld [vmem:[%s0 + $0x550] sm:$0xff]
  %v197 = vld [vmem:[%s0 + $0x558] sm:$0xff]
  %v198 = vld [vmem:[%s0 + $0x560] sm:$0xff]
  %v199 = vld [vmem:[%s0 + $0x568] sm:$0xff]
  %v200 = vld [vmem:[%s0 + $0x570] sm:$0xff]
  %v201 = vld [vmem:[%s0 + $0x578] sm:$0xff]
  %v202 = vld [vmem:[%s0 + $0x580] sm:$0xff]
  %v203 = vld [vmem:[%s0 + $0x588] sm:$0xff]
  %v204 = vld [vmem:[%s0 + $0x590] sm:$0xff]
  %v205 = vld [vmem:[%s0 + $0x598] sm:$0xff]
  %v206 = vld [vmem:[%s0 + $0x5a0] sm:$0xff]
  %v207 = vld [vmem:[%s0 + $0x5a8] sm:$0xff]
  %v208 = vld [vmem:[%s0 + $0x5b0] sm:$0xff]
  %v209 = vld [vmem:[%s0 + $0x5b8] sm:$0xff]
  %v210 = vld [vmem:[%s0 + $0x5c0] sm:$0xff]
  %v211 = vld [vmem:[%s0 + $0x5c8] sm:$0xff]
  %v212 = vld [vmem:[%s0 + $0x5d0] sm:$0xff]
  %v213 = vld [vmem:[%s0 + $0x5d8] sm:$0xff]
  %v214 = vld [vmem:[%s0 + $0x5e0] sm:$0xff]
  %v215 = vld [vmem:[%s0 + $0x5e8] sm:$0xff]
  %v216 = vld [vmem:[%s0 + $0x5f0] sm:$0xff]
  %v217 = vld [vmem:[%s0 + $0x5f8] sm:$0xff]
  %v218 = vld [vmem:[%s0 + $0x600] sm:$0xff]
  %v219 = vld [vmem:[%s0 + $0x608] sm:$0xff]
  %v220 = vld [vmem:[%s0 + $0x610] sm:$0xff]
  %v221 = vld [vmem:[%s0 + $0x618] sm:$0xff]
  %v222 = vld [vmem:[%s0 + $0x620] sm:$0xff]
  %v223 = vld [vmem:[%s0 + $0x628] sm:$0xff]
  %v224 = vld [vmem:[%s0 + $0x630] sm:$0xff]
  %v225 = vld [vmem:[%s0 + $0x638] sm:$0xff]
  %v226 = vld [vmem:[%s0 + $0x640] sm:$0xff]
  %v227 = vld [vmem:[%s0 + $0x648] sm:$0xff]
  %v228 = vld [vmem:[%s0 + $0x650] sm:$0xff]
  %v229 = vld [vmem:[%s0 + $0x658] sm:$0xff]
  %v230 = vld [vmem:[%s0 + $0x660] sm:$0xff]
  %v231 = vld [vmem:[%s0 + $0x668] sm:$0xff]
  %v232 = vld [vmem:[%s0 + $0x670] sm:$0xff]
  %v233 = vld [vmem:[%s0 + $0x678] sm:$0xff]
  %v234 = vld [vmem:[%s0 + $0x680] sm:$0xff]
  %v235 = vld [vmem:[%s0 + $0x688] sm:$0xff]
  %v236 = vld [vmem:[%s0 + $0x690] sm:$0xff]
  %v237 = vld [vmem:[%s0 + $0x698] sm:$0xff]
  %v238 = vld [vmem:[%s0 + $0x6a0] sm:$0xff]
  %v239 = vld [vmem:[%s0 + $0x6a8] sm:$0xff]
  %v240 = vld [vmem:[%s0 + $0x6b0] sm:$0xff]
  %v241 = vld [vmem:[%s0 + $0x6b8] sm:$0xff]
  %v242 = vld [vmem:[%s0 + $0x6c0] sm:$0xff]
  %v243 = vld [vmem:[%s0 + $0x6c8] sm:$0xff]
  %v244 = vld [vmem:[%s0 + $0x6d0] sm:$0xff]
  %v245 = vld [vmem:[%s0 + $0x6d8] sm:$0xff]
  %v246 = vld [vmem:[%s0 + $0x6e0] sm:$0xff]
  %v247 = vld [vmem:[%s0 + $0x6e8] sm:$0xff]
  %v248 = vld [vmem:[%s0 + $0x6f0] sm:$0xff]
  %v249 = vld [vmem:[%s0 + $0x6f8] sm:$0xff]
  %v250 = vld [vmem:[%s0 + $0x700] sm:$0xff]
  %v251 = vld [vmem:[%s0 + $0x708] sm:$0xff]
  %v252 = vld [vmem:[%s0 + $0x710] sm:$0xff]
  %v253 = vld [vmem:[%s0 + $0x718] sm:$0xff]
  %v254 = vld [vmem:[%s0 + $0x720] sm:$0xff]
  %v255 = vld [vmem:[%s0 + $0x728] sm:$0xff]
  %v256 = vld [vmem:[%s0 + $0x730] sm:$0xff]
  %v257 = vld [vmem:[%s0 + $0x738] sm:$0xff]
  %v258 = vld [vmem:[%s0 + $0x740] sm:$0xff]
  %v259 = vld [vmem:[%s0 + $0x748] sm:$0xff]
  %v260 = vld [vmem:[%s0 + $0x750] sm:$0xff]
  %v261 = vld [vmem:[%s0 + $0x758] sm:$0xff]
  %v262 = vld [vmem:[%s0 + $0x760] sm:$0xff]
  %v263 = vld [vmem:[%s0 + $0x768] sm:$0xff]
  %v264 = vld [vmem:[%s0 + $0x770] sm:$0xff]
  %v265 = vld [vmem:[%s0 + $0x778] sm:$0xff]
  %v266 = vld [vmem:[%s0 + $0x780] sm:$0xff]
  %v267 = vld [vmem:[%s0 + $0x788] sm:$0xff]
  %v268 = vld [vmem:[%s0 + $0x790] sm:$0xff]
  %v269 = vld [vmem:[%s0 + $0x798] sm:$0xff]
  %v270 = vld [vmem:[%s0 + $0x7a0] sm:$0xff]
  %v271 = vld [vmem:[%s0 + $0x7a8] sm:$0xff]
  %v272 = vld [vmem:[%s0 + $0x7b0] sm:$0xff]
  %v273 = vld [vmem:[%s0 + $0x7b8] sm:$0xff]
  %v274 = vld [vmem:[%s0 + $0x7c0] sm:$0xff]
  %v275 = vld [vmem:[%s0 + $0x7c8] sm:$0xff]
  %v276 = vld [vmem:[%s0 + $0x7d0] sm:$0xff]
  %v277 = vld [vmem:[%s0 + $0x7d8] sm:$0xff]
  %v278 = vld [vmem:[%s0 + $0x7e0] sm:$0xff]
  %v279 = vld [vmem:[%s0 + $0x7e8] sm:$0xff]
  %v280 = vld [vmem:[%s0 + $0x7f0] sm:$0xff]
  %v281 = vld [vmem:[%s0 + $0x7f8] sm:$0xff]
  %v282 = vld [vmem:[%s1] sm:$0x77]
  %284 = vst [vmem:[#allocation1] ss:$2 sm:$0xff] %v282
  %v285 = vld.sshfl [vmem:[#allocation1] sm:$0xff pattern:$0x75316420]
  %v286 = vld.sshfl [vmem:[#allocation1 + $0x8] sm:$0xff pattern:$0x75316420]
  %vm287 = vcmask 23552
  %v289 = vsel %vm287, %v26, 0
  %v292 = vsel %vm287, %v27, 0
  %v295 = vsel %vm287, %v28, 0
  %v298 = vsel %vm287, %v29, 0
  %v301 = vsel %vm287, %v30, 0
  %v304 = vsel %vm287, %v31, 0
  %v307 = vsel %vm287, %v32, 0
  %v310 = vsel %vm287, %v33, 0
  %v313 = vsel %vm287, %v34, 0
  %v316 = vsel %vm287, %v35, 0
  %v319 = vsel %vm287, %v36, 0
  %v322 = vsel %vm287, %v37, 0
  %v325 = vsel %vm287, %v38, 0
  %v328 = vsel %vm287, %v39, 0
  %v331 = vsel %vm287, %v40, 0
  %v334 = vsel %vm287, %v41, 0
  %v337 = vsel %vm287, %v42, 0
  %v340 = vsel %vm287, %v43, 0
  %v343 = vsel %vm287, %v44, 0
  %v346 = vsel %vm287, %v45, 0
  %v349 = vsel %vm287, %v46, 0
  %v352 = vsel %vm287, %v47, 0
  %v355 = vsel %vm287, %v48, 0
  %v358 = vsel %vm287, %v49, 0
  %v361 = vsel %vm287, %v50, 0
  %v364 = vsel %vm287, %v51, 0
  %v367 = vsel %vm287, %v52, 0
  %v370 = vsel %vm287, %v53, 0
  %v373 = vsel %vm287, %v54, 0
  %v376 = vsel %vm287, %v55, 0
  %v379 = vsel %vm287, %v56, 0
  %v382 = vsel %vm287, %v57, 0
  %v385 = vsel %vm287, %v58, 0
  %v388 = vsel %vm287, %v59, 0
  %v391 = vsel %vm287, %v60, 0
  %v394 = vsel %vm287, %v61, 0
  %v397 = vsel %vm287, %v62, 0
  %v400 = vsel %vm287, %v63, 0
  %v403 = vsel %vm287, %v64, 0
  %v406 = vsel %vm287, %v65, 0
  %v409 = vsel %vm287, %v66, 0
  %v412 = vsel %vm287, %v67, 0
  %v415 = vsel %vm287, %v68, 0
  %v418 = vsel %vm287, %v69, 0
  %v421 = vsel %vm287, %v70, 0
  %v424 = vsel %vm287, %v71, 0
  %v427 = vsel %vm287, %v72, 0
  %v430 = vsel %vm287, %v73, 0
  %v433 = vsel %vm287, %v74, 0
  %v436 = vsel %vm287, %v75, 0
  %v439 = vsel %vm287, %v76, 0
  %v442 = vsel %vm287, %v77, 0
  %v445 = vsel %vm287, %v78, 0
  %v448 = vsel %vm287, %v79, 0
  %v451 = vsel %vm287, %v80, 0
  %v454 = vsel %vm287, %v81, 0
  %v457 = vsel %vm287, %v82, 0
  %v460 = vsel %vm287, %v83, 0
  %v463 = vsel %vm287, %v84, 0
  %v466 = vsel %vm287, %v85, 0
  %v469 = vsel %vm287, %v86, 0
  %v472 = vsel %vm287, %v87, 0
  %v475 = vsel %vm287, %v88, 0
  %v478 = vsel %vm287, %v89, 0
  %v481 = vsel %vm287, %v90, 0
  %v484 = vsel %vm287, %v91, 0
  %v487 = vsel %vm287, %v92, 0
  %v490 = vsel %vm287, %v93, 0
  %v493 = vsel %vm287, %v94, 0
  %v496 = vsel %vm287, %v95, 0
  %v499 = vsel %vm287, %v96, 0
  %v502 = vsel %vm287, %v97, 0
  %v505 = vsel %vm287, %v98, 0
  %v508 = vsel %vm287, %v99, 0
  %v511 = vsel %vm287, %v100, 0
  %v514 = vsel %vm287, %v101, 0
  %v517 = vsel %vm287, %v102, 0
  %v520 = vsel %vm287, %v103, 0
  %v523 = vsel %vm287, %v104, 0
  %v526 = vsel %vm287, %v105, 0
  %v529 = vsel %vm287, %v106, 0
  %v532 = vsel %vm287, %v107, 0
  %v535 = vsel %vm287, %v108, 0
  %v538 = vsel %vm287, %v109, 0
  %v541 = vsel %vm287, %v110, 0
  %v544 = vsel %vm287, %v111, 0
  %v547 = vsel %vm287, %v112, 0
  %v550 = vsel %vm287, %v113, 0
  %v553 = vsel %vm287, %v114, 0
  %v556 = vsel %vm287, %v115, 0
  %v559 = vsel %vm287, %v116, 0
  %v562 = vsel %vm287, %v117, 0
  %v565 = vsel %vm287, %v118, 0
  %v568 = vsel %vm287, %v119, 0
  %v571 = vsel %vm287, %v120, 0
  %v574 = vsel %vm287, %v121, 0
  %v577 = vsel %vm287, %v122, 0
  %v580 = vsel %vm287, %v123, 0
  %v583 = vsel %vm287, %v124, 0
  %v586 = vsel %vm287, %v125, 0
  %v589 = vsel %vm287, %v126, 0
  %v592 = vsel %vm287, %v127, 0
  %v595 = vsel %vm287, %v128, 0
  %v598 = vsel %vm287, %v129, 0
  %v601 = vsel %vm287, %v130, 0
  %v604 = vsel %vm287, %v131, 0
  %v607 = vsel %vm287, %v132, 0
  %v610 = vsel %vm287, %v133, 0
  %v613 = vsel %vm287, %v134, 0
  %v616 = vsel %vm287, %v135, 0
  %v619 = vsel %vm287, %v136, 0
  %v622 = vsel %vm287, %v137, 0
  %v625 = vsel %vm287, %v138, 0
  %v628 = vsel %vm287, %v139, 0
  %v631 = vsel %vm287, %v140, 0
  %v634 = vsel %vm287, %v141, 0
  %v637 = vsel %vm287, %v142, 0
  %v640 = vsel %vm287, %v143, 0
  %v643 = vsel %vm287, %v144, 0
  %v646 = vsel %vm287, %v145, 0
  %v649 = vsel %vm287, %v146, 0
  %v652 = vsel %vm287, %v147, 0
  %v655 = vsel %vm287, %v148, 0
  %v658 = vsel %vm287, %v149, 0
  %v661 = vsel %vm287, %v150, 0
  %v664 = vsel %vm287, %v151, 0
  %v667 = vsel %vm287, %v152, 0
  %v670 = vsel %vm287, %v153, 0
  %v673 = vsel %vm287, %v154, 0
  %v676 = vsel %vm287, %v155, 0
  %v679 = vsel %vm287, %v156, 0
  %v682 = vsel %vm287, %v157, 0
  %v685 = vsel %vm287, %v158, 0
  %v688 = vsel %vm287, %v159, 0
  %v691 = vsel %vm287, %v160, 0
  %v694 = vsel %vm287, %v161, 0
  %v697 = vsel %vm287, %v162, 0
  %v700 = vsel %vm287, %v163, 0
  %v703 = vsel %vm287, %v164, 0
  %v706 = vsel %vm287, %v165, 0
  %v709 = vsel %vm287, %v166, 0
  %v712 = vsel %vm287, %v167, 0
  %v715 = vsel %vm287, %v168, 0
  %v718 = vsel %vm287, %v169, 0
  %v721 = vsel %vm287, %v170, 0
  %v724 = vsel %vm287, %v171, 0
  %v727 = vsel %vm287, %v172, 0
  %v730 = vsel %vm287, %v173, 0
  %v733 = vsel %vm287, %v174, 0
  %v736 = vsel %vm287, %v175, 0
  %v739 = vsel %vm287, %v176, 0
  %v742 = vsel %vm287, %v177, 0
  %v745 = vsel %vm287, %v178, 0
  %v748 = vsel %vm287, %v179, 0
  %v751 = vsel %vm287, %v180, 0
  %v754 = vsel %vm287, %v181, 0
  %v757 = vsel %vm287, %v182, 0
  %v760 = vsel %vm287, %v183, 0
  %v763 = vsel %vm287, %v184, 0
  %v766 = vsel %vm287, %v185, 0
  %v769 = vsel %vm287, %v186, 0
  %v772 = vsel %vm287, %v187, 0
  %v775 = vsel %vm287, %v188, 0
  %v778 = vsel %vm287, %v189, 0
  %v781 = vsel %vm287, %v190, 0
  %v784 = vsel %vm287, %v191, 0
  %v787 = vsel %vm287, %v192, 0
  %v790 = vsel %vm287, %v193, 0
  %v793 = vsel %vm287, %v194, 0
  %v796 = vsel %vm287, %v195, 0
  %v799 = vsel %vm287, %v196, 0
  %v802 = vsel %vm287, %v197, 0
  %v805 = vsel %vm287, %v198, 0
  %v808 = vsel %vm287, %v199, 0
  %v811 = vsel %vm287, %v200, 0
  %v814 = vsel %vm287, %v201, 0
  %v817 = vsel %vm287, %v202, 0
  %v820 = vsel %vm287, %v203, 0
  %v823 = vsel %vm287, %v204, 0
  %v826 = vsel %vm287, %v205, 0
  %v829 = vsel %vm287, %v206, 0
  %v832 = vsel %vm287, %v207, 0
  %v835 = vsel %vm287, %v208, 0
  %v838 = vsel %vm287, %v209, 0
  %v841 = vsel %vm287, %v210, 0
  %v844 = vsel %vm287, %v211, 0
  %v847 = vsel %vm287, %v212, 0
  %v850 = vsel %vm287, %v213, 0
  %v853 = vsel %vm287, %v214, 0
  %v856 = vsel %vm287, %v215, 0
  %v859 = vsel %vm287, %v216, 0
  %v862 = vsel %vm287, %v217, 0
  %v865 = vsel %vm287, %v218, 0
  %v868 = vsel %vm287, %v219, 0
  %v871 = vsel %vm287, %v220, 0
  %v874 = vsel %vm287, %v221, 0
  %v877 = vsel %vm287, %v222, 0
  %v880 = vsel %vm287, %v223, 0
  %v883 = vsel %vm287, %v224, 0
  %v886 = vsel %vm287, %v225, 0
  %v889 = vsel %vm287, %v226, 0
  %v892 = vsel %vm287, %v227, 0
  %v895 = vsel %vm287, %v228, 0
  %v898 = vsel %vm287, %v229, 0
  %v901 = vsel %vm287, %v230, 0
  %v904 = vsel %vm287, %v231, 0
  %v907 = vsel %vm287, %v232, 0
  %v910 = vsel %vm287, %v233, 0
  %v913 = vsel %vm287, %v234, 0
  %v916 = vsel %vm287, %v235, 0
  %v919 = vsel %vm287, %v236, 0
  %v922 = vsel %vm287, %v237, 0
  %v925 = vsel %vm287, %v238, 0
  %v928 = vsel %vm287, %v239, 0
  %v931 = vsel %vm287, %v240, 0
  %v934 = vsel %vm287, %v241, 0
  %v937 = vsel %vm287, %v242, 0
  %v940 = vsel %vm287, %v243, 0
  %v943 = vsel %vm287, %v244, 0
  %v946 = vsel %vm287, %v245, 0
  %v949 = vsel %vm287, %v246, 0
  %v952 = vsel %vm287, %v247, 0
  %v955 = vsel %vm287, %v248, 0
  %v958 = vsel %vm287, %v249, 0
  %v961 = vsel %vm287, %v250, 0
  %v964 = vsel %vm287, %v251, 0
  %v967 = vsel %vm287, %v252, 0
  %v970 = vsel %vm287, %v253, 0
  %v973 = vsel %vm287, %v254, 0
  %v976 = vsel %vm287, %v255, 0
  %v979 = vsel %vm287, %v256, 0
  %v982 = vsel %vm287, %v257, 0
  %v985 = vsel %vm287, %v258, 0
  %v988 = vsel %vm287, %v259, 0
  %v991 = vsel %vm287, %v260, 0
  %v994 = vsel %vm287, %v261, 0
  %v997 = vsel %vm287, %v262, 0
  %v1000 = vsel %vm287, %v263, 0
  %v1003 = vsel %vm287, %v264, 0
  %v1006 = vsel %vm287, %v265, 0
  %v1009 = vsel %vm287, %v266, 0
  %v1012 = vsel %vm287, %v267, 0
  %v1015 = vsel %vm287, %v268, 0
  %v1018 = vsel %vm287, %v269, 0
  %v1021 = vsel %vm287, %v270, 0
  %v1024 = vsel %vm287, %v271, 0
  %v1027 = vsel %vm287, %v272, 0
  %v1030 = vsel %vm287, %v273, 0
  %v1033 = vsel %vm287, %v274, 0
  %v1036 = vsel %vm287, %v275, 0
  %v1039 = vsel %vm287, %v276, 0
  %v1042 = vsel %vm287, %v277, 0
  %v1045 = vsel %vm287, %v278, 0
  %v1048 = vsel %vm287, %v279, 0
  %v1051 = vsel %vm287, %v280, 0
  %v1054 = vsel %vm287, %v281, 0
  %vm1056 = vcmask 1042432
  %v1057 = vsel %vm1056, %v285, 0
  %v1059 = vsel %vm1056, %v286, 0
  %1061 = vmatpush.msra.mxu0 0.0
  %1062 = vmatpush.msra.mxu0 0.0
  %1063 = vmatpush.msra.mxu0 0.0
  %1064 = vmatpush.msra.mxu0 0.0
  %1065 = vmatpush.msra.mxu0 0.0
  %1066 = vmatpush.msra.mxu0 0.0
  %1067 = vmatpush.msra.mxu0 0.0
  %1068 = vmatpush.msra.mxu0 0.0
  %1069 = vmatpush.msra.mxu0 0.0
  %1070 = vmatpush.msra.mxu0 0.0
  %1071 = vmatpush.msra.mxu0 0.0
  %1072 = vmatpush.msra.mxu0 0.0
  %1073 = vmatpush.msra.mxu0 0.0
  %1074 = vmatpush.msra.mxu0 0.0
  %1075 = vmatpush.msra.mxu0 0.0
  %1076 = vmatpush.msra.mxu0 %v1057
  %1077 = vmatmul.f32.gmra.mxu0 %v289
  %v1078 = vpop.f32.mrf.mxu0
  %v1079 = vadd.f32 0.0, %v1078
  %1080 = vmatmul.f32.gmra.mxu0 %v292
  %v1081 = vpop.f32.mrf.mxu0
  %v1082 = vadd.f32 0.0, %v1081
  %1083 = vmatmul.f32.gmra.mxu0 %v295
  %v1084 = vpop.f32.mrf.mxu0
  %v1085 = vadd.f32 0.0, %v1084
  %1086 = vmatmul.f32.gmra.mxu0 %v298
  %v1087 = vpop.f32.mrf.mxu0
  %v1088 = vadd.f32 0.0, %v1087
  %1089 = vmatmul.f32.gmra.mxu0 %v301
  %v1090 = vpop.f32.mrf.mxu0
  %v1091 = vadd.f32 0.0, %v1090
  %1092 = vmatmul.f32.gmra.mxu0 %v304
  %v1093 = vpop.f32.mrf.mxu0
  %v1094 = vadd.f32 0.0, %v1093
  %1095 = vmatmul.f32.gmra.mxu0 %v307
  %v1096 = vpop.f32.mrf.mxu0
  %v1097 = vadd.f32 0.0, %v1096
  %1098 = vmatmul.f32.gmra.mxu0 %v310
  %v1099 = vpop.f32.mrf.mxu0
  %v1100 = vadd.f32 0.0, %v1099
  %1101 = vmatmul.f32.gmra.mxu0 %v313
  %v1102 = vpop.f32.mrf.mxu0
  %v1103 = vadd.f32 0.0, %v1102
  %1104 = vmatmul.f32.gmra.mxu0 %v316
  %v1105 = vpop.f32.mrf.mxu0
  %v1106 = vadd.f32 0.0, %v1105
  %1107 = vmatmul.f32.gmra.mxu0 %v319
  %v1108 = vpop.f32.mrf.mxu0
  %v1109 = vadd.f32 0.0, %v1108
  %1110 = vmatmul.f32.gmra.mxu0 %v322
  %v1111 = vpop.f32.mrf.mxu0
  %v1112 = vadd.f32 0.0, %v1111
  %1113 = vmatmul.f32.gmra.mxu0 %v325
  %v1114 = vpop.f32.mrf.mxu0
  %v1115 = vadd.f32 0.0, %v1114
  %1116 = vmatmul.f32.gmra.mxu0 %v328
  %v1117 = vpop.f32.mrf.mxu0
  %v1118 = vadd.f32 0.0, %v1117
  %1119 = vmatmul.f32.gmra.mxu0 %v331
  %v1120 = vpop.f32.mrf.mxu0
  %v1121 = vadd.f32 0.0, %v1120
  %1122 = vmatmul.f32.gmra.mxu0 %v334
  %v1123 = vpop.f32.mrf.mxu0
  %1124 = vmatmul.f32.gmra.mxu0 %v337
  %v1125 = vpop.f32.mrf.mxu0
  %v1126 = vadd.f32 0.0, %v1125
  %1127 = vmatmul.f32.gmra.mxu0 %v340
  %v1128 = vpop.f32.mrf.mxu0
  %v1129 = vadd.f32 0.0, %v1128
  %1130 = vmatmul.f32.gmra.mxu0 %v343
  %v1131 = vpop.f32.mrf.mxu0
  %v1132 = vadd.f32 0.0, %v1131
  %1133 = vmatmul.f32.gmra.mxu0 %v346
  %v1134 = vpop.f32.mrf.mxu0
  %v1135 = vadd.f32 0.0, %v1134
  %1136 = vmatmul.f32.gmra.mxu0 %v349
  %v1137 = vpop.f32.mrf.mxu0
  %v1138 = vadd.f32 0.0, %v1137
  %1139 = vmatmul.f32.gmra.mxu0 %v352
  %v1140 = vpop.f32.mrf.mxu0
  %v1141 = vadd.f32 0.0, %v1140
  %1142 = vmatmul.f32.gmra.mxu0 %v355
  %v1143 = vpop.f32.mrf.mxu0
  %v1144 = vadd.f32 0.0, %v1143
  %1145 = vmatmul.f32.gmra.mxu0 %v358
  %v1146 = vpop.f32.mrf.mxu0
  %v1147 = vadd.f32 0.0, %v1146
  %1148 = vmatmul.f32.gmra.mxu0 %v361
  %v1149 = vpop.f32.mrf.mxu0
  %v1150 = vadd.f32 0.0, %v1149
  %1151 = vmatmul.f32.gmra.mxu0 %v364
  %v1152 = vpop.f32.mrf.mxu0
  %v1153 = vadd.f32 0.0, %v1152
  %1154 = vmatmul.f32.gmra.mxu0 %v367
  %v1155 = vpop.f32.mrf.mxu0
  %v1156 = vadd.f32 0.0, %v1155
  %1157 = vmatmul.f32.gmra.mxu0 %v370
  %v1158 = vpop.f32.mrf.mxu0
  %v1159 = vadd.f32 0.0, %v1158
  %1160 = vmatmul.f32.gmra.mxu0 %v373
  %v1161 = vpop.f32.mrf.mxu0
  %v1162 = vadd.f32 0.0, %v1161
  %1163 = vmatmul.f32.gmra.mxu0 %v376
  %v1164 = vpop.f32.mrf.mxu0
  %v1165 = vadd.f32 0.0, %v1164
  %1166 = vmatmul.f32.gmra.mxu0 %v379
  %v1167 = vpop.f32.mrf.mxu0
  %v1168 = vadd.f32 0.0, %v1167
  %1169 = vmatmul.f32.gmra.mxu0 %v382
  %v1170 = vpop.f32.mrf.mxu0
  %1171 = vmatmul.f32.gmra.mxu0 %v385
  %v1172 = vpop.f32.mrf.mxu0
  %v1173 = vadd.f32 0.0, %v1172
  %1174 = vmatmul.f32.gmra.mxu0 %v388
  %v1175 = vpop.f32.mrf.mxu0
  %v1176 = vadd.f32 0.0, %v1175
  %1177 = vmatmul.f32.gmra.mxu0 %v391
  %v1178 = vpop.f32.mrf.mxu0
  %v1179 = vadd.f32 0.0, %v1178
  %1180 = vmatmul.f32.gmra.mxu0 %v394
  %v1181 = vpop.f32.mrf.mxu0
  %v1182 = vadd.f32 0.0, %v1181
  %1183 = vmatmul.f32.gmra.mxu0 %v397
  %v1184 = vpop.f32.mrf.mxu0
  %v1185 = vadd.f32 0.0, %v1184
  %1186 = vmatmul.f32.gmra.mxu0 %v400
  %v1187 = vpop.f32.mrf.mxu0
  %v1188 = vadd.f32 0.0, %v1187
  %1189 = vmatmul.f32.gmra.mxu0 %v403
  %v1190 = vpop.f32.mrf.mxu0
  %v1191 = vadd.f32 0.0, %v1190
  %1192 = vmatmul.f32.gmra.mxu0 %v406
  %v1193 = vpop.f32.mrf.mxu0
  %v1194 = vadd.f32 0.0, %v1193
  %1195 = vmatmul.f32.gmra.mxu0 %v409
  %v1196 = vpop.f32.mrf.mxu0
  %v1197 = vadd.f32 0.0, %v1196
  %1198 = vmatmul.f32.gmra.mxu0 %v412
  %v1199 = vpop.f32.mrf.mxu0
  %v1200 = vadd.f32 0.0, %v1199
  %1201 = vmatmul.f32.gmra.mxu0 %v415
  %v1202 = vpop.f32.mrf.mxu0
  %v1203 = vadd.f32 0.0, %v1202
  %1204 = vmatmul.f32.gmra.mxu0 %v418
  %v1205 = vpop.f32.mrf.mxu0
  %v1206 = vadd.f32 0.0, %v1205
  %1207 = vmatmul.f32.gmra.mxu0 %v421
  %v1208 = vpop.f32.mrf.mxu0
  %v1209 = vadd.f32 0.0, %v1208
  %1210 = vmatmul.f32.gmra.mxu0 %v424
  %v1211 = vpop.f32.mrf.mxu0
  %v1212 = vadd.f32 0.0, %v1211
  %1213 = vmatmul.f32.gmra.mxu0 %v427
  %v1214 = vpop.f32.mrf.mxu0
  %v1215 = vadd.f32 0.0, %v1214
  %1216 = vmatmul.f32.gmra.mxu0 %v430
  %v1217 = vpop.f32.mrf.mxu0
  %1218 = vmatmul.f32.gmra.mxu0 %v433
  %v1219 = vpop.f32.mrf.mxu0
  %v1220 = vadd.f32 0.0, %v1219
  %1221 = vmatmul.f32.gmra.mxu0 %v436
  %v1222 = vpop.f32.mrf.mxu0
  %v1223 = vadd.f32 0.0, %v1222
  %1224 = vmatmul.f32.gmra.mxu0 %v439
  %v1225 = vpop.f32.mrf.mxu0
  %v1226 = vadd.f32 0.0, %v1225
  %1227 = vmatmul.f32.gmra.mxu0 %v442
  %v1228 = vpop.f32.mrf.mxu0
  %v1229 = vadd.f32 0.0, %v1228
  %1230 = vmatmul.f32.gmra.mxu0 %v445
  %v1231 = vpop.f32.mrf.mxu0
  %v1232 = vadd.f32 0.0, %v1231
  %1233 = vmatmul.f32.gmra.mxu0 %v448
  %v1234 = vpop.f32.mrf.mxu0
  %v1235 = vadd.f32 0.0, %v1234
  %1236 = vmatmul.f32.gmra.mxu0 %v451
  %v1237 = vpop.f32.mrf.mxu0
  %v1238 = vadd.f32 0.0, %v1237
  %1239 = vmatmul.f32.gmra.mxu0 %v454
  %v1240 = vpop.f32.mrf.mxu0
  %v1241 = vadd.f32 0.0, %v1240
  %1242 = vmatmul.f32.gmra.mxu0 %v457
  %v1243 = vpop.f32.mrf.mxu0
  %v1244 = vadd.f32 0.0, %v1243
  %1245 = vmatmul.f32.gmra.mxu0 %v460
  %v1246 = vpop.f32.mrf.mxu0
  %v1247 = vadd.f32 0.0, %v1246
  %1248 = vmatmul.f32.gmra.mxu0 %v463
  %v1249 = vpop.f32.mrf.mxu0
  %v1250 = vadd.f32 0.0, %v1249
  %1251 = vmatmul.f32.gmra.mxu0 %v466
  %v1252 = vpop.f32.mrf.mxu0
  %v1253 = vadd.f32 0.0, %v1252
  %1254 = vmatmul.f32.gmra.mxu0 %v469
  %v1255 = vpop.f32.mrf.mxu0
  %v1256 = vadd.f32 0.0, %v1255
  %1257 = vmatmul.f32.gmra.mxu0 %v472
  %v1258 = vpop.f32.mrf.mxu0
  %v1259 = vadd.f32 0.0, %v1258
  %1260 = vmatmul.f32.gmra.mxu0 %v475
  %v1261 = vpop.f32.mrf.mxu0
  %v1262 = vadd.f32 0.0, %v1261
  %1263 = vmatmul.f32.gmra.mxu0 %v478
  %v1264 = vpop.f32.mrf.mxu0
  %1265 = vmatmul.f32.gmra.mxu0 %v481
  %v1266 = vpop.f32.mrf.mxu0
  %v1267 = vadd.f32 0.0, %v1266
  %1268 = vmatmul.f32.gmra.mxu0 %v484
  %v1269 = vpop.f32.mrf.mxu0
  %v1270 = vadd.f32 0.0, %v1269
  %1271 = vmatmul.f32.gmra.mxu0 %v487
  %v1272 = vpop.f32.mrf.mxu0
  %v1273 = vadd.f32 0.0, %v1272
  %1274 = vmatmul.f32.gmra.mxu0 %v490
  %v1275 = vpop.f32.mrf.mxu0
  %v1276 = vadd.f32 0.0, %v1275
  %1277 = vmatmul.f32.gmra.mxu0 %v493
  %v1278 = vpop.f32.mrf.mxu0
  %v1279 = vadd.f32 0.0, %v1278
  %1280 = vmatmul.f32.gmra.mxu0 %v496
  %v1281 = vpop.f32.mrf.mxu0
  %v1282 = vadd.f32 0.0, %v1281
  %1283 = vmatmul.f32.gmra.mxu0 %v499
  %v1284 = vpop.f32.mrf.mxu0
  %v1285 = vadd.f32 0.0, %v1284
  %1286 = vmatmul.f32.gmra.mxu0 %v502
  %v1287 = vpop.f32.mrf.mxu0
  %v1288 = vadd.f32 0.0, %v1287
  %1289 = vmatmul.f32.gmra.mxu0 %v505
  %v1290 = vpop.f32.mrf.mxu0
  %v1291 = vadd.f32 0.0, %v1290
  %1292 = vmatmul.f32.gmra.mxu0 %v508
  %v1293 = vpop.f32.mrf.mxu0
  %v1294 = vadd.f32 0.0, %v1293
  %1295 = vmatmul.f32.gmra.mxu0 %v511
  %v1296 = vpop.f32.mrf.mxu0
  %v1297 = vadd.f32 0.0, %v1296
  %1298 = vmatmul.f32.gmra.mxu0 %v514
  %v1299 = vpop.f32.mrf.mxu0
  %v1300 = vadd.f32 0.0, %v1299
  %1301 = vmatmul.f32.gmra.mxu0 %v517
  %v1302 = vpop.f32.mrf.mxu0
  %v1303 = vadd.f32 0.0, %v1302
  %1304 = vmatmul.f32.gmra.mxu0 %v520
  %v1305 = vpop.f32.mrf.mxu0
  %v1306 = vadd.f32 0.0, %v1305
  %1307 = vmatmul.f32.gmra.mxu0 %v523
  %v1308 = vpop.f32.mrf.mxu0
  %v1309 = vadd.f32 0.0, %v1308
  %1310 = vmatmul.f32.gmra.mxu0 %v526
  %v1311 = vpop.f32.mrf.mxu0
  %1312 = vmatmul.f32.gmra.mxu0 %v529
  %v1313 = vpop.f32.mrf.mxu0
  %v1314 = vadd.f32 0.0, %v1313
  %1315 = vmatmul.f32.gmra.mxu0 %v532
  %v1316 = vpop.f32.mrf.mxu0
  %v1317 = vadd.f32 0.0, %v1316
  %1318 = vmatmul.f32.gmra.mxu0 %v535
  %v1319 = vpop.f32.mrf.mxu0
  %v1320 = vadd.f32 0.0, %v1319
  %1321 = vmatmul.f32.gmra.mxu0 %v538
  %v1322 = vpop.f32.mrf.mxu0
  %v1323 = vadd.f32 0.0, %v1322
  %1324 = vmatmul.f32.gmra.mxu0 %v541
  %v1325 = vpop.f32.mrf.mxu0
  %v1326 = vadd.f32 0.0, %v1325
  %1327 = vmatmul.f32.gmra.mxu0 %v544
  %v1328 = vpop.f32.mrf.mxu0
  %v1329 = vadd.f32 0.0, %v1328
  %1330 = vmatmul.f32.gmra.mxu0 %v547
  %v1331 = vpop.f32.mrf.mxu0
  %v1332 = vadd.f32 0.0, %v1331
  %1333 = vmatmul.f32.gmra.mxu0 %v550
  %v1334 = vpop.f32.mrf.mxu0
  %v1335 = vadd.f32 0.0, %v1334
  %1336 = vmatmul.f32.gmra.mxu0 %v553
  %v1337 = vpop.f32.mrf.mxu0
  %v1338 = vadd.f32 0.0, %v1337
  %1339 = vmatmul.f32.gmra.mxu0 %v556
  %v1340 = vpop.f32.mrf.mxu0
  %v1341 = vadd.f32 0.0, %v1340
  %1342 = vmatmul.f32.gmra.mxu0 %v559
  %v1343 = vpop.f32.mrf.mxu0
  %v1344 = vadd.f32 0.0, %v1343
  %1345 = vmatmul.f32.gmra.mxu0 %v562
  %v1346 = vpop.f32.mrf.mxu0
  %v1347 = vadd.f32 0.0, %v1346
  %1348 = vmatmul.f32.gmra.mxu0 %v565
  %v1349 = vpop.f32.mrf.mxu0
  %v1350 = vadd.f32 0.0, %v1349
  %1351 = vmatmul.f32.gmra.mxu0 %v568
  %v1352 = vpop.f32.mrf.mxu0
  %v1353 = vadd.f32 0.0, %v1352
  %1354 = vmatmul.f32.gmra.mxu0 %v571
  %v1355 = vpop.f32.mrf.mxu0
  %v1356 = vadd.f32 0.0, %v1355
  %1357 = vmatmul.f32.gmra.mxu0 %v574
  %v1358 = vpop.f32.mrf.mxu0
  %1359 = vmatmul.f32.gmra.mxu0 %v577
  %v1360 = vpop.f32.mrf.mxu0
  %v1361 = vadd.f32 0.0, %v1360
  %1362 = vmatmul.f32.gmra.mxu0 %v580
  %v1363 = vpop.f32.mrf.mxu0
  %v1364 = vadd.f32 0.0, %v1363
  %1365 = vmatmul.f32.gmra.mxu0 %v583
  %v1366 = vpop.f32.mrf.mxu0
  %v1367 = vadd.f32 0.0, %v1366
  %1368 = vmatmul.f32.gmra.mxu0 %v586
  %v1369 = vpop.f32.mrf.mxu0
  %v1370 = vadd.f32 0.0, %v1369
  %1371 = vmatmul.f32.gmra.mxu0 %v589
  %v1372 = vpop.f32.mrf.mxu0
  %v1373 = vadd.f32 0.0, %v1372
  %1374 = vmatmul.f32.gmra.mxu0 %v592
  %v1375 = vpop.f32.mrf.mxu0
  %v1376 = vadd.f32 0.0, %v1375
  %1377 = vmatmul.f32.gmra.mxu0 %v595
  %v1378 = vpop.f32.mrf.mxu0
  %v1379 = vadd.f32 0.0, %v1378
  %1380 = vmatmul.f32.gmra.mxu0 %v598
  %v1381 = vpop.f32.mrf.mxu0
  %v1382 = vadd.f32 0.0, %v1381
  %1383 = vmatmul.f32.gmra.mxu0 %v601
  %v1384 = vpop.f32.mrf.mxu0
  %v1385 = vadd.f32 0.0, %v1384
  %1386 = vmatmul.f32.gmra.mxu0 %v604
  %v1387 = vpop.f32.mrf.mxu0
  %v1388 = vadd.f32 0.0, %v1387
  %1389 = vmatmul.f32.gmra.mxu0 %v607
  %v1390 = vpop.f32.mrf.mxu0
  %v1391 = vadd.f32 0.0, %v1390
  %1392 = vmatmul.f32.gmra.mxu0 %v610
  %v1393 = vpop.f32.mrf.mxu0
  %v1394 = vadd.f32 0.0, %v1393
  %1395 = vmatmul.f32.gmra.mxu0 %v613
  %v1396 = vpop.f32.mrf.mxu0
  %v1397 = vadd.f32 0.0, %v1396
  %1398 = vmatmul.f32.gmra.mxu0 %v616
  %v1399 = vpop.f32.mrf.mxu0
  %v1400 = vadd.f32 0.0, %v1399
  %1401 = vmatmul.f32.gmra.mxu0 %v619
  %v1402 = vpop.f32.mrf.mxu0
  %v1403 = vadd.f32 0.0, %v1402
  %1404 = vmatmul.f32.gmra.mxu0 %v622
  %v1405 = vpop.f32.mrf.mxu0
  %1406 = vmatmul.f32.gmra.mxu0 %v625
  %v1407 = vpop.f32.mrf.mxu0
  %v1408 = vadd.f32 0.0, %v1407
  %1409 = vmatmul.f32.gmra.mxu0 %v628
  %v1410 = vpop.f32.mrf.mxu0
  %v1411 = vadd.f32 0.0, %v1410
  %1412 = vmatmul.f32.gmra.mxu0 %v631
  %v1413 = vpop.f32.mrf.mxu0
  %v1414 = vadd.f32 0.0, %v1413
  %1415 = vmatmul.f32.gmra.mxu0 %v634
  %v1416 = vpop.f32.mrf.mxu0
  %v1417 = vadd.f32 0.0, %v1416
  %1418 = vmatmul.f32.gmra.mxu0 %v637
  %v1419 = vpop.f32.mrf.mxu0
  %v1420 = vadd.f32 0.0, %v1419
  %1421 = vmatmul.f32.gmra.mxu0 %v640
  %v1422 = vpop.f32.mrf.mxu0
  %v1423 = vadd.f32 0.0, %v1422
  %1424 = vmatmul.f32.gmra.mxu0 %v643
  %v1425 = vpop.f32.mrf.mxu0
  %v1426 = vadd.f32 0.0, %v1425
  %1427 = vmatmul.f32.gmra.mxu0 %v646
  %v1428 = vpop.f32.mrf.mxu0
  %v1429 = vadd.f32 0.0, %v1428
  %1430 = vmatmul.f32.gmra.mxu0 %v649
  %v1431 = vpop.f32.mrf.mxu0
  %v1432 = vadd.f32 0.0, %v1431
  %1433 = vmatmul.f32.gmra.mxu0 %v652
  %v1434 = vpop.f32.mrf.mxu0
  %v1435 = vadd.f32 0.0, %v1434
  %1436 = vmatmul.f32.gmra.mxu0 %v655
  %v1437 = vpop.f32.mrf.mxu0
  %v1438 = vadd.f32 0.0, %v1437
  %1439 = vmatmul.f32.gmra.mxu0 %v658
  %v1440 = vpop.f32.mrf.mxu0
  %v1441 = vadd.f32 0.0, %v1440
  %1442 = vmatmul.f32.gmra.mxu0 %v661
  %v1443 = vpop.f32.mrf.mxu0
  %v1444 = vadd.f32 0.0, %v1443
  %1445 = vmatmul.f32.gmra.mxu0 %v664
  %v1446 = vpop.f32.mrf.mxu0
  %v1447 = vadd.f32 0.0, %v1446
  %1448 = vmatmul.f32.gmra.mxu0 %v667
  %v1449 = vpop.f32.mrf.mxu0
  %v1450 = vadd.f32 0.0, %v1449
  %1451 = vmatmul.f32.gmra.mxu0 %v670
  %v1452 = vpop.f32.mrf.mxu0
  %1453 = vmatmul.f32.gmra.mxu0 %v673
  %v1454 = vpop.f32.mrf.mxu0
  %v1455 = vadd.f32 0.0, %v1454
  %1456 = vmatmul.f32.gmra.mxu0 %v676
  %v1457 = vpop.f32.mrf.mxu0
  %v1458 = vadd.f32 0.0, %v1457
  %1459 = vmatmul.f32.gmra.mxu0 %v679
  %v1460 = vpop.f32.mrf.mxu0
  %v1461 = vadd.f32 0.0, %v1460
  %1462 = vmatmul.f32.gmra.mxu0 %v682
  %v1463 = vpop.f32.mrf.mxu0
  %v1464 = vadd.f32 0.0, %v1463
  %1465 = vmatmul.f32.gmra.mxu0 %v685
  %v1466 = vpop.f32.mrf.mxu0
  %v1467 = vadd.f32 0.0, %v1466
  %1468 = vmatmul.f32.gmra.mxu0 %v688
  %v1469 = vpop.f32.mrf.mxu0
  %v1470 = vadd.f32 0.0, %v1469
  %1471 = vmatmul.f32.gmra.mxu0 %v691
  %v1472 = vpop.f32.mrf.mxu0
  %v1473 = vadd.f32 0.0, %v1472
  %1474 = vmatmul.f32.gmra.mxu0 %v694
  %v1475 = vpop.f32.mrf.mxu0
  %v1476 = vadd.f32 0.0, %v1475
  %1477 = vmatmul.f32.gmra.mxu0 %v697
  %v1478 = vpop.f32.mrf.mxu0
  %v1479 = vadd.f32 0.0, %v1478
  %1480 = vmatmul.f32.gmra.mxu0 %v700
  %v1481 = vpop.f32.mrf.mxu0
  %v1482 = vadd.f32 0.0, %v1481
  %1483 = vmatmul.f32.gmra.mxu0 %v703
  %v1484 = vpop.f32.mrf.mxu0
  %v1485 = vadd.f32 0.0, %v1484
  %1486 = vmatmul.f32.gmra.mxu0 %v706
  %v1487 = vpop.f32.mrf.mxu0
  %v1488 = vadd.f32 0.0, %v1487
  %1489 = vmatmul.f32.gmra.mxu0 %v709
  %v1490 = vpop.f32.mrf.mxu0
  %v1491 = vadd.f32 0.0, %v1490
  %1492 = vmatmul.f32.gmra.mxu0 %v712
  %v1493 = vpop.f32.mrf.mxu0
  %v1494 = vadd.f32 0.0, %v1493
  %1495 = vmatmul.f32.gmra.mxu0 %v715
  %v1496 = vpop.f32.mrf.mxu0
  %v1497 = vadd.f32 0.0, %v1496
  %1498 = vmatmul.f32.gmra.mxu0 %v718
  %v1499 = vpop.f32.mrf.mxu0
  %1500 = vmatmul.f32.gmra.mxu0 %v721
  %v1501 = vpop.f32.mrf.mxu0
  %v1502 = vadd.f32 0.0, %v1501
  %1503 = vmatmul.f32.gmra.mxu0 %v724
  %v1504 = vpop.f32.mrf.mxu0
  %v1505 = vadd.f32 0.0, %v1504
  %1506 = vmatmul.f32.gmra.mxu0 %v727
  %v1507 = vpop.f32.mrf.mxu0
  %v1508 = vadd.f32 0.0, %v1507
  %1509 = vmatmul.f32.gmra.mxu0 %v730
  %v1510 = vpop.f32.mrf.mxu0
  %v1511 = vadd.f32 0.0, %v1510
  %1512 = vmatmul.f32.gmra.mxu0 %v733
  %v1513 = vpop.f32.mrf.mxu0
  %v1514 = vadd.f32 0.0, %v1513
  %1515 = vmatmul.f32.gmra.mxu0 %v736
  %v1516 = vpop.f32.mrf.mxu0
  %v1517 = vadd.f32 0.0, %v1516
  %1518 = vmatmul.f32.gmra.mxu0 %v739
  %v1519 = vpop.f32.mrf.mxu0
  %v1520 = vadd.f32 0.0, %v1519
  %1521 = vmatmul.f32.gmra.mxu0 %v742
  %v1522 = vpop.f32.mrf.mxu0
  %v1523 = vadd.f32 0.0, %v1522
  %1524 = vmatmul.f32.gmra.mxu0 %v745
  %v1525 = vpop.f32.mrf.mxu0
  %v1526 = vadd.f32 0.0, %v1525
  %1527 = vmatmul.f32.gmra.mxu0 %v748
  %v1528 = vpop.f32.mrf.mxu0
  %v1529 = vadd.f32 0.0, %v1528
  %1530 = vmatmul.f32.gmra.mxu0 %v751
  %v1531 = vpop.f32.mrf.mxu0
  %v1532 = vadd.f32 0.0, %v1531
  %1533 = vmatmul.f32.gmra.mxu0 %v754
  %v1534 = vpop.f32.mrf.mxu0
  %v1535 = vadd.f32 0.0, %v1534
  %1536 = vmatmul.f32.gmra.mxu0 %v757
  %v1537 = vpop.f32.mrf.mxu0
  %v1538 = vadd.f32 0.0, %v1537
  %1539 = vmatmul.f32.gmra.mxu0 %v760
  %v1540 = vpop.f32.mrf.mxu0
  %v1541 = vadd.f32 0.0, %v1540
  %1542 = vmatmul.f32.gmra.mxu0 %v763
  %v1543 = vpop.f32.mrf.mxu0
  %v1544 = vadd.f32 0.0, %v1543
  %1545 = vmatmul.f32.gmra.mxu0 %v766
  %v1546 = vpop.f32.mrf.mxu0
  %1547 = vmatmul.f32.gmra.mxu0 %v769
  %v1548 = vpop.f32.mrf.mxu0
  %v1549 = vadd.f32 0.0, %v1548
  %1550 = vmatmul.f32.gmra.mxu0 %v772
  %v1551 = vpop.f32.mrf.mxu0
  %v1552 = vadd.f32 0.0, %v1551
  %1553 = vmatmul.f32.gmra.mxu0 %v775
  %v1554 = vpop.f32.mrf.mxu0
  %v1555 = vadd.f32 0.0, %v1554
  %1556 = vmatmul.f32.gmra.mxu0 %v778
  %v1557 = vpop.f32.mrf.mxu0
  %v1558 = vadd.f32 0.0, %v1557
  %1559 = vmatmul.f32.gmra.mxu0 %v781
  %v1560 = vpop.f32.mrf.mxu0
  %v1561 = vadd.f32 0.0, %v1560
  %1562 = vmatmul.f32.gmra.mxu0 %v784
  %v1563 = vpop.f32.mrf.mxu0
  %v1564 = vadd.f32 0.0, %v1563
  %1565 = vmatmul.f32.gmra.mxu0 %v787
  %v1566 = vpop.f32.mrf.mxu0
  %v1567 = vadd.f32 0.0, %v1566
  %1568 = vmatmul.f32.gmra.mxu0 %v790
  %v1569 = vpop.f32.mrf.mxu0
  %v1570 = vadd.f32 0.0, %v1569
  %1571 = vmatmul.f32.gmra.mxu0 %v793
  %v1572 = vpop.f32.mrf.mxu0
  %v1573 = vadd.f32 0.0, %v1572
  %1574 = vmatmul.f32.gmra.mxu0 %v796
  %v1575 = vpop.f32.mrf.mxu0
  %v1576 = vadd.f32 0.0, %v1575
  %1577 = vmatmul.f32.gmra.mxu0 %v799
  %v1578 = vpop.f32.mrf.mxu0
  %v1579 = vadd.f32 0.0, %v1578
  %1580 = vmatmul.f32.gmra.mxu0 %v802
  %v1581 = vpop.f32.mrf.mxu0
  %v1582 = vadd.f32 0.0, %v1581
  %1583 = vmatmul.f32.gmra.mxu0 %v805
  %v1584 = vpop.f32.mrf.mxu0
  %v1585 = vadd.f32 0.0, %v1584
  %1586 = vmatmul.f32.gmra.mxu0 %v808
  %v1587 = vpop.f32.mrf.mxu0
  %v1588 = vadd.f32 0.0, %v1587
  %1589 = vmatmul.f32.gmra.mxu0 %v811
  %v1590 = vpop.f32.mrf.mxu0
  %v1591 = vadd.f32 0.0, %v1590
  %1592 = vmatmul.f32.gmra.mxu0 %v814
  %v1593 = vpop.f32.mrf.mxu0
  %1594 = vmatmul.f32.gmra.mxu0 %v817
  %v1595 = vpop.f32.mrf.mxu0
  %v1596 = vadd.f32 0.0, %v1595
  %1597 = vmatmul.f32.gmra.mxu0 %v820
  %v1598 = vpop.f32.mrf.mxu0
  %v1599 = vadd.f32 0.0, %v1598
  %1600 = vmatmul.f32.gmra.mxu0 %v823
  %v1601 = vpop.f32.mrf.mxu0
  %v1602 = vadd.f32 0.0, %v1601
  %1603 = vmatmul.f32.gmra.mxu0 %v826
  %v1604 = vpop.f32.mrf.mxu0
  %v1605 = vadd.f32 0.0, %v1604
  %1606 = vmatmul.f32.gmra.mxu0 %v829
  %v1607 = vpop.f32.mrf.mxu0
  %v1608 = vadd.f32 0.0, %v1607
  %1609 = vmatmul.f32.gmra.mxu0 %v832
  %v1610 = vpop.f32.mrf.mxu0
  %v1611 = vadd.f32 0.0, %v1610
  %1612 = vmatmul.f32.gmra.mxu0 %v835
  %v1613 = vpop.f32.mrf.mxu0
  %v1614 = vadd.f32 0.0, %v1613
  %1615 = vmatmul.f32.gmra.mxu0 %v838
  %v1616 = vpop.f32.mrf.mxu0
  %v1617 = vadd.f32 0.0, %v1616
  %1618 = vmatmul.f32.gmra.mxu0 %v841
  %v1619 = vpop.f32.mrf.mxu0
  %v1620 = vadd.f32 0.0, %v1619
  %1621 = vmatmul.f32.gmra.mxu0 %v844
  %v1622 = vpop.f32.mrf.mxu0
  %v1623 = vadd.f32 0.0, %v1622
  %1624 = vmatmul.f32.gmra.mxu0 %v847
  %v1625 = vpop.f32.mrf.mxu0
  %v1626 = vadd.f32 0.0, %v1625
  %1627 = vmatmul.f32.gmra.mxu0 %v850
  %v1628 = vpop.f32.mrf.mxu0
  %v1629 = vadd.f32 0.0, %v1628
  %1630 = vmatmul.f32.gmra.mxu0 %v853
  %v1631 = vpop.f32.mrf.mxu0
  %v1632 = vadd.f32 0.0, %v1631
  %1633 = vmatmul.f32.gmra.mxu0 %v856
  %v1634 = vpop.f32.mrf.mxu0
  %v1635 = vadd.f32 0.0, %v1634
  %1636 = vmatmul.f32.gmra.mxu0 %v859
  %v1637 = vpop.f32.mrf.mxu0
  %v1638 = vadd.f32 0.0, %v1637
  %1639 = vmatmul.f32.gmra.mxu0 %v862
  %v1640 = vpop.f32.mrf.mxu0
  %1641 = vmatmul.f32.gmra.mxu0 %v865
  %v1642 = vpop.f32.mrf.mxu0
  %v1643 = vadd.f32 0.0, %v1642
  %1644 = vmatmul.f32.gmra.mxu0 %v868
  %v1645 = vpop.f32.mrf.mxu0
  %v1646 = vadd.f32 0.0, %v1645
  %1647 = vmatmul.f32.gmra.mxu0 %v871
  %v1648 = vpop.f32.mrf.mxu0
  %v1649 = vadd.f32 0.0, %v1648
  %1650 = vmatmul.f32.gmra.mxu0 %v874
  %v1651 = vpop.f32.mrf.mxu0
  %v1652 = vadd.f32 0.0, %v1651
  %1653 = vmatmul.f32.gmra.mxu0 %v877
  %v1654 = vpop.f32.mrf.mxu0
  %v1655 = vadd.f32 0.0, %v1654
  %1656 = vmatmul.f32.gmra.mxu0 %v880
  %v1657 = vpop.f32.mrf.mxu0
  %v1658 = vadd.f32 0.0, %v1657
  %1659 = vmatmul.f32.gmra.mxu0 %v883
  %v1660 = vpop.f32.mrf.mxu0
  %v1661 = vadd.f32 0.0, %v1660
  %1662 = vmatmul.f32.gmra.mxu0 %v886
  %v1663 = vpop.f32.mrf.mxu0
  %v1664 = vadd.f32 0.0, %v1663
  %1665 = vmatmul.f32.gmra.mxu0 %v889
  %v1666 = vpop.f32.mrf.mxu0
  %v1667 = vadd.f32 0.0, %v1666
  %1668 = vmatmul.f32.gmra.mxu0 %v892
  %v1669 = vpop.f32.mrf.mxu0
  %v1670 = vadd.f32 0.0, %v1669
  %1671 = vmatmul.f32.gmra.mxu0 %v895
  %v1672 = vpop.f32.mrf.mxu0
  %v1673 = vadd.f32 0.0, %v1672
  %1674 = vmatmul.f32.gmra.mxu0 %v898
  %v1675 = vpop.f32.mrf.mxu0
  %v1676 = vadd.f32 0.0, %v1675
  %1677 = vmatmul.f32.gmra.mxu0 %v901
  %v1678 = vpop.f32.mrf.mxu0
  %v1679 = vadd.f32 0.0, %v1678
  %1680 = vmatmul.f32.gmra.mxu0 %v904
  %v1681 = vpop.f32.mrf.mxu0
  %v1682 = vadd.f32 0.0, %v1681
  %1683 = vmatmul.f32.gmra.mxu0 %v907
  %v1684 = vpop.f32.mrf.mxu0
  %v1685 = vadd.f32 0.0, %v1684
  %1686 = vmatmul.f32.gmra.mxu0 %v910
  %v1687 = vpop.f32.mrf.mxu0
  %1688 = vmatmul.f32.gmra.mxu0 %v913
  %v1689 = vpop.f32.mrf.mxu0
  %v1690 = vadd.f32 0.0, %v1689
  %1691 = vmatmul.f32.gmra.mxu0 %v916
  %v1692 = vpop.f32.mrf.mxu0
  %v1693 = vadd.f32 0.0, %v1692
  %1694 = vmatmul.f32.gmra.mxu0 %v919
  %v1695 = vpop.f32.mrf.mxu0
  %v1696 = vadd.f32 0.0, %v1695
  %1697 = vmatmul.f32.gmra.mxu0 %v922
  %v1698 = vpop.f32.mrf.mxu0
  %v1699 = vadd.f32 0.0, %v1698
  %1700 = vmatmul.f32.gmra.mxu0 %v925
  %v1701 = vpop.f32.mrf.mxu0
  %v1702 = vadd.f32 0.0, %v1701
  %1703 = vmatmul.f32.gmra.mxu0 %v928
  %v1704 = vpop.f32.mrf.mxu0
  %v1705 = vadd.f32 0.0, %v1704
  %1706 = vmatmul.f32.gmra.mxu0 %v931
  %v1707 = vpop.f32.mrf.mxu0
  %v1708 = vadd.f32 0.0, %v1707
  %1709 = vmatmul.f32.gmra.mxu0 %v934
  %v1710 = vpop.f32.mrf.mxu0
  %v1711 = vadd.f32 0.0, %v1710
  %1712 = vmatmul.f32.gmra.mxu0 %v937
  %v1713 = vpop.f32.mrf.mxu0
  %v1714 = vadd.f32 0.0, %v1713
  %1715 = vmatmul.f32.gmra.mxu0 %v940
  %v1716 = vpop.f32.mrf.mxu0
  %v1717 = vadd.f32 0.0, %v1716
  %1718 = vmatmul.f32.gmra.mxu0 %v943
  %v1719 = vpop.f32.mrf.mxu0
  %v1720 = vadd.f32 0.0, %v1719
  %1721 = vmatmul.f32.gmra.mxu0 %v946
  %v1722 = vpop.f32.mrf.mxu0
  %v1723 = vadd.f32 0.0, %v1722
  %1724 = vmatmul.f32.gmra.mxu0 %v949
  %v1725 = vpop.f32.mrf.mxu0
  %v1726 = vadd.f32 0.0, %v1725
  %1727 = vmatmul.f32.gmra.mxu0 %v952
  %v1728 = vpop.f32.mrf.mxu0
  %v1729 = vadd.f32 0.0, %v1728
  %1730 = vmatmul.f32.gmra.mxu0 %v955
  %v1731 = vpop.f32.mrf.mxu0
  %v1732 = vadd.f32 0.0, %v1731
  %1733 = vmatmul.f32.gmra.mxu0 %v958
  %v1734 = vpop.f32.mrf.mxu0
  %1735 = vmatmul.f32.gmra.mxu0 %v961
  %v1736 = vpop.f32.mrf.mxu0
  %v1737 = vadd.f32 0.0, %v1736
  %1738 = vmatmul.f32.gmra.mxu0 %v964
  %v1739 = vpop.f32.mrf.mxu0
  %v1740 = vadd.f32 0.0, %v1739
  %1741 = vmatmul.f32.gmra.mxu0 %v967
  %v1742 = vpop.f32.mrf.mxu0
  %v1743 = vadd.f32 0.0, %v1742
  %1744 = vmatmul.f32.gmra.mxu0 %v970
  %v1745 = vpop.f32.mrf.mxu0
  %v1746 = vadd.f32 0.0, %v1745
  %1747 = vmatmul.f32.gmra.mxu0 %v973
  %v1748 = vpop.f32.mrf.mxu0
  %v1749 = vadd.f32 0.0, %v1748
  %1750 = vmatmul.f32.gmra.mxu0 %v976
  %v1751 = vpop.f32.mrf.mxu0
  %v1752 = vadd.f32 0.0, %v1751
  %1753 = vmatmul.f32.gmra.mxu0 %v979
  %v1754 = vpop.f32.mrf.mxu0
  %v1755 = vadd.f32 0.0, %v1754
  %1756 = vmatmul.f32.gmra.mxu0 %v982
  %v1757 = vpop.f32.mrf.mxu0
  %v1758 = vadd.f32 0.0, %v1757
  %1759 = vmatmul.f32.gmra.mxu0 %v985
  %v1760 = vpop.f32.mrf.mxu0
  %v1761 = vadd.f32 0.0, %v1760
  %1762 = vmatmul.f32.gmra.mxu0 %v988
  %v1763 = vpop.f32.mrf.mxu0
  %v1764 = vadd.f32 0.0, %v1763
  %1765 = vmatmul.f32.gmra.mxu0 %v991
  %v1766 = vpop.f32.mrf.mxu0
  %v1767 = vadd.f32 0.0, %v1766
  %1768 = vmatmul.f32.gmra.mxu0 %v994
  %v1769 = vpop.f32.mrf.mxu0
  %v1770 = vadd.f32 0.0, %v1769
  %1771 = vmatmul.f32.gmra.mxu0 %v997
  %v1772 = vpop.f32.mrf.mxu0
  %v1773 = vadd.f32 0.0, %v1772
  %1774 = vmatmul.f32.gmra.mxu0 %v1000
  %v1775 = vpop.f32.mrf.mxu0
  %v1776 = vadd.f32 0.0, %v1775
  %1777 = vmatmul.f32.gmra.mxu0 %v1003
  %v1778 = vpop.f32.mrf.mxu0
  %1779 = vmatmul.f32.gmra.mxu0 %v1006
  %v1780 = vpop.f32.mrf.mxu0
  %1781 = vmatmul.f32.gmra.mxu0 %v1009
  %v1782 = vpop.f32.mrf.mxu0
  %1783 = vmatmul.f32.gmra.mxu0 %v1012
  %v1784 = vpop.f32.mrf.mxu0
  %1785 = vmatmul.f32.gmra.mxu0 %v1015
  %v1786 = vpop.f32.mrf.mxu0
  %1787 = vmatmul.f32.gmra.mxu0 %v1018
  %v1788 = vpop.f32.mrf.mxu0
  %1789 = vmatmul.f32.gmra.mxu0 %v1021
  %v1790 = vpop.f32.mrf.mxu0
  %1791 = vmatmul.f32.gmra.mxu0 %v1024
  %v1792 = vpop.f32.mrf.mxu0
  %1793 = vmatmul.f32.gmra.mxu0 %v1027
  %v1794 = vpop.f32.mrf.mxu0
  %1795 = vmatmul.f32.gmra.mxu0 %v1030
  %v1796 = vpop.f32.mrf.mxu0
  %1797 = vmatmul.f32.gmra.mxu0 %v1033
  %v1798 = vpop.f32.mrf.mxu0
  %1799 = vmatmul.f32.gmra.mxu0 %v1036
  %v1800 = vpop.f32.mrf.mxu0
  %1801 = vmatmul.f32.gmra.mxu0 %v1039
  %v1802 = vpop.f32.mrf.mxu0
  %1803 = vmatmul.f32.gmra.mxu0 %v1042
  %v1804 = vpop.f32.mrf.mxu0
  %1805 = vmatmul.f32.gmra.mxu0 %v1045
  %v1806 = vpop.f32.mrf.mxu0
  %1807 = vmatmul.f32.gmra.mxu0 %v1048
  %v1808 = vpop.f32.mrf.mxu0
  %1809 = vmatmul.f32.gmra.mxu0 %v1051
  %v1810 = vpop.f32.mrf.mxu0
  %1811 = vmatmul.f32.gmra.mxu0 %v1054
  %v1812 = vpop.f32.mrf.mxu0
  %1813 = vdwg.mxu0
  %1814 = vmatpush.msra.mxu0 0.0
  %1815 = vmatpush.msra.mxu0 0.0
  %1816 = vmatpush.msra.mxu0 0.0
  %1817 = vmatpush.msra.mxu0 0.0
  %1818 = vmatpush.msra.mxu0 0.0
  %1819 = vmatpush.msra.mxu0 0.0
  %1820 = vmatpush.msra.mxu0 0.0
  %1821 = vmatpush.msra.mxu0 0.0
  %1822 = vmatpush.msra.mxu0 0.0
  %1823 = vmatpush.msra.mxu0 0.0
  %1824 = vmatpush.msra.mxu0 0.0
  %1825 = vmatpush.msra.mxu0 0.0
  %1826 = vmatpush.msra.mxu0 0.0
  %1827 = vmatpush.msra.mxu0 0.0
  %1828 = vmatpush.msra.mxu0 0.0
  %1829 = vmatpush.msra.mxu0 %v1059
  %1830 = vmatmul.f32.gmra.mxu0 %v289
  %v1831 = vpop.f32.mrf.mxu0
  %1832 = vmatmul.f32.gmra.mxu0 %v292
  %v1833 = vpop.f32.mrf.mxu0
  %1834 = vmatmul.f32.gmra.mxu0 %v295
  %v1835 = vpop.f32.mrf.mxu0
  %1836 = vmatmul.f32.gmra.mxu0 %v298
  %v1837 = vpop.f32.mrf.mxu0
  %1838 = vmatmul.f32.gmra.mxu0 %v301
  %v1839 = vpop.f32.mrf.mxu0
  %1840 = vmatmul.f32.gmra.mxu0 %v304
  %v1841 = vpop.f32.mrf.mxu0
  %1842 = vmatmul.f32.gmra.mxu0 %v307
  %v1843 = vpop.f32.mrf.mxu0
  %1844 = vmatmul.f32.gmra.mxu0 %v310
  %v1845 = vpop.f32.mrf.mxu0
  %1846 = vmatmul.f32.gmra.mxu0 %v313
  %v1847 = vpop.f32.mrf.mxu0
  %1848 = vmatmul.f32.gmra.mxu0 %v316
  %v1849 = vpop.f32.mrf.mxu0
  %1850 = vmatmul.f32.gmra.mxu0 %v319
  %v1851 = vpop.f32.mrf.mxu0
  %1852 = vmatmul.f32.gmra.mxu0 %v322
  %v1853 = vpop.f32.mrf.mxu0
  %1854 = vmatmul.f32.gmra.mxu0 %v325
  %v1855 = vpop.f32.mrf.mxu0
  %1856 = vmatmul.f32.gmra.mxu0 %v328
  %v1857 = vpop.f32.mrf.mxu0
  %1858 = vmatmul.f32.gmra.mxu0 %v331
  %v1859 = vpop.f32.mrf.mxu0
  %1860 = vmatmul.f32.gmra.mxu0 %v334
  %v1861 = vpop.f32.mrf.mxu0
  %1862 = vmatmul.f32.gmra.mxu0 %v337
  %v1863 = vpop.f32.mrf.mxu0
  %1864 = vmatmul.f32.gmra.mxu0 %v340
  %v1865 = vpop.f32.mrf.mxu0
  %1866 = vmatmul.f32.gmra.mxu0 %v343
  %v1867 = vpop.f32.mrf.mxu0
  %1868 = vmatmul.f32.gmra.mxu0 %v346
  %v1869 = vpop.f32.mrf.mxu0
  %1870 = vmatmul.f32.gmra.mxu0 %v349
  %v1871 = vpop.f32.mrf.mxu0
  %1872 = vmatmul.f32.gmra.mxu0 %v352
  %v1873 = vpop.f32.mrf.mxu0
  %1874 = vmatmul.f32.gmra.mxu0 %v355
  %v1875 = vpop.f32.mrf.mxu0
  %1876 = vmatmul.f32.gmra.mxu0 %v358
  %v1877 = vpop.f32.mrf.mxu0
  %1878 = vmatmul.f32.gmra.mxu0 %v361
  %v1879 = vpop.f32.mrf.mxu0
  %1880 = vmatmul.f32.gmra.mxu0 %v364
  %v1881 = vpop.f32.mrf.mxu0
  %1882 = vmatmul.f32.gmra.mxu0 %v367
  %v1883 = vpop.f32.mrf.mxu0
  %1884 = vmatmul.f32.gmra.mxu0 %v370
  %v1885 = vpop.f32.mrf.mxu0
  %1886 = vmatmul.f32.gmra.mxu0 %v373
  %v1887 = vpop.f32.mrf.mxu0
  %1888 = vmatmul.f32.gmra.mxu0 %v376
  %v1889 = vpop.f32.mrf.mxu0
  %1890 = vmatmul.f32.gmra.mxu0 %v379
  %v1891 = vpop.f32.mrf.mxu0
  %1892 = vmatmul.f32.gmra.mxu0 %v382
  %v1893 = vpop.f32.mrf.mxu0
  %1894 = vmatmul.f32.gmra.mxu0 %v385
  %v1895 = vpop.f32.mrf.mxu0
  %1896 = vmatmul.f32.gmra.mxu0 %v388
  %v1897 = vpop.f32.mrf.mxu0
  %1898 = vmatmul.f32.gmra.mxu0 %v391
  %v1899 = vpop.f32.mrf.mxu0
  %v1900 = vadd.f32 0.0, %v1899
  %1901 = vmatmul.f32.gmra.mxu0 %v394
  %v1902 = vpop.f32.mrf.mxu0
  %v1903 = vadd.f32 0.0, %v1902
  %1904 = vmatmul.f32.gmra.mxu0 %v397
  %v1905 = vpop.f32.mrf.mxu0
  %v1906 = vadd.f32 0.0, %v1905
  %1907 = vmatmul.f32.gmra.mxu0 %v400
  %v1908 = vpop.f32.mrf.mxu0
  %v1909 = vadd.f32 0.0, %v1908
  %1910 = vmatmul.f32.gmra.mxu0 %v403
  %v1911 = vpop.f32.mrf.mxu0
  %v1912 = vadd.f32 0.0, %v1911
  %1913 = vmatmul.f32.gmra.mxu0 %v406
  %v1914 = vpop.f32.mrf.mxu0
  %v1915 = vadd.f32 0.0, %v1914
  %1916 = vmatmul.f32.gmra.mxu0 %v409
  %v1917 = vpop.f32.mrf.mxu0
  %v1918 = vadd.f32 0.0, %v1917
  %1919 = vmatmul.f32.gmra.mxu0 %v412
  %v1920 = vpop.f32.mrf.mxu0
  %v1921 = vadd.f32 0.0, %v1920
  %1922 = vmatmul.f32.gmra.mxu0 %v415
  %v1923 = vpop.f32.mrf.mxu0
  %v1924 = vadd.f32 0.0, %v1923
  %1925 = vmatmul.f32.gmra.mxu0 %v418
  %v1926 = vpop.f32.mrf.mxu0
  %v1927 = vadd.f32 0.0, %v1926
  %1928 = vmatmul.f32.gmra.mxu0 %v421
  %v1929 = vpop.f32.mrf.mxu0
  %v1930 = vadd.f32 0.0, %v1929
  %1931 = vmatmul.f32.gmra.mxu0 %v424
  %v1932 = vpop.f32.mrf.mxu0
  %v1933 = vadd.f32 0.0, %v1932
  %1934 = vmatmul.f32.gmra.mxu0 %v427
  %v1935 = vpop.f32.mrf.mxu0
  %v1936 = vadd.f32 0.0, %v1935
  %1937 = vmatmul.f32.gmra.mxu0 %v430
  %v1938 = vpop.f32.mrf.mxu0
  %1939 = vmatmul.f32.gmra.mxu0 %v433
  %v1940 = vpop.f32.mrf.mxu0
  %1941 = vmatmul.f32.gmra.mxu0 %v436
  %v1942 = vpop.f32.mrf.mxu0
  %1943 = vmatmul.f32.gmra.mxu0 %v439
  %v1944 = vpop.f32.mrf.mxu0
  %v1945 = vadd.f32 0.0, %v1944
  %1946 = vmatmul.f32.gmra.mxu0 %v442
  %v1947 = vpop.f32.mrf.mxu0
  %v1948 = vadd.f32 0.0, %v1947
  %1949 = vmatmul.f32.gmra.mxu0 %v445
  %v1950 = vpop.f32.mrf.mxu0
  %v1951 = vadd.f32 0.0, %v1950
  %1952 = vmatmul.f32.gmra.mxu0 %v448
  %v1953 = vpop.f32.mrf.mxu0
  %v1954 = vadd.f32 0.0, %v1953
  %1955 = vmatmul.f32.gmra.mxu0 %v451
  %v1956 = vpop.f32.mrf.mxu0
  %v1957 = vadd.f32 0.0, %v1956
  %1958 = vmatmul.f32.gmra.mxu0 %v454
  %v1959 = vpop.f32.mrf.mxu0
  %v1960 = vadd.f32 0.0, %v1959
  %1961 = vmatmul.f32.gmra.mxu0 %v457
  %v1962 = vpop.f32.mrf.mxu0
  %v1963 = vadd.f32 0.0, %v1962
  %1964 = vmatmul.f32.gmra.mxu0 %v460
  %v1965 = vpop.f32.mrf.mxu0
  %v1966 = vadd.f32 0.0, %v1965
  %1967 = vmatmul.f32.gmra.mxu0 %v463
  %v1968 = vpop.f32.mrf.mxu0
  %v1969 = vadd.f32 0.0, %v1968
  %1970 = vmatmul.f32.gmra.mxu0 %v466
  %v1971 = vpop.f32.mrf.mxu0
  %v1972 = vadd.f32 0.0, %v1971
  %1973 = vmatmul.f32.gmra.mxu0 %v469
  %v1974 = vpop.f32.mrf.mxu0
  %v1975 = vadd.f32 0.0, %v1974
  %1976 = vmatmul.f32.gmra.mxu0 %v472
  %v1977 = vpop.f32.mrf.mxu0
  %v1978 = vadd.f32 0.0, %v1977
  %1979 = vmatmul.f32.gmra.mxu0 %v475
  %v1980 = vpop.f32.mrf.mxu0
  %v1981 = vadd.f32 0.0, %v1980
  %1982 = vmatmul.f32.gmra.mxu0 %v478
  %v1983 = vpop.f32.mrf.mxu0
  %1984 = vmatmul.f32.gmra.mxu0 %v481
  %v1985 = vpop.f32.mrf.mxu0
  %1986 = vmatmul.f32.gmra.mxu0 %v484
  %v1987 = vpop.f32.mrf.mxu0
  %1988 = vmatmul.f32.gmra.mxu0 %v487
  %v1989 = vpop.f32.mrf.mxu0
  %v1990 = vadd.f32 0.0, %v1989
  %1991 = vmatmul.f32.gmra.mxu0 %v490
  %v1992 = vpop.f32.mrf.mxu0
  %v1993 = vadd.f32 0.0, %v1992
  %1994 = vmatmul.f32.gmra.mxu0 %v493
  %v1995 = vpop.f32.mrf.mxu0
  %v1996 = vadd.f32 0.0, %v1995
  %1997 = vmatmul.f32.gmra.mxu0 %v496
  %v1998 = vpop.f32.mrf.mxu0
  %v1999 = vadd.f32 0.0, %v1998
  %2000 = vmatmul.f32.gmra.mxu0 %v499
  %v2001 = vpop.f32.mrf.mxu0
  %v2002 = vadd.f32 0.0, %v2001
  %2003 = vmatmul.f32.gmra.mxu0 %v502
  %v2004 = vpop.f32.mrf.mxu0
  %v2005 = vadd.f32 0.0, %v2004
  %2006 = vmatmul.f32.gmra.mxu0 %v505
  %v2007 = vpop.f32.mrf.mxu0
  %v2008 = vadd.f32 0.0, %v2007
  %2009 = vmatmul.f32.gmra.mxu0 %v508
  %v2010 = vpop.f32.mrf.mxu0
  %v2011 = vadd.f32 0.0, %v2010
  %2012 = vmatmul.f32.gmra.mxu0 %v511
  %v2013 = vpop.f32.mrf.mxu0
  %v2014 = vadd.f32 0.0, %v2013
  %2015 = vmatmul.f32.gmra.mxu0 %v514
  %v2016 = vpop.f32.mrf.mxu0
  %v2017 = vadd.f32 0.0, %v2016
  %2018 = vmatmul.f32.gmra.mxu0 %v517
  %v2019 = vpop.f32.mrf.mxu0
  %v2020 = vadd.f32 0.0, %v2019
  %2021 = vmatmul.f32.gmra.mxu0 %v520
  %v2022 = vpop.f32.mrf.mxu0
  %v2023 = vadd.f32 0.0, %v2022
  %2024 = vmatmul.f32.gmra.mxu0 %v523
  %v2025 = vpop.f32.mrf.mxu0
  %v2026 = vadd.f32 0.0, %v2025
  %2027 = vmatmul.f32.gmra.mxu0 %v526
  %v2028 = vpop.f32.mrf.mxu0
  %2029 = vmatmul.f32.gmra.mxu0 %v529
  %v2030 = vpop.f32.mrf.mxu0
  %2031 = vmatmul.f32.gmra.mxu0 %v532
  %v2032 = vpop.f32.mrf.mxu0
  %2033 = vmatmul.f32.gmra.mxu0 %v535
  %v2034 = vpop.f32.mrf.mxu0
  %v2035 = vadd.f32 0.0, %v2034
  %2036 = vmatmul.f32.gmra.mxu0 %v538
  %v2037 = vpop.f32.mrf.mxu0
  %v2038 = vadd.f32 0.0, %v2037
  %2039 = vmatmul.f32.gmra.mxu0 %v541
  %v2040 = vpop.f32.mrf.mxu0
  %v2041 = vadd.f32 0.0, %v2040
  %2042 = vmatmul.f32.gmra.mxu0 %v544
  %v2043 = vpop.f32.mrf.mxu0
  %v2044 = vadd.f32 0.0, %v2043
  %2045 = vmatmul.f32.gmra.mxu0 %v547
  %v2046 = vpop.f32.mrf.mxu0
  %v2047 = vadd.f32 0.0, %v2046
  %2048 = vmatmul.f32.gmra.mxu0 %v550
  %v2049 = vpop.f32.mrf.mxu0
  %v2050 = vadd.f32 0.0, %v2049
  %2051 = vmatmul.f32.gmra.mxu0 %v553
  %v2052 = vpop.f32.mrf.mxu0
  %v2053 = vadd.f32 0.0, %v2052
  %2054 = vmatmul.f32.gmra.mxu0 %v556
  %v2055 = vpop.f32.mrf.mxu0
  %v2056 = vadd.f32 0.0, %v2055
  %2057 = vmatmul.f32.gmra.mxu0 %v559
  %v2058 = vpop.f32.mrf.mxu0
  %v2059 = vadd.f32 0.0, %v2058
  %2060 = vmatmul.f32.gmra.mxu0 %v562
  %v2061 = vpop.f32.mrf.mxu0
  %v2062 = vadd.f32 0.0, %v2061
  %2063 = vmatmul.f32.gmra.mxu0 %v565
  %v2064 = vpop.f32.mrf.mxu0
  %v2065 = vadd.f32 0.0, %v2064
  %2066 = vmatmul.f32.gmra.mxu0 %v568
  %v2067 = vpop.f32.mrf.mxu0
  %v2068 = vadd.f32 0.0, %v2067
  %2069 = vmatmul.f32.gmra.mxu0 %v571
  %v2070 = vpop.f32.mrf.mxu0
  %v2071 = vadd.f32 0.0, %v2070
  %2072 = vmatmul.f32.gmra.mxu0 %v574
  %v2073 = vpop.f32.mrf.mxu0
  %2074 = vmatmul.f32.gmra.mxu0 %v577
  %v2075 = vpop.f32.mrf.mxu0
  %2076 = vmatmul.f32.gmra.mxu0 %v580
  %v2077 = vpop.f32.mrf.mxu0
  %2078 = vmatmul.f32.gmra.mxu0 %v583
  %v2079 = vpop.f32.mrf.mxu0
  %v2080 = vadd.f32 0.0, %v2079
  %2081 = vmatmul.f32.gmra.mxu0 %v586
  %v2082 = vpop.f32.mrf.mxu0
  %v2083 = vadd.f32 0.0, %v2082
  %2084 = vmatmul.f32.gmra.mxu0 %v589
  %v2085 = vpop.f32.mrf.mxu0
  %v2086 = vadd.f32 0.0, %v2085
  %2087 = vmatmul.f32.gmra.mxu0 %v592
  %v2088 = vpop.f32.mrf.mxu0
  %v2089 = vadd.f32 0.0, %v2088
  %2090 = vmatmul.f32.gmra.mxu0 %v595
  %v2091 = vpop.f32.mrf.mxu0
  %v2092 = vadd.f32 0.0, %v2091
  %2093 = vmatmul.f32.gmra.mxu0 %v598
  %v2094 = vpop.f32.mrf.mxu0
  %v2095 = vadd.f32 0.0, %v2094
  %2096 = vmatmul.f32.gmra.mxu0 %v601
  %v2097 = vpop.f32.mrf.mxu0
  %v2098 = vadd.f32 0.0, %v2097
  %2099 = vmatmul.f32.gmra.mxu0 %v604
  %v2100 = vpop.f32.mrf.mxu0
  %v2101 = vadd.f32 0.0, %v2100
  %2102 = vmatmul.f32.gmra.mxu0 %v607
  %v2103 = vpop.f32.mrf.mxu0
  %v2104 = vadd.f32 0.0, %v2103
  %2105 = vmatmul.f32.gmra.mxu0 %v610
  %v2106 = vpop.f32.mrf.mxu0
  %v2107 = vadd.f32 0.0, %v2106
  %2108 = vmatmul.f32.gmra.mxu0 %v613
  %v2109 = vpop.f32.mrf.mxu0
  %v2110 = vadd.f32 0.0, %v2109
  %2111 = vmatmul.f32.gmra.mxu0 %v616
  %v2112 = vpop.f32.mrf.mxu0
  %v2113 = vadd.f32 0.0, %v2112
  %2114 = vmatmul.f32.gmra.mxu0 %v619
  %v2115 = vpop.f32.mrf.mxu0
  %v2116 = vadd.f32 0.0, %v2115
  %2117 = vmatmul.f32.gmra.mxu0 %v622
  %v2118 = vpop.f32.mrf.mxu0
  %2119 = vmatmul.f32.gmra.mxu0 %v625
  %v2120 = vpop.f32.mrf.mxu0
  %2121 = vmatmul.f32.gmra.mxu0 %v628
  %v2122 = vpop.f32.mrf.mxu0
  %2123 = vmatmul.f32.gmra.mxu0 %v631
  %v2124 = vpop.f32.mrf.mxu0
  %v2125 = vadd.f32 0.0, %v2124
  %2126 = vmatmul.f32.gmra.mxu0 %v634
  %v2127 = vpop.f32.mrf.mxu0
  %v2128 = vadd.f32 0.0, %v2127
  %2129 = vmatmul.f32.gmra.mxu0 %v637
  %v2130 = vpop.f32.mrf.mxu0
  %v2131 = vadd.f32 0.0, %v2130
  %2132 = vmatmul.f32.gmra.mxu0 %v640
  %v2133 = vpop.f32.mrf.mxu0
  %v2134 = vadd.f32 0.0, %v2133
  %2135 = vmatmul.f32.gmra.mxu0 %v643
  %v2136 = vpop.f32.mrf.mxu0
  %v2137 = vadd.f32 0.0, %v2136
  %2138 = vmatmul.f32.gmra.mxu0 %v646
  %v2139 = vpop.f32.mrf.mxu0
  %v2140 = vadd.f32 0.0, %v2139
  %2141 = vmatmul.f32.gmra.mxu0 %v649
  %v2142 = vpop.f32.mrf.mxu0
  %v2143 = vadd.f32 0.0, %v2142
  %2144 = vmatmul.f32.gmra.mxu0 %v652
  %v2145 = vpop.f32.mrf.mxu0
  %v2146 = vadd.f32 0.0, %v2145
  %2147 = vmatmul.f32.gmra.mxu0 %v655
  %v2148 = vpop.f32.mrf.mxu0
  %v2149 = vadd.f32 0.0, %v2148
  %2150 = vmatmul.f32.gmra.mxu0 %v658
  %v2151 = vpop.f32.mrf.mxu0
  %v2152 = vadd.f32 0.0, %v2151
  %2153 = vmatmul.f32.gmra.mxu0 %v661
  %v2154 = vpop.f32.mrf.mxu0
  %v2155 = vadd.f32 0.0, %v2154
  %2156 = vmatmul.f32.gmra.mxu0 %v664
  %v2157 = vpop.f32.mrf.mxu0
  %v2158 = vadd.f32 0.0, %v2157
  %2159 = vmatmul.f32.gmra.mxu0 %v667
  %v2160 = vpop.f32.mrf.mxu0
  %v2161 = vadd.f32 0.0, %v2160
  %2162 = vmatmul.f32.gmra.mxu0 %v670
  %v2163 = vpop.f32.mrf.mxu0
  %2164 = vmatmul.f32.gmra.mxu0 %v673
  %v2165 = vpop.f32.mrf.mxu0
  %2166 = vmatmul.f32.gmra.mxu0 %v676
  %v2167 = vpop.f32.mrf.mxu0
  %2168 = vmatmul.f32.gmra.mxu0 %v679
  %v2169 = vpop.f32.mrf.mxu0
  %v2170 = vadd.f32 0.0, %v2169
  %2171 = vmatmul.f32.gmra.mxu0 %v682
  %v2172 = vpop.f32.mrf.mxu0
  %v2173 = vadd.f32 0.0, %v2172
  %2174 = vmatmul.f32.gmra.mxu0 %v685
  %v2175 = vpop.f32.mrf.mxu0
  %v2176 = vadd.f32 0.0, %v2175
  %2177 = vmatmul.f32.gmra.mxu0 %v688
  %v2178 = vpop.f32.mrf.mxu0
  %v2179 = vadd.f32 0.0, %v2178
  %2180 = vmatmul.f32.gmra.mxu0 %v691
  %v2181 = vpop.f32.mrf.mxu0
  %v2182 = vadd.f32 0.0, %v2181
  %2183 = vmatmul.f32.gmra.mxu0 %v694
  %v2184 = vpop.f32.mrf.mxu0
  %v2185 = vadd.f32 0.0, %v2184
  %2186 = vmatmul.f32.gmra.mxu0 %v697
  %v2187 = vpop.f32.mrf.mxu0
  %v2188 = vadd.f32 0.0, %v2187
  %2189 = vmatmul.f32.gmra.mxu0 %v700
  %v2190 = vpop.f32.mrf.mxu0
  %v2191 = vadd.f32 0.0, %v2190
  %2192 = vmatmul.f32.gmra.mxu0 %v703
  %v2193 = vpop.f32.mrf.mxu0
  %v2194 = vadd.f32 0.0, %v2193
  %2195 = vmatmul.f32.gmra.mxu0 %v706
  %v2196 = vpop.f32.mrf.mxu0
  %v2197 = vadd.f32 0.0, %v2196
  %2198 = vmatmul.f32.gmra.mxu0 %v709
  %v2199 = vpop.f32.mrf.mxu0
  %v2200 = vadd.f32 0.0, %v2199
  %2201 = vmatmul.f32.gmra.mxu0 %v712
  %v2202 = vpop.f32.mrf.mxu0
  %v2203 = vadd.f32 0.0, %v2202
  %2204 = vmatmul.f32.gmra.mxu0 %v715
  %v2205 = vpop.f32.mrf.mxu0
  %v2206 = vadd.f32 0.0, %v2205
  %2207 = vmatmul.f32.gmra.mxu0 %v718
  %v2208 = vpop.f32.mrf.mxu0
  %2209 = vmatmul.f32.gmra.mxu0 %v721
  %v2210 = vpop.f32.mrf.mxu0
  %2211 = vmatmul.f32.gmra.mxu0 %v724
  %v2212 = vpop.f32.mrf.mxu0
  %2213 = vmatmul.f32.gmra.mxu0 %v727
  %v2214 = vpop.f32.mrf.mxu0
  %v2215 = vadd.f32 0.0, %v2214
  %2216 = vmatmul.f32.gmra.mxu0 %v730
  %v2217 = vpop.f32.mrf.mxu0
  %v2218 = vadd.f32 0.0, %v2217
  %2219 = vmatmul.f32.gmra.mxu0 %v733
  %v2220 = vpop.f32.mrf.mxu0
  %v2221 = vadd.f32 0.0, %v2220
  %2222 = vmatmul.f32.gmra.mxu0 %v736
  %v2223 = vpop.f32.mrf.mxu0
  %v2224 = vadd.f32 0.0, %v2223
  %2225 = vmatmul.f32.gmra.mxu0 %v739
  %v2226 = vpop.f32.mrf.mxu0
  %v2227 = vadd.f32 0.0, %v2226
  %2228 = vmatmul.f32.gmra.mxu0 %v742
  %v2229 = vpop.f32.mrf.mxu0
  %v2230 = vadd.f32 0.0, %v2229
  %2231 = vmatmul.f32.gmra.mxu0 %v745
  %v2232 = vpop.f32.mrf.mxu0
  %v2233 = vadd.f32 0.0, %v2232
  %2234 = vmatmul.f32.gmra.mxu0 %v748
  %v2235 = vpop.f32.mrf.mxu0
  %v2236 = vadd.f32 0.0, %v2235
  %2237 = vmatmul.f32.gmra.mxu0 %v751
  %v2238 = vpop.f32.mrf.mxu0
  %v2239 = vadd.f32 0.0, %v2238
  %2240 = vmatmul.f32.gmra.mxu0 %v754
  %v2241 = vpop.f32.mrf.mxu0
  %v2242 = vadd.f32 0.0, %v2241
  %2243 = vmatmul.f32.gmra.mxu0 %v757
  %v2244 = vpop.f32.mrf.mxu0
  %v2245 = vadd.f32 0.0, %v2244
  %2246 = vmatmul.f32.gmra.mxu0 %v760
  %v2247 = vpop.f32.mrf.mxu0
  %v2248 = vadd.f32 0.0, %v2247
  %2249 = vmatmul.f32.gmra.mxu0 %v763
  %v2250 = vpop.f32.mrf.mxu0
  %v2251 = vadd.f32 0.0, %v2250
  %2252 = vmatmul.f32.gmra.mxu0 %v766
  %v2253 = vpop.f32.mrf.mxu0
  %2254 = vmatmul.f32.gmra.mxu0 %v769
  %v2255 = vpop.f32.mrf.mxu0
  %2256 = vmatmul.f32.gmra.mxu0 %v772
  %v2257 = vpop.f32.mrf.mxu0
  %2258 = vmatmul.f32.gmra.mxu0 %v775
  %v2259 = vpop.f32.mrf.mxu0
  %v2260 = vadd.f32 0.0, %v2259
  %2261 = vmatmul.f32.gmra.mxu0 %v778
  %v2262 = vpop.f32.mrf.mxu0
  %v2263 = vadd.f32 0.0, %v2262
  %2264 = vmatmul.f32.gmra.mxu0 %v781
  %v2265 = vpop.f32.mrf.mxu0
  %v2266 = vadd.f32 0.0, %v2265
  %2267 = vmatmul.f32.gmra.mxu0 %v784
  %v2268 = vpop.f32.mrf.mxu0
  %v2269 = vadd.f32 0.0, %v2268
  %2270 = vmatmul.f32.gmra.mxu0 %v787
  %v2271 = vpop.f32.mrf.mxu0
  %v2272 = vadd.f32 0.0, %v2271
  %2273 = vmatmul.f32.gmra.mxu0 %v790
  %v2274 = vpop.f32.mrf.mxu0
  %v2275 = vadd.f32 0.0, %v2274
  %2276 = vmatmul.f32.gmra.mxu0 %v793
  %v2277 = vpop.f32.mrf.mxu0
  %v2278 = vadd.f32 0.0, %v2277
  %2279 = vmatmul.f32.gmra.mxu0 %v796
  %v2280 = vpop.f32.mrf.mxu0
  %v2281 = vadd.f32 0.0, %v2280
  %2282 = vmatmul.f32.gmra.mxu0 %v799
  %v2283 = vpop.f32.mrf.mxu0
  %v2284 = vadd.f32 0.0, %v2283
  %2285 = vmatmul.f32.gmra.mxu0 %v802
  %v2286 = vpop.f32.mrf.mxu0
  %v2287 = vadd.f32 0.0, %v2286
  %2288 = vmatmul.f32.gmra.mxu0 %v805
  %v2289 = vpop.f32.mrf.mxu0
  %v2290 = vadd.f32 0.0, %v2289
  %2291 = vmatmul.f32.gmra.mxu0 %v808
  %v2292 = vpop.f32.mrf.mxu0
  %v2293 = vadd.f32 0.0, %v2292
  %2294 = vmatmul.f32.gmra.mxu0 %v811
  %v2295 = vpop.f32.mrf.mxu0
  %v2296 = vadd.f32 0.0, %v2295
  %2297 = vmatmul.f32.gmra.mxu0 %v814
  %v2298 = vpop.f32.mrf.mxu0
  %2299 = vmatmul.f32.gmra.mxu0 %v817
  %v2300 = vpop.f32.mrf.mxu0
  %2301 = vmatmul.f32.gmra.mxu0 %v820
  %v2302 = vpop.f32.mrf.mxu0
  %2303 = vmatmul.f32.gmra.mxu0 %v823
  %v2304 = vpop.f32.mrf.mxu0
  %v2305 = vadd.f32 0.0, %v2304
  %2306 = vmatmul.f32.gmra.mxu0 %v826
  %v2307 = vpop.f32.mrf.mxu0
  %v2308 = vadd.f32 0.0, %v2307
  %2309 = vmatmul.f32.gmra.mxu0 %v829
  %v2310 = vpop.f32.mrf.mxu0
  %v2311 = vadd.f32 0.0, %v2310
  %2312 = vmatmul.f32.gmra.mxu0 %v832
  %v2313 = vpop.f32.mrf.mxu0
  %v2314 = vadd.f32 0.0, %v2313
  %2315 = vmatmul.f32.gmra.mxu0 %v835
  %v2316 = vpop.f32.mrf.mxu0
  %v2317 = vadd.f32 0.0, %v2316
  %2318 = vmatmul.f32.gmra.mxu0 %v838
  %v2319 = vpop.f32.mrf.mxu0
  %v2320 = vadd.f32 0.0, %v2319
  %2321 = vmatmul.f32.gmra.mxu0 %v841
  %v2322 = vpop.f32.mrf.mxu0
  %v2323 = vadd.f32 0.0, %v2322
  %2324 = vmatmul.f32.gmra.mxu0 %v844
  %v2325 = vpop.f32.mrf.mxu0
  %v2326 = vadd.f32 0.0, %v2325
  %2327 = vmatmul.f32.gmra.mxu0 %v847
  %v2328 = vpop.f32.mrf.mxu0
  %v2329 = vadd.f32 0.0, %v2328
  %2330 = vmatmul.f32.gmra.mxu0 %v850
  %v2331 = vpop.f32.mrf.mxu0
  %v2332 = vadd.f32 0.0, %v2331
  %2333 = vmatmul.f32.gmra.mxu0 %v853
  %v2334 = vpop.f32.mrf.mxu0
  %v2335 = vadd.f32 0.0, %v2334
  %2336 = vmatmul.f32.gmra.mxu0 %v856
  %v2337 = vpop.f32.mrf.mxu0
  %v2338 = vadd.f32 0.0, %v2337
  %2339 = vmatmul.f32.gmra.mxu0 %v859
  %v2340 = vpop.f32.mrf.mxu0
  %v2341 = vadd.f32 0.0, %v2340
  %2342 = vmatmul.f32.gmra.mxu0 %v862
  %v2343 = vpop.f32.mrf.mxu0
  %2344 = vmatmul.f32.gmra.mxu0 %v865
  %v2345 = vpop.f32.mrf.mxu0
  %2346 = vmatmul.f32.gmra.mxu0 %v868
  %v2347 = vpop.f32.mrf.mxu0
  %2348 = vmatmul.f32.gmra.mxu0 %v871
  %v2349 = vpop.f32.mrf.mxu0
  %v2350 = vadd.f32 0.0, %v2349
  %2351 = vmatmul.f32.gmra.mxu0 %v874
  %v2352 = vpop.f32.mrf.mxu0
  %v2353 = vadd.f32 0.0, %v2352
  %2354 = vmatmul.f32.gmra.mxu0 %v877
  %v2355 = vpop.f32.mrf.mxu0
  %v2356 = vadd.f32 0.0, %v2355
  %2357 = vmatmul.f32.gmra.mxu0 %v880
  %v2358 = vpop.f32.mrf.mxu0
  %v2359 = vadd.f32 0.0, %v2358
  %2360 = vmatmul.f32.gmra.mxu0 %v883
  %v2361 = vpop.f32.mrf.mxu0
  %v2362 = vadd.f32 0.0, %v2361
  %2363 = vmatmul.f32.gmra.mxu0 %v886
  %v2364 = vpop.f32.mrf.mxu0
  %v2365 = vadd.f32 0.0, %v2364
  %2366 = vmatmul.f32.gmra.mxu0 %v889
  %v2367 = vpop.f32.mrf.mxu0
  %v2368 = vadd.f32 0.0, %v2367
  %2369 = vmatmul.f32.gmra.mxu0 %v892
  %v2370 = vpop.f32.mrf.mxu0
  %v2371 = vadd.f32 0.0, %v2370
  %2372 = vmatmul.f32.gmra.mxu0 %v895
  %v2373 = vpop.f32.mrf.mxu0
  %v2374 = vadd.f32 0.0, %v2373
  %2375 = vmatmul.f32.gmra.mxu0 %v898
  %v2376 = vpop.f32.mrf.mxu0
  %v2377 = vadd.f32 0.0, %v2376
  %2378 = vmatmul.f32.gmra.mxu0 %v901
  %v2379 = vpop.f32.mrf.mxu0
  %v2380 = vadd.f32 0.0, %v2379
  %2381 = vmatmul.f32.gmra.mxu0 %v904
  %v2382 = vpop.f32.mrf.mxu0
  %v2383 = vadd.f32 0.0, %v2382
  %2384 = vmatmul.f32.gmra.mxu0 %v907
  %v2385 = vpop.f32.mrf.mxu0
  %v2386 = vadd.f32 0.0, %v2385
  %2387 = vmatmul.f32.gmra.mxu0 %v910
  %v2388 = vpop.f32.mrf.mxu0
  %2389 = vmatmul.f32.gmra.mxu0 %v913
  %v2390 = vpop.f32.mrf.mxu0
  %2391 = vmatmul.f32.gmra.mxu0 %v916
  %v2392 = vpop.f32.mrf.mxu0
  %2393 = vmatmul.f32.gmra.mxu0 %v919
  %v2394 = vpop.f32.mrf.mxu0
  %v2395 = vadd.f32 0.0, %v2394
  %2396 = vmatmul.f32.gmra.mxu0 %v922
  %v2397 = vpop.f32.mrf.mxu0
  %v2398 = vadd.f32 0.0, %v2397
  %2399 = vmatmul.f32.gmra.mxu0 %v925
  %v2400 = vpop.f32.mrf.mxu0
  %v2401 = vadd.f32 0.0, %v2400
  %2402 = vmatmul.f32.gmra.mxu0 %v928
  %v2403 = vpop.f32.mrf.mxu0
  %v2404 = vadd.f32 0.0, %v2403
  %2405 = vmatmul.f32.gmra.mxu0 %v931
  %v2406 = vpop.f32.mrf.mxu0
  %v2407 = vadd.f32 0.0, %v2406
  %2408 = vmatmul.f32.gmra.mxu0 %v934
  %v2409 = vpop.f32.mrf.mxu0
  %v2410 = vadd.f32 0.0, %v2409
  %2411 = vmatmul.f32.gmra.mxu0 %v937
  %v2412 = vpop.f32.mrf.mxu0
  %v2413 = vadd.f32 0.0, %v2412
  %2414 = vmatmul.f32.gmra.mxu0 %v940
  %v2415 = vpop.f32.mrf.mxu0
  %v2416 = vadd.f32 0.0, %v2415
  %2417 = vmatmul.f32.gmra.mxu0 %v943
  %v2418 = vpop.f32.mrf.mxu0
  %v2419 = vadd.f32 0.0, %v2418
  %2420 = vmatmul.f32.gmra.mxu0 %v946
  %v2421 = vpop.f32.mrf.mxu0
  %v2422 = vadd.f32 0.0, %v2421
  %2423 = vmatmul.f32.gmra.mxu0 %v949
  %v2424 = vpop.f32.mrf.mxu0
  %v2425 = vadd.f32 0.0, %v2424
  %2426 = vmatmul.f32.gmra.mxu0 %v952
  %v2427 = vpop.f32.mrf.mxu0
  %v2428 = vadd.f32 0.0, %v2427
  %2429 = vmatmul.f32.gmra.mxu0 %v955
  %v2430 = vpop.f32.mrf.mxu0
  %v2431 = vadd.f32 0.0, %v2430
  %2432 = vmatmul.f32.gmra.mxu0 %v958
  %v2433 = vpop.f32.mrf.mxu0
  %2434 = vmatmul.f32.gmra.mxu0 %v961
  %v2435 = vpop.f32.mrf.mxu0
  %2436 = vmatmul.f32.gmra.mxu0 %v964
  %v2437 = vpop.f32.mrf.mxu0
  %2438 = vmatmul.f32.gmra.mxu0 %v967
  %v2439 = vpop.f32.mrf.mxu0
  %v2440 = vadd.f32 0.0, %v2439
  %2441 = vmatmul.f32.gmra.mxu0 %v970
  %v2442 = vpop.f32.mrf.mxu0
  %v2443 = vadd.f32 0.0, %v2442
  %2444 = vmatmul.f32.gmra.mxu0 %v973
  %v2445 = vpop.f32.mrf.mxu0
  %v2446 = vadd.f32 0.0, %v2445
  %2447 = vmatmul.f32.gmra.mxu0 %v976
  %v2448 = vpop.f32.mrf.mxu0
  %v2449 = vadd.f32 0.0, %v2448
  %2450 = vmatmul.f32.gmra.mxu0 %v979
  %v2451 = vpop.f32.mrf.mxu0
  %v2452 = vadd.f32 0.0, %v2451
  %2453 = vmatmul.f32.gmra.mxu0 %v982
  %v2454 = vpop.f32.mrf.mxu0
  %v2455 = vadd.f32 0.0, %v2454
  %2456 = vmatmul.f32.gmra.mxu0 %v985
  %v2457 = vpop.f32.mrf.mxu0
  %v2458 = vadd.f32 0.0, %v2457
  %2459 = vmatmul.f32.gmra.mxu0 %v988
  %v2460 = vpop.f32.mrf.mxu0
  %v2461 = vadd.f32 0.0, %v2460
  %2462 = vmatmul.f32.gmra.mxu0 %v991
  %v2463 = vpop.f32.mrf.mxu0
  %v2464 = vadd.f32 0.0, %v2463
  %2465 = vmatmul.f32.gmra.mxu0 %v994
  %v2466 = vpop.f32.mrf.mxu0
  %v2467 = vadd.f32 0.0, %v2466
  %2468 = vmatmul.f32.gmra.mxu0 %v997
  %v2469 = vpop.f32.mrf.mxu0
  %v2470 = vadd.f32 0.0, %v2469
  %2471 = vmatmul.f32.gmra.mxu0 %v1000
  %v2472 = vpop.f32.mrf.mxu0
  %v2473 = vadd.f32 0.0, %v2472
  %2474 = vmatmul.f32.gmra.mxu0 %v1003
  %v2475 = vpop.f32.mrf.mxu0
  %v2476 = vadd.f32 0.0, %v2475
  %2477 = vmatmul.f32.gmra.mxu0 %v1006
  %v2478 = vpop.f32.mrf.mxu0
  %2479 = vmatmul.f32.gmra.mxu0 %v1009
  %v2480 = vpop.f32.mrf.mxu0
  %2481 = vmatmul.f32.gmra.mxu0 %v1012
  %v2482 = vpop.f32.mrf.mxu0
  %2483 = vmatmul.f32.gmra.mxu0 %v1015
  %v2484 = vpop.f32.mrf.mxu0
  %2485 = vmatmul.f32.gmra.mxu0 %v1018
  %v2486 = vpop.f32.mrf.mxu0
  %2487 = vmatmul.f32.gmra.mxu0 %v1021
  %v2488 = vpop.f32.mrf.mxu0
  %2489 = vmatmul.f32.gmra.mxu0 %v1024
  %v2490 = vpop.f32.mrf.mxu0
  %2491 = vmatmul.f32.gmra.mxu0 %v1027
  %v2492 = vpop.f32.mrf.mxu0
  %2493 = vmatmul.f32.gmra.mxu0 %v1030
  %v2494 = vpop.f32.mrf.mxu0
  %2495 = vmatmul.f32.gmra.mxu0 %v1033
  %v2496 = vpop.f32.mrf.mxu0
  %2497 = vmatmul.f32.gmra.mxu0 %v1036
  %v2498 = vpop.f32.mrf.mxu0
  %2499 = vmatmul.f32.gmra.mxu0 %v1039
  %v2500 = vpop.f32.mrf.mxu0
  %2501 = vmatmul.f32.gmra.mxu0 %v1042
  %v2502 = vpop.f32.mrf.mxu0
  %2503 = vmatmul.f32.gmra.mxu0 %v1045
  %v2504 = vpop.f32.mrf.mxu0
  %2505 = vmatmul.f32.gmra.mxu0 %v1048
  %v2506 = vpop.f32.mrf.mxu0
  %2507 = vmatmul.f32.gmra.mxu0 %v1051
  %v2508 = vpop.f32.mrf.mxu0
  %2509 = vmatmul.f32.gmra.mxu0 %v1054
  %v2510 = vpop.f32.mrf.mxu0
  %2511 = vdwg.mxu0
  %2681 = vrot.lane.b32.xlu0 %v1082, 112
  %v2682 = vpop.permute.xlu0 %2681
  %2683 = vrot.lane.b32.xlu0 %v1085, 112
  %v2684 = vpop.permute.xlu0 %2683
  %2685 = vrot.lane.b32.xlu0 %v1088, 112
  %v2686 = vpop.permute.xlu0 %2685
  %2687 = vrot.lane.b32.xlu0 %v1091, 112
  %v2688 = vpop.permute.xlu0 %2687
  %2689 = vrot.lane.b32.xlu0 %v1094, 112
  %v2690 = vpop.permute.xlu0 %2689
  %2691 = vrot.lane.b32.xlu0 %v1097, 112
  %v2692 = vpop.permute.xlu0 %2691
  %2693 = vrot.lane.b32.xlu0 %v1100, 112
  %v2694 = vpop.permute.xlu0 %2693
  %2695 = vrot.lane.b32.xlu0 %v1103, 112
  %v2696 = vpop.permute.xlu0 %2695
  %2697 = vrot.lane.b32.xlu0 %v1106, 112
  %v2698 = vpop.permute.xlu0 %2697
  %2699 = vrot.lane.b32.xlu0 %v1109, 112
  %v2700 = vpop.permute.xlu0 %2699
  %2701 = vrot.lane.b32.xlu0 %v1112, 112
  %v2702 = vpop.permute.xlu0 %2701
  %2703 = vrot.lane.b32.xlu0 %v1115, 112
  %v2704 = vpop.permute.xlu0 %2703
  %2705 = vrot.lane.b32.xlu0 %v1118, 112
  %v2706 = vpop.permute.xlu0 %2705
  %2707 = vrot.lane.b32.xlu0 %v1129, 112
  %v2708 = vpop.permute.xlu0 %2707
  %2709 = vrot.lane.b32.xlu0 %v1132, 112
  %v2710 = vpop.permute.xlu0 %2709
  %2711 = vrot.lane.b32.xlu0 %v1135, 112
  %v2712 = vpop.permute.xlu0 %2711
  %2713 = vrot.lane.b32.xlu0 %v1138, 112
  %v2714 = vpop.permute.xlu0 %2713
  %2715 = vrot.lane.b32.xlu0 %v1141, 112
  %v2716 = vpop.permute.xlu0 %2715
  %2717 = vrot.lane.b32.xlu0 %v1144, 112
  %v2718 = vpop.permute.xlu0 %2717
  %2719 = vrot.lane.b32.xlu0 %v1147, 112
  %v2720 = vpop.permute.xlu0 %2719
  %2721 = vrot.lane.b32.xlu0 %v1150, 112
  %v2722 = vpop.permute.xlu0 %2721
  %2723 = vrot.lane.b32.xlu0 %v1153, 112
  %v2724 = vpop.permute.xlu0 %2723
  %2725 = vrot.lane.b32.xlu0 %v1156, 112
  %v2726 = vpop.permute.xlu0 %2725
  %2727 = vrot.lane.b32.xlu0 %v1159, 112
  %v2728 = vpop.permute.xlu0 %2727
  %2729 = vrot.lane.b32.xlu0 %v1162, 112
  %v2730 = vpop.permute.xlu0 %2729
  %2731 = vrot.lane.b32.xlu0 %v1165, 112
  %v2732 = vpop.permute.xlu0 %2731
  %2733 = vrot.lane.b32.xlu0 %v1176, 112
  %v2734 = vpop.permute.xlu0 %2733
  %2735 = vrot.lane.b32.xlu0 %v1179, 112
  %v2736 = vpop.permute.xlu0 %2735
  %2737 = vrot.lane.b32.xlu0 %v1182, 112
  %v2738 = vpop.permute.xlu0 %2737
  %2739 = vrot.lane.b32.xlu0 %v1185, 112
  %v2740 = vpop.permute.xlu0 %2739
  %2741 = vrot.lane.b32.xlu0 %v1188, 112
  %v2742 = vpop.permute.xlu0 %2741
  %2743 = vrot.lane.b32.xlu0 %v1191, 112
  %v2744 = vpop.permute.xlu0 %2743
  %2745 = vrot.lane.b32.xlu0 %v1194, 112
  %v2746 = vpop.permute.xlu0 %2745
  %2747 = vrot.lane.b32.xlu0 %v1197, 112
  %v2748 = vpop.permute.xlu0 %2747
  %2749 = vrot.lane.b32.xlu0 %v1200, 112
  %v2750 = vpop.permute.xlu0 %2749
  %2751 = vrot.lane.b32.xlu0 %v1203, 112
  %v2752 = vpop.permute.xlu0 %2751
  %2753 = vrot.lane.b32.xlu0 %v1206, 112
  %v2754 = vpop.permute.xlu0 %2753
  %2755 = vrot.lane.b32.xlu0 %v1209, 112
  %v2756 = vpop.permute.xlu0 %2755
  %2757 = vrot.lane.b32.xlu0 %v1212, 112
  %v2758 = vpop.permute.xlu0 %2757
  %2759 = vrot.lane.b32.xlu0 %v1223, 112
  %v2760 = vpop.permute.xlu0 %2759
  %2761 = vrot.lane.b32.xlu0 %v1226, 112
  %v2762 = vpop.permute.xlu0 %2761
  %2763 = vrot.lane.b32.xlu0 %v1229, 112
  %v2764 = vpop.permute.xlu0 %2763
  %2765 = vrot.lane.b32.xlu0 %v1232, 112
  %v2766 = vpop.permute.xlu0 %2765
  %2767 = vrot.lane.b32.xlu0 %v1235, 112
  %v2768 = vpop.permute.xlu0 %2767
  %2769 = vrot.lane.b32.xlu0 %v1238, 112
  %v2770 = vpop.permute.xlu0 %2769
  %2771 = vrot.lane.b32.xlu0 %v1241, 112
  %v2772 = vpop.permute.xlu0 %2771
  %2773 = vrot.lane.b32.xlu0 %v1244, 112
  %v2774 = vpop.permute.xlu0 %2773
  %2775 = vrot.lane.b32.xlu0 %v1247, 112
  %v2776 = vpop.permute.xlu0 %2775
  %2777 = vrot.lane.b32.xlu0 %v1250, 112
  %v2778 = vpop.permute.xlu0 %2777
  %2779 = vrot.lane.b32.xlu0 %v1253, 112
  %v2780 = vpop.permute.xlu0 %2779
  %2781 = vrot.lane.b32.xlu0 %v1256, 112
  %v2782 = vpop.permute.xlu0 %2781
  %2783 = vrot.lane.b32.xlu0 %v1259, 112
  %v2784 = vpop.permute.xlu0 %2783
  %2785 = vrot.lane.b32.xlu0 %v1270, 112
  %v2786 = vpop.permute.xlu0 %2785
  %2787 = vrot.lane.b32.xlu0 %v1273, 112
  %v2788 = vpop.permute.xlu0 %2787
  %2789 = vrot.lane.b32.xlu0 %v1276, 112
  %v2790 = vpop.permute.xlu0 %2789
  %2791 = vrot.lane.b32.xlu0 %v1279, 112
  %v2792 = vpop.permute.xlu0 %2791
  %2793 = vrot.lane.b32.xlu0 %v1282, 112
  %v2794 = vpop.permute.xlu0 %2793
  %2795 = vrot.lane.b32.xlu0 %v1285, 112
  %v2796 = vpop.permute.xlu0 %2795
  %2797 = vrot.lane.b32.xlu0 %v1288, 112
  %v2798 = vpop.permute.xlu0 %2797
  %2799 = vrot.lane.b32.xlu0 %v1291, 112
  %v2800 = vpop.permute.xlu0 %2799
  %2801 = vrot.lane.b32.xlu0 %v1294, 112
  %v2802 = vpop.permute.xlu0 %2801
  %2803 = vrot.lane.b32.xlu0 %v1297, 112
  %v2804 = vpop.permute.xlu0 %2803
  %2805 = vrot.lane.b32.xlu0 %v1300, 112
  %v2806 = vpop.permute.xlu0 %2805
  %2807 = vrot.lane.b32.xlu0 %v1303, 112
  %v2808 = vpop.permute.xlu0 %2807
  %2809 = vrot.lane.b32.xlu0 %v1306, 112
  %v2810 = vpop.permute.xlu0 %2809
  %2811 = vrot.lane.b32.xlu0 %v1317, 112
  %v2812 = vpop.permute.xlu0 %2811
  %2813 = vrot.lane.b32.xlu0 %v1320, 112
  %v2814 = vpop.permute.xlu0 %2813
  %2815 = vrot.lane.b32.xlu0 %v1323, 112
  %v2816 = vpop.permute.xlu0 %2815
  %2817 = vrot.lane.b32.xlu0 %v1326, 112
  %v2818 = vpop.permute.xlu0 %2817
  %2819 = vrot.lane.b32.xlu0 %v1329, 112
  %v2820 = vpop.permute.xlu0 %2819
  %2821 = vrot.lane.b32.xlu0 %v1332, 112
  %v2822 = vpop.permute.xlu0 %2821
  %2823 = vrot.lane.b32.xlu0 %v1335, 112
  %v2824 = vpop.permute.xlu0 %2823
  %2825 = vrot.lane.b32.xlu0 %v1338, 112
  %v2826 = vpop.permute.xlu0 %2825
  %2827 = vrot.lane.b32.xlu0 %v1341, 112
  %v2828 = vpop.permute.xlu0 %2827
  %2829 = vrot.lane.b32.xlu0 %v1344, 112
  %v2830 = vpop.permute.xlu0 %2829
  %2831 = vrot.lane.b32.xlu0 %v1347, 112
  %v2832 = vpop.permute.xlu0 %2831
  %2833 = vrot.lane.b32.xlu0 %v1350, 112
  %v2834 = vpop.permute.xlu0 %2833
  %2835 = vrot.lane.b32.xlu0 %v1353, 112
  %v2836 = vpop.permute.xlu0 %2835
  %2837 = vrot.lane.b32.xlu0 %v1364, 112
  %v2838 = vpop.permute.xlu0 %2837
  %2839 = vrot.lane.b32.xlu0 %v1367, 112
  %v2840 = vpop.permute.xlu0 %2839
  %2841 = vrot.lane.b32.xlu0 %v1370, 112
  %v2842 = vpop.permute.xlu0 %2841
  %2843 = vrot.lane.b32.xlu0 %v1373, 112
  %v2844 = vpop.permute.xlu0 %2843
  %2845 = vrot.lane.b32.xlu0 %v1376, 112
  %v2846 = vpop.permute.xlu0 %2845
  %2847 = vrot.lane.b32.xlu0 %v1379, 112
  %v2848 = vpop.permute.xlu0 %2847
  %2849 = vrot.lane.b32.xlu0 %v1382, 112
  %v2850 = vpop.permute.xlu0 %2849
  %2851 = vrot.lane.b32.xlu0 %v1385, 112
  %v2852 = vpop.permute.xlu0 %2851
  %2853 = vrot.lane.b32.xlu0 %v1388, 112
  %v2854 = vpop.permute.xlu0 %2853
  %2855 = vrot.lane.b32.xlu0 %v1391, 112
  %v2856 = vpop.permute.xlu0 %2855
  %2857 = vrot.lane.b32.xlu0 %v1394, 112
  %v2858 = vpop.permute.xlu0 %2857
  %2859 = vrot.lane.b32.xlu0 %v1397, 112
  %v2860 = vpop.permute.xlu0 %2859
  %2861 = vrot.lane.b32.xlu0 %v1400, 112
  %v2862 = vpop.permute.xlu0 %2861
  %2863 = vrot.lane.b32.xlu0 %v1411, 112
  %v2864 = vpop.permute.xlu0 %2863
  %2865 = vrot.lane.b32.xlu0 %v1414, 112
  %v2866 = vpop.permute.xlu0 %2865
  %2867 = vrot.lane.b32.xlu0 %v1417, 112
  %v2868 = vpop.permute.xlu0 %2867
  %2869 = vrot.lane.b32.xlu0 %v1420, 112
  %v2870 = vpop.permute.xlu0 %2869
  %2871 = vrot.lane.b32.xlu0 %v1423, 112
  %v2872 = vpop.permute.xlu0 %2871
  %2873 = vrot.lane.b32.xlu0 %v1426, 112
  %v2874 = vpop.permute.xlu0 %2873
  %2875 = vrot.lane.b32.xlu0 %v1429, 112
  %v2876 = vpop.permute.xlu0 %2875
  %2877 = vrot.lane.b32.xlu0 %v1432, 112
  %v2878 = vpop.permute.xlu0 %2877
  %2879 = vrot.lane.b32.xlu0 %v1435, 112
  %v2880 = vpop.permute.xlu0 %2879
  %2881 = vrot.lane.b32.xlu0 %v1438, 112
  %v2882 = vpop.permute.xlu0 %2881
  %2883 = vrot.lane.b32.xlu0 %v1441, 112
  %v2884 = vpop.permute.xlu0 %2883
  %2885 = vrot.lane.b32.xlu0 %v1444, 112
  %v2886 = vpop.permute.xlu0 %2885
  %2887 = vrot.lane.b32.xlu0 %v1447, 112
  %v2888 = vpop.permute.xlu0 %2887
  %2889 = vrot.lane.b32.xlu0 %v1458, 112
  %v2890 = vpop.permute.xlu0 %2889
  %2891 = vrot.lane.b32.xlu0 %v1461, 112
  %v2892 = vpop.permute.xlu0 %2891
  %2893 = vrot.lane.b32.xlu0 %v1464, 112
  %v2894 = vpop.permute.xlu0 %2893
  %2895 = vrot.lane.b32.xlu0 %v1467, 112
  %v2896 = vpop.permute.xlu0 %2895
  %2897 = vrot.lane.b32.xlu0 %v1470, 112
  %v2898 = vpop.permute.xlu0 %2897
  %2899 = vrot.lane.b32.xlu0 %v1473, 112
  %v2900 = vpop.permute.xlu0 %2899
  %2901 = vrot.lane.b32.xlu0 %v1476, 112
  %v2902 = vpop.permute.xlu0 %2901
  %2903 = vrot.lane.b32.xlu0 %v1479, 112
  %v2904 = vpop.permute.xlu0 %2903
  %2905 = vrot.lane.b32.xlu0 %v1482, 112
  %v2906 = vpop.permute.xlu0 %2905
  %2907 = vrot.lane.b32.xlu0 %v1485, 112
  %v2908 = vpop.permute.xlu0 %2907
  %2909 = vrot.lane.b32.xlu0 %v1488, 112
  %v2910 = vpop.permute.xlu0 %2909
  %2911 = vrot.lane.b32.xlu0 %v1491, 112
  %v2912 = vpop.permute.xlu0 %2911
  %2913 = vrot.lane.b32.xlu0 %v1494, 112
  %v2914 = vpop.permute.xlu0 %2913
  %2915 = vrot.lane.b32.xlu0 %v1505, 112
  %v2916 = vpop.permute.xlu0 %2915
  %2917 = vrot.lane.b32.xlu0 %v1508, 112
  %v2918 = vpop.permute.xlu0 %2917
  %2919 = vrot.lane.b32.xlu0 %v1511, 112
  %v2920 = vpop.permute.xlu0 %2919
  %2921 = vrot.lane.b32.xlu0 %v1514, 112
  %v2922 = vpop.permute.xlu0 %2921
  %2923 = vrot.lane.b32.xlu0 %v1517, 112
  %v2924 = vpop.permute.xlu0 %2923
  %2925 = vrot.lane.b32.xlu0 %v1520, 112
  %v2926 = vpop.permute.xlu0 %2925
  %2927 = vrot.lane.b32.xlu0 %v1523, 112
  %v2928 = vpop.permute.xlu0 %2927
  %2929 = vrot.lane.b32.xlu0 %v1526, 112
  %v2930 = vpop.permute.xlu0 %2929
  %2931 = vrot.lane.b32.xlu0 %v1529, 112
  %v2932 = vpop.permute.xlu0 %2931
  %2933 = vrot.lane.b32.xlu0 %v1532, 112
  %v2934 = vpop.permute.xlu0 %2933
  %2935 = vrot.lane.b32.xlu0 %v1535, 112
  %v2936 = vpop.permute.xlu0 %2935
  %2937 = vrot.lane.b32.xlu0 %v1538, 112
  %v2938 = vpop.permute.xlu0 %2937
  %2939 = vrot.lane.b32.xlu0 %v1541, 112
  %v2940 = vpop.permute.xlu0 %2939
  %2941 = vrot.lane.b32.xlu0 %v1552, 112
  %v2942 = vpop.permute.xlu0 %2941
  %2943 = vrot.lane.b32.xlu0 %v1555, 112
  %v2944 = vpop.permute.xlu0 %2943
  %2945 = vrot.lane.b32.xlu0 %v1558, 112
  %v2946 = vpop.permute.xlu0 %2945
  %2947 = vrot.lane.b32.xlu0 %v1561, 112
  %v2948 = vpop.permute.xlu0 %2947
  %2949 = vrot.lane.b32.xlu0 %v1564, 112
  %v2950 = vpop.permute.xlu0 %2949
  %2951 = vrot.lane.b32.xlu0 %v1567, 112
  %v2952 = vpop.permute.xlu0 %2951
  %2953 = vrot.lane.b32.xlu0 %v1570, 112
  %v2954 = vpop.permute.xlu0 %2953
  %2955 = vrot.lane.b32.xlu0 %v1573, 112
  %v2956 = vpop.permute.xlu0 %2955
  %2957 = vrot.lane.b32.xlu0 %v1576, 112
  %v2958 = vpop.permute.xlu0 %2957
  %2959 = vrot.lane.b32.xlu0 %v1579, 112
  %v2960 = vpop.permute.xlu0 %2959
  %2961 = vrot.lane.b32.xlu0 %v1582, 112
  %v2962 = vpop.permute.xlu0 %2961
  %2963 = vrot.lane.b32.xlu0 %v1585, 112
  %v2964 = vpop.permute.xlu0 %2963
  %2965 = vrot.lane.b32.xlu0 %v1588, 112
  %v2966 = vpop.permute.xlu0 %2965
  %2967 = vrot.lane.b32.xlu0 %v1599, 112
  %v2968 = vpop.permute.xlu0 %2967
  %2969 = vrot.lane.b32.xlu0 %v1602, 112
  %v2970 = vpop.permute.xlu0 %2969
  %2971 = vrot.lane.b32.xlu0 %v1605, 112
  %v2972 = vpop.permute.xlu0 %2971
  %2973 = vrot.lane.b32.xlu0 %v1608, 112
  %v2974 = vpop.permute.xlu0 %2973
  %2975 = vrot.lane.b32.xlu0 %v1611, 112
  %v2976 = vpop.permute.xlu0 %2975
  %2977 = vrot.lane.b32.xlu0 %v1614, 112
  %v2978 = vpop.permute.xlu0 %2977
  %2979 = vrot.lane.b32.xlu0 %v1617, 112
  %v2980 = vpop.permute.xlu0 %2979
  %2981 = vrot.lane.b32.xlu0 %v1620, 112
  %v2982 = vpop.permute.xlu0 %2981
  %2983 = vrot.lane.b32.xlu0 %v1623, 112
  %v2984 = vpop.permute.xlu0 %2983
  %2985 = vrot.lane.b32.xlu0 %v1626, 112
  %v2986 = vpop.permute.xlu0 %2985
  %2987 = vrot.lane.b32.xlu0 %v1629, 112
  %v2988 = vpop.permute.xlu0 %2987
  %2989 = vrot.lane.b32.xlu0 %v1632, 112
  %v2990 = vpop.permute.xlu0 %2989
  %2991 = vrot.lane.b32.xlu0 %v1635, 112
  %v2992 = vpop.permute.xlu0 %2991
  %2993 = vrot.lane.b32.xlu0 %v1646, 112
  %v2994 = vpop.permute.xlu0 %2993
  %2995 = vrot.lane.b32.xlu0 %v1649, 112
  %v2996 = vpop.permute.xlu0 %2995
  %2997 = vrot.lane.b32.xlu0 %v1652, 112
  %v2998 = vpop.permute.xlu0 %2997
  %2999 = vrot.lane.b32.xlu0 %v1655, 112
  %v3000 = vpop.permute.xlu0 %2999
  %3001 = vrot.lane.b32.xlu0 %v1658, 112
  %v3002 = vpop.permute.xlu0 %3001
  %3003 = vrot.lane.b32.xlu0 %v1661, 112
  %v3004 = vpop.permute.xlu0 %3003
  %3005 = vrot.lane.b32.xlu0 %v1664, 112
  %v3006 = vpop.permute.xlu0 %3005
  %3007 = vrot.lane.b32.xlu0 %v1667, 112
  %v3008 = vpop.permute.xlu0 %3007
  %3009 = vrot.lane.b32.xlu0 %v1670, 112
  %v3010 = vpop.permute.xlu0 %3009
  %3011 = vrot.lane.b32.xlu0 %v1673, 112
  %v3012 = vpop.permute.xlu0 %3011
  %3013 = vrot.lane.b32.xlu0 %v1676, 112
  %v3014 = vpop.permute.xlu0 %3013
  %3015 = vrot.lane.b32.xlu0 %v1679, 112
  %v3016 = vpop.permute.xlu0 %3015
  %3017 = vrot.lane.b32.xlu0 %v1682, 112
  %v3018 = vpop.permute.xlu0 %3017
  %v3188 = vadd.f32 %v1079, %v2682
  %v3189 = vadd.f32 %v1082, %v2684
  %v3190 = vadd.f32 %v1085, %v2686
  %v3191 = vadd.f32 %v1088, %v2688
  %v3192 = vadd.f32 %v1091, %v2690
  %v3193 = vadd.f32 %v1094, %v2692
  %v3194 = vadd.f32 %v1097, %v2694
  %v3195 = vadd.f32 %v1100, %v2696
  %v3196 = vadd.f32 %v1103, %v2698
  %v3197 = vadd.f32 %v1106, %v2700
  %v3198 = vadd.f32 %v1109, %v2702
  %v3199 = vadd.f32 %v1112, %v2704
  %v3200 = vadd.f32 %v1115, %v2706
  %v3201 = vadd.f32 %v1126, %v2708
  %v3202 = vadd.f32 %v1129, %v2710
  %v3203 = vadd.f32 %v1132, %v2712
  %v3204 = vadd.f32 %v1135, %v2714
  %v3205 = vadd.f32 %v1138, %v2716
  %v3206 = vadd.f32 %v1141, %v2718
  %v3207 = vadd.f32 %v1144, %v2720
  %v3208 = vadd.f32 %v1147, %v2722
  %v3209 = vadd.f32 %v1150, %v2724
  %v3210 = vadd.f32 %v1153, %v2726
  %v3211 = vadd.f32 %v1156, %v2728
  %v3212 = vadd.f32 %v1159, %v2730
  %v3213 = vadd.f32 %v1162, %v2732
  %v3214 = vadd.f32 %v1173, %v2734
  %v3215 = vadd.f32 %v1176, %v2736
  %v3216 = vadd.f32 %v1179, %v2738
  %v3217 = vadd.f32 %v1182, %v2740
  %v3218 = vadd.f32 %v1185, %v2742
  %v3219 = vadd.f32 %v1188, %v2744
  %v3220 = vadd.f32 %v1191, %v2746
  %v3221 = vadd.f32 %v1194, %v2748
  %v3222 = vadd.f32 %v1197, %v2750
  %v3223 = vadd.f32 %v1200, %v2752
  %v3224 = vadd.f32 %v1203, %v2754
  %v3225 = vadd.f32 %v1206, %v2756
  %v3226 = vadd.f32 %v1209, %v2758
  %v3227 = vadd.f32 %v1220, %v2760
  %v3228 = vadd.f32 %v1223, %v2762
  %v3229 = vadd.f32 %v1226, %v2764
  %v3230 = vadd.f32 %v1229, %v2766
  %v3231 = vadd.f32 %v1232, %v2768
  %v3232 = vadd.f32 %v1235, %v2770
  %v3233 = vadd.f32 %v1238, %v2772
  %v3234 = vadd.f32 %v1241, %v2774
  %v3235 = vadd.f32 %v1244, %v2776
  %v3236 = vadd.f32 %v1247, %v2778
  %v3237 = vadd.f32 %v1250, %v2780
  %v3238 = vadd.f32 %v1253, %v2782
  %v3239 = vadd.f32 %v1256, %v2784
  %v3240 = vadd.f32 %v1267, %v2786
  %v3241 = vadd.f32 %v1270, %v2788
  %v3242 = vadd.f32 %v1273, %v2790
  %v3243 = vadd.f32 %v1276, %v2792
  %v3244 = vadd.f32 %v1279, %v2794
  %v3245 = vadd.f32 %v1282, %v2796
  %v3246 = vadd.f32 %v1285, %v2798
  %v3247 = vadd.f32 %v1288, %v2800
  %v3248 = vadd.f32 %v1291, %v2802
  %v3249 = vadd.f32 %v1294, %v2804
  %v3250 = vadd.f32 %v1297, %v2806
  %v3251 = vadd.f32 %v1300, %v2808
  %v3252 = vadd.f32 %v1303, %v2810
  %v3253 = vadd.f32 %v1314, %v2812
  %v3254 = vadd.f32 %v1317, %v2814
  %v3255 = vadd.f32 %v1320, %v2816
  %v3256 = vadd.f32 %v1323, %v2818
  %v3257 = vadd.f32 %v1326, %v2820
  %v3258 = vadd.f32 %v1329, %v2822
  %v3259 = vadd.f32 %v1332, %v2824
  %v3260 = vadd.f32 %v1335, %v2826
  %v3261 = vadd.f32 %v1338, %v2828
  %v3262 = vadd.f32 %v1341, %v2830
  %v3263 = vadd.f32 %v1344, %v2832
  %v3264 = vadd.f32 %v1347, %v2834
  %v3265 = vadd.f32 %v1350, %v2836
  %v3266 = vadd.f32 %v1361, %v2838
  %v3267 = vadd.f32 %v1364, %v2840
  %v3268 = vadd.f32 %v1367, %v2842
  %v3269 = vadd.f32 %v1370, %v2844
  %v3270 = vadd.f32 %v1373, %v2846
  %v3271 = vadd.f32 %v1376, %v2848
  %v3272 = vadd.f32 %v1379, %v2850
  %v3273 = vadd.f32 %v1382, %v2852
  %v3274 = vadd.f32 %v1385, %v2854
  %v3275 = vadd.f32 %v1388, %v2856
  %v3276 = vadd.f32 %v1391, %v2858
  %v3277 = vadd.f32 %v1394, %v2860
  %v3278 = vadd.f32 %v1397, %v2862
  %v3279 = vadd.f32 %v1408, %v2864
  %v3280 = vadd.f32 %v1411, %v2866
  %v3281 = vadd.f32 %v1414, %v2868
  %v3282 = vadd.f32 %v1417, %v2870
  %v3283 = vadd.f32 %v1420, %v2872
  %v3284 = vadd.f32 %v1423, %v2874
  %v3285 = vadd.f32 %v1426, %v2876
  %v3286 = vadd.f32 %v1429, %v2878
  %v3287 = vadd.f32 %v1432, %v2880
  %v3288 = vadd.f32 %v1435, %v2882
  %v3289 = vadd.f32 %v1438, %v2884
  %v3290 = vadd.f32 %v1441, %v2886
  %v3291 = vadd.f32 %v1444, %v2888
  %v3292 = vadd.f32 %v1455, %v2890
  %v3293 = vadd.f32 %v1458, %v2892
  %v3294 = vadd.f32 %v1461, %v2894
  %v3295 = vadd.f32 %v1464, %v2896
  %v3296 = vadd.f32 %v1467, %v2898
  %v3297 = vadd.f32 %v1470, %v2900
  %v3298 = vadd.f32 %v1473, %v2902
  %v3299 = vadd.f32 %v1476, %v2904
  %v3300 = vadd.f32 %v1479, %v2906
  %v3301 = vadd.f32 %v1482, %v2908
  %v3302 = vadd.f32 %v1485, %v2910
  %v3303 = vadd.f32 %v1488, %v2912
  %v3304 = vadd.f32 %v1491, %v2914
  %v3305 = vadd.f32 %v1502, %v2916
  %v3306 = vadd.f32 %v1505, %v2918
  %v3307 = vadd.f32 %v1508, %v2920
  %v3308 = vadd.f32 %v1511, %v2922
  %v3309 = vadd.f32 %v1514, %v2924
  %v3310 = vadd.f32 %v1517, %v2926
  %v3311 = vadd.f32 %v1520, %v2928
  %v3312 = vadd.f32 %v1523, %v2930
  %v3313 = vadd.f32 %v1526, %v2932
  %v3314 = vadd.f32 %v1529, %v2934
  %v3315 = vadd.f32 %v1532, %v2936
  %v3316 = vadd.f32 %v1535, %v2938
  %v3317 = vadd.f32 %v1538, %v2940
  %v3318 = vadd.f32 %v1549, %v2942
  %v3319 = vadd.f32 %v1552, %v2944
  %v3320 = vadd.f32 %v1555, %v2946
  %v3321 = vadd.f32 %v1558, %v2948
  %v3322 = vadd.f32 %v1561, %v2950
  %v3323 = vadd.f32 %v1564, %v2952
  %v3324 = vadd.f32 %v1567, %v2954
  %v3325 = vadd.f32 %v1570, %v2956
  %v3326 = vadd.f32 %v1573, %v2958
  %v3327 = vadd.f32 %v1576, %v2960
  %v3328 = vadd.f32 %v1579, %v2962
  %v3329 = vadd.f32 %v1582, %v2964
  %v3330 = vadd.f32 %v1585, %v2966
  %v3331 = vadd.f32 %v1596, %v2968
  %v3332 = vadd.f32 %v1599, %v2970
  %v3333 = vadd.f32 %v1602, %v2972
  %v3334 = vadd.f32 %v1605, %v2974
  %v3335 = vadd.f32 %v1608, %v2976
  %v3336 = vadd.f32 %v1611, %v2978
  %v3337 = vadd.f32 %v1614, %v2980
  %v3338 = vadd.f32 %v1617, %v2982
  %v3339 = vadd.f32 %v1620, %v2984
  %v3340 = vadd.f32 %v1623, %v2986
  %v3341 = vadd.f32 %v1626, %v2988
  %v3342 = vadd.f32 %v1629, %v2990
  %v3343 = vadd.f32 %v1632, %v2992
  %v3344 = vadd.f32 %v1643, %v2994
  %v3345 = vadd.f32 %v1646, %v2996
  %v3346 = vadd.f32 %v1649, %v2998
  %v3347 = vadd.f32 %v1652, %v3000
  %v3348 = vadd.f32 %v1655, %v3002
  %v3349 = vadd.f32 %v1658, %v3004
  %v3350 = vadd.f32 %v1661, %v3006
  %v3351 = vadd.f32 %v1664, %v3008
  %v3352 = vadd.f32 %v1667, %v3010
  %v3353 = vadd.f32 %v1670, %v3012
  %v3354 = vadd.f32 %v1673, %v3014
  %v3355 = vadd.f32 %v1676, %v3016
  %v3356 = vadd.f32 %v1679, %v3018
  %3370 = vrot.lane.b32.xlu0 %v1085, 96
  %v3371 = vpop.permute.xlu0 %3370
  %3372 = vrot.lane.b32.xlu0 %v1088, 96
  %v3373 = vpop.permute.xlu0 %3372
  %3374 = vrot.lane.b32.xlu0 %v1091, 96
  %v3375 = vpop.permute.xlu0 %3374
  %3376 = vrot.lane.b32.xlu0 %v1094, 96
  %v3377 = vpop.permute.xlu0 %3376
  %3378 = vrot.lane.b32.xlu0 %v1097, 96
  %v3379 = vpop.permute.xlu0 %3378
  %3380 = vrot.lane.b32.xlu0 %v1100, 96
  %v3381 = vpop.permute.xlu0 %3380
  %3382 = vrot.lane.b32.xlu0 %v1103, 96
  %v3383 = vpop.permute.xlu0 %3382
  %3384 = vrot.lane.b32.xlu0 %v1106, 96
  %v3385 = vpop.permute.xlu0 %3384
  %3386 = vrot.lane.b32.xlu0 %v1109, 96
  %v3387 = vpop.permute.xlu0 %3386
  %3388 = vrot.lane.b32.xlu0 %v1112, 96
  %v3389 = vpop.permute.xlu0 %3388
  %3390 = vrot.lane.b32.xlu0 %v1115, 96
  %v3391 = vpop.permute.xlu0 %3390
  %3392 = vrot.lane.b32.xlu0 %v1118, 96
  %v3393 = vpop.permute.xlu0 %3392
  %3394 = vrot.lane.b32.xlu0 %v1121, 96
  %v3395 = vpop.permute.xlu0 %3394
  %3396 = vrot.lane.b32.xlu0 %v1132, 96
  %v3397 = vpop.permute.xlu0 %3396
  %3398 = vrot.lane.b32.xlu0 %v1135, 96
  %v3399 = vpop.permute.xlu0 %3398
  %3400 = vrot.lane.b32.xlu0 %v1138, 96
  %v3401 = vpop.permute.xlu0 %3400
  %3402 = vrot.lane.b32.xlu0 %v1141, 96
  %v3403 = vpop.permute.xlu0 %3402
  %3404 = vrot.lane.b32.xlu0 %v1144, 96
  %v3405 = vpop.permute.xlu0 %3404
  %3406 = vrot.lane.b32.xlu0 %v1147, 96
  %v3407 = vpop.permute.xlu0 %3406
  %3408 = vrot.lane.b32.xlu0 %v1150, 96
  %v3409 = vpop.permute.xlu0 %3408
  %3410 = vrot.lane.b32.xlu0 %v1153, 96
  %v3411 = vpop.permute.xlu0 %3410
  %3412 = vrot.lane.b32.xlu0 %v1156, 96
  %v3413 = vpop.permute.xlu0 %3412
  %3414 = vrot.lane.b32.xlu0 %v1159, 96
  %v3415 = vpop.permute.xlu0 %3414
  %3416 = vrot.lane.b32.xlu0 %v1162, 96
  %v3417 = vpop.permute.xlu0 %3416
  %3418 = vrot.lane.b32.xlu0 %v1165, 96
  %v3419 = vpop.permute.xlu0 %3418
  %3420 = vrot.lane.b32.xlu0 %v1168, 96
  %v3421 = vpop.permute.xlu0 %3420
  %3422 = vrot.lane.b32.xlu0 %v1179, 96
  %v3423 = vpop.permute.xlu0 %3422
  %3424 = vrot.lane.b32.xlu0 %v1182, 96
  %v3425 = vpop.permute.xlu0 %3424
  %3426 = vrot.lane.b32.xlu0 %v1185, 96
  %v3427 = vpop.permute.xlu0 %3426
  %3428 = vrot.lane.b32.xlu0 %v1188, 96
  %v3429 = vpop.permute.xlu0 %3428
  %3430 = vrot.lane.b32.xlu0 %v1191, 96
  %v3431 = vpop.permute.xlu0 %3430
  %3432 = vrot.lane.b32.xlu0 %v1194, 96
  %v3433 = vpop.permute.xlu0 %3432
  %3434 = vrot.lane.b32.xlu0 %v1197, 96
  %v3435 = vpop.permute.xlu0 %3434
  %3436 = vrot.lane.b32.xlu0 %v1200, 96
  %v3437 = vpop.permute.xlu0 %3436
  %3438 = vrot.lane.b32.xlu0 %v1203, 96
  %v3439 = vpop.permute.xlu0 %3438
  %3440 = vrot.lane.b32.xlu0 %v1206, 96
  %v3441 = vpop.permute.xlu0 %3440
  %3442 = vrot.lane.b32.xlu0 %v1209, 96
  %v3443 = vpop.permute.xlu0 %3442
  %3444 = vrot.lane.b32.xlu0 %v1212, 96
  %v3445 = vpop.permute.xlu0 %3444
  %3446 = vrot.lane.b32.xlu0 %v1215, 96
  %v3447 = vpop.permute.xlu0 %3446
  %3448 = vrot.lane.b32.xlu0 %v1226, 96
  %v3449 = vpop.permute.xlu0 %3448
  %3450 = vrot.lane.b32.xlu0 %v1229, 96
  %v3451 = vpop.permute.xlu0 %3450
  %3452 = vrot.lane.b32.xlu0 %v1232, 96
  %v3453 = vpop.permute.xlu0 %3452
  %3454 = vrot.lane.b32.xlu0 %v1235, 96
  %v3455 = vpop.permute.xlu0 %3454
  %3456 = vrot.lane.b32.xlu0 %v1238, 96
  %v3457 = vpop.permute.xlu0 %3456
  %3458 = vrot.lane.b32.xlu0 %v1241, 96
  %v3459 = vpop.permute.xlu0 %3458
  %3460 = vrot.lane.b32.xlu0 %v1244, 96
  %v3461 = vpop.permute.xlu0 %3460
  %3462 = vrot.lane.b32.xlu0 %v1247, 96
  %v3463 = vpop.permute.xlu0 %3462
  %3464 = vrot.lane.b32.xlu0 %v1250, 96
  %v3465 = vpop.permute.xlu0 %3464
  %3466 = vrot.lane.b32.xlu0 %v1253, 96
  %v3467 = vpop.permute.xlu0 %3466
  %3468 = vrot.lane.b32.xlu0 %v1256, 96
  %v3469 = vpop.permute.xlu0 %3468
  %3470 = vrot.lane.b32.xlu0 %v1259, 96
  %v3471 = vpop.permute.xlu0 %3470
  %3472 = vrot.lane.b32.xlu0 %v1262, 96
  %v3473 = vpop.permute.xlu0 %3472
  %3474 = vrot.lane.b32.xlu0 %v1273, 96
  %v3475 = vpop.permute.xlu0 %3474
  %3476 = vrot.lane.b32.xlu0 %v1276, 96
  %v3477 = vpop.permute.xlu0 %3476
  %3478 = vrot.lane.b32.xlu0 %v1279, 96
  %v3479 = vpop.permute.xlu0 %3478
  %3480 = vrot.lane.b32.xlu0 %v1282, 96
  %v3481 = vpop.permute.xlu0 %3480
  %3482 = vrot.lane.b32.xlu0 %v1285, 96
  %v3483 = vpop.permute.xlu0 %3482
  %3484 = vrot.lane.b32.xlu0 %v1288, 96
  %v3485 = vpop.permute.xlu0 %3484
  %3486 = vrot.lane.b32.xlu0 %v1291, 96
  %v3487 = vpop.permute.xlu0 %3486
  %3488 = vrot.lane.b32.xlu0 %v1294, 96
  %v3489 = vpop.permute.xlu0 %3488
  %3490 = vrot.lane.b32.xlu0 %v1297, 96
  %v3491 = vpop.permute.xlu0 %3490
  %3492 = vrot.lane.b32.xlu0 %v1300, 96
  %v3493 = vpop.permute.xlu0 %3492
  %3494 = vrot.lane.b32.xlu0 %v1303, 96
  %v3495 = vpop.permute.xlu0 %3494
  %3496 = vrot.lane.b32.xlu0 %v1306, 96
  %v3497 = vpop.permute.xlu0 %3496
  %3498 = vrot.lane.b32.xlu0 %v1309, 96
  %v3499 = vpop.permute.xlu0 %3498
  %3500 = vrot.lane.b32.xlu0 %v1320, 96
  %v3501 = vpop.permute.xlu0 %3500
  %3502 = vrot.lane.b32.xlu0 %v1323, 96
  %v3503 = vpop.permute.xlu0 %3502
  %3504 = vrot.lane.b32.xlu0 %v1326, 96
  %v3505 = vpop.permute.xlu0 %3504
  %3506 = vrot.lane.b32.xlu0 %v1329, 96
  %v3507 = vpop.permute.xlu0 %3506
  %3508 = vrot.lane.b32.xlu0 %v1332, 96
  %v3509 = vpop.permute.xlu0 %3508
  %3510 = vrot.lane.b32.xlu0 %v1335, 96
  %v3511 = vpop.permute.xlu0 %3510
  %3512 = vrot.lane.b32.xlu0 %v1338, 96
  %v3513 = vpop.permute.xlu0 %3512
  %3514 = vrot.lane.b32.xlu0 %v1341, 96
  %v3515 = vpop.permute.xlu0 %3514
  %3516 = vrot.lane.b32.xlu0 %v1344, 96
  %v3517 = vpop.permute.xlu0 %3516
  %3518 = vrot.lane.b32.xlu0 %v1347, 96
  %v3519 = vpop.permute.xlu0 %3518
  %3520 = vrot.lane.b32.xlu0 %v1350, 96
  %v3521 = vpop.permute.xlu0 %3520
  %3522 = vrot.lane.b32.xlu0 %v1353, 96
  %v3523 = vpop.permute.xlu0 %3522
  %3524 = vrot.lane.b32.xlu0 %v1356, 96
  %v3525 = vpop.permute.xlu0 %3524
  %3526 = vrot.lane.b32.xlu0 %v1367, 96
  %v3527 = vpop.permute.xlu0 %3526
  %3528 = vrot.lane.b32.xlu0 %v1370, 96
  %v3529 = vpop.permute.xlu0 %3528
  %3530 = vrot.lane.b32.xlu0 %v1373, 96
  %v3531 = vpop.permute.xlu0 %3530
  %3532 = vrot.lane.b32.xlu0 %v1376, 96
  %v3533 = vpop.permute.xlu0 %3532
  %3534 = vrot.lane.b32.xlu0 %v1379, 96
  %v3535 = vpop.permute.xlu0 %3534
  %3536 = vrot.lane.b32.xlu0 %v1382, 96
  %v3537 = vpop.permute.xlu0 %3536
  %3538 = vrot.lane.b32.xlu0 %v1385, 96
  %v3539 = vpop.permute.xlu0 %3538
  %3540 = vrot.lane.b32.xlu0 %v1388, 96
  %v3541 = vpop.permute.xlu0 %3540
  %3542 = vrot.lane.b32.xlu0 %v1391, 96
  %v3543 = vpop.permute.xlu0 %3542
  %3544 = vrot.lane.b32.xlu0 %v1394, 96
  %v3545 = vpop.permute.xlu0 %3544
  %3546 = vrot.lane.b32.xlu0 %v1397, 96
  %v3547 = vpop.permute.xlu0 %3546
  %3548 = vrot.lane.b32.xlu0 %v1400, 96
  %v3549 = vpop.permute.xlu0 %3548
  %3550 = vrot.lane.b32.xlu0 %v1403, 96
  %v3551 = vpop.permute.xlu0 %3550
  %3552 = vrot.lane.b32.xlu0 %v1414, 96
  %v3553 = vpop.permute.xlu0 %3552
  %3554 = vrot.lane.b32.xlu0 %v1417, 96
  %v3555 = vpop.permute.xlu0 %3554
  %3556 = vrot.lane.b32.xlu0 %v1420, 96
  %v3557 = vpop.permute.xlu0 %3556
  %3558 = vrot.lane.b32.xlu0 %v1423, 96
  %v3559 = vpop.permute.xlu0 %3558
  %3560 = vrot.lane.b32.xlu0 %v1426, 96
  %v3561 = vpop.permute.xlu0 %3560
  %3562 = vrot.lane.b32.xlu0 %v1429, 96
  %v3563 = vpop.permute.xlu0 %3562
  %3564 = vrot.lane.b32.xlu0 %v1432, 96
  %v3565 = vpop.permute.xlu0 %3564
  %3566 = vrot.lane.b32.xlu0 %v1435, 96
  %v3567 = vpop.permute.xlu0 %3566
  %3568 = vrot.lane.b32.xlu0 %v1438, 96
  %v3569 = vpop.permute.xlu0 %3568
  %3570 = vrot.lane.b32.xlu0 %v1441, 96
  %v3571 = vpop.permute.xlu0 %3570
  %3572 = vrot.lane.b32.xlu0 %v1444, 96
  %v3573 = vpop.permute.xlu0 %3572
  %3574 = vrot.lane.b32.xlu0 %v1447, 96
  %v3575 = vpop.permute.xlu0 %3574
  %3576 = vrot.lane.b32.xlu0 %v1450, 96
  %v3577 = vpop.permute.xlu0 %3576
  %3578 = vrot.lane.b32.xlu0 %v1461, 96
  %v3579 = vpop.permute.xlu0 %3578
  %3580 = vrot.lane.b32.xlu0 %v1464, 96
  %v3581 = vpop.permute.xlu0 %3580
  %3582 = vrot.lane.b32.xlu0 %v1467, 96
  %v3583 = vpop.permute.xlu0 %3582
  %3584 = vrot.lane.b32.xlu0 %v1470, 96
  %v3585 = vpop.permute.xlu0 %3584
  %3586 = vrot.lane.b32.xlu0 %v1473, 96
  %v3587 = vpop.permute.xlu0 %3586
  %3588 = vrot.lane.b32.xlu0 %v1476, 96
  %v3589 = vpop.permute.xlu0 %3588
  %3590 = vrot.lane.b32.xlu0 %v1479, 96
  %v3591 = vpop.permute.xlu0 %3590
  %3592 = vrot.lane.b32.xlu0 %v1482, 96
  %v3593 = vpop.permute.xlu0 %3592
  %3594 = vrot.lane.b32.xlu0 %v1485, 96
  %v3595 = vpop.permute.xlu0 %3594
  %3596 = vrot.lane.b32.xlu0 %v1488, 96
  %v3597 = vpop.permute.xlu0 %3596
  %3598 = vrot.lane.b32.xlu0 %v1491, 96
  %v3599 = vpop.permute.xlu0 %3598
  %3600 = vrot.lane.b32.xlu0 %v1494, 96
  %v3601 = vpop.permute.xlu0 %3600
  %3602 = vrot.lane.b32.xlu0 %v1497, 96
  %v3603 = vpop.permute.xlu0 %3602
  %3604 = vrot.lane.b32.xlu0 %v1508, 96
  %v3605 = vpop.permute.xlu0 %3604
  %3606 = vrot.lane.b32.xlu0 %v1511, 96
  %v3607 = vpop.permute.xlu0 %3606
  %3608 = vrot.lane.b32.xlu0 %v1514, 96
  %v3609 = vpop.permute.xlu0 %3608
  %3610 = vrot.lane.b32.xlu0 %v1517, 96
  %v3611 = vpop.permute.xlu0 %3610
  %3612 = vrot.lane.b32.xlu0 %v1520, 96
  %v3613 = vpop.permute.xlu0 %3612
  %3614 = vrot.lane.b32.xlu0 %v1523, 96
  %v3615 = vpop.permute.xlu0 %3614
  %3616 = vrot.lane.b32.xlu0 %v1526, 96
  %v3617 = vpop.permute.xlu0 %3616
  %3618 = vrot.lane.b32.xlu0 %v1529, 96
  %v3619 = vpop.permute.xlu0 %3618
  %3620 = vrot.lane.b32.xlu0 %v1532, 96
  %v3621 = vpop.permute.xlu0 %3620
  %3622 = vrot.lane.b32.xlu0 %v1535, 96
  %v3623 = vpop.permute.xlu0 %3622
  %3624 = vrot.lane.b32.xlu0 %v1538, 96
  %v3625 = vpop.permute.xlu0 %3624
  %3626 = vrot.lane.b32.xlu0 %v1541, 96
  %v3627 = vpop.permute.xlu0 %3626
  %3628 = vrot.lane.b32.xlu0 %v1544, 96
  %v3629 = vpop.permute.xlu0 %3628
  %3630 = vrot.lane.b32.xlu0 %v1555, 96
  %v3631 = vpop.permute.xlu0 %3630
  %3632 = vrot.lane.b32.xlu0 %v1558, 96
  %v3633 = vpop.permute.xlu0 %3632
  %3634 = vrot.lane.b32.xlu0 %v1561, 96
  %v3635 = vpop.permute.xlu0 %3634
  %3636 = vrot.lane.b32.xlu0 %v1564, 96
  %v3637 = vpop.permute.xlu0 %3636
  %3638 = vrot.lane.b32.xlu0 %v1567, 96
  %v3639 = vpop.permute.xlu0 %3638
  %3640 = vrot.lane.b32.xlu0 %v1570, 96
  %v3641 = vpop.permute.xlu0 %3640
  %3642 = vrot.lane.b32.xlu0 %v1573, 96
  %v3643 = vpop.permute.xlu0 %3642
  %3644 = vrot.lane.b32.xlu0 %v1576, 96
  %v3645 = vpop.permute.xlu0 %3644
  %3646 = vrot.lane.b32.xlu0 %v1579, 96
  %v3647 = vpop.permute.xlu0 %3646
  %3648 = vrot.lane.b32.xlu0 %v1582, 96
  %v3649 = vpop.permute.xlu0 %3648
  %3650 = vrot.lane.b32.xlu0 %v1585, 96
  %v3651 = vpop.permute.xlu0 %3650
  %3652 = vrot.lane.b32.xlu0 %v1588, 96
  %v3653 = vpop.permute.xlu0 %3652
  %3654 = vrot.lane.b32.xlu0 %v1591, 96
  %v3655 = vpop.permute.xlu0 %3654
  %3656 = vrot.lane.b32.xlu0 %v1602, 96
  %v3657 = vpop.permute.xlu0 %3656
  %3658 = vrot.lane.b32.xlu0 %v1605, 96
  %v3659 = vpop.permute.xlu0 %3658
  %3660 = vrot.lane.b32.xlu0 %v1608, 96
  %v3661 = vpop.permute.xlu0 %3660
  %3662 = vrot.lane.b32.xlu0 %v1611, 96
  %v3663 = vpop.permute.xlu0 %3662
  %3664 = vrot.lane.b32.xlu0 %v1614, 96
  %v3665 = vpop.permute.xlu0 %3664
  %3666 = vrot.lane.b32.xlu0 %v1617, 96
  %v3667 = vpop.permute.xlu0 %3666
  %3668 = vrot.lane.b32.xlu0 %v1620, 96
  %v3669 = vpop.permute.xlu0 %3668
  %3670 = vrot.lane.b32.xlu0 %v1623, 96
  %v3671 = vpop.permute.xlu0 %3670
  %3672 = vrot.lane.b32.xlu0 %v1626, 96
  %v3673 = vpop.permute.xlu0 %3672
  %3674 = vrot.lane.b32.xlu0 %v1629, 96
  %v3675 = vpop.permute.xlu0 %3674
  %3676 = vrot.lane.b32.xlu0 %v1632, 96
  %v3677 = vpop.permute.xlu0 %3676
  %3678 = vrot.lane.b32.xlu0 %v1635, 96
  %v3679 = vpop.permute.xlu0 %3678
  %3680 = vrot.lane.b32.xlu0 %v1638, 96
  %v3681 = vpop.permute.xlu0 %3680
  %3682 = vrot.lane.b32.xlu0 %v1649, 96
  %v3683 = vpop.permute.xlu0 %3682
  %3684 = vrot.lane.b32.xlu0 %v1652, 96
  %v3685 = vpop.permute.xlu0 %3684
  %3686 = vrot.lane.b32.xlu0 %v1655, 96
  %v3687 = vpop.permute.xlu0 %3686
  %3688 = vrot.lane.b32.xlu0 %v1658, 96
  %v3689 = vpop.permute.xlu0 %3688
  %3690 = vrot.lane.b32.xlu0 %v1661, 96
  %v3691 = vpop.permute.xlu0 %3690
  %3692 = vrot.lane.b32.xlu0 %v1664, 96
  %v3693 = vpop.permute.xlu0 %3692
  %3694 = vrot.lane.b32.xlu0 %v1667, 96
  %v3695 = vpop.permute.xlu0 %3694
  %3696 = vrot.lane.b32.xlu0 %v1670, 96
  %v3697 = vpop.permute.xlu0 %3696
  %3698 = vrot.lane.b32.xlu0 %v1673, 96
  %v3699 = vpop.permute.xlu0 %3698
  %3700 = vrot.lane.b32.xlu0 %v1676, 96
  %v3701 = vpop.permute.xlu0 %3700
  %3702 = vrot.lane.b32.xlu0 %v1679, 96
  %v3703 = vpop.permute.xlu0 %3702
  %3704 = vrot.lane.b32.xlu0 %v1682, 96
  %v3705 = vpop.permute.xlu0 %3704
  %3706 = vrot.lane.b32.xlu0 %v1685, 96
  %v3707 = vpop.permute.xlu0 %3706
  %v3877 = vadd.f32 %v3188, %v3371
  %v3878 = vadd.f32 %v3189, %v3373
  %v3879 = vadd.f32 %v3190, %v3375
  %v3880 = vadd.f32 %v3191, %v3377
  %v3881 = vadd.f32 %v3192, %v3379
  %v3882 = vadd.f32 %v3193, %v3381
  %v3883 = vadd.f32 %v3194, %v3383
  %v3884 = vadd.f32 %v3195, %v3385
  %v3885 = vadd.f32 %v3196, %v3387
  %v3886 = vadd.f32 %v3197, %v3389
  %v3887 = vadd.f32 %v3198, %v3391
  %v3888 = vadd.f32 %v3199, %v3393
  %v3889 = vadd.f32 %v3200, %v3395
  %v3890 = vadd.f32 %v3201, %v3397
  %v3891 = vadd.f32 %v3202, %v3399
  %v3892 = vadd.f32 %v3203, %v3401
  %v3893 = vadd.f32 %v3204, %v3403
  %v3894 = vadd.f32 %v3205, %v3405
  %v3895 = vadd.f32 %v3206, %v3407
  %v3896 = vadd.f32 %v3207, %v3409
  %v3897 = vadd.f32 %v3208, %v3411
  %v3898 = vadd.f32 %v3209, %v3413
  %v3899 = vadd.f32 %v3210, %v3415
  %v3900 = vadd.f32 %v3211, %v3417
  %v3901 = vadd.f32 %v3212, %v3419
  %v3902 = vadd.f32 %v3213, %v3421
  %v3903 = vadd.f32 %v3214, %v3423
  %v3904 = vadd.f32 %v3215, %v3425
  %v3905 = vadd.f32 %v3216, %v3427
  %v3906 = vadd.f32 %v3217, %v3429
  %v3907 = vadd.f32 %v3218, %v3431
  %v3908 = vadd.f32 %v3219, %v3433
  %v3909 = vadd.f32 %v3220, %v3435
  %v3910 = vadd.f32 %v3221, %v3437
  %v3911 = vadd.f32 %v3222, %v3439
  %v3912 = vadd.f32 %v3223, %v3441
  %v3913 = vadd.f32 %v3224, %v3443
  %v3914 = vadd.f32 %v3225, %v3445
  %v3915 = vadd.f32 %v3226, %v3447
  %v3916 = vadd.f32 %v3227, %v3449
  %v3917 = vadd.f32 %v3228, %v3451
  %v3918 = vadd.f32 %v3229, %v3453
  %v3919 = vadd.f32 %v3230, %v3455
  %v3920 = vadd.f32 %v3231, %v3457
  %v3921 = vadd.f32 %v3232, %v3459
  %v3922 = vadd.f32 %v3233, %v3461
  %v3923 = vadd.f32 %v3234, %v3463
  %v3924 = vadd.f32 %v3235, %v3465
  %v3925 = vadd.f32 %v3236, %v3467
  %v3926 = vadd.f32 %v3237, %v3469
  %v3927 = vadd.f32 %v3238, %v3471
  %v3928 = vadd.f32 %v3239, %v3473
  %v3929 = vadd.f32 %v3240, %v3475
  %v3930 = vadd.f32 %v3241, %v3477
  %v3931 = vadd.f32 %v3242, %v3479
  %v3932 = vadd.f32 %v3243, %v3481
  %v3933 = vadd.f32 %v3244, %v3483
  %v3934 = vadd.f32 %v3245, %v3485
  %v3935 = vadd.f32 %v3246, %v3487
  %v3936 = vadd.f32 %v3247, %v3489
  %v3937 = vadd.f32 %v3248, %v3491
  %v3938 = vadd.f32 %v3249, %v3493
  %v3939 = vadd.f32 %v3250, %v3495
  %v3940 = vadd.f32 %v3251, %v3497
  %v3941 = vadd.f32 %v3252, %v3499
  %v3942 = vadd.f32 %v3253, %v3501
  %v3943 = vadd.f32 %v3254, %v3503
  %v3944 = vadd.f32 %v3255, %v3505
  %v3945 = vadd.f32 %v3256, %v3507
  %v3946 = vadd.f32 %v3257, %v3509
  %v3947 = vadd.f32 %v3258, %v3511
  %v3948 = vadd.f32 %v3259, %v3513
  %v3949 = vadd.f32 %v3260, %v3515
  %v3950 = vadd.f32 %v3261, %v3517
  %v3951 = vadd.f32 %v3262, %v3519
  %v3952 = vadd.f32 %v3263, %v3521
  %v3953 = vadd.f32 %v3264, %v3523
  %v3954 = vadd.f32 %v3265, %v3525
  %v3955 = vadd.f32 %v3266, %v3527
  %v3956 = vadd.f32 %v3267, %v3529
  %v3957 = vadd.f32 %v3268, %v3531
  %v3958 = vadd.f32 %v3269, %v3533
  %v3959 = vadd.f32 %v3270, %v3535
  %v3960 = vadd.f32 %v3271, %v3537
  %v3961 = vadd.f32 %v3272, %v3539
  %v3962 = vadd.f32 %v3273, %v3541
  %v3963 = vadd.f32 %v3274, %v3543
  %v3964 = vadd.f32 %v3275, %v3545
  %v3965 = vadd.f32 %v3276, %v3547
  %v3966 = vadd.f32 %v3277, %v3549
  %v3967 = vadd.f32 %v3278, %v3551
  %v3968 = vadd.f32 %v3279, %v3553
  %v3969 = vadd.f32 %v3280, %v3555
  %v3970 = vadd.f32 %v3281, %v3557
  %v3971 = vadd.f32 %v3282, %v3559
  %v3972 = vadd.f32 %v3283, %v3561
  %v3973 = vadd.f32 %v3284, %v3563
  %v3974 = vadd.f32 %v3285, %v3565
  %v3975 = vadd.f32 %v3286, %v3567
  %v3976 = vadd.f32 %v3287, %v3569
  %v3977 = vadd.f32 %v3288, %v3571
  %v3978 = vadd.f32 %v3289, %v3573
  %v3979 = vadd.f32 %v3290, %v3575
  %v3980 = vadd.f32 %v3291, %v3577
  %v3981 = vadd.f32 %v3292, %v3579
  %v3982 = vadd.f32 %v3293, %v3581
  %v3983 = vadd.f32 %v3294, %v3583
  %v3984 = vadd.f32 %v3295, %v3585
  %v3985 = vadd.f32 %v3296, %v3587
  %v3986 = vadd.f32 %v3297, %v3589
  %v3987 = vadd.f32 %v3298, %v3591
  %v3988 = vadd.f32 %v3299, %v3593
  %v3989 = vadd.f32 %v3300, %v3595
  %v3990 = vadd.f32 %v3301, %v3597
  %v3991 = vadd.f32 %v3302, %v3599
  %v3992 = vadd.f32 %v3303, %v3601
  %v3993 = vadd.f32 %v3304, %v3603
  %v3994 = vadd.f32 %v3305, %v3605
  %v3995 = vadd.f32 %v3306, %v3607
  %v3996 = vadd.f32 %v3307, %v3609
  %v3997 = vadd.f32 %v3308, %v3611
  %v3998 = vadd.f32 %v3309, %v3613
  %v3999 = vadd.f32 %v3310, %v3615
  %v4000 = vadd.f32 %v3311, %v3617
  %v4001 = vadd.f32 %v3312, %v3619
  %v4002 = vadd.f32 %v3313, %v3621
  %v4003 = vadd.f32 %v3314, %v3623
  %v4004 = vadd.f32 %v3315, %v3625
  %v4005 = vadd.f32 %v3316, %v3627
  %v4006 = vadd.f32 %v3317, %v3629
  %v4007 = vadd.f32 %v3318, %v3631
  %v4008 = vadd.f32 %v3319, %v3633
  %v4009 = vadd.f32 %v3320, %v3635
  %v4010 = vadd.f32 %v3321, %v3637
  %v4011 = vadd.f32 %v3322, %v3639
  %v4012 = vadd.f32 %v3323, %v3641
  %v4013 = vadd.f32 %v3324, %v3643
  %v4014 = vadd.f32 %v3325, %v3645
  %v4015 = vadd.f32 %v3326, %v3647
  %v4016 = vadd.f32 %v3327, %v3649
  %v4017 = vadd.f32 %v3328, %v3651
  %v4018 = vadd.f32 %v3329, %v3653
  %v4019 = vadd.f32 %v3330, %v3655
  %v4020 = vadd.f32 %v3331, %v3657
  %v4021 = vadd.f32 %v3332, %v3659
  %v4022 = vadd.f32 %v3333, %v3661
  %v4023 = vadd.f32 %v3334, %v3663
  %v4024 = vadd.f32 %v3335, %v3665
  %v4025 = vadd.f32 %v3336, %v3667
  %v4026 = vadd.f32 %v3337, %v3669
  %v4027 = vadd.f32 %v3338, %v3671
  %v4028 = vadd.f32 %v3339, %v3673
  %v4029 = vadd.f32 %v3340, %v3675
  %v4030 = vadd.f32 %v3341, %v3677
  %v4031 = vadd.f32 %v3342, %v3679
  %v4032 = vadd.f32 %v3343, %v3681
  %v4033 = vadd.f32 %v3344, %v3683
  %v4034 = vadd.f32 %v3345, %v3685
  %v4035 = vadd.f32 %v3346, %v3687
  %v4036 = vadd.f32 %v3347, %v3689
  %v4037 = vadd.f32 %v3348, %v3691
  %v4038 = vadd.f32 %v3349, %v3693
  %v4039 = vadd.f32 %v3350, %v3695
  %v4040 = vadd.f32 %v3351, %v3697
  %v4041 = vadd.f32 %v3352, %v3699
  %v4042 = vadd.f32 %v3353, %v3701
  %v4043 = vadd.f32 %v3354, %v3703
  %v4044 = vadd.f32 %v3355, %v3705
  %v4045 = vadd.f32 %v3356, %v3707
  %4071 = vrot.lane.b32.xlu0 %v1126, 80
  %v4072 = vpop.permute.xlu0 %4071
  %4073 = vrot.lane.b32.xlu0 %v1129, 80
  %v4074 = vpop.permute.xlu0 %4073
  %4075 = vrot.lane.b32.xlu0 %v1132, 80
  %v4076 = vpop.permute.xlu0 %4075
  %4077 = vrot.lane.b32.xlu0 %v1135, 80
  %v4078 = vpop.permute.xlu0 %4077
  %4079 = vrot.lane.b32.xlu0 %v1138, 80
  %v4080 = vpop.permute.xlu0 %4079
  %4081 = vrot.lane.b32.xlu0 %v1141, 80
  %v4082 = vpop.permute.xlu0 %4081
  %4083 = vrot.lane.b32.xlu0 %v1144, 80
  %v4084 = vpop.permute.xlu0 %4083
  %4085 = vrot.lane.b32.xlu0 %v1147, 80
  %v4086 = vpop.permute.xlu0 %4085
  %4087 = vrot.lane.b32.xlu0 %v1150, 80
  %v4088 = vpop.permute.xlu0 %4087
  %4089 = vrot.lane.b32.xlu0 %v1153, 80
  %v4090 = vpop.permute.xlu0 %4089
  %4091 = vrot.lane.b32.xlu0 %v1156, 80
  %v4092 = vpop.permute.xlu0 %4091
  %4093 = vrot.lane.b32.xlu0 %v1159, 80
  %v4094 = vpop.permute.xlu0 %4093
  %4095 = vrot.lane.b32.xlu0 %v1162, 80
  %v4096 = vpop.permute.xlu0 %4095
  %4097 = vrot.lane.b32.xlu0 %v1173, 80
  %v4098 = vpop.permute.xlu0 %4097
  %4099 = vrot.lane.b32.xlu0 %v1176, 80
  %v4100 = vpop.permute.xlu0 %4099
  %4101 = vrot.lane.b32.xlu0 %v1179, 80
  %v4102 = vpop.permute.xlu0 %4101
  %4103 = vrot.lane.b32.xlu0 %v1182, 80
  %v4104 = vpop.permute.xlu0 %4103
  %4105 = vrot.lane.b32.xlu0 %v1185, 80
  %v4106 = vpop.permute.xlu0 %4105
  %4107 = vrot.lane.b32.xlu0 %v1188, 80
  %v4108 = vpop.permute.xlu0 %4107
  %4109 = vrot.lane.b32.xlu0 %v1191, 80
  %v4110 = vpop.permute.xlu0 %4109
  %4111 = vrot.lane.b32.xlu0 %v1194, 80
  %v4112 = vpop.permute.xlu0 %4111
  %4113 = vrot.lane.b32.xlu0 %v1197, 80
  %v4114 = vpop.permute.xlu0 %4113
  %4115 = vrot.lane.b32.xlu0 %v1200, 80
  %v4116 = vpop.permute.xlu0 %4115
  %4117 = vrot.lane.b32.xlu0 %v1203, 80
  %v4118 = vpop.permute.xlu0 %4117
  %4119 = vrot.lane.b32.xlu0 %v1206, 80
  %v4120 = vpop.permute.xlu0 %4119
  %4121 = vrot.lane.b32.xlu0 %v1209, 80
  %v4122 = vpop.permute.xlu0 %4121
  %4123 = vrot.lane.b32.xlu0 %v1220, 80
  %v4124 = vpop.permute.xlu0 %4123
  %4125 = vrot.lane.b32.xlu0 %v1223, 80
  %v4126 = vpop.permute.xlu0 %4125
  %4127 = vrot.lane.b32.xlu0 %v1226, 80
  %v4128 = vpop.permute.xlu0 %4127
  %4129 = vrot.lane.b32.xlu0 %v1229, 80
  %v4130 = vpop.permute.xlu0 %4129
  %4131 = vrot.lane.b32.xlu0 %v1232, 80
  %v4132 = vpop.permute.xlu0 %4131
  %4133 = vrot.lane.b32.xlu0 %v1235, 80
  %v4134 = vpop.permute.xlu0 %4133
  %4135 = vrot.lane.b32.xlu0 %v1238, 80
  %v4136 = vpop.permute.xlu0 %4135
  %4137 = vrot.lane.b32.xlu0 %v1241, 80
  %v4138 = vpop.permute.xlu0 %4137
  %4139 = vrot.lane.b32.xlu0 %v1244, 80
  %v4140 = vpop.permute.xlu0 %4139
  %4141 = vrot.lane.b32.xlu0 %v1247, 80
  %v4142 = vpop.permute.xlu0 %4141
  %4143 = vrot.lane.b32.xlu0 %v1250, 80
  %v4144 = vpop.permute.xlu0 %4143
  %4145 = vrot.lane.b32.xlu0 %v1253, 80
  %v4146 = vpop.permute.xlu0 %4145
  %4147 = vrot.lane.b32.xlu0 %v1256, 80
  %v4148 = vpop.permute.xlu0 %4147
  %4149 = vrot.lane.b32.xlu0 %v1267, 80
  %v4150 = vpop.permute.xlu0 %4149
  %4151 = vrot.lane.b32.xlu0 %v1270, 80
  %v4152 = vpop.permute.xlu0 %4151
  %4153 = vrot.lane.b32.xlu0 %v1273, 80
  %v4154 = vpop.permute.xlu0 %4153
  %4155 = vrot.lane.b32.xlu0 %v1276, 80
  %v4156 = vpop.permute.xlu0 %4155
  %4157 = vrot.lane.b32.xlu0 %v1279, 80
  %v4158 = vpop.permute.xlu0 %4157
  %4159 = vrot.lane.b32.xlu0 %v1282, 80
  %v4160 = vpop.permute.xlu0 %4159
  %4161 = vrot.lane.b32.xlu0 %v1285, 80
  %v4162 = vpop.permute.xlu0 %4161
  %4163 = vrot.lane.b32.xlu0 %v1288, 80
  %v4164 = vpop.permute.xlu0 %4163
  %4165 = vrot.lane.b32.xlu0 %v1291, 80
  %v4166 = vpop.permute.xlu0 %4165
  %4167 = vrot.lane.b32.xlu0 %v1294, 80
  %v4168 = vpop.permute.xlu0 %4167
  %4169 = vrot.lane.b32.xlu0 %v1297, 80
  %v4170 = vpop.permute.xlu0 %4169
  %4171 = vrot.lane.b32.xlu0 %v1300, 80
  %v4172 = vpop.permute.xlu0 %4171
  %4173 = vrot.lane.b32.xlu0 %v1303, 80
  %v4174 = vpop.permute.xlu0 %4173
  %4175 = vrot.lane.b32.xlu0 %v1314, 80
  %v4176 = vpop.permute.xlu0 %4175
  %4177 = vrot.lane.b32.xlu0 %v1317, 80
  %v4178 = vpop.permute.xlu0 %4177
  %4179 = vrot.lane.b32.xlu0 %v1320, 80
  %v4180 = vpop.permute.xlu0 %4179
  %4181 = vrot.lane.b32.xlu0 %v1323, 80
  %v4182 = vpop.permute.xlu0 %4181
  %4183 = vrot.lane.b32.xlu0 %v1326, 80
  %v4184 = vpop.permute.xlu0 %4183
  %4185 = vrot.lane.b32.xlu0 %v1329, 80
  %v4186 = vpop.permute.xlu0 %4185
  %4187 = vrot.lane.b32.xlu0 %v1332, 80
  %v4188 = vpop.permute.xlu0 %4187
  %4189 = vrot.lane.b32.xlu0 %v1335, 80
  %v4190 = vpop.permute.xlu0 %4189
  %4191 = vrot.lane.b32.xlu0 %v1338, 80
  %v4192 = vpop.permute.xlu0 %4191
  %4193 = vrot.lane.b32.xlu0 %v1341, 80
  %v4194 = vpop.permute.xlu0 %4193
  %4195 = vrot.lane.b32.xlu0 %v1344, 80
  %v4196 = vpop.permute.xlu0 %4195
  %4197 = vrot.lane.b32.xlu0 %v1347, 80
  %v4198 = vpop.permute.xlu0 %4197
  %4199 = vrot.lane.b32.xlu0 %v1350, 80
  %v4200 = vpop.permute.xlu0 %4199
  %4201 = vrot.lane.b32.xlu0 %v1361, 80
  %v4202 = vpop.permute.xlu0 %4201
  %4203 = vrot.lane.b32.xlu0 %v1364, 80
  %v4204 = vpop.permute.xlu0 %4203
  %4205 = vrot.lane.b32.xlu0 %v1367, 80
  %v4206 = vpop.permute.xlu0 %4205
  %4207 = vrot.lane.b32.xlu0 %v1370, 80
  %v4208 = vpop.permute.xlu0 %4207
  %4209 = vrot.lane.b32.xlu0 %v1373, 80
  %v4210 = vpop.permute.xlu0 %4209
  %4211 = vrot.lane.b32.xlu0 %v1376, 80
  %v4212 = vpop.permute.xlu0 %4211
  %4213 = vrot.lane.b32.xlu0 %v1379, 80
  %v4214 = vpop.permute.xlu0 %4213
  %4215 = vrot.lane.b32.xlu0 %v1382, 80
  %v4216 = vpop.permute.xlu0 %4215
  %4217 = vrot.lane.b32.xlu0 %v1385, 80
  %v4218 = vpop.permute.xlu0 %4217
  %4219 = vrot.lane.b32.xlu0 %v1388, 80
  %v4220 = vpop.permute.xlu0 %4219
  %4221 = vrot.lane.b32.xlu0 %v1391, 80
  %v4222 = vpop.permute.xlu0 %4221
  %4223 = vrot.lane.b32.xlu0 %v1394, 80
  %v4224 = vpop.permute.xlu0 %4223
  %4225 = vrot.lane.b32.xlu0 %v1397, 80
  %v4226 = vpop.permute.xlu0 %4225
  %4227 = vrot.lane.b32.xlu0 %v1408, 80
  %v4228 = vpop.permute.xlu0 %4227
  %4229 = vrot.lane.b32.xlu0 %v1411, 80
  %v4230 = vpop.permute.xlu0 %4229
  %4231 = vrot.lane.b32.xlu0 %v1414, 80
  %v4232 = vpop.permute.xlu0 %4231
  %4233 = vrot.lane.b32.xlu0 %v1417, 80
  %v4234 = vpop.permute.xlu0 %4233
  %4235 = vrot.lane.b32.xlu0 %v1420, 80
  %v4236 = vpop.permute.xlu0 %4235
  %4237 = vrot.lane.b32.xlu0 %v1423, 80
  %v4238 = vpop.permute.xlu0 %4237
  %4239 = vrot.lane.b32.xlu0 %v1426, 80
  %v4240 = vpop.permute.xlu0 %4239
  %4241 = vrot.lane.b32.xlu0 %v1429, 80
  %v4242 = vpop.permute.xlu0 %4241
  %4243 = vrot.lane.b32.xlu0 %v1432, 80
  %v4244 = vpop.permute.xlu0 %4243
  %4245 = vrot.lane.b32.xlu0 %v1435, 80
  %v4246 = vpop.permute.xlu0 %4245
  %4247 = vrot.lane.b32.xlu0 %v1438, 80
  %v4248 = vpop.permute.xlu0 %4247
  %4249 = vrot.lane.b32.xlu0 %v1441, 80
  %v4250 = vpop.permute.xlu0 %4249
  %4251 = vrot.lane.b32.xlu0 %v1444, 80
  %v4252 = vpop.permute.xlu0 %4251
  %4253 = vrot.lane.b32.xlu0 %v1455, 80
  %v4254 = vpop.permute.xlu0 %4253
  %4255 = vrot.lane.b32.xlu0 %v1458, 80
  %v4256 = vpop.permute.xlu0 %4255
  %4257 = vrot.lane.b32.xlu0 %v1461, 80
  %v4258 = vpop.permute.xlu0 %4257
  %4259 = vrot.lane.b32.xlu0 %v1464, 80
  %v4260 = vpop.permute.xlu0 %4259
  %4261 = vrot.lane.b32.xlu0 %v1467, 80
  %v4262 = vpop.permute.xlu0 %4261
  %4263 = vrot.lane.b32.xlu0 %v1470, 80
  %v4264 = vpop.permute.xlu0 %4263
  %4265 = vrot.lane.b32.xlu0 %v1473, 80
  %v4266 = vpop.permute.xlu0 %4265
  %4267 = vrot.lane.b32.xlu0 %v1476, 80
  %v4268 = vpop.permute.xlu0 %4267
  %4269 = vrot.lane.b32.xlu0 %v1479, 80
  %v4270 = vpop.permute.xlu0 %4269
  %4271 = vrot.lane.b32.xlu0 %v1482, 80
  %v4272 = vpop.permute.xlu0 %4271
  %4273 = vrot.lane.b32.xlu0 %v1485, 80
  %v4274 = vpop.permute.xlu0 %4273
  %4275 = vrot.lane.b32.xlu0 %v1488, 80
  %v4276 = vpop.permute.xlu0 %4275
  %4277 = vrot.lane.b32.xlu0 %v1491, 80
  %v4278 = vpop.permute.xlu0 %4277
  %4279 = vrot.lane.b32.xlu0 %v1502, 80
  %v4280 = vpop.permute.xlu0 %4279
  %4281 = vrot.lane.b32.xlu0 %v1505, 80
  %v4282 = vpop.permute.xlu0 %4281
  %4283 = vrot.lane.b32.xlu0 %v1508, 80
  %v4284 = vpop.permute.xlu0 %4283
  %4285 = vrot.lane.b32.xlu0 %v1511, 80
  %v4286 = vpop.permute.xlu0 %4285
  %4287 = vrot.lane.b32.xlu0 %v1514, 80
  %v4288 = vpop.permute.xlu0 %4287
  %4289 = vrot.lane.b32.xlu0 %v1517, 80
  %v4290 = vpop.permute.xlu0 %4289
  %4291 = vrot.lane.b32.xlu0 %v1520, 80
  %v4292 = vpop.permute.xlu0 %4291
  %4293 = vrot.lane.b32.xlu0 %v1523, 80
  %v4294 = vpop.permute.xlu0 %4293
  %4295 = vrot.lane.b32.xlu0 %v1526, 80
  %v4296 = vpop.permute.xlu0 %4295
  %4297 = vrot.lane.b32.xlu0 %v1529, 80
  %v4298 = vpop.permute.xlu0 %4297
  %4299 = vrot.lane.b32.xlu0 %v1532, 80
  %v4300 = vpop.permute.xlu0 %4299
  %4301 = vrot.lane.b32.xlu0 %v1535, 80
  %v4302 = vpop.permute.xlu0 %4301
  %4303 = vrot.lane.b32.xlu0 %v1538, 80
  %v4304 = vpop.permute.xlu0 %4303
  %4305 = vrot.lane.b32.xlu0 %v1549, 80
  %v4306 = vpop.permute.xlu0 %4305
  %4307 = vrot.lane.b32.xlu0 %v1552, 80
  %v4308 = vpop.permute.xlu0 %4307
  %4309 = vrot.lane.b32.xlu0 %v1555, 80
  %v4310 = vpop.permute.xlu0 %4309
  %4311 = vrot.lane.b32.xlu0 %v1558, 80
  %v4312 = vpop.permute.xlu0 %4311
  %4313 = vrot.lane.b32.xlu0 %v1561, 80
  %v4314 = vpop.permute.xlu0 %4313
  %4315 = vrot.lane.b32.xlu0 %v1564, 80
  %v4316 = vpop.permute.xlu0 %4315
  %4317 = vrot.lane.b32.xlu0 %v1567, 80
  %v4318 = vpop.permute.xlu0 %4317
  %4319 = vrot.lane.b32.xlu0 %v1570, 80
  %v4320 = vpop.permute.xlu0 %4319
  %4321 = vrot.lane.b32.xlu0 %v1573, 80
  %v4322 = vpop.permute.xlu0 %4321
  %4323 = vrot.lane.b32.xlu0 %v1576, 80
  %v4324 = vpop.permute.xlu0 %4323
  %4325 = vrot.lane.b32.xlu0 %v1579, 80
  %v4326 = vpop.permute.xlu0 %4325
  %4327 = vrot.lane.b32.xlu0 %v1582, 80
  %v4328 = vpop.permute.xlu0 %4327
  %4329 = vrot.lane.b32.xlu0 %v1585, 80
  %v4330 = vpop.permute.xlu0 %4329
  %4331 = vrot.lane.b32.xlu0 %v1596, 80
  %v4332 = vpop.permute.xlu0 %4331
  %4333 = vrot.lane.b32.xlu0 %v1599, 80
  %v4334 = vpop.permute.xlu0 %4333
  %4335 = vrot.lane.b32.xlu0 %v1602, 80
  %v4336 = vpop.permute.xlu0 %4335
  %4337 = vrot.lane.b32.xlu0 %v1605, 80
  %v4338 = vpop.permute.xlu0 %4337
  %4339 = vrot.lane.b32.xlu0 %v1608, 80
  %v4340 = vpop.permute.xlu0 %4339
  %4341 = vrot.lane.b32.xlu0 %v1611, 80
  %v4342 = vpop.permute.xlu0 %4341
  %4343 = vrot.lane.b32.xlu0 %v1614, 80
  %v4344 = vpop.permute.xlu0 %4343
  %4345 = vrot.lane.b32.xlu0 %v1617, 80
  %v4346 = vpop.permute.xlu0 %4345
  %4347 = vrot.lane.b32.xlu0 %v1620, 80
  %v4348 = vpop.permute.xlu0 %4347
  %4349 = vrot.lane.b32.xlu0 %v1623, 80
  %v4350 = vpop.permute.xlu0 %4349
  %4351 = vrot.lane.b32.xlu0 %v1626, 80
  %v4352 = vpop.permute.xlu0 %4351
  %4353 = vrot.lane.b32.xlu0 %v1629, 80
  %v4354 = vpop.permute.xlu0 %4353
  %4355 = vrot.lane.b32.xlu0 %v1632, 80
  %v4356 = vpop.permute.xlu0 %4355
  %4357 = vrot.lane.b32.xlu0 %v1643, 80
  %v4358 = vpop.permute.xlu0 %4357
  %4359 = vrot.lane.b32.xlu0 %v1646, 80
  %v4360 = vpop.permute.xlu0 %4359
  %4361 = vrot.lane.b32.xlu0 %v1649, 80
  %v4362 = vpop.permute.xlu0 %4361
  %4363 = vrot.lane.b32.xlu0 %v1652, 80
  %v4364 = vpop.permute.xlu0 %4363
  %4365 = vrot.lane.b32.xlu0 %v1655, 80
  %v4366 = vpop.permute.xlu0 %4365
  %4367 = vrot.lane.b32.xlu0 %v1658, 80
  %v4368 = vpop.permute.xlu0 %4367
  %4369 = vrot.lane.b32.xlu0 %v1661, 80
  %v4370 = vpop.permute.xlu0 %4369
  %4371 = vrot.lane.b32.xlu0 %v1664, 80
  %v4372 = vpop.permute.xlu0 %4371
  %4373 = vrot.lane.b32.xlu0 %v1667, 80
  %v4374 = vpop.permute.xlu0 %4373
  %4375 = vrot.lane.b32.xlu0 %v1670, 80
  %v4376 = vpop.permute.xlu0 %4375
  %4377 = vrot.lane.b32.xlu0 %v1673, 80
  %v4378 = vpop.permute.xlu0 %4377
  %4379 = vrot.lane.b32.xlu0 %v1676, 80
  %v4380 = vpop.permute.xlu0 %4379
  %4381 = vrot.lane.b32.xlu0 %v1679, 80
  %v4382 = vpop.permute.xlu0 %4381
  %4383 = vrot.lane.b32.xlu0 %v1690, 80
  %v4384 = vpop.permute.xlu0 %4383
  %4385 = vrot.lane.b32.xlu0 %v1693, 80
  %v4386 = vpop.permute.xlu0 %4385
  %4387 = vrot.lane.b32.xlu0 %v1696, 80
  %v4388 = vpop.permute.xlu0 %4387
  %4389 = vrot.lane.b32.xlu0 %v1699, 80
  %v4390 = vpop.permute.xlu0 %4389
  %4391 = vrot.lane.b32.xlu0 %v1702, 80
  %v4392 = vpop.permute.xlu0 %4391
  %4393 = vrot.lane.b32.xlu0 %v1705, 80
  %v4394 = vpop.permute.xlu0 %4393
  %4395 = vrot.lane.b32.xlu0 %v1708, 80
  %v4396 = vpop.permute.xlu0 %4395
  %4397 = vrot.lane.b32.xlu0 %v1711, 80
  %v4398 = vpop.permute.xlu0 %4397
  %4399 = vrot.lane.b32.xlu0 %v1714, 80
  %v4400 = vpop.permute.xlu0 %4399
  %4401 = vrot.lane.b32.xlu0 %v1717, 80
  %v4402 = vpop.permute.xlu0 %4401
  %4403 = vrot.lane.b32.xlu0 %v1720, 80
  %v4404 = vpop.permute.xlu0 %4403
  %4405 = vrot.lane.b32.xlu0 %v1723, 80
  %v4406 = vpop.permute.xlu0 %4405
  %4407 = vrot.lane.b32.xlu0 %v1726, 80
  %v4408 = vpop.permute.xlu0 %4407
  %v4578 = vadd.f32 %v3877, %v4072
  %v4579 = vadd.f32 %v3878, %v4074
  %v4580 = vadd.f32 %v3879, %v4076
  %v4581 = vadd.f32 %v3880, %v4078
  %v4582 = vadd.f32 %v3881, %v4080
  %v4583 = vadd.f32 %v3882, %v4082
  %v4584 = vadd.f32 %v3883, %v4084
  %v4585 = vadd.f32 %v3884, %v4086
  %v4586 = vadd.f32 %v3885, %v4088
  %v4587 = vadd.f32 %v3886, %v4090
  %v4588 = vadd.f32 %v3887, %v4092
  %v4589 = vadd.f32 %v3888, %v4094
  %v4590 = vadd.f32 %v3889, %v4096
  %v4591 = vadd.f32 %v3890, %v4098
  %v4592 = vadd.f32 %v3891, %v4100
  %v4593 = vadd.f32 %v3892, %v4102
  %v4594 = vadd.f32 %v3893, %v4104
  %v4595 = vadd.f32 %v3894, %v4106
  %v4596 = vadd.f32 %v3895, %v4108
  %v4597 = vadd.f32 %v3896, %v4110
  %v4598 = vadd.f32 %v3897, %v4112
  %v4599 = vadd.f32 %v3898, %v4114
  %v4600 = vadd.f32 %v3899, %v4116
  %v4601 = vadd.f32 %v3900, %v4118
  %v4602 = vadd.f32 %v3901, %v4120
  %v4603 = vadd.f32 %v3902, %v4122
  %v4604 = vadd.f32 %v3903, %v4124
  %v4605 = vadd.f32 %v3904, %v4126
  %v4606 = vadd.f32 %v3905, %v4128
  %v4607 = vadd.f32 %v3906, %v4130
  %v4608 = vadd.f32 %v3907, %v4132
  %v4609 = vadd.f32 %v3908, %v4134
  %v4610 = vadd.f32 %v3909, %v4136
  %v4611 = vadd.f32 %v3910, %v4138
  %v4612 = vadd.f32 %v3911, %v4140
  %v4613 = vadd.f32 %v3912, %v4142
  %v4614 = vadd.f32 %v3913, %v4144
  %v4615 = vadd.f32 %v3914, %v4146
  %v4616 = vadd.f32 %v3915, %v4148
  %v4617 = vadd.f32 %v3916, %v4150
  %v4618 = vadd.f32 %v3917, %v4152
  %v4619 = vadd.f32 %v3918, %v4154
  %v4620 = vadd.f32 %v3919, %v4156
  %v4621 = vadd.f32 %v3920, %v4158
  %v4622 = vadd.f32 %v3921, %v4160
  %v4623 = vadd.f32 %v3922, %v4162
  %v4624 = vadd.f32 %v3923, %v4164
  %v4625 = vadd.f32 %v3924, %v4166
  %v4626 = vadd.f32 %v3925, %v4168
  %v4627 = vadd.f32 %v3926, %v4170
  %v4628 = vadd.f32 %v3927, %v4172
  %v4629 = vadd.f32 %v3928, %v4174
  %v4630 = vadd.f32 %v3929, %v4176
  %v4631 = vadd.f32 %v3930, %v4178
  %v4632 = vadd.f32 %v3931, %v4180
  %v4633 = vadd.f32 %v3932, %v4182
  %v4634 = vadd.f32 %v3933, %v4184
  %v4635 = vadd.f32 %v3934, %v4186
  %v4636 = vadd.f32 %v3935, %v4188
  %v4637 = vadd.f32 %v3936, %v4190
  %v4638 = vadd.f32 %v3937, %v4192
  %v4639 = vadd.f32 %v3938, %v4194
  %v4640 = vadd.f32 %v3939, %v4196
  %v4641 = vadd.f32 %v3940, %v4198
  %v4642 = vadd.f32 %v3941, %v4200
  %v4643 = vadd.f32 %v3942, %v4202
  %v4644 = vadd.f32 %v3943, %v4204
  %v4645 = vadd.f32 %v3944, %v4206
  %v4646 = vadd.f32 %v3945, %v4208
  %v4647 = vadd.f32 %v3946, %v4210
  %v4648 = vadd.f32 %v3947, %v4212
  %v4649 = vadd.f32 %v3948, %v4214
  %v4650 = vadd.f32 %v3949, %v4216
  %v4651 = vadd.f32 %v3950, %v4218
  %v4652 = vadd.f32 %v3951, %v4220
  %v4653 = vadd.f32 %v3952, %v4222
  %v4654 = vadd.f32 %v3953, %v4224
  %v4655 = vadd.f32 %v3954, %v4226
  %v4656 = vadd.f32 %v3955, %v4228
  %v4657 = vadd.f32 %v3956, %v4230
  %v4658 = vadd.f32 %v3957, %v4232
  %v4659 = vadd.f32 %v3958, %v4234
  %v4660 = vadd.f32 %v3959, %v4236
  %v4661 = vadd.f32 %v3960, %v4238
  %v4662 = vadd.f32 %v3961, %v4240
  %v4663 = vadd.f32 %v3962, %v4242
  %v4664 = vadd.f32 %v3963, %v4244
  %v4665 = vadd.f32 %v3964, %v4246
  %v4666 = vadd.f32 %v3965, %v4248
  %v4667 = vadd.f32 %v3966, %v4250
  %v4668 = vadd.f32 %v3967, %v4252
  %v4669 = vadd.f32 %v3968, %v4254
  %v4670 = vadd.f32 %v3969, %v4256
  %v4671 = vadd.f32 %v3970, %v4258
  %v4672 = vadd.f32 %v3971, %v4260
  %v4673 = vadd.f32 %v3972, %v4262
  %v4674 = vadd.f32 %v3973, %v4264
  %v4675 = vadd.f32 %v3974, %v4266
  %v4676 = vadd.f32 %v3975, %v4268
  %v4677 = vadd.f32 %v3976, %v4270
  %v4678 = vadd.f32 %v3977, %v4272
  %v4679 = vadd.f32 %v3978, %v4274
  %v4680 = vadd.f32 %v3979, %v4276
  %v4681 = vadd.f32 %v3980, %v4278
  %v4682 = vadd.f32 %v3981, %v4280
  %v4683 = vadd.f32 %v3982, %v4282
  %v4684 = vadd.f32 %v3983, %v4284
  %v4685 = vadd.f32 %v3984, %v4286
  %v4686 = vadd.f32 %v3985, %v4288
  %v4687 = vadd.f32 %v3986, %v4290
  %v4688 = vadd.f32 %v3987, %v4292
  %v4689 = vadd.f32 %v3988, %v4294
  %v4690 = vadd.f32 %v3989, %v4296
  %v4691 = vadd.f32 %v3990, %v4298
  %v4692 = vadd.f32 %v3991, %v4300
  %v4693 = vadd.f32 %v3992, %v4302
  %v4694 = vadd.f32 %v3993, %v4304
  %v4695 = vadd.f32 %v3994, %v4306
  %v4696 = vadd.f32 %v3995, %v4308
  %v4697 = vadd.f32 %v3996, %v4310
  %v4698 = vadd.f32 %v3997, %v4312
  %v4699 = vadd.f32 %v3998, %v4314
  %v4700 = vadd.f32 %v3999, %v4316
  %v4701 = vadd.f32 %v4000, %v4318
  %v4702 = vadd.f32 %v4001, %v4320
  %v4703 = vadd.f32 %v4002, %v4322
  %v4704 = vadd.f32 %v4003, %v4324
  %v4705 = vadd.f32 %v4004, %v4326
  %v4706 = vadd.f32 %v4005, %v4328
  %v4707 = vadd.f32 %v4006, %v4330
  %v4708 = vadd.f32 %v4007, %v4332
  %v4709 = vadd.f32 %v4008, %v4334
  %v4710 = vadd.f32 %v4009, %v4336
  %v4711 = vadd.f32 %v4010, %v4338
  %v4712 = vadd.f32 %v4011, %v4340
  %v4713 = vadd.f32 %v4012, %v4342
  %v4714 = vadd.f32 %v4013, %v4344
  %v4715 = vadd.f32 %v4014, %v4346
  %v4716 = vadd.f32 %v4015, %v4348
  %v4717 = vadd.f32 %v4016, %v4350
  %v4718 = vadd.f32 %v4017, %v4352
  %v4719 = vadd.f32 %v4018, %v4354
  %v4720 = vadd.f32 %v4019, %v4356
  %v4721 = vadd.f32 %v4020, %v4358
  %v4722 = vadd.f32 %v4021, %v4360
  %v4723 = vadd.f32 %v4022, %v4362
  %v4724 = vadd.f32 %v4023, %v4364
  %v4725 = vadd.f32 %v4024, %v4366
  %v4726 = vadd.f32 %v4025, %v4368
  %v4727 = vadd.f32 %v4026, %v4370
  %v4728 = vadd.f32 %v4027, %v4372
  %v4729 = vadd.f32 %v4028, %v4374
  %v4730 = vadd.f32 %v4029, %v4376
  %v4731 = vadd.f32 %v4030, %v4378
  %v4732 = vadd.f32 %v4031, %v4380
  %v4733 = vadd.f32 %v4032, %v4382
  %v4734 = vadd.f32 %v4033, %v4384
  %v4735 = vadd.f32 %v4034, %v4386
  %v4736 = vadd.f32 %v4035, %v4388
  %v4737 = vadd.f32 %v4036, %v4390
  %v4738 = vadd.f32 %v4037, %v4392
  %v4739 = vadd.f32 %v4038, %v4394
  %v4740 = vadd.f32 %v4039, %v4396
  %v4741 = vadd.f32 %v4040, %v4398
  %v4742 = vadd.f32 %v4041, %v4400
  %v4743 = vadd.f32 %v4042, %v4402
  %v4744 = vadd.f32 %v4043, %v4404
  %v4745 = vadd.f32 %v4044, %v4406
  %v4746 = vadd.f32 %v4045, %v4408
  %4748 = vrot.lane.b32.xlu0 %v1129, 64
  %v4749 = vpop.permute.xlu0 %4748
  %4750 = vrot.lane.b32.xlu0 %v1132, 64
  %v4751 = vpop.permute.xlu0 %4750
  %4752 = vrot.lane.b32.xlu0 %v1135, 64
  %v4753 = vpop.permute.xlu0 %4752
  %4754 = vrot.lane.b32.xlu0 %v1138, 64
  %v4755 = vpop.permute.xlu0 %4754
  %4756 = vrot.lane.b32.xlu0 %v1141, 64
  %v4757 = vpop.permute.xlu0 %4756
  %4758 = vrot.lane.b32.xlu0 %v1144, 64
  %v4759 = vpop.permute.xlu0 %4758
  %4760 = vrot.lane.b32.xlu0 %v1147, 64
  %v4761 = vpop.permute.xlu0 %4760
  %4762 = vrot.lane.b32.xlu0 %v1150, 64
  %v4763 = vpop.permute.xlu0 %4762
  %4764 = vrot.lane.b32.xlu0 %v1153, 64
  %v4765 = vpop.permute.xlu0 %4764
  %4766 = vrot.lane.b32.xlu0 %v1156, 64
  %v4767 = vpop.permute.xlu0 %4766
  %4768 = vrot.lane.b32.xlu0 %v1159, 64
  %v4769 = vpop.permute.xlu0 %4768
  %4770 = vrot.lane.b32.xlu0 %v1162, 64
  %v4771 = vpop.permute.xlu0 %4770
  %4772 = vrot.lane.b32.xlu0 %v1165, 64
  %v4773 = vpop.permute.xlu0 %4772
  %4774 = vrot.lane.b32.xlu0 %v1176, 64
  %v4775 = vpop.permute.xlu0 %4774
  %4776 = vrot.lane.b32.xlu0 %v1179, 64
  %v4777 = vpop.permute.xlu0 %4776
  %4778 = vrot.lane.b32.xlu0 %v1182, 64
  %v4779 = vpop.permute.xlu0 %4778
  %4780 = vrot.lane.b32.xlu0 %v1185, 64
  %v4781 = vpop.permute.xlu0 %4780
  %4782 = vrot.lane.b32.xlu0 %v1188, 64
  %v4783 = vpop.permute.xlu0 %4782
  %4784 = vrot.lane.b32.xlu0 %v1191, 64
  %v4785 = vpop.permute.xlu0 %4784
  %4786 = vrot.lane.b32.xlu0 %v1194, 64
  %v4787 = vpop.permute.xlu0 %4786
  %4788 = vrot.lane.b32.xlu0 %v1197, 64
  %v4789 = vpop.permute.xlu0 %4788
  %4790 = vrot.lane.b32.xlu0 %v1200, 64
  %v4791 = vpop.permute.xlu0 %4790
  %4792 = vrot.lane.b32.xlu0 %v1203, 64
  %v4793 = vpop.permute.xlu0 %4792
  %4794 = vrot.lane.b32.xlu0 %v1206, 64
  %v4795 = vpop.permute.xlu0 %4794
  %4796 = vrot.lane.b32.xlu0 %v1209, 64
  %v4797 = vpop.permute.xlu0 %4796
  %4798 = vrot.lane.b32.xlu0 %v1212, 64
  %v4799 = vpop.permute.xlu0 %4798
  %4800 = vrot.lane.b32.xlu0 %v1223, 64
  %v4801 = vpop.permute.xlu0 %4800
  %4802 = vrot.lane.b32.xlu0 %v1226, 64
  %v4803 = vpop.permute.xlu0 %4802
  %4804 = vrot.lane.b32.xlu0 %v1229, 64
  %v4805 = vpop.permute.xlu0 %4804
  %4806 = vrot.lane.b32.xlu0 %v1232, 64
  %v4807 = vpop.permute.xlu0 %4806
  %4808 = vrot.lane.b32.xlu0 %v1235, 64
  %v4809 = vpop.permute.xlu0 %4808
  %4810 = vrot.lane.b32.xlu0 %v1238, 64
  %v4811 = vpop.permute.xlu0 %4810
  %4812 = vrot.lane.b32.xlu0 %v1241, 64
  %v4813 = vpop.permute.xlu0 %4812
  %4814 = vrot.lane.b32.xlu0 %v1244, 64
  %v4815 = vpop.permute.xlu0 %4814
  %4816 = vrot.lane.b32.xlu0 %v1247, 64
  %v4817 = vpop.permute.xlu0 %4816
  %4818 = vrot.lane.b32.xlu0 %v1250, 64
  %v4819 = vpop.permute.xlu0 %4818
  %4820 = vrot.lane.b32.xlu0 %v1253, 64
  %v4821 = vpop.permute.xlu0 %4820
  %4822 = vrot.lane.b32.xlu0 %v1256, 64
  %v4823 = vpop.permute.xlu0 %4822
  %4824 = vrot.lane.b32.xlu0 %v1259, 64
  %v4825 = vpop.permute.xlu0 %4824
  %4826 = vrot.lane.b32.xlu0 %v1270, 64
  %v4827 = vpop.permute.xlu0 %4826
  %4828 = vrot.lane.b32.xlu0 %v1273, 64
  %v4829 = vpop.permute.xlu0 %4828
  %4830 = vrot.lane.b32.xlu0 %v1276, 64
  %v4831 = vpop.permute.xlu0 %4830
  %4832 = vrot.lane.b32.xlu0 %v1279, 64
  %v4833 = vpop.permute.xlu0 %4832
  %4834 = vrot.lane.b32.xlu0 %v1282, 64
  %v4835 = vpop.permute.xlu0 %4834
  %4836 = vrot.lane.b32.xlu0 %v1285, 64
  %v4837 = vpop.permute.xlu0 %4836
  %4838 = vrot.lane.b32.xlu0 %v1288, 64
  %v4839 = vpop.permute.xlu0 %4838
  %4840 = vrot.lane.b32.xlu0 %v1291, 64
  %v4841 = vpop.permute.xlu0 %4840
  %4842 = vrot.lane.b32.xlu0 %v1294, 64
  %v4843 = vpop.permute.xlu0 %4842
  %4844 = vrot.lane.b32.xlu0 %v1297, 64
  %v4845 = vpop.permute.xlu0 %4844
  %4846 = vrot.lane.b32.xlu0 %v1300, 64
  %v4847 = vpop.permute.xlu0 %4846
  %4848 = vrot.lane.b32.xlu0 %v1303, 64
  %v4849 = vpop.permute.xlu0 %4848
  %4850 = vrot.lane.b32.xlu0 %v1306, 64
  %v4851 = vpop.permute.xlu0 %4850
  %4852 = vrot.lane.b32.xlu0 %v1317, 64
  %v4853 = vpop.permute.xlu0 %4852
  %4854 = vrot.lane.b32.xlu0 %v1320, 64
  %v4855 = vpop.permute.xlu0 %4854
  %4856 = vrot.lane.b32.xlu0 %v1323, 64
  %v4857 = vpop.permute.xlu0 %4856
  %4858 = vrot.lane.b32.xlu0 %v1326, 64
  %v4859 = vpop.permute.xlu0 %4858
  %4860 = vrot.lane.b32.xlu0 %v1329, 64
  %v4861 = vpop.permute.xlu0 %4860
  %4862 = vrot.lane.b32.xlu0 %v1332, 64
  %v4863 = vpop.permute.xlu0 %4862
  %4864 = vrot.lane.b32.xlu0 %v1335, 64
  %v4865 = vpop.permute.xlu0 %4864
  %4866 = vrot.lane.b32.xlu0 %v1338, 64
  %v4867 = vpop.permute.xlu0 %4866
  %4868 = vrot.lane.b32.xlu0 %v1341, 64
  %v4869 = vpop.permute.xlu0 %4868
  %4870 = vrot.lane.b32.xlu0 %v1344, 64
  %v4871 = vpop.permute.xlu0 %4870
  %4872 = vrot.lane.b32.xlu0 %v1347, 64
  %v4873 = vpop.permute.xlu0 %4872
  %4874 = vrot.lane.b32.xlu0 %v1350, 64
  %v4875 = vpop.permute.xlu0 %4874
  %4876 = vrot.lane.b32.xlu0 %v1353, 64
  %v4877 = vpop.permute.xlu0 %4876
  %4878 = vrot.lane.b32.xlu0 %v1364, 64
  %v4879 = vpop.permute.xlu0 %4878
  %4880 = vrot.lane.b32.xlu0 %v1367, 64
  %v4881 = vpop.permute.xlu0 %4880
  %4882 = vrot.lane.b32.xlu0 %v1370, 64
  %v4883 = vpop.permute.xlu0 %4882
  %4884 = vrot.lane.b32.xlu0 %v1373, 64
  %v4885 = vpop.permute.xlu0 %4884
  %4886 = vrot.lane.b32.xlu0 %v1376, 64
  %v4887 = vpop.permute.xlu0 %4886
  %4888 = vrot.lane.b32.xlu0 %v1379, 64
  %v4889 = vpop.permute.xlu0 %4888
  %4890 = vrot.lane.b32.xlu0 %v1382, 64
  %v4891 = vpop.permute.xlu0 %4890
  %4892 = vrot.lane.b32.xlu0 %v1385, 64
  %v4893 = vpop.permute.xlu0 %4892
  %4894 = vrot.lane.b32.xlu0 %v1388, 64
  %v4895 = vpop.permute.xlu0 %4894
  %4896 = vrot.lane.b32.xlu0 %v1391, 64
  %v4897 = vpop.permute.xlu0 %4896
  %4898 = vrot.lane.b32.xlu0 %v1394, 64
  %v4899 = vpop.permute.xlu0 %4898
  %4900 = vrot.lane.b32.xlu0 %v1397, 64
  %v4901 = vpop.permute.xlu0 %4900
  %4902 = vrot.lane.b32.xlu0 %v1400, 64
  %v4903 = vpop.permute.xlu0 %4902
  %4904 = vrot.lane.b32.xlu0 %v1411, 64
  %v4905 = vpop.permute.xlu0 %4904
  %4906 = vrot.lane.b32.xlu0 %v1414, 64
  %v4907 = vpop.permute.xlu0 %4906
  %4908 = vrot.lane.b32.xlu0 %v1417, 64
  %v4909 = vpop.permute.xlu0 %4908
  %4910 = vrot.lane.b32.xlu0 %v1420, 64
  %v4911 = vpop.permute.xlu0 %4910
  %4912 = vrot.lane.b32.xlu0 %v1423, 64
  %v4913 = vpop.permute.xlu0 %4912
  %4914 = vrot.lane.b32.xlu0 %v1426, 64
  %v4915 = vpop.permute.xlu0 %4914
  %4916 = vrot.lane.b32.xlu0 %v1429, 64
  %v4917 = vpop.permute.xlu0 %4916
  %4918 = vrot.lane.b32.xlu0 %v1432, 64
  %v4919 = vpop.permute.xlu0 %4918
  %4920 = vrot.lane.b32.xlu0 %v1435, 64
  %v4921 = vpop.permute.xlu0 %4920
  %4922 = vrot.lane.b32.xlu0 %v1438, 64
  %v4923 = vpop.permute.xlu0 %4922
  %4924 = vrot.lane.b32.xlu0 %v1441, 64
  %v4925 = vpop.permute.xlu0 %4924
  %4926 = vrot.lane.b32.xlu0 %v1444, 64
  %v4927 = vpop.permute.xlu0 %4926
  %4928 = vrot.lane.b32.xlu0 %v1447, 64
  %v4929 = vpop.permute.xlu0 %4928
  %4930 = vrot.lane.b32.xlu0 %v1458, 64
  %v4931 = vpop.permute.xlu0 %4930
  %4932 = vrot.lane.b32.xlu0 %v1461, 64
  %v4933 = vpop.permute.xlu0 %4932
  %4934 = vrot.lane.b32.xlu0 %v1464, 64
  %v4935 = vpop.permute.xlu0 %4934
  %4936 = vrot.lane.b32.xlu0 %v1467, 64
  %v4937 = vpop.permute.xlu0 %4936
  %4938 = vrot.lane.b32.xlu0 %v1470, 64
  %v4939 = vpop.permute.xlu0 %4938
  %4940 = vrot.lane.b32.xlu0 %v1473, 64
  %v4941 = vpop.permute.xlu0 %4940
  %4942 = vrot.lane.b32.xlu0 %v1476, 64
  %v4943 = vpop.permute.xlu0 %4942
  %4944 = vrot.lane.b32.xlu0 %v1479, 64
  %v4945 = vpop.permute.xlu0 %4944
  %4946 = vrot.lane.b32.xlu0 %v1482, 64
  %v4947 = vpop.permute.xlu0 %4946
  %4948 = vrot.lane.b32.xlu0 %v1485, 64
  %v4949 = vpop.permute.xlu0 %4948
  %4950 = vrot.lane.b32.xlu0 %v1488, 64
  %v4951 = vpop.permute.xlu0 %4950
  %4952 = vrot.lane.b32.xlu0 %v1491, 64
  %v4953 = vpop.permute.xlu0 %4952
  %4954 = vrot.lane.b32.xlu0 %v1494, 64
  %v4955 = vpop.permute.xlu0 %4954
  %4956 = vrot.lane.b32.xlu0 %v1505, 64
  %v4957 = vpop.permute.xlu0 %4956
  %4958 = vrot.lane.b32.xlu0 %v1508, 64
  %v4959 = vpop.permute.xlu0 %4958
  %4960 = vrot.lane.b32.xlu0 %v1511, 64
  %v4961 = vpop.permute.xlu0 %4960
  %4962 = vrot.lane.b32.xlu0 %v1514, 64
  %v4963 = vpop.permute.xlu0 %4962
  %4964 = vrot.lane.b32.xlu0 %v1517, 64
  %v4965 = vpop.permute.xlu0 %4964
  %4966 = vrot.lane.b32.xlu0 %v1520, 64
  %v4967 = vpop.permute.xlu0 %4966
  %4968 = vrot.lane.b32.xlu0 %v1523, 64
  %v4969 = vpop.permute.xlu0 %4968
  %4970 = vrot.lane.b32.xlu0 %v1526, 64
  %v4971 = vpop.permute.xlu0 %4970
  %4972 = vrot.lane.b32.xlu0 %v1529, 64
  %v4973 = vpop.permute.xlu0 %4972
  %4974 = vrot.lane.b32.xlu0 %v1532, 64
  %v4975 = vpop.permute.xlu0 %4974
  %4976 = vrot.lane.b32.xlu0 %v1535, 64
  %v4977 = vpop.permute.xlu0 %4976
  %4978 = vrot.lane.b32.xlu0 %v1538, 64
  %v4979 = vpop.permute.xlu0 %4978
  %4980 = vrot.lane.b32.xlu0 %v1541, 64
  %v4981 = vpop.permute.xlu0 %4980
  %4982 = vrot.lane.b32.xlu0 %v1552, 64
  %v4983 = vpop.permute.xlu0 %4982
  %4984 = vrot.lane.b32.xlu0 %v1555, 64
  %v4985 = vpop.permute.xlu0 %4984
  %4986 = vrot.lane.b32.xlu0 %v1558, 64
  %v4987 = vpop.permute.xlu0 %4986
  %4988 = vrot.lane.b32.xlu0 %v1561, 64
  %v4989 = vpop.permute.xlu0 %4988
  %4990 = vrot.lane.b32.xlu0 %v1564, 64
  %v4991 = vpop.permute.xlu0 %4990
  %4992 = vrot.lane.b32.xlu0 %v1567, 64
  %v4993 = vpop.permute.xlu0 %4992
  %4994 = vrot.lane.b32.xlu0 %v1570, 64
  %v4995 = vpop.permute.xlu0 %4994
  %4996 = vrot.lane.b32.xlu0 %v1573, 64
  %v4997 = vpop.permute.xlu0 %4996
  %4998 = vrot.lane.b32.xlu0 %v1576, 64
  %v4999 = vpop.permute.xlu0 %4998
  %5000 = vrot.lane.b32.xlu0 %v1579, 64
  %v5001 = vpop.permute.xlu0 %5000
  %5002 = vrot.lane.b32.xlu0 %v1582, 64
  %v5003 = vpop.permute.xlu0 %5002
  %5004 = vrot.lane.b32.xlu0 %v1585, 64
  %v5005 = vpop.permute.xlu0 %5004
  %5006 = vrot.lane.b32.xlu0 %v1588, 64
  %v5007 = vpop.permute.xlu0 %5006
  %5008 = vrot.lane.b32.xlu0 %v1599, 64
  %v5009 = vpop.permute.xlu0 %5008
  %5010 = vrot.lane.b32.xlu0 %v1602, 64
  %v5011 = vpop.permute.xlu0 %5010
  %5012 = vrot.lane.b32.xlu0 %v1605, 64
  %v5013 = vpop.permute.xlu0 %5012
  %5014 = vrot.lane.b32.xlu0 %v1608, 64
  %v5015 = vpop.permute.xlu0 %5014
  %5016 = vrot.lane.b32.xlu0 %v1611, 64
  %v5017 = vpop.permute.xlu0 %5016
  %5018 = vrot.lane.b32.xlu0 %v1614, 64
  %v5019 = vpop.permute.xlu0 %5018
  %5020 = vrot.lane.b32.xlu0 %v1617, 64
  %v5021 = vpop.permute.xlu0 %5020
  %5022 = vrot.lane.b32.xlu0 %v1620, 64
  %v5023 = vpop.permute.xlu0 %5022
  %5024 = vrot.lane.b32.xlu0 %v1623, 64
  %v5025 = vpop.permute.xlu0 %5024
  %5026 = vrot.lane.b32.xlu0 %v1626, 64
  %v5027 = vpop.permute.xlu0 %5026
  %5028 = vrot.lane.b32.xlu0 %v1629, 64
  %v5029 = vpop.permute.xlu0 %5028
  %5030 = vrot.lane.b32.xlu0 %v1632, 64
  %v5031 = vpop.permute.xlu0 %5030
  %5032 = vrot.lane.b32.xlu0 %v1635, 64
  %v5033 = vpop.permute.xlu0 %5032
  %5034 = vrot.lane.b32.xlu0 %v1646, 64
  %v5035 = vpop.permute.xlu0 %5034
  %5036 = vrot.lane.b32.xlu0 %v1649, 64
  %v5037 = vpop.permute.xlu0 %5036
  %5038 = vrot.lane.b32.xlu0 %v1652, 64
  %v5039 = vpop.permute.xlu0 %5038
  %5040 = vrot.lane.b32.xlu0 %v1655, 64
  %v5041 = vpop.permute.xlu0 %5040
  %5042 = vrot.lane.b32.xlu0 %v1658, 64
  %v5043 = vpop.permute.xlu0 %5042
  %5044 = vrot.lane.b32.xlu0 %v1661, 64
  %v5045 = vpop.permute.xlu0 %5044
  %5046 = vrot.lane.b32.xlu0 %v1664, 64
  %v5047 = vpop.permute.xlu0 %5046
  %5048 = vrot.lane.b32.xlu0 %v1667, 64
  %v5049 = vpop.permute.xlu0 %5048
  %5050 = vrot.lane.b32.xlu0 %v1670, 64
  %v5051 = vpop.permute.xlu0 %5050
  %5052 = vrot.lane.b32.xlu0 %v1673, 64
  %v5053 = vpop.permute.xlu0 %5052
  %5054 = vrot.lane.b32.xlu0 %v1676, 64
  %v5055 = vpop.permute.xlu0 %5054
  %5056 = vrot.lane.b32.xlu0 %v1679, 64
  %v5057 = vpop.permute.xlu0 %5056
  %5058 = vrot.lane.b32.xlu0 %v1682, 64
  %v5059 = vpop.permute.xlu0 %5058
  %5060 = vrot.lane.b32.xlu0 %v1693, 64
  %v5061 = vpop.permute.xlu0 %5060
  %5062 = vrot.lane.b32.xlu0 %v1696, 64
  %v5063 = vpop.permute.xlu0 %5062
  %5064 = vrot.lane.b32.xlu0 %v1699, 64
  %v5065 = vpop.permute.xlu0 %5064
  %5066 = vrot.lane.b32.xlu0 %v1702, 64
  %v5067 = vpop.permute.xlu0 %5066
  %5068 = vrot.lane.b32.xlu0 %v1705, 64
  %v5069 = vpop.permute.xlu0 %5068
  %5070 = vrot.lane.b32.xlu0 %v1708, 64
  %v5071 = vpop.permute.xlu0 %5070
  %5072 = vrot.lane.b32.xlu0 %v1711, 64
  %v5073 = vpop.permute.xlu0 %5072
  %5074 = vrot.lane.b32.xlu0 %v1714, 64
  %v5075 = vpop.permute.xlu0 %5074
  %5076 = vrot.lane.b32.xlu0 %v1717, 64
  %v5077 = vpop.permute.xlu0 %5076
  %5078 = vrot.lane.b32.xlu0 %v1720, 64
  %v5079 = vpop.permute.xlu0 %5078
  %5080 = vrot.lane.b32.xlu0 %v1723, 64
  %v5081 = vpop.permute.xlu0 %5080
  %5082 = vrot.lane.b32.xlu0 %v1726, 64
  %v5083 = vpop.permute.xlu0 %5082
  %5084 = vrot.lane.b32.xlu0 %v1729, 64
  %v5085 = vpop.permute.xlu0 %5084
  %v5255 = vadd.f32 %v4578, %v4749
  %v5256 = vadd.f32 %v4579, %v4751
  %v5257 = vadd.f32 %v4580, %v4753
  %v5258 = vadd.f32 %v4581, %v4755
  %v5259 = vadd.f32 %v4582, %v4757
  %v5260 = vadd.f32 %v4583, %v4759
  %v5261 = vadd.f32 %v4584, %v4761
  %v5262 = vadd.f32 %v4585, %v4763
  %v5263 = vadd.f32 %v4586, %v4765
  %v5264 = vadd.f32 %v4587, %v4767
  %v5265 = vadd.f32 %v4588, %v4769
  %v5266 = vadd.f32 %v4589, %v4771
  %v5267 = vadd.f32 %v4590, %v4773
  %v5268 = vadd.f32 %v4591, %v4775
  %v5269 = vadd.f32 %v4592, %v4777
  %v5270 = vadd.f32 %v4593, %v4779
  %v5271 = vadd.f32 %v4594, %v4781
  %v5272 = vadd.f32 %v4595, %v4783
  %v5273 = vadd.f32 %v4596, %v4785
  %v5274 = vadd.f32 %v4597, %v4787
  %v5275 = vadd.f32 %v4598, %v4789
  %v5276 = vadd.f32 %v4599, %v4791
  %v5277 = vadd.f32 %v4600, %v4793
  %v5278 = vadd.f32 %v4601, %v4795
  %v5279 = vadd.f32 %v4602, %v4797
  %v5280 = vadd.f32 %v4603, %v4799
  %v5281 = vadd.f32 %v4604, %v4801
  %v5282 = vadd.f32 %v4605, %v4803
  %v5283 = vadd.f32 %v4606, %v4805
  %v5284 = vadd.f32 %v4607, %v4807
  %v5285 = vadd.f32 %v4608, %v4809
  %v5286 = vadd.f32 %v4609, %v4811
  %v5287 = vadd.f32 %v4610, %v4813
  %v5288 = vadd.f32 %v4611, %v4815
  %v5289 = vadd.f32 %v4612, %v4817
  %v5290 = vadd.f32 %v4613, %v4819
  %v5291 = vadd.f32 %v4614, %v4821
  %v5292 = vadd.f32 %v4615, %v4823
  %v5293 = vadd.f32 %v4616, %v4825
  %v5294 = vadd.f32 %v4617, %v4827
  %v5295 = vadd.f32 %v4618, %v4829
  %v5296 = vadd.f32 %v4619, %v4831
  %v5297 = vadd.f32 %v4620, %v4833
  %v5298 = vadd.f32 %v4621, %v4835
  %v5299 = vadd.f32 %v4622, %v4837
  %v5300 = vadd.f32 %v4623, %v4839
  %v5301 = vadd.f32 %v4624, %v4841
  %v5302 = vadd.f32 %v4625, %v4843
  %v5303 = vadd.f32 %v4626, %v4845
  %v5304 = vadd.f32 %v4627, %v4847
  %v5305 = vadd.f32 %v4628, %v4849
  %v5306 = vadd.f32 %v4629, %v4851
  %v5307 = vadd.f32 %v4630, %v4853
  %v5308 = vadd.f32 %v4631, %v4855
  %v5309 = vadd.f32 %v4632, %v4857
  %v5310 = vadd.f32 %v4633, %v4859
  %v5311 = vadd.f32 %v4634, %v4861
  %v5312 = vadd.f32 %v4635, %v4863
  %v5313 = vadd.f32 %v4636, %v4865
  %v5314 = vadd.f32 %v4637, %v4867
  %v5315 = vadd.f32 %v4638, %v4869
  %v5316 = vadd.f32 %v4639, %v4871
  %v5317 = vadd.f32 %v4640, %v4873
  %v5318 = vadd.f32 %v4641, %v4875
  %v5319 = vadd.f32 %v4642, %v4877
  %v5320 = vadd.f32 %v4643, %v4879
  %v5321 = vadd.f32 %v4644, %v4881
  %v5322 = vadd.f32 %v4645, %v4883
  %v5323 = vadd.f32 %v4646, %v4885
  %v5324 = vadd.f32 %v4647, %v4887
  %v5325 = vadd.f32 %v4648, %v4889
  %v5326 = vadd.f32 %v4649, %v4891
  %v5327 = vadd.f32 %v4650, %v4893
  %v5328 = vadd.f32 %v4651, %v4895
  %v5329 = vadd.f32 %v4652, %v4897
  %v5330 = vadd.f32 %v4653, %v4899
  %v5331 = vadd.f32 %v4654, %v4901
  %v5332 = vadd.f32 %v4655, %v4903
  %v5333 = vadd.f32 %v4656, %v4905
  %v5334 = vadd.f32 %v4657, %v4907
  %v5335 = vadd.f32 %v4658, %v4909
  %v5336 = vadd.f32 %v4659, %v4911
  %v5337 = vadd.f32 %v4660, %v4913
  %v5338 = vadd.f32 %v4661, %v4915
  %v5339 = vadd.f32 %v4662, %v4917
  %v5340 = vadd.f32 %v4663, %v4919
  %v5341 = vadd.f32 %v4664, %v4921
  %v5342 = vadd.f32 %v4665, %v4923
  %v5343 = vadd.f32 %v4666, %v4925
  %v5344 = vadd.f32 %v4667, %v4927
  %v5345 = vadd.f32 %v4668, %v4929
  %v5346 = vadd.f32 %v4669, %v4931
  %v5347 = vadd.f32 %v4670, %v4933
  %v5348 = vadd.f32 %v4671, %v4935
  %v5349 = vadd.f32 %v4672, %v4937
  %v5350 = vadd.f32 %v4673, %v4939
  %v5351 = vadd.f32 %v4674, %v4941
  %v5352 = vadd.f32 %v4675, %v4943
  %v5353 = vadd.f32 %v4676, %v4945
  %v5354 = vadd.f32 %v4677, %v4947
  %v5355 = vadd.f32 %v4678, %v4949
  %v5356 = vadd.f32 %v4679, %v4951
  %v5357 = vadd.f32 %v4680, %v4953
  %v5358 = vadd.f32 %v4681, %v4955
  %v5359 = vadd.f32 %v4682, %v4957
  %v5360 = vadd.f32 %v4683, %v4959
  %v5361 = vadd.f32 %v4684, %v4961
  %v5362 = vadd.f32 %v4685, %v4963
  %v5363 = vadd.f32 %v4686, %v4965
  %v5364 = vadd.f32 %v4687, %v4967
  %v5365 = vadd.f32 %v4688, %v4969
  %v5366 = vadd.f32 %v4689, %v4971
  %v5367 = vadd.f32 %v4690, %v4973
  %v5368 = vadd.f32 %v4691, %v4975
  %v5369 = vadd.f32 %v4692, %v4977
  %v5370 = vadd.f32 %v4693, %v4979
  %v5371 = vadd.f32 %v4694, %v4981
  %v5372 = vadd.f32 %v4695, %v4983
  %v5373 = vadd.f32 %v4696, %v4985
  %v5374 = vadd.f32 %v4697, %v4987
  %v5375 = vadd.f32 %v4698, %v4989
  %v5376 = vadd.f32 %v4699, %v4991
  %v5377 = vadd.f32 %v4700, %v4993
  %v5378 = vadd.f32 %v4701, %v4995
  %v5379 = vadd.f32 %v4702, %v4997
  %v5380 = vadd.f32 %v4703, %v4999
  %v5381 = vadd.f32 %v4704, %v5001
  %v5382 = vadd.f32 %v4705, %v5003
  %v5383 = vadd.f32 %v4706, %v5005
  %v5384 = vadd.f32 %v4707, %v5007
  %v5385 = vadd.f32 %v4708, %v5009
  %v5386 = vadd.f32 %v4709, %v5011
  %v5387 = vadd.f32 %v4710, %v5013
  %v5388 = vadd.f32 %v4711, %v5015
  %v5389 = vadd.f32 %v4712, %v5017
  %v5390 = vadd.f32 %v4713, %v5019
  %v5391 = vadd.f32 %v4714, %v5021
  %v5392 = vadd.f32 %v4715, %v5023
  %v5393 = vadd.f32 %v4716, %v5025
  %v5394 = vadd.f32 %v4717, %v5027
  %v5395 = vadd.f32 %v4718, %v5029
  %v5396 = vadd.f32 %v4719, %v5031
  %v5397 = vadd.f32 %v4720, %v5033
  %v5398 = vadd.f32 %v4721, %v5035
  %v5399 = vadd.f32 %v4722, %v5037
  %v5400 = vadd.f32 %v4723, %v5039
  %v5401 = vadd.f32 %v4724, %v5041
  %v5402 = vadd.f32 %v4725, %v5043
  %v5403 = vadd.f32 %v4726, %v5045
  %v5404 = vadd.f32 %v4727, %v5047
  %v5405 = vadd.f32 %v4728, %v5049
  %v5406 = vadd.f32 %v4729, %v5051
  %v5407 = vadd.f32 %v4730, %v5053
  %v5408 = vadd.f32 %v4731, %v5055
  %v5409 = vadd.f32 %v4732, %v5057
  %v5410 = vadd.f32 %v4733, %v5059
  %v5411 = vadd.f32 %v4734, %v5061
  %v5412 = vadd.f32 %v4735, %v5063
  %v5413 = vadd.f32 %v4736, %v5065
  %v5414 = vadd.f32 %v4737, %v5067
  %v5415 = vadd.f32 %v4738, %v5069
  %v5416 = vadd.f32 %v4739, %v5071
  %v5417 = vadd.f32 %v4740, %v5073
  %v5418 = vadd.f32 %v4741, %v5075
  %v5419 = vadd.f32 %v4742, %v5077
  %v5420 = vadd.f32 %v4743, %v5079
  %v5421 = vadd.f32 %v4744, %v5081
  %v5422 = vadd.f32 %v4745, %v5083
  %v5423 = vadd.f32 %v4746, %v5085
  %5425 = vrot.lane.b32.xlu0 %v1132, 48
  %v5426 = vpop.permute.xlu0 %5425
  %5427 = vrot.lane.b32.xlu0 %v1135, 48
  %v5428 = vpop.permute.xlu0 %5427
  %5429 = vrot.lane.b32.xlu0 %v1138, 48
  %v5430 = vpop.permute.xlu0 %5429
  %5431 = vrot.lane.b32.xlu0 %v1141, 48
  %v5432 = vpop.permute.xlu0 %5431
  %5433 = vrot.lane.b32.xlu0 %v1144, 48
  %v5434 = vpop.permute.xlu0 %5433
  %5435 = vrot.lane.b32.xlu0 %v1147, 48
  %v5436 = vpop.permute.xlu0 %5435
  %5437 = vrot.lane.b32.xlu0 %v1150, 48
  %v5438 = vpop.permute.xlu0 %5437
  %5439 = vrot.lane.b32.xlu0 %v1153, 48
  %v5440 = vpop.permute.xlu0 %5439
  %5441 = vrot.lane.b32.xlu0 %v1156, 48
  %v5442 = vpop.permute.xlu0 %5441
  %5443 = vrot.lane.b32.xlu0 %v1159, 48
  %v5444 = vpop.permute.xlu0 %5443
  %5445 = vrot.lane.b32.xlu0 %v1162, 48
  %v5446 = vpop.permute.xlu0 %5445
  %5447 = vrot.lane.b32.xlu0 %v1165, 48
  %v5448 = vpop.permute.xlu0 %5447
  %5449 = vrot.lane.b32.xlu0 %v1168, 48
  %v5450 = vpop.permute.xlu0 %5449
  %5451 = vrot.lane.b32.xlu0 %v1179, 48
  %v5452 = vpop.permute.xlu0 %5451
  %5453 = vrot.lane.b32.xlu0 %v1182, 48
  %v5454 = vpop.permute.xlu0 %5453
  %5455 = vrot.lane.b32.xlu0 %v1185, 48
  %v5456 = vpop.permute.xlu0 %5455
  %5457 = vrot.lane.b32.xlu0 %v1188, 48
  %v5458 = vpop.permute.xlu0 %5457
  %5459 = vrot.lane.b32.xlu0 %v1191, 48
  %v5460 = vpop.permute.xlu0 %5459
  %5461 = vrot.lane.b32.xlu0 %v1194, 48
  %v5462 = vpop.permute.xlu0 %5461
  %5463 = vrot.lane.b32.xlu0 %v1197, 48
  %v5464 = vpop.permute.xlu0 %5463
  %5465 = vrot.lane.b32.xlu0 %v1200, 48
  %v5466 = vpop.permute.xlu0 %5465
  %5467 = vrot.lane.b32.xlu0 %v1203, 48
  %v5468 = vpop.permute.xlu0 %5467
  %5469 = vrot.lane.b32.xlu0 %v1206, 48
  %v5470 = vpop.permute.xlu0 %5469
  %5471 = vrot.lane.b32.xlu0 %v1209, 48
  %v5472 = vpop.permute.xlu0 %5471
  %5473 = vrot.lane.b32.xlu0 %v1212, 48
  %v5474 = vpop.permute.xlu0 %5473
  %5475 = vrot.lane.b32.xlu0 %v1215, 48
  %v5476 = vpop.permute.xlu0 %5475
  %5477 = vrot.lane.b32.xlu0 %v1226, 48
  %v5478 = vpop.permute.xlu0 %5477
  %5479 = vrot.lane.b32.xlu0 %v1229, 48
  %v5480 = vpop.permute.xlu0 %5479
  %5481 = vrot.lane.b32.xlu0 %v1232, 48
  %v5482 = vpop.permute.xlu0 %5481
  %5483 = vrot.lane.b32.xlu0 %v1235, 48
  %v5484 = vpop.permute.xlu0 %5483
  %5485 = vrot.lane.b32.xlu0 %v1238, 48
  %v5486 = vpop.permute.xlu0 %5485
  %5487 = vrot.lane.b32.xlu0 %v1241, 48
  %v5488 = vpop.permute.xlu0 %5487
  %5489 = vrot.lane.b32.xlu0 %v1244, 48
  %v5490 = vpop.permute.xlu0 %5489
  %5491 = vrot.lane.b32.xlu0 %v1247, 48
  %v5492 = vpop.permute.xlu0 %5491
  %5493 = vrot.lane.b32.xlu0 %v1250, 48
  %v5494 = vpop.permute.xlu0 %5493
  %5495 = vrot.lane.b32.xlu0 %v1253, 48
  %v5496 = vpop.permute.xlu0 %5495
  %5497 = vrot.lane.b32.xlu0 %v1256, 48
  %v5498 = vpop.permute.xlu0 %5497
  %5499 = vrot.lane.b32.xlu0 %v1259, 48
  %v5500 = vpop.permute.xlu0 %5499
  %5501 = vrot.lane.b32.xlu0 %v1262, 48
  %v5502 = vpop.permute.xlu0 %5501
  %5503 = vrot.lane.b32.xlu0 %v1273, 48
  %v5504 = vpop.permute.xlu0 %5503
  %5505 = vrot.lane.b32.xlu0 %v1276, 48
  %v5506 = vpop.permute.xlu0 %5505
  %5507 = vrot.lane.b32.xlu0 %v1279, 48
  %v5508 = vpop.permute.xlu0 %5507
  %5509 = vrot.lane.b32.xlu0 %v1282, 48
  %v5510 = vpop.permute.xlu0 %5509
  %5511 = vrot.lane.b32.xlu0 %v1285, 48
  %v5512 = vpop.permute.xlu0 %5511
  %5513 = vrot.lane.b32.xlu0 %v1288, 48
  %v5514 = vpop.permute.xlu0 %5513
  %5515 = vrot.lane.b32.xlu0 %v1291, 48
  %v5516 = vpop.permute.xlu0 %5515
  %5517 = vrot.lane.b32.xlu0 %v1294, 48
  %v5518 = vpop.permute.xlu0 %5517
  %5519 = vrot.lane.b32.xlu0 %v1297, 48
  %v5520 = vpop.permute.xlu0 %5519
  %5521 = vrot.lane.b32.xlu0 %v1300, 48
  %v5522 = vpop.permute.xlu0 %5521
  %5523 = vrot.lane.b32.xlu0 %v1303, 48
  %v5524 = vpop.permute.xlu0 %5523
  %5525 = vrot.lane.b32.xlu0 %v1306, 48
  %v5526 = vpop.permute.xlu0 %5525
  %5527 = vrot.lane.b32.xlu0 %v1309, 48
  %v5528 = vpop.permute.xlu0 %5527
  %5529 = vrot.lane.b32.xlu0 %v1320, 48
  %v5530 = vpop.permute.xlu0 %5529
  %5531 = vrot.lane.b32.xlu0 %v1323, 48
  %v5532 = vpop.permute.xlu0 %5531
  %5533 = vrot.lane.b32.xlu0 %v1326, 48
  %v5534 = vpop.permute.xlu0 %5533
  %5535 = vrot.lane.b32.xlu0 %v1329, 48
  %v5536 = vpop.permute.xlu0 %5535
  %5537 = vrot.lane.b32.xlu0 %v1332, 48
  %v5538 = vpop.permute.xlu0 %5537
  %5539 = vrot.lane.b32.xlu0 %v1335, 48
  %v5540 = vpop.permute.xlu0 %5539
  %5541 = vrot.lane.b32.xlu0 %v1338, 48
  %v5542 = vpop.permute.xlu0 %5541
  %5543 = vrot.lane.b32.xlu0 %v1341, 48
  %v5544 = vpop.permute.xlu0 %5543
  %5545 = vrot.lane.b32.xlu0 %v1344, 48
  %v5546 = vpop.permute.xlu0 %5545
  %5547 = vrot.lane.b32.xlu0 %v1347, 48
  %v5548 = vpop.permute.xlu0 %5547
  %5549 = vrot.lane.b32.xlu0 %v1350, 48
  %v5550 = vpop.permute.xlu0 %5549
  %5551 = vrot.lane.b32.xlu0 %v1353, 48
  %v5552 = vpop.permute.xlu0 %5551
  %5553 = vrot.lane.b32.xlu0 %v1356, 48
  %v5554 = vpop.permute.xlu0 %5553
  %5555 = vrot.lane.b32.xlu0 %v1367, 48
  %v5556 = vpop.permute.xlu0 %5555
  %5557 = vrot.lane.b32.xlu0 %v1370, 48
  %v5558 = vpop.permute.xlu0 %5557
  %5559 = vrot.lane.b32.xlu0 %v1373, 48
  %v5560 = vpop.permute.xlu0 %5559
  %5561 = vrot.lane.b32.xlu0 %v1376, 48
  %v5562 = vpop.permute.xlu0 %5561
  %5563 = vrot.lane.b32.xlu0 %v1379, 48
  %v5564 = vpop.permute.xlu0 %5563
  %5565 = vrot.lane.b32.xlu0 %v1382, 48
  %v5566 = vpop.permute.xlu0 %5565
  %5567 = vrot.lane.b32.xlu0 %v1385, 48
  %v5568 = vpop.permute.xlu0 %5567
  %5569 = vrot.lane.b32.xlu0 %v1388, 48
  %v5570 = vpop.permute.xlu0 %5569
  %5571 = vrot.lane.b32.xlu0 %v1391, 48
  %v5572 = vpop.permute.xlu0 %5571
  %5573 = vrot.lane.b32.xlu0 %v1394, 48
  %v5574 = vpop.permute.xlu0 %5573
  %5575 = vrot.lane.b32.xlu0 %v1397, 48
  %v5576 = vpop.permute.xlu0 %5575
  %5577 = vrot.lane.b32.xlu0 %v1400, 48
  %v5578 = vpop.permute.xlu0 %5577
  %5579 = vrot.lane.b32.xlu0 %v1403, 48
  %v5580 = vpop.permute.xlu0 %5579
  %5581 = vrot.lane.b32.xlu0 %v1414, 48
  %v5582 = vpop.permute.xlu0 %5581
  %5583 = vrot.lane.b32.xlu0 %v1417, 48
  %v5584 = vpop.permute.xlu0 %5583
  %5585 = vrot.lane.b32.xlu0 %v1420, 48
  %v5586 = vpop.permute.xlu0 %5585
  %5587 = vrot.lane.b32.xlu0 %v1423, 48
  %v5588 = vpop.permute.xlu0 %5587
  %5589 = vrot.lane.b32.xlu0 %v1426, 48
  %v5590 = vpop.permute.xlu0 %5589
  %5591 = vrot.lane.b32.xlu0 %v1429, 48
  %v5592 = vpop.permute.xlu0 %5591
  %5593 = vrot.lane.b32.xlu0 %v1432, 48
  %v5594 = vpop.permute.xlu0 %5593
  %5595 = vrot.lane.b32.xlu0 %v1435, 48
  %v5596 = vpop.permute.xlu0 %5595
  %5597 = vrot.lane.b32.xlu0 %v1438, 48
  %v5598 = vpop.permute.xlu0 %5597
  %5599 = vrot.lane.b32.xlu0 %v1441, 48
  %v5600 = vpop.permute.xlu0 %5599
  %5601 = vrot.lane.b32.xlu0 %v1444, 48
  %v5602 = vpop.permute.xlu0 %5601
  %5603 = vrot.lane.b32.xlu0 %v1447, 48
  %v5604 = vpop.permute.xlu0 %5603
  %5605 = vrot.lane.b32.xlu0 %v1450, 48
  %v5606 = vpop.permute.xlu0 %5605
  %5607 = vrot.lane.b32.xlu0 %v1461, 48
  %v5608 = vpop.permute.xlu0 %5607
  %5609 = vrot.lane.b32.xlu0 %v1464, 48
  %v5610 = vpop.permute.xlu0 %5609
  %5611 = vrot.lane.b32.xlu0 %v1467, 48
  %v5612 = vpop.permute.xlu0 %5611
  %5613 = vrot.lane.b32.xlu0 %v1470, 48
  %v5614 = vpop.permute.xlu0 %5613
  %5615 = vrot.lane.b32.xlu0 %v1473, 48
  %v5616 = vpop.permute.xlu0 %5615
  %5617 = vrot.lane.b32.xlu0 %v1476, 48
  %v5618 = vpop.permute.xlu0 %5617
  %5619 = vrot.lane.b32.xlu0 %v1479, 48
  %v5620 = vpop.permute.xlu0 %5619
  %5621 = vrot.lane.b32.xlu0 %v1482, 48
  %v5622 = vpop.permute.xlu0 %5621
  %5623 = vrot.lane.b32.xlu0 %v1485, 48
  %v5624 = vpop.permute.xlu0 %5623
  %5625 = vrot.lane.b32.xlu0 %v1488, 48
  %v5626 = vpop.permute.xlu0 %5625
  %5627 = vrot.lane.b32.xlu0 %v1491, 48
  %v5628 = vpop.permute.xlu0 %5627
  %5629 = vrot.lane.b32.xlu0 %v1494, 48
  %v5630 = vpop.permute.xlu0 %5629
  %5631 = vrot.lane.b32.xlu0 %v1497, 48
  %v5632 = vpop.permute.xlu0 %5631
  %5633 = vrot.lane.b32.xlu0 %v1508, 48
  %v5634 = vpop.permute.xlu0 %5633
  %5635 = vrot.lane.b32.xlu0 %v1511, 48
  %v5636 = vpop.permute.xlu0 %5635
  %5637 = vrot.lane.b32.xlu0 %v1514, 48
  %v5638 = vpop.permute.xlu0 %5637
  %5639 = vrot.lane.b32.xlu0 %v1517, 48
  %v5640 = vpop.permute.xlu0 %5639
  %5641 = vrot.lane.b32.xlu0 %v1520, 48
  %v5642 = vpop.permute.xlu0 %5641
  %5643 = vrot.lane.b32.xlu0 %v1523, 48
  %v5644 = vpop.permute.xlu0 %5643
  %5645 = vrot.lane.b32.xlu0 %v1526, 48
  %v5646 = vpop.permute.xlu0 %5645
  %5647 = vrot.lane.b32.xlu0 %v1529, 48
  %v5648 = vpop.permute.xlu0 %5647
  %5649 = vrot.lane.b32.xlu0 %v1532, 48
  %v5650 = vpop.permute.xlu0 %5649
  %5651 = vrot.lane.b32.xlu0 %v1535, 48
  %v5652 = vpop.permute.xlu0 %5651
  %5653 = vrot.lane.b32.xlu0 %v1538, 48
  %v5654 = vpop.permute.xlu0 %5653
  %5655 = vrot.lane.b32.xlu0 %v1541, 48
  %v5656 = vpop.permute.xlu0 %5655
  %5657 = vrot.lane.b32.xlu0 %v1544, 48
  %v5658 = vpop.permute.xlu0 %5657
  %5659 = vrot.lane.b32.xlu0 %v1555, 48
  %v5660 = vpop.permute.xlu0 %5659
  %5661 = vrot.lane.b32.xlu0 %v1558, 48
  %v5662 = vpop.permute.xlu0 %5661
  %5663 = vrot.lane.b32.xlu0 %v1561, 48
  %v5664 = vpop.permute.xlu0 %5663
  %5665 = vrot.lane.b32.xlu0 %v1564, 48
  %v5666 = vpop.permute.xlu0 %5665
  %5667 = vrot.lane.b32.xlu0 %v1567, 48
  %v5668 = vpop.permute.xlu0 %5667
  %5669 = vrot.lane.b32.xlu0 %v1570, 48
  %v5670 = vpop.permute.xlu0 %5669
  %5671 = vrot.lane.b32.xlu0 %v1573, 48
  %v5672 = vpop.permute.xlu0 %5671
  %5673 = vrot.lane.b32.xlu0 %v1576, 48
  %v5674 = vpop.permute.xlu0 %5673
  %5675 = vrot.lane.b32.xlu0 %v1579, 48
  %v5676 = vpop.permute.xlu0 %5675
  %5677 = vrot.lane.b32.xlu0 %v1582, 48
  %v5678 = vpop.permute.xlu0 %5677
  %5679 = vrot.lane.b32.xlu0 %v1585, 48
  %v5680 = vpop.permute.xlu0 %5679
  %5681 = vrot.lane.b32.xlu0 %v1588, 48
  %v5682 = vpop.permute.xlu0 %5681
  %5683 = vrot.lane.b32.xlu0 %v1591, 48
  %v5684 = vpop.permute.xlu0 %5683
  %5685 = vrot.lane.b32.xlu0 %v1602, 48
  %v5686 = vpop.permute.xlu0 %5685
  %5687 = vrot.lane.b32.xlu0 %v1605, 48
  %v5688 = vpop.permute.xlu0 %5687
  %5689 = vrot.lane.b32.xlu0 %v1608, 48
  %v5690 = vpop.permute.xlu0 %5689
  %5691 = vrot.lane.b32.xlu0 %v1611, 48
  %v5692 = vpop.permute.xlu0 %5691
  %5693 = vrot.lane.b32.xlu0 %v1614, 48
  %v5694 = vpop.permute.xlu0 %5693
  %5695 = vrot.lane.b32.xlu0 %v1617, 48
  %v5696 = vpop.permute.xlu0 %5695
  %5697 = vrot.lane.b32.xlu0 %v1620, 48
  %v5698 = vpop.permute.xlu0 %5697
  %5699 = vrot.lane.b32.xlu0 %v1623, 48
  %v5700 = vpop.permute.xlu0 %5699
  %5701 = vrot.lane.b32.xlu0 %v1626, 48
  %v5702 = vpop.permute.xlu0 %5701
  %5703 = vrot.lane.b32.xlu0 %v1629, 48
  %v5704 = vpop.permute.xlu0 %5703
  %5705 = vrot.lane.b32.xlu0 %v1632, 48
  %v5706 = vpop.permute.xlu0 %5705
  %5707 = vrot.lane.b32.xlu0 %v1635, 48
  %v5708 = vpop.permute.xlu0 %5707
  %5709 = vrot.lane.b32.xlu0 %v1638, 48
  %v5710 = vpop.permute.xlu0 %5709
  %5711 = vrot.lane.b32.xlu0 %v1649, 48
  %v5712 = vpop.permute.xlu0 %5711
  %5713 = vrot.lane.b32.xlu0 %v1652, 48
  %v5714 = vpop.permute.xlu0 %5713
  %5715 = vrot.lane.b32.xlu0 %v1655, 48
  %v5716 = vpop.permute.xlu0 %5715
  %5717 = vrot.lane.b32.xlu0 %v1658, 48
  %v5718 = vpop.permute.xlu0 %5717
  %5719 = vrot.lane.b32.xlu0 %v1661, 48
  %v5720 = vpop.permute.xlu0 %5719
  %5721 = vrot.lane.b32.xlu0 %v1664, 48
  %v5722 = vpop.permute.xlu0 %5721
  %5723 = vrot.lane.b32.xlu0 %v1667, 48
  %v5724 = vpop.permute.xlu0 %5723
  %5725 = vrot.lane.b32.xlu0 %v1670, 48
  %v5726 = vpop.permute.xlu0 %5725
  %5727 = vrot.lane.b32.xlu0 %v1673, 48
  %v5728 = vpop.permute.xlu0 %5727
  %5729 = vrot.lane.b32.xlu0 %v1676, 48
  %v5730 = vpop.permute.xlu0 %5729
  %5731 = vrot.lane.b32.xlu0 %v1679, 48
  %v5732 = vpop.permute.xlu0 %5731
  %5733 = vrot.lane.b32.xlu0 %v1682, 48
  %v5734 = vpop.permute.xlu0 %5733
  %5735 = vrot.lane.b32.xlu0 %v1685, 48
  %v5736 = vpop.permute.xlu0 %5735
  %5737 = vrot.lane.b32.xlu0 %v1696, 48
  %v5738 = vpop.permute.xlu0 %5737
  %5739 = vrot.lane.b32.xlu0 %v1699, 48
  %v5740 = vpop.permute.xlu0 %5739
  %5741 = vrot.lane.b32.xlu0 %v1702, 48
  %v5742 = vpop.permute.xlu0 %5741
  %5743 = vrot.lane.b32.xlu0 %v1705, 48
  %v5744 = vpop.permute.xlu0 %5743
  %5745 = vrot.lane.b32.xlu0 %v1708, 48
  %v5746 = vpop.permute.xlu0 %5745
  %5747 = vrot.lane.b32.xlu0 %v1711, 48
  %v5748 = vpop.permute.xlu0 %5747
  %5749 = vrot.lane.b32.xlu0 %v1714, 48
  %v5750 = vpop.permute.xlu0 %5749
  %5751 = vrot.lane.b32.xlu0 %v1717, 48
  %v5752 = vpop.permute.xlu0 %5751
  %5753 = vrot.lane.b32.xlu0 %v1720, 48
  %v5754 = vpop.permute.xlu0 %5753
  %5755 = vrot.lane.b32.xlu0 %v1723, 48
  %v5756 = vpop.permute.xlu0 %5755
  %5757 = vrot.lane.b32.xlu0 %v1726, 48
  %v5758 = vpop.permute.xlu0 %5757
  %5759 = vrot.lane.b32.xlu0 %v1729, 48
  %v5760 = vpop.permute.xlu0 %5759
  %5761 = vrot.lane.b32.xlu0 %v1732, 48
  %v5762 = vpop.permute.xlu0 %5761
  %v5932 = vadd.f32 %v5255, %v5426
  %v5933 = vadd.f32 %v5256, %v5428
  %v5934 = vadd.f32 %v5257, %v5430
  %v5935 = vadd.f32 %v5258, %v5432
  %v5936 = vadd.f32 %v5259, %v5434
  %v5937 = vadd.f32 %v5260, %v5436
  %v5938 = vadd.f32 %v5261, %v5438
  %v5939 = vadd.f32 %v5262, %v5440
  %v5940 = vadd.f32 %v5263, %v5442
  %v5941 = vadd.f32 %v5264, %v5444
  %v5942 = vadd.f32 %v5265, %v5446
  %v5943 = vadd.f32 %v5266, %v5448
  %v5944 = vadd.f32 %v5267, %v5450
  %v5945 = vadd.f32 %v5268, %v5452
  %v5946 = vadd.f32 %v5269, %v5454
  %v5947 = vadd.f32 %v5270, %v5456
  %v5948 = vadd.f32 %v5271, %v5458
  %v5949 = vadd.f32 %v5272, %v5460
  %v5950 = vadd.f32 %v5273, %v5462
  %v5951 = vadd.f32 %v5274, %v5464
  %v5952 = vadd.f32 %v5275, %v5466
  %v5953 = vadd.f32 %v5276, %v5468
  %v5954 = vadd.f32 %v5277, %v5470
  %v5955 = vadd.f32 %v5278, %v5472
  %v5956 = vadd.f32 %v5279, %v5474
  %v5957 = vadd.f32 %v5280, %v5476
  %v5958 = vadd.f32 %v5281, %v5478
  %v5959 = vadd.f32 %v5282, %v5480
  %v5960 = vadd.f32 %v5283, %v5482
  %v5961 = vadd.f32 %v5284, %v5484
  %v5962 = vadd.f32 %v5285, %v5486
  %v5963 = vadd.f32 %v5286, %v5488
  %v5964 = vadd.f32 %v5287, %v5490
  %v5965 = vadd.f32 %v5288, %v5492
  %v5966 = vadd.f32 %v5289, %v5494
  %v5967 = vadd.f32 %v5290, %v5496
  %v5968 = vadd.f32 %v5291, %v5498
  %v5969 = vadd.f32 %v5292, %v5500
  %v5970 = vadd.f32 %v5293, %v5502
  %v5971 = vadd.f32 %v5294, %v5504
  %v5972 = vadd.f32 %v5295, %v5506
  %v5973 = vadd.f32 %v5296, %v5508
  %v5974 = vadd.f32 %v5297, %v5510
  %v5975 = vadd.f32 %v5298, %v5512
  %v5976 = vadd.f32 %v5299, %v5514
  %v5977 = vadd.f32 %v5300, %v5516
  %v5978 = vadd.f32 %v5301, %v5518
  %v5979 = vadd.f32 %v5302, %v5520
  %v5980 = vadd.f32 %v5303, %v5522
  %v5981 = vadd.f32 %v5304, %v5524
  %v5982 = vadd.f32 %v5305, %v5526
  %v5983 = vadd.f32 %v5306, %v5528
  %v5984 = vadd.f32 %v5307, %v5530
  %v5985 = vadd.f32 %v5308, %v5532
  %v5986 = vadd.f32 %v5309, %v5534
  %v5987 = vadd.f32 %v5310, %v5536
  %v5988 = vadd.f32 %v5311, %v5538
  %v5989 = vadd.f32 %v5312, %v5540
  %v5990 = vadd.f32 %v5313, %v5542
  %v5991 = vadd.f32 %v5314, %v5544
  %v5992 = vadd.f32 %v5315, %v5546
  %v5993 = vadd.f32 %v5316, %v5548
  %v5994 = vadd.f32 %v5317, %v5550
  %v5995 = vadd.f32 %v5318, %v5552
  %v5996 = vadd.f32 %v5319, %v5554
  %v5997 = vadd.f32 %v5320, %v5556
  %v5998 = vadd.f32 %v5321, %v5558
  %v5999 = vadd.f32 %v5322, %v5560
  %v6000 = vadd.f32 %v5323, %v5562
  %v6001 = vadd.f32 %v5324, %v5564
  %v6002 = vadd.f32 %v5325, %v5566
  %v6003 = vadd.f32 %v5326, %v5568
  %v6004 = vadd.f32 %v5327, %v5570
  %v6005 = vadd.f32 %v5328, %v5572
  %v6006 = vadd.f32 %v5329, %v5574
  %v6007 = vadd.f32 %v5330, %v5576
  %v6008 = vadd.f32 %v5331, %v5578
  %v6009 = vadd.f32 %v5332, %v5580
  %v6010 = vadd.f32 %v5333, %v5582
  %v6011 = vadd.f32 %v5334, %v5584
  %v6012 = vadd.f32 %v5335, %v5586
  %v6013 = vadd.f32 %v5336, %v5588
  %v6014 = vadd.f32 %v5337, %v5590
  %v6015 = vadd.f32 %v5338, %v5592
  %v6016 = vadd.f32 %v5339, %v5594
  %v6017 = vadd.f32 %v5340, %v5596
  %v6018 = vadd.f32 %v5341, %v5598
  %v6019 = vadd.f32 %v5342, %v5600
  %v6020 = vadd.f32 %v5343, %v5602
  %v6021 = vadd.f32 %v5344, %v5604
  %v6022 = vadd.f32 %v5345, %v5606
  %v6023 = vadd.f32 %v5346, %v5608
  %v6024 = vadd.f32 %v5347, %v5610
  %v6025 = vadd.f32 %v5348, %v5612
  %v6026 = vadd.f32 %v5349, %v5614
  %v6027 = vadd.f32 %v5350, %v5616
  %v6028 = vadd.f32 %v5351, %v5618
  %v6029 = vadd.f32 %v5352, %v5620
  %v6030 = vadd.f32 %v5353, %v5622
  %v6031 = vadd.f32 %v5354, %v5624
  %v6032 = vadd.f32 %v5355, %v5626
  %v6033 = vadd.f32 %v5356, %v5628
  %v6034 = vadd.f32 %v5357, %v5630
  %v6035 = vadd.f32 %v5358, %v5632
  %v6036 = vadd.f32 %v5359, %v5634
  %v6037 = vadd.f32 %v5360, %v5636
  %v6038 = vadd.f32 %v5361, %v5638
  %v6039 = vadd.f32 %v5362, %v5640
  %v6040 = vadd.f32 %v5363, %v5642
  %v6041 = vadd.f32 %v5364, %v5644
  %v6042 = vadd.f32 %v5365, %v5646
  %v6043 = vadd.f32 %v5366, %v5648
  %v6044 = vadd.f32 %v5367, %v5650
  %v6045 = vadd.f32 %v5368, %v5652
  %v6046 = vadd.f32 %v5369, %v5654
  %v6047 = vadd.f32 %v5370, %v5656
  %v6048 = vadd.f32 %v5371, %v5658
  %v6049 = vadd.f32 %v5372, %v5660
  %v6050 = vadd.f32 %v5373, %v5662
  %v6051 = vadd.f32 %v5374, %v5664
  %v6052 = vadd.f32 %v5375, %v5666
  %v6053 = vadd.f32 %v5376, %v5668
  %v6054 = vadd.f32 %v5377, %v5670
  %v6055 = vadd.f32 %v5378, %v5672
  %v6056 = vadd.f32 %v5379, %v5674
  %v6057 = vadd.f32 %v5380, %v5676
  %v6058 = vadd.f32 %v5381, %v5678
  %v6059 = vadd.f32 %v5382, %v5680
  %v6060 = vadd.f32 %v5383, %v5682
  %v6061 = vadd.f32 %v5384, %v5684
  %v6062 = vadd.f32 %v5385, %v5686
  %v6063 = vadd.f32 %v5386, %v5688
  %v6064 = vadd.f32 %v5387, %v5690
  %v6065 = vadd.f32 %v5388, %v5692
  %v6066 = vadd.f32 %v5389, %v5694
  %v6067 = vadd.f32 %v5390, %v5696
  %v6068 = vadd.f32 %v5391, %v5698
  %v6069 = vadd.f32 %v5392, %v5700
  %v6070 = vadd.f32 %v5393, %v5702
  %v6071 = vadd.f32 %v5394, %v5704
  %v6072 = vadd.f32 %v5395, %v5706
  %v6073 = vadd.f32 %v5396, %v5708
  %v6074 = vadd.f32 %v5397, %v5710
  %v6075 = vadd.f32 %v5398, %v5712
  %v6076 = vadd.f32 %v5399, %v5714
  %v6077 = vadd.f32 %v5400, %v5716
  %v6078 = vadd.f32 %v5401, %v5718
  %v6079 = vadd.f32 %v5402, %v5720
  %v6080 = vadd.f32 %v5403, %v5722
  %v6081 = vadd.f32 %v5404, %v5724
  %v6082 = vadd.f32 %v5405, %v5726
  %v6083 = vadd.f32 %v5406, %v5728
  %v6084 = vadd.f32 %v5407, %v5730
  %v6085 = vadd.f32 %v5408, %v5732
  %v6086 = vadd.f32 %v5409, %v5734
  %v6087 = vadd.f32 %v5410, %v5736
  %v6088 = vadd.f32 %v5411, %v5738
  %v6089 = vadd.f32 %v5412, %v5740
  %v6090 = vadd.f32 %v5413, %v5742
  %v6091 = vadd.f32 %v5414, %v5744
  %v6092 = vadd.f32 %v5415, %v5746
  %v6093 = vadd.f32 %v5416, %v5748
  %v6094 = vadd.f32 %v5417, %v5750
  %v6095 = vadd.f32 %v5418, %v5752
  %v6096 = vadd.f32 %v5419, %v5754
  %v6097 = vadd.f32 %v5420, %v5756
  %v6098 = vadd.f32 %v5421, %v5758
  %v6099 = vadd.f32 %v5422, %v5760
  %v6100 = vadd.f32 %v5423, %v5762
  %6114 = vrot.lane.b32.xlu0 %v1173, 32
  %v6115 = vpop.permute.xlu0 %6114
  %6116 = vrot.lane.b32.xlu0 %v1176, 32
  %v6117 = vpop.permute.xlu0 %6116
  %6118 = vrot.lane.b32.xlu0 %v1179, 32
  %v6119 = vpop.permute.xlu0 %6118
  %6120 = vrot.lane.b32.xlu0 %v1182, 32
  %v6121 = vpop.permute.xlu0 %6120
  %6122 = vrot.lane.b32.xlu0 %v1185, 32
  %v6123 = vpop.permute.xlu0 %6122
  %6124 = vrot.lane.b32.xlu0 %v1188, 32
  %v6125 = vpop.permute.xlu0 %6124
  %6126 = vrot.lane.b32.xlu0 %v1191, 32
  %v6127 = vpop.permute.xlu0 %6126
  %6128 = vrot.lane.b32.xlu0 %v1194, 32
  %v6129 = vpop.permute.xlu0 %6128
  %6130 = vrot.lane.b32.xlu0 %v1197, 32
  %v6131 = vpop.permute.xlu0 %6130
  %6132 = vrot.lane.b32.xlu0 %v1200, 32
  %v6133 = vpop.permute.xlu0 %6132
  %6134 = vrot.lane.b32.xlu0 %v1203, 32
  %v6135 = vpop.permute.xlu0 %6134
  %6136 = vrot.lane.b32.xlu0 %v1206, 32
  %v6137 = vpop.permute.xlu0 %6136
  %6138 = vrot.lane.b32.xlu0 %v1209, 32
  %v6139 = vpop.permute.xlu0 %6138
  %6140 = vrot.lane.b32.xlu0 %v1220, 32
  %v6141 = vpop.permute.xlu0 %6140
  %6142 = vrot.lane.b32.xlu0 %v1223, 32
  %v6143 = vpop.permute.xlu0 %6142
  %6144 = vrot.lane.b32.xlu0 %v1226, 32
  %v6145 = vpop.permute.xlu0 %6144
  %6146 = vrot.lane.b32.xlu0 %v1229, 32
  %v6147 = vpop.permute.xlu0 %6146
  %6148 = vrot.lane.b32.xlu0 %v1232, 32
  %v6149 = vpop.permute.xlu0 %6148
  %6150 = vrot.lane.b32.xlu0 %v1235, 32
  %v6151 = vpop.permute.xlu0 %6150
  %6152 = vrot.lane.b32.xlu0 %v1238, 32
  %v6153 = vpop.permute.xlu0 %6152
  %6154 = vrot.lane.b32.xlu0 %v1241, 32
  %v6155 = vpop.permute.xlu0 %6154
  %6156 = vrot.lane.b32.xlu0 %v1244, 32
  %v6157 = vpop.permute.xlu0 %6156
  %6158 = vrot.lane.b32.xlu0 %v1247, 32
  %v6159 = vpop.permute.xlu0 %6158
  %6160 = vrot.lane.b32.xlu0 %v1250, 32
  %v6161 = vpop.permute.xlu0 %6160
  %6162 = vrot.lane.b32.xlu0 %v1253, 32
  %v6163 = vpop.permute.xlu0 %6162
  %6164 = vrot.lane.b32.xlu0 %v1256, 32
  %v6165 = vpop.permute.xlu0 %6164
  %6166 = vrot.lane.b32.xlu0 %v1267, 32
  %v6167 = vpop.permute.xlu0 %6166
  %6168 = vrot.lane.b32.xlu0 %v1270, 32
  %v6169 = vpop.permute.xlu0 %6168
  %6170 = vrot.lane.b32.xlu0 %v1273, 32
  %v6171 = vpop.permute.xlu0 %6170
  %6172 = vrot.lane.b32.xlu0 %v1276, 32
  %v6173 = vpop.permute.xlu0 %6172
  %6174 = vrot.lane.b32.xlu0 %v1279, 32
  %v6175 = vpop.permute.xlu0 %6174
  %6176 = vrot.lane.b32.xlu0 %v1282, 32
  %v6177 = vpop.permute.xlu0 %6176
  %6178 = vrot.lane.b32.xlu0 %v1285, 32
  %v6179 = vpop.permute.xlu0 %6178
  %6180 = vrot.lane.b32.xlu0 %v1288, 32
  %v6181 = vpop.permute.xlu0 %6180
  %6182 = vrot.lane.b32.xlu0 %v1291, 32
  %v6183 = vpop.permute.xlu0 %6182
  %6184 = vrot.lane.b32.xlu0 %v1294, 32
  %v6185 = vpop.permute.xlu0 %6184
  %6186 = vrot.lane.b32.xlu0 %v1297, 32
  %v6187 = vpop.permute.xlu0 %6186
  %6188 = vrot.lane.b32.xlu0 %v1300, 32
  %v6189 = vpop.permute.xlu0 %6188
  %6190 = vrot.lane.b32.xlu0 %v1303, 32
  %v6191 = vpop.permute.xlu0 %6190
  %6192 = vrot.lane.b32.xlu0 %v1314, 32
  %v6193 = vpop.permute.xlu0 %6192
  %6194 = vrot.lane.b32.xlu0 %v1317, 32
  %v6195 = vpop.permute.xlu0 %6194
  %6196 = vrot.lane.b32.xlu0 %v1320, 32
  %v6197 = vpop.permute.xlu0 %6196
  %6198 = vrot.lane.b32.xlu0 %v1323, 32
  %v6199 = vpop.permute.xlu0 %6198
  %6200 = vrot.lane.b32.xlu0 %v1326, 32
  %v6201 = vpop.permute.xlu0 %6200
  %6202 = vrot.lane.b32.xlu0 %v1329, 32
  %v6203 = vpop.permute.xlu0 %6202
  %6204 = vrot.lane.b32.xlu0 %v1332, 32
  %v6205 = vpop.permute.xlu0 %6204
  %6206 = vrot.lane.b32.xlu0 %v1335, 32
  %v6207 = vpop.permute.xlu0 %6206
  %6208 = vrot.lane.b32.xlu0 %v1338, 32
  %v6209 = vpop.permute.xlu0 %6208
  %6210 = vrot.lane.b32.xlu0 %v1341, 32
  %v6211 = vpop.permute.xlu0 %6210
  %6212 = vrot.lane.b32.xlu0 %v1344, 32
  %v6213 = vpop.permute.xlu0 %6212
  %6214 = vrot.lane.b32.xlu0 %v1347, 32
  %v6215 = vpop.permute.xlu0 %6214
  %6216 = vrot.lane.b32.xlu0 %v1350, 32
  %v6217 = vpop.permute.xlu0 %6216
  %6218 = vrot.lane.b32.xlu0 %v1361, 32
  %v6219 = vpop.permute.xlu0 %6218
  %6220 = vrot.lane.b32.xlu0 %v1364, 32
  %v6221 = vpop.permute.xlu0 %6220
  %6222 = vrot.lane.b32.xlu0 %v1367, 32
  %v6223 = vpop.permute.xlu0 %6222
  %6224 = vrot.lane.b32.xlu0 %v1370, 32
  %v6225 = vpop.permute.xlu0 %6224
  %6226 = vrot.lane.b32.xlu0 %v1373, 32
  %v6227 = vpop.permute.xlu0 %6226
  %6228 = vrot.lane.b32.xlu0 %v1376, 32
  %v6229 = vpop.permute.xlu0 %6228
  %6230 = vrot.lane.b32.xlu0 %v1379, 32
  %v6231 = vpop.permute.xlu0 %6230
  %6232 = vrot.lane.b32.xlu0 %v1382, 32
  %v6233 = vpop.permute.xlu0 %6232
  %6234 = vrot.lane.b32.xlu0 %v1385, 32
  %v6235 = vpop.permute.xlu0 %6234
  %6236 = vrot.lane.b32.xlu0 %v1388, 32
  %v6237 = vpop.permute.xlu0 %6236
  %6238 = vrot.lane.b32.xlu0 %v1391, 32
  %v6239 = vpop.permute.xlu0 %6238
  %6240 = vrot.lane.b32.xlu0 %v1394, 32
  %v6241 = vpop.permute.xlu0 %6240
  %6242 = vrot.lane.b32.xlu0 %v1397, 32
  %v6243 = vpop.permute.xlu0 %6242
  %6244 = vrot.lane.b32.xlu0 %v1408, 32
  %v6245 = vpop.permute.xlu0 %6244
  %6246 = vrot.lane.b32.xlu0 %v1411, 32
  %v6247 = vpop.permute.xlu0 %6246
  %6248 = vrot.lane.b32.xlu0 %v1414, 32
  %v6249 = vpop.permute.xlu0 %6248
  %6250 = vrot.lane.b32.xlu0 %v1417, 32
  %v6251 = vpop.permute.xlu0 %6250
  %6252 = vrot.lane.b32.xlu0 %v1420, 32
  %v6253 = vpop.permute.xlu0 %6252
  %6254 = vrot.lane.b32.xlu0 %v1423, 32
  %v6255 = vpop.permute.xlu0 %6254
  %6256 = vrot.lane.b32.xlu0 %v1426, 32
  %v6257 = vpop.permute.xlu0 %6256
  %6258 = vrot.lane.b32.xlu0 %v1429, 32
  %v6259 = vpop.permute.xlu0 %6258
  %6260 = vrot.lane.b32.xlu0 %v1432, 32
  %v6261 = vpop.permute.xlu0 %6260
  %6262 = vrot.lane.b32.xlu0 %v1435, 32
  %v6263 = vpop.permute.xlu0 %6262
  %6264 = vrot.lane.b32.xlu0 %v1438, 32
  %v6265 = vpop.permute.xlu0 %6264
  %6266 = vrot.lane.b32.xlu0 %v1441, 32
  %v6267 = vpop.permute.xlu0 %6266
  %6268 = vrot.lane.b32.xlu0 %v1444, 32
  %v6269 = vpop.permute.xlu0 %6268
  %6270 = vrot.lane.b32.xlu0 %v1455, 32
  %v6271 = vpop.permute.xlu0 %6270
  %6272 = vrot.lane.b32.xlu0 %v1458, 32
  %v6273 = vpop.permute.xlu0 %6272
  %6274 = vrot.lane.b32.xlu0 %v1461, 32
  %v6275 = vpop.permute.xlu0 %6274
  %6276 = vrot.lane.b32.xlu0 %v1464, 32
  %v6277 = vpop.permute.xlu0 %6276
  %6278 = vrot.lane.b32.xlu0 %v1467, 32
  %v6279 = vpop.permute.xlu0 %6278
  %6280 = vrot.lane.b32.xlu0 %v1470, 32
  %v6281 = vpop.permute.xlu0 %6280
  %6282 = vrot.lane.b32.xlu0 %v1473, 32
  %v6283 = vpop.permute.xlu0 %6282
  %6284 = vrot.lane.b32.xlu0 %v1476, 32
  %v6285 = vpop.permute.xlu0 %6284
  %6286 = vrot.lane.b32.xlu0 %v1479, 32
  %v6287 = vpop.permute.xlu0 %6286
  %6288 = vrot.lane.b32.xlu0 %v1482, 32
  %v6289 = vpop.permute.xlu0 %6288
  %6290 = vrot.lane.b32.xlu0 %v1485, 32
  %v6291 = vpop.permute.xlu0 %6290
  %6292 = vrot.lane.b32.xlu0 %v1488, 32
  %v6293 = vpop.permute.xlu0 %6292
  %6294 = vrot.lane.b32.xlu0 %v1491, 32
  %v6295 = vpop.permute.xlu0 %6294
  %6296 = vrot.lane.b32.xlu0 %v1502, 32
  %v6297 = vpop.permute.xlu0 %6296
  %6298 = vrot.lane.b32.xlu0 %v1505, 32
  %v6299 = vpop.permute.xlu0 %6298
  %6300 = vrot.lane.b32.xlu0 %v1508, 32
  %v6301 = vpop.permute.xlu0 %6300
  %6302 = vrot.lane.b32.xlu0 %v1511, 32
  %v6303 = vpop.permute.xlu0 %6302
  %6304 = vrot.lane.b32.xlu0 %v1514, 32
  %v6305 = vpop.permute.xlu0 %6304
  %6306 = vrot.lane.b32.xlu0 %v1517, 32
  %v6307 = vpop.permute.xlu0 %6306
  %6308 = vrot.lane.b32.xlu0 %v1520, 32
  %v6309 = vpop.permute.xlu0 %6308
  %6310 = vrot.lane.b32.xlu0 %v1523, 32
  %v6311 = vpop.permute.xlu0 %6310
  %6312 = vrot.lane.b32.xlu0 %v1526, 32
  %v6313 = vpop.permute.xlu0 %6312
  %6314 = vrot.lane.b32.xlu0 %v1529, 32
  %v6315 = vpop.permute.xlu0 %6314
  %6316 = vrot.lane.b32.xlu0 %v1532, 32
  %v6317 = vpop.permute.xlu0 %6316
  %6318 = vrot.lane.b32.xlu0 %v1535, 32
  %v6319 = vpop.permute.xlu0 %6318
  %6320 = vrot.lane.b32.xlu0 %v1538, 32
  %v6321 = vpop.permute.xlu0 %6320
  %6322 = vrot.lane.b32.xlu0 %v1549, 32
  %v6323 = vpop.permute.xlu0 %6322
  %6324 = vrot.lane.b32.xlu0 %v1552, 32
  %v6325 = vpop.permute.xlu0 %6324
  %6326 = vrot.lane.b32.xlu0 %v1555, 32
  %v6327 = vpop.permute.xlu0 %6326
  %6328 = vrot.lane.b32.xlu0 %v1558, 32
  %v6329 = vpop.permute.xlu0 %6328
  %6330 = vrot.lane.b32.xlu0 %v1561, 32
  %v6331 = vpop.permute.xlu0 %6330
  %6332 = vrot.lane.b32.xlu0 %v1564, 32
  %v6333 = vpop.permute.xlu0 %6332
  %6334 = vrot.lane.b32.xlu0 %v1567, 32
  %v6335 = vpop.permute.xlu0 %6334
  %6336 = vrot.lane.b32.xlu0 %v1570, 32
  %v6337 = vpop.permute.xlu0 %6336
  %6338 = vrot.lane.b32.xlu0 %v1573, 32
  %v6339 = vpop.permute.xlu0 %6338
  %6340 = vrot.lane.b32.xlu0 %v1576, 32
  %v6341 = vpop.permute.xlu0 %6340
  %6342 = vrot.lane.b32.xlu0 %v1579, 32
  %v6343 = vpop.permute.xlu0 %6342
  %6344 = vrot.lane.b32.xlu0 %v1582, 32
  %v6345 = vpop.permute.xlu0 %6344
  %6346 = vrot.lane.b32.xlu0 %v1585, 32
  %v6347 = vpop.permute.xlu0 %6346
  %6348 = vrot.lane.b32.xlu0 %v1596, 32
  %v6349 = vpop.permute.xlu0 %6348
  %6350 = vrot.lane.b32.xlu0 %v1599, 32
  %v6351 = vpop.permute.xlu0 %6350
  %6352 = vrot.lane.b32.xlu0 %v1602, 32
  %v6353 = vpop.permute.xlu0 %6352
  %6354 = vrot.lane.b32.xlu0 %v1605, 32
  %v6355 = vpop.permute.xlu0 %6354
  %6356 = vrot.lane.b32.xlu0 %v1608, 32
  %v6357 = vpop.permute.xlu0 %6356
  %6358 = vrot.lane.b32.xlu0 %v1611, 32
  %v6359 = vpop.permute.xlu0 %6358
  %6360 = vrot.lane.b32.xlu0 %v1614, 32
  %v6361 = vpop.permute.xlu0 %6360
  %6362 = vrot.lane.b32.xlu0 %v1617, 32
  %v6363 = vpop.permute.xlu0 %6362
  %6364 = vrot.lane.b32.xlu0 %v1620, 32
  %v6365 = vpop.permute.xlu0 %6364
  %6366 = vrot.lane.b32.xlu0 %v1623, 32
  %v6367 = vpop.permute.xlu0 %6366
  %6368 = vrot.lane.b32.xlu0 %v1626, 32
  %v6369 = vpop.permute.xlu0 %6368
  %6370 = vrot.lane.b32.xlu0 %v1629, 32
  %v6371 = vpop.permute.xlu0 %6370
  %6372 = vrot.lane.b32.xlu0 %v1632, 32
  %v6373 = vpop.permute.xlu0 %6372
  %6374 = vrot.lane.b32.xlu0 %v1643, 32
  %v6375 = vpop.permute.xlu0 %6374
  %6376 = vrot.lane.b32.xlu0 %v1646, 32
  %v6377 = vpop.permute.xlu0 %6376
  %6378 = vrot.lane.b32.xlu0 %v1649, 32
  %v6379 = vpop.permute.xlu0 %6378
  %6380 = vrot.lane.b32.xlu0 %v1652, 32
  %v6381 = vpop.permute.xlu0 %6380
  %6382 = vrot.lane.b32.xlu0 %v1655, 32
  %v6383 = vpop.permute.xlu0 %6382
  %6384 = vrot.lane.b32.xlu0 %v1658, 32
  %v6385 = vpop.permute.xlu0 %6384
  %6386 = vrot.lane.b32.xlu0 %v1661, 32
  %v6387 = vpop.permute.xlu0 %6386
  %6388 = vrot.lane.b32.xlu0 %v1664, 32
  %v6389 = vpop.permute.xlu0 %6388
  %6390 = vrot.lane.b32.xlu0 %v1667, 32
  %v6391 = vpop.permute.xlu0 %6390
  %6392 = vrot.lane.b32.xlu0 %v1670, 32
  %v6393 = vpop.permute.xlu0 %6392
  %6394 = vrot.lane.b32.xlu0 %v1673, 32
  %v6395 = vpop.permute.xlu0 %6394
  %6396 = vrot.lane.b32.xlu0 %v1676, 32
  %v6397 = vpop.permute.xlu0 %6396
  %6398 = vrot.lane.b32.xlu0 %v1679, 32
  %v6399 = vpop.permute.xlu0 %6398
  %6400 = vrot.lane.b32.xlu0 %v1690, 32
  %v6401 = vpop.permute.xlu0 %6400
  %6402 = vrot.lane.b32.xlu0 %v1693, 32
  %v6403 = vpop.permute.xlu0 %6402
  %6404 = vrot.lane.b32.xlu0 %v1696, 32
  %v6405 = vpop.permute.xlu0 %6404
  %6406 = vrot.lane.b32.xlu0 %v1699, 32
  %v6407 = vpop.permute.xlu0 %6406
  %6408 = vrot.lane.b32.xlu0 %v1702, 32
  %v6409 = vpop.permute.xlu0 %6408
  %6410 = vrot.lane.b32.xlu0 %v1705, 32
  %v6411 = vpop.permute.xlu0 %6410
  %6412 = vrot.lane.b32.xlu0 %v1708, 32
  %v6413 = vpop.permute.xlu0 %6412
  %6414 = vrot.lane.b32.xlu0 %v1711, 32
  %v6415 = vpop.permute.xlu0 %6414
  %6416 = vrot.lane.b32.xlu0 %v1714, 32
  %v6417 = vpop.permute.xlu0 %6416
  %6418 = vrot.lane.b32.xlu0 %v1717, 32
  %v6419 = vpop.permute.xlu0 %6418
  %6420 = vrot.lane.b32.xlu0 %v1720, 32
  %v6421 = vpop.permute.xlu0 %6420
  %6422 = vrot.lane.b32.xlu0 %v1723, 32
  %v6423 = vpop.permute.xlu0 %6422
  %6424 = vrot.lane.b32.xlu0 %v1726, 32
  %v6425 = vpop.permute.xlu0 %6424
  %6426 = vrot.lane.b32.xlu0 %v1737, 32
  %v6427 = vpop.permute.xlu0 %6426
  %6428 = vrot.lane.b32.xlu0 %v1740, 32
  %v6429 = vpop.permute.xlu0 %6428
  %6430 = vrot.lane.b32.xlu0 %v1743, 32
  %v6431 = vpop.permute.xlu0 %6430
  %6432 = vrot.lane.b32.xlu0 %v1746, 32
  %v6433 = vpop.permute.xlu0 %6432
  %6434 = vrot.lane.b32.xlu0 %v1749, 32
  %v6435 = vpop.permute.xlu0 %6434
  %6436 = vrot.lane.b32.xlu0 %v1752, 32
  %v6437 = vpop.permute.xlu0 %6436
  %6438 = vrot.lane.b32.xlu0 %v1755, 32
  %v6439 = vpop.permute.xlu0 %6438
  %6440 = vrot.lane.b32.xlu0 %v1758, 32
  %v6441 = vpop.permute.xlu0 %6440
  %6442 = vrot.lane.b32.xlu0 %v1761, 32
  %v6443 = vpop.permute.xlu0 %6442
  %6444 = vrot.lane.b32.xlu0 %v1764, 32
  %v6445 = vpop.permute.xlu0 %6444
  %6446 = vrot.lane.b32.xlu0 %v1767, 32
  %v6447 = vpop.permute.xlu0 %6446
  %6448 = vrot.lane.b32.xlu0 %v1770, 32
  %v6449 = vpop.permute.xlu0 %6448
  %6450 = vrot.lane.b32.xlu0 %v1773, 32
  %v6451 = vpop.permute.xlu0 %6450
  %v6621 = vadd.f32 %v5932, %v6115
  %v6622 = vadd.f32 %v5933, %v6117
  %v6623 = vadd.f32 %v5934, %v6119
  %v6624 = vadd.f32 %v5935, %v6121
  %v6625 = vadd.f32 %v5936, %v6123
  %v6626 = vadd.f32 %v5937, %v6125
  %v6627 = vadd.f32 %v5938, %v6127
  %v6628 = vadd.f32 %v5939, %v6129
  %v6629 = vadd.f32 %v5940, %v6131
  %v6630 = vadd.f32 %v5941, %v6133
  %v6631 = vadd.f32 %v5942, %v6135
  %v6632 = vadd.f32 %v5943, %v6137
  %v6633 = vadd.f32 %v5944, %v6139
  %v6634 = vadd.f32 %v5945, %v6141
  %v6635 = vadd.f32 %v5946, %v6143
  %v6636 = vadd.f32 %v5947, %v6145
  %v6637 = vadd.f32 %v5948, %v6147
  %v6638 = vadd.f32 %v5949, %v6149
  %v6639 = vadd.f32 %v5950, %v6151
  %v6640 = vadd.f32 %v5951, %v6153
  %v6641 = vadd.f32 %v5952, %v6155
  %v6642 = vadd.f32 %v5953, %v6157
  %v6643 = vadd.f32 %v5954, %v6159
  %v6644 = vadd.f32 %v5955, %v6161
  %v6645 = vadd.f32 %v5956, %v6163
  %v6646 = vadd.f32 %v5957, %v6165
  %v6647 = vadd.f32 %v5958, %v6167
  %v6648 = vadd.f32 %v5959, %v6169
  %v6649 = vadd.f32 %v5960, %v6171
  %v6650 = vadd.f32 %v5961, %v6173
  %v6651 = vadd.f32 %v5962, %v6175
  %v6652 = vadd.f32 %v5963, %v6177
  %v6653 = vadd.f32 %v5964, %v6179
  %v6654 = vadd.f32 %v5965, %v6181
  %v6655 = vadd.f32 %v5966, %v6183
  %v6656 = vadd.f32 %v5967, %v6185
  %v6657 = vadd.f32 %v5968, %v6187
  %v6658 = vadd.f32 %v5969, %v6189
  %v6659 = vadd.f32 %v5970, %v6191
  %v6660 = vadd.f32 %v5971, %v6193
  %v6661 = vadd.f32 %v5972, %v6195
  %v6662 = vadd.f32 %v5973, %v6197
  %v6663 = vadd.f32 %v5974, %v6199
  %v6664 = vadd.f32 %v5975, %v6201
  %v6665 = vadd.f32 %v5976, %v6203
  %v6666 = vadd.f32 %v5977, %v6205
  %v6667 = vadd.f32 %v5978, %v6207
  %v6668 = vadd.f32 %v5979, %v6209
  %v6669 = vadd.f32 %v5980, %v6211
  %v6670 = vadd.f32 %v5981, %v6213
  %v6671 = vadd.f32 %v5982, %v6215
  %v6672 = vadd.f32 %v5983, %v6217
  %v6673 = vadd.f32 %v5984, %v6219
  %v6674 = vadd.f32 %v5985, %v6221
  %v6675 = vadd.f32 %v5986, %v6223
  %v6676 = vadd.f32 %v5987, %v6225
  %v6677 = vadd.f32 %v5988, %v6227
  %v6678 = vadd.f32 %v5989, %v6229
  %v6679 = vadd.f32 %v5990, %v6231
  %v6680 = vadd.f32 %v5991, %v6233
  %v6681 = vadd.f32 %v5992, %v6235
  %v6682 = vadd.f32 %v5993, %v6237
  %v6683 = vadd.f32 %v5994, %v6239
  %v6684 = vadd.f32 %v5995, %v6241
  %v6685 = vadd.f32 %v5996, %v6243
  %v6686 = vadd.f32 %v5997, %v6245
  %v6687 = vadd.f32 %v5998, %v6247
  %v6688 = vadd.f32 %v5999, %v6249
  %v6689 = vadd.f32 %v6000, %v6251
  %v6690 = vadd.f32 %v6001, %v6253
  %v6691 = vadd.f32 %v6002, %v6255
  %v6692 = vadd.f32 %v6003, %v6257
  %v6693 = vadd.f32 %v6004, %v6259
  %v6694 = vadd.f32 %v6005, %v6261
  %v6695 = vadd.f32 %v6006, %v6263
  %v6696 = vadd.f32 %v6007, %v6265
  %v6697 = vadd.f32 %v6008, %v6267
  %v6698 = vadd.f32 %v6009, %v6269
  %v6699 = vadd.f32 %v6010, %v6271
  %v6700 = vadd.f32 %v6011, %v6273
  %v6701 = vadd.f32 %v6012, %v6275
  %v6702 = vadd.f32 %v6013, %v6277
  %v6703 = vadd.f32 %v6014, %v6279
  %v6704 = vadd.f32 %v6015, %v6281
  %v6705 = vadd.f32 %v6016, %v6283
  %v6706 = vadd.f32 %v6017, %v6285
  %v6707 = vadd.f32 %v6018, %v6287
  %v6708 = vadd.f32 %v6019, %v6289
  %v6709 = vadd.f32 %v6020, %v6291
  %v6710 = vadd.f32 %v6021, %v6293
  %v6711 = vadd.f32 %v6022, %v6295
  %v6712 = vadd.f32 %v6023, %v6297
  %v6713 = vadd.f32 %v6024, %v6299
  %v6714 = vadd.f32 %v6025, %v6301
  %v6715 = vadd.f32 %v6026, %v6303
  %v6716 = vadd.f32 %v6027, %v6305
  %v6717 = vadd.f32 %v6028, %v6307
  %v6718 = vadd.f32 %v6029, %v6309
  %v6719 = vadd.f32 %v6030, %v6311
  %v6720 = vadd.f32 %v6031, %v6313
  %v6721 = vadd.f32 %v6032, %v6315
  %v6722 = vadd.f32 %v6033, %v6317
  %v6723 = vadd.f32 %v6034, %v6319
  %v6724 = vadd.f32 %v6035, %v6321
  %v6725 = vadd.f32 %v6036, %v6323
  %v6726 = vadd.f32 %v6037, %v6325
  %v6727 = vadd.f32 %v6038, %v6327
  %v6728 = vadd.f32 %v6039, %v6329
  %v6729 = vadd.f32 %v6040, %v6331
  %v6730 = vadd.f32 %v6041, %v6333
  %v6731 = vadd.f32 %v6042, %v6335
  %v6732 = vadd.f32 %v6043, %v6337
  %v6733 = vadd.f32 %v6044, %v6339
  %v6734 = vadd.f32 %v6045, %v6341
  %v6735 = vadd.f32 %v6046, %v6343
  %v6736 = vadd.f32 %v6047, %v6345
  %v6737 = vadd.f32 %v6048, %v6347
  %v6738 = vadd.f32 %v6049, %v6349
  %v6739 = vadd.f32 %v6050, %v6351
  %v6740 = vadd.f32 %v6051, %v6353
  %v6741 = vadd.f32 %v6052, %v6355
  %v6742 = vadd.f32 %v6053, %v6357
  %v6743 = vadd.f32 %v6054, %v6359
  %v6744 = vadd.f32 %v6055, %v6361
  %v6745 = vadd.f32 %v6056, %v6363
  %v6746 = vadd.f32 %v6057, %v6365
  %v6747 = vadd.f32 %v6058, %v6367
  %v6748 = vadd.f32 %v6059, %v6369
  %v6749 = vadd.f32 %v6060, %v6371
  %v6750 = vadd.f32 %v6061, %v6373
  %v6751 = vadd.f32 %v6062, %v6375
  %v6752 = vadd.f32 %v6063, %v6377
  %v6753 = vadd.f32 %v6064, %v6379
  %v6754 = vadd.f32 %v6065, %v6381
  %v6755 = vadd.f32 %v6066, %v6383
  %v6756 = vadd.f32 %v6067, %v6385
  %v6757 = vadd.f32 %v6068, %v6387
  %v6758 = vadd.f32 %v6069, %v6389
  %v6759 = vadd.f32 %v6070, %v6391
  %v6760 = vadd.f32 %v6071, %v6393
  %v6761 = vadd.f32 %v6072, %v6395
  %v6762 = vadd.f32 %v6073, %v6397
  %v6763 = vadd.f32 %v6074, %v6399
  %v6764 = vadd.f32 %v6075, %v6401
  %v6765 = vadd.f32 %v6076, %v6403
  %v6766 = vadd.f32 %v6077, %v6405
  %v6767 = vadd.f32 %v6078, %v6407
  %v6768 = vadd.f32 %v6079, %v6409
  %v6769 = vadd.f32 %v6080, %v6411
  %v6770 = vadd.f32 %v6081, %v6413
  %v6771 = vadd.f32 %v6082, %v6415
  %v6772 = vadd.f32 %v6083, %v6417
  %v6773 = vadd.f32 %v6084, %v6419
  %v6774 = vadd.f32 %v6085, %v6421
  %v6775 = vadd.f32 %v6086, %v6423
  %v6776 = vadd.f32 %v6087, %v6425
  %v6777 = vadd.f32 %v6088, %v6427
  %v6778 = vadd.f32 %v6089, %v6429
  %v6779 = vadd.f32 %v6090, %v6431
  %v6780 = vadd.f32 %v6091, %v6433
  %v6781 = vadd.f32 %v6092, %v6435
  %v6782 = vadd.f32 %v6093, %v6437
  %v6783 = vadd.f32 %v6094, %v6439
  %v6784 = vadd.f32 %v6095, %v6441
  %v6785 = vadd.f32 %v6096, %v6443
  %v6786 = vadd.f32 %v6097, %v6445
  %v6787 = vadd.f32 %v6098, %v6447
  %v6788 = vadd.f32 %v6099, %v6449
  %v6789 = vadd.f32 %v6100, %v6451
  %6791 = vrot.lane.b32.xlu0 %v1176, 16
  %v6792 = vpop.permute.xlu0 %6791
  %6793 = vrot.lane.b32.xlu0 %v1179, 16
  %v6794 = vpop.permute.xlu0 %6793
  %6795 = vrot.lane.b32.xlu0 %v1182, 16
  %v6796 = vpop.permute.xlu0 %6795
  %6797 = vrot.lane.b32.xlu0 %v1185, 16
  %v6798 = vpop.permute.xlu0 %6797
  %6799 = vrot.lane.b32.xlu0 %v1188, 16
  %v6800 = vpop.permute.xlu0 %6799
  %6801 = vrot.lane.b32.xlu0 %v1191, 16
  %v6802 = vpop.permute.xlu0 %6801
  %6803 = vrot.lane.b32.xlu0 %v1194, 16
  %v6804 = vpop.permute.xlu0 %6803
  %6805 = vrot.lane.b32.xlu0 %v1197, 16
  %v6806 = vpop.permute.xlu0 %6805
  %6807 = vrot.lane.b32.xlu0 %v1200, 16
  %v6808 = vpop.permute.xlu0 %6807
  %6809 = vrot.lane.b32.xlu0 %v1203, 16
  %v6810 = vpop.permute.xlu0 %6809
  %6811 = vrot.lane.b32.xlu0 %v1206, 16
  %v6812 = vpop.permute.xlu0 %6811
  %6813 = vrot.lane.b32.xlu0 %v1209, 16
  %v6814 = vpop.permute.xlu0 %6813
  %6815 = vrot.lane.b32.xlu0 %v1212, 16
  %v6816 = vpop.permute.xlu0 %6815
  %6817 = vrot.lane.b32.xlu0 %v1223, 16
  %v6818 = vpop.permute.xlu0 %6817
  %6819 = vrot.lane.b32.xlu0 %v1226, 16
  %v6820 = vpop.permute.xlu0 %6819
  %6821 = vrot.lane.b32.xlu0 %v1229, 16
  %v6822 = vpop.permute.xlu0 %6821
  %6823 = vrot.lane.b32.xlu0 %v1232, 16
  %v6824 = vpop.permute.xlu0 %6823
  %6825 = vrot.lane.b32.xlu0 %v1235, 16
  %v6826 = vpop.permute.xlu0 %6825
  %6827 = vrot.lane.b32.xlu0 %v1238, 16
  %v6828 = vpop.permute.xlu0 %6827
  %6829 = vrot.lane.b32.xlu0 %v1241, 16
  %v6830 = vpop.permute.xlu0 %6829
  %6831 = vrot.lane.b32.xlu0 %v1244, 16
  %v6832 = vpop.permute.xlu0 %6831
  %6833 = vrot.lane.b32.xlu0 %v1247, 16
  %v6834 = vpop.permute.xlu0 %6833
  %6835 = vrot.lane.b32.xlu0 %v1250, 16
  %v6836 = vpop.permute.xlu0 %6835
  %6837 = vrot.lane.b32.xlu0 %v1253, 16
  %v6838 = vpop.permute.xlu0 %6837
  %6839 = vrot.lane.b32.xlu0 %v1256, 16
  %v6840 = vpop.permute.xlu0 %6839
  %6841 = vrot.lane.b32.xlu0 %v1259, 16
  %v6842 = vpop.permute.xlu0 %6841
  %6843 = vrot.lane.b32.xlu0 %v1270, 16
  %v6844 = vpop.permute.xlu0 %6843
  %6845 = vrot.lane.b32.xlu0 %v1273, 16
  %v6846 = vpop.permute.xlu0 %6845
  %6847 = vrot.lane.b32.xlu0 %v1276, 16
  %v6848 = vpop.permute.xlu0 %6847
  %6849 = vrot.lane.b32.xlu0 %v1279, 16
  %v6850 = vpop.permute.xlu0 %6849
  %6851 = vrot.lane.b32.xlu0 %v1282, 16
  %v6852 = vpop.permute.xlu0 %6851
  %6853 = vrot.lane.b32.xlu0 %v1285, 16
  %v6854 = vpop.permute.xlu0 %6853
  %6855 = vrot.lane.b32.xlu0 %v1288, 16
  %v6856 = vpop.permute.xlu0 %6855
  %6857 = vrot.lane.b32.xlu0 %v1291, 16
  %v6858 = vpop.permute.xlu0 %6857
  %6859 = vrot.lane.b32.xlu0 %v1294, 16
  %v6860 = vpop.permute.xlu0 %6859
  %6861 = vrot.lane.b32.xlu0 %v1297, 16
  %v6862 = vpop.permute.xlu0 %6861
  %6863 = vrot.lane.b32.xlu0 %v1300, 16
  %v6864 = vpop.permute.xlu0 %6863
  %6865 = vrot.lane.b32.xlu0 %v1303, 16
  %v6866 = vpop.permute.xlu0 %6865
  %6867 = vrot.lane.b32.xlu0 %v1306, 16
  %v6868 = vpop.permute.xlu0 %6867
  %6869 = vrot.lane.b32.xlu0 %v1317, 16
  %v6870 = vpop.permute.xlu0 %6869
  %6871 = vrot.lane.b32.xlu0 %v1320, 16
  %v6872 = vpop.permute.xlu0 %6871
  %6873 = vrot.lane.b32.xlu0 %v1323, 16
  %v6874 = vpop.permute.xlu0 %6873
  %6875 = vrot.lane.b32.xlu0 %v1326, 16
  %v6876 = vpop.permute.xlu0 %6875
  %6877 = vrot.lane.b32.xlu0 %v1329, 16
  %v6878 = vpop.permute.xlu0 %6877
  %6879 = vrot.lane.b32.xlu0 %v1332, 16
  %v6880 = vpop.permute.xlu0 %6879
  %6881 = vrot.lane.b32.xlu0 %v1335, 16
  %v6882 = vpop.permute.xlu0 %6881
  %6883 = vrot.lane.b32.xlu0 %v1338, 16
  %v6884 = vpop.permute.xlu0 %6883
  %6885 = vrot.lane.b32.xlu0 %v1341, 16
  %v6886 = vpop.permute.xlu0 %6885
  %6887 = vrot.lane.b32.xlu0 %v1344, 16
  %v6888 = vpop.permute.xlu0 %6887
  %6889 = vrot.lane.b32.xlu0 %v1347, 16
  %v6890 = vpop.permute.xlu0 %6889
  %6891 = vrot.lane.b32.xlu0 %v1350, 16
  %v6892 = vpop.permute.xlu0 %6891
  %6893 = vrot.lane.b32.xlu0 %v1353, 16
  %v6894 = vpop.permute.xlu0 %6893
  %6895 = vrot.lane.b32.xlu0 %v1364, 16
  %v6896 = vpop.permute.xlu0 %6895
  %6897 = vrot.lane.b32.xlu0 %v1367, 16
  %v6898 = vpop.permute.xlu0 %6897
  %6899 = vrot.lane.b32.xlu0 %v1370, 16
  %v6900 = vpop.permute.xlu0 %6899
  %6901 = vrot.lane.b32.xlu0 %v1373, 16
  %v6902 = vpop.permute.xlu0 %6901
  %6903 = vrot.lane.b32.xlu0 %v1376, 16
  %v6904 = vpop.permute.xlu0 %6903
  %6905 = vrot.lane.b32.xlu0 %v1379, 16
  %v6906 = vpop.permute.xlu0 %6905
  %6907 = vrot.lane.b32.xlu0 %v1382, 16
  %v6908 = vpop.permute.xlu0 %6907
  %6909 = vrot.lane.b32.xlu0 %v1385, 16
  %v6910 = vpop.permute.xlu0 %6909
  %6911 = vrot.lane.b32.xlu0 %v1388, 16
  %v6912 = vpop.permute.xlu0 %6911
  %6913 = vrot.lane.b32.xlu0 %v1391, 16
  %v6914 = vpop.permute.xlu0 %6913
  %6915 = vrot.lane.b32.xlu0 %v1394, 16
  %v6916 = vpop.permute.xlu0 %6915
  %6917 = vrot.lane.b32.xlu0 %v1397, 16
  %v6918 = vpop.permute.xlu0 %6917
  %6919 = vrot.lane.b32.xlu0 %v1400, 16
  %v6920 = vpop.permute.xlu0 %6919
  %6921 = vrot.lane.b32.xlu0 %v1411, 16
  %v6922 = vpop.permute.xlu0 %6921
  %6923 = vrot.lane.b32.xlu0 %v1414, 16
  %v6924 = vpop.permute.xlu0 %6923
  %6925 = vrot.lane.b32.xlu0 %v1417, 16
  %v6926 = vpop.permute.xlu0 %6925
  %6927 = vrot.lane.b32.xlu0 %v1420, 16
  %v6928 = vpop.permute.xlu0 %6927
  %6929 = vrot.lane.b32.xlu0 %v1423, 16
  %v6930 = vpop.permute.xlu0 %6929
  %6931 = vrot.lane.b32.xlu0 %v1426, 16
  %v6932 = vpop.permute.xlu0 %6931
  %6933 = vrot.lane.b32.xlu0 %v1429, 16
  %v6934 = vpop.permute.xlu0 %6933
  %6935 = vrot.lane.b32.xlu0 %v1432, 16
  %v6936 = vpop.permute.xlu0 %6935
  %6937 = vrot.lane.b32.xlu0 %v1435, 16
  %v6938 = vpop.permute.xlu0 %6937
  %6939 = vrot.lane.b32.xlu0 %v1438, 16
  %v6940 = vpop.permute.xlu0 %6939
  %6941 = vrot.lane.b32.xlu0 %v1441, 16
  %v6942 = vpop.permute.xlu0 %6941
  %6943 = vrot.lane.b32.xlu0 %v1444, 16
  %v6944 = vpop.permute.xlu0 %6943
  %6945 = vrot.lane.b32.xlu0 %v1447, 16
  %v6946 = vpop.permute.xlu0 %6945
  %6947 = vrot.lane.b32.xlu0 %v1458, 16
  %v6948 = vpop.permute.xlu0 %6947
  %6949 = vrot.lane.b32.xlu0 %v1461, 16
  %v6950 = vpop.permute.xlu0 %6949
  %6951 = vrot.lane.b32.xlu0 %v1464, 16
  %v6952 = vpop.permute.xlu0 %6951
  %6953 = vrot.lane.b32.xlu0 %v1467, 16
  %v6954 = vpop.permute.xlu0 %6953
  %6955 = vrot.lane.b32.xlu0 %v1470, 16
  %v6956 = vpop.permute.xlu0 %6955
  %6957 = vrot.lane.b32.xlu0 %v1473, 16
  %v6958 = vpop.permute.xlu0 %6957
  %6959 = vrot.lane.b32.xlu0 %v1476, 16
  %v6960 = vpop.permute.xlu0 %6959
  %6961 = vrot.lane.b32.xlu0 %v1479, 16
  %v6962 = vpop.permute.xlu0 %6961
  %6963 = vrot.lane.b32.xlu0 %v1482, 16
  %v6964 = vpop.permute.xlu0 %6963
  %6965 = vrot.lane.b32.xlu0 %v1485, 16
  %v6966 = vpop.permute.xlu0 %6965
  %6967 = vrot.lane.b32.xlu0 %v1488, 16
  %v6968 = vpop.permute.xlu0 %6967
  %6969 = vrot.lane.b32.xlu0 %v1491, 16
  %v6970 = vpop.permute.xlu0 %6969
  %6971 = vrot.lane.b32.xlu0 %v1494, 16
  %v6972 = vpop.permute.xlu0 %6971
  %6973 = vrot.lane.b32.xlu0 %v1505, 16
  %v6974 = vpop.permute.xlu0 %6973
  %6975 = vrot.lane.b32.xlu0 %v1508, 16
  %v6976 = vpop.permute.xlu0 %6975
  %6977 = vrot.lane.b32.xlu0 %v1511, 16
  %v6978 = vpop.permute.xlu0 %6977
  %6979 = vrot.lane.b32.xlu0 %v1514, 16
  %v6980 = vpop.permute.xlu0 %6979
  %6981 = vrot.lane.b32.xlu0 %v1517, 16
  %v6982 = vpop.permute.xlu0 %6981
  %6983 = vrot.lane.b32.xlu0 %v1520, 16
  %v6984 = vpop.permute.xlu0 %6983
  %6985 = vrot.lane.b32.xlu0 %v1523, 16
  %v6986 = vpop.permute.xlu0 %6985
  %6987 = vrot.lane.b32.xlu0 %v1526, 16
  %v6988 = vpop.permute.xlu0 %6987
  %6989 = vrot.lane.b32.xlu0 %v1529, 16
  %v6990 = vpop.permute.xlu0 %6989
  %6991 = vrot.lane.b32.xlu0 %v1532, 16
  %v6992 = vpop.permute.xlu0 %6991
  %6993 = vrot.lane.b32.xlu0 %v1535, 16
  %v6994 = vpop.permute.xlu0 %6993
  %6995 = vrot.lane.b32.xlu0 %v1538, 16
  %v6996 = vpop.permute.xlu0 %6995
  %6997 = vrot.lane.b32.xlu0 %v1541, 16
  %v6998 = vpop.permute.xlu0 %6997
  %6999 = vrot.lane.b32.xlu0 %v1552, 16
  %v7000 = vpop.permute.xlu0 %6999
  %7001 = vrot.lane.b32.xlu0 %v1555, 16
  %v7002 = vpop.permute.xlu0 %7001
  %7003 = vrot.lane.b32.xlu0 %v1558, 16
  %v7004 = vpop.permute.xlu0 %7003
  %7005 = vrot.lane.b32.xlu0 %v1561, 16
  %v7006 = vpop.permute.xlu0 %7005
  %7007 = vrot.lane.b32.xlu0 %v1564, 16
  %v7008 = vpop.permute.xlu0 %7007
  %7009 = vrot.lane.b32.xlu0 %v1567, 16
  %v7010 = vpop.permute.xlu0 %7009
  %7011 = vrot.lane.b32.xlu0 %v1570, 16
  %v7012 = vpop.permute.xlu0 %7011
  %7013 = vrot.lane.b32.xlu0 %v1573, 16
  %v7014 = vpop.permute.xlu0 %7013
  %7015 = vrot.lane.b32.xlu0 %v1576, 16
  %v7016 = vpop.permute.xlu0 %7015
  %7017 = vrot.lane.b32.xlu0 %v1579, 16
  %v7018 = vpop.permute.xlu0 %7017
  %7019 = vrot.lane.b32.xlu0 %v1582, 16
  %v7020 = vpop.permute.xlu0 %7019
  %7021 = vrot.lane.b32.xlu0 %v1585, 16
  %v7022 = vpop.permute.xlu0 %7021
  %7023 = vrot.lane.b32.xlu0 %v1588, 16
  %v7024 = vpop.permute.xlu0 %7023
  %7025 = vrot.lane.b32.xlu0 %v1599, 16
  %v7026 = vpop.permute.xlu0 %7025
  %7027 = vrot.lane.b32.xlu0 %v1602, 16
  %v7028 = vpop.permute.xlu0 %7027
  %7029 = vrot.lane.b32.xlu0 %v1605, 16
  %v7030 = vpop.permute.xlu0 %7029
  %7031 = vrot.lane.b32.xlu0 %v1608, 16
  %v7032 = vpop.permute.xlu0 %7031
  %7033 = vrot.lane.b32.xlu0 %v1611, 16
  %v7034 = vpop.permute.xlu0 %7033
  %7035 = vrot.lane.b32.xlu0 %v1614, 16
  %v7036 = vpop.permute.xlu0 %7035
  %7037 = vrot.lane.b32.xlu0 %v1617, 16
  %v7038 = vpop.permute.xlu0 %7037
  %7039 = vrot.lane.b32.xlu0 %v1620, 16
  %v7040 = vpop.permute.xlu0 %7039
  %7041 = vrot.lane.b32.xlu0 %v1623, 16
  %v7042 = vpop.permute.xlu0 %7041
  %7043 = vrot.lane.b32.xlu0 %v1626, 16
  %v7044 = vpop.permute.xlu0 %7043
  %7045 = vrot.lane.b32.xlu0 %v1629, 16
  %v7046 = vpop.permute.xlu0 %7045
  %7047 = vrot.lane.b32.xlu0 %v1632, 16
  %v7048 = vpop.permute.xlu0 %7047
  %7049 = vrot.lane.b32.xlu0 %v1635, 16
  %v7050 = vpop.permute.xlu0 %7049
  %7051 = vrot.lane.b32.xlu0 %v1646, 16
  %v7052 = vpop.permute.xlu0 %7051
  %7053 = vrot.lane.b32.xlu0 %v1649, 16
  %v7054 = vpop.permute.xlu0 %7053
  %7055 = vrot.lane.b32.xlu0 %v1652, 16
  %v7056 = vpop.permute.xlu0 %7055
  %7057 = vrot.lane.b32.xlu0 %v1655, 16
  %v7058 = vpop.permute.xlu0 %7057
  %7059 = vrot.lane.b32.xlu0 %v1658, 16
  %v7060 = vpop.permute.xlu0 %7059
  %7061 = vrot.lane.b32.xlu0 %v1661, 16
  %v7062 = vpop.permute.xlu0 %7061
  %7063 = vrot.lane.b32.xlu0 %v1664, 16
  %v7064 = vpop.permute.xlu0 %7063
  %7065 = vrot.lane.b32.xlu0 %v1667, 16
  %v7066 = vpop.permute.xlu0 %7065
  %7067 = vrot.lane.b32.xlu0 %v1670, 16
  %v7068 = vpop.permute.xlu0 %7067
  %7069 = vrot.lane.b32.xlu0 %v1673, 16
  %v7070 = vpop.permute.xlu0 %7069
  %7071 = vrot.lane.b32.xlu0 %v1676, 16
  %v7072 = vpop.permute.xlu0 %7071
  %7073 = vrot.lane.b32.xlu0 %v1679, 16
  %v7074 = vpop.permute.xlu0 %7073
  %7075 = vrot.lane.b32.xlu0 %v1682, 16
  %v7076 = vpop.permute.xlu0 %7075
  %7077 = vrot.lane.b32.xlu0 %v1693, 16
  %v7078 = vpop.permute.xlu0 %7077
  %7079 = vrot.lane.b32.xlu0 %v1696, 16
  %v7080 = vpop.permute.xlu0 %7079
  %7081 = vrot.lane.b32.xlu0 %v1699, 16
  %v7082 = vpop.permute.xlu0 %7081
  %7083 = vrot.lane.b32.xlu0 %v1702, 16
  %v7084 = vpop.permute.xlu0 %7083
  %7085 = vrot.lane.b32.xlu0 %v1705, 16
  %v7086 = vpop.permute.xlu0 %7085
  %7087 = vrot.lane.b32.xlu0 %v1708, 16
  %v7088 = vpop.permute.xlu0 %7087
  %7089 = vrot.lane.b32.xlu0 %v1711, 16
  %v7090 = vpop.permute.xlu0 %7089
  %7091 = vrot.lane.b32.xlu0 %v1714, 16
  %v7092 = vpop.permute.xlu0 %7091
  %7093 = vrot.lane.b32.xlu0 %v1717, 16
  %v7094 = vpop.permute.xlu0 %7093
  %7095 = vrot.lane.b32.xlu0 %v1720, 16
  %v7096 = vpop.permute.xlu0 %7095
  %7097 = vrot.lane.b32.xlu0 %v1723, 16
  %v7098 = vpop.permute.xlu0 %7097
  %7099 = vrot.lane.b32.xlu0 %v1726, 16
  %v7100 = vpop.permute.xlu0 %7099
  %7101 = vrot.lane.b32.xlu0 %v1729, 16
  %v7102 = vpop.permute.xlu0 %7101
  %7103 = vrot.lane.b32.xlu0 %v1740, 16
  %v7104 = vpop.permute.xlu0 %7103
  %7105 = vrot.lane.b32.xlu0 %v1743, 16
  %v7106 = vpop.permute.xlu0 %7105
  %7107 = vrot.lane.b32.xlu0 %v1746, 16
  %v7108 = vpop.permute.xlu0 %7107
  %7109 = vrot.lane.b32.xlu0 %v1749, 16
  %v7110 = vpop.permute.xlu0 %7109
  %7111 = vrot.lane.b32.xlu0 %v1752, 16
  %v7112 = vpop.permute.xlu0 %7111
  %7113 = vrot.lane.b32.xlu0 %v1755, 16
  %v7114 = vpop.permute.xlu0 %7113
  %7115 = vrot.lane.b32.xlu0 %v1758, 16
  %v7116 = vpop.permute.xlu0 %7115
  %7117 = vrot.lane.b32.xlu0 %v1761, 16
  %v7118 = vpop.permute.xlu0 %7117
  %7119 = vrot.lane.b32.xlu0 %v1764, 16
  %v7120 = vpop.permute.xlu0 %7119
  %7121 = vrot.lane.b32.xlu0 %v1767, 16
  %v7122 = vpop.permute.xlu0 %7121
  %7123 = vrot.lane.b32.xlu0 %v1770, 16
  %v7124 = vpop.permute.xlu0 %7123
  %7125 = vrot.lane.b32.xlu0 %v1773, 16
  %v7126 = vpop.permute.xlu0 %7125
  %7127 = vrot.lane.b32.xlu0 %v1776, 16
  %v7128 = vpop.permute.xlu0 %7127
  %v7298 = vadd.f32 %v6621, %v6792
  %v7299 = vadd.f32 %v6622, %v6794
  %v7300 = vadd.f32 %v6623, %v6796
  %v7301 = vadd.f32 %v6624, %v6798
  %v7302 = vadd.f32 %v6625, %v6800
  %v7303 = vadd.f32 %v6626, %v6802
  %v7304 = vadd.f32 %v6627, %v6804
  %v7305 = vadd.f32 %v6628, %v6806
  %v7306 = vadd.f32 %v6629, %v6808
  %v7307 = vadd.f32 %v6630, %v6810
  %v7308 = vadd.f32 %v6631, %v6812
  %v7309 = vadd.f32 %v6632, %v6814
  %v7310 = vadd.f32 %v6633, %v6816
  %v7311 = vadd.f32 %v6634, %v6818
  %v7312 = vadd.f32 %v6635, %v6820
  %v7313 = vadd.f32 %v6636, %v6822
  %v7314 = vadd.f32 %v6637, %v6824
  %v7315 = vadd.f32 %v6638, %v6826
  %v7316 = vadd.f32 %v6639, %v6828
  %v7317 = vadd.f32 %v6640, %v6830
  %v7318 = vadd.f32 %v6641, %v6832
  %v7319 = vadd.f32 %v6642, %v6834
  %v7320 = vadd.f32 %v6643, %v6836
  %v7321 = vadd.f32 %v6644, %v6838
  %v7322 = vadd.f32 %v6645, %v6840
  %v7323 = vadd.f32 %v6646, %v6842
  %v7324 = vadd.f32 %v6647, %v6844
  %v7325 = vadd.f32 %v6648, %v6846
  %v7326 = vadd.f32 %v6649, %v6848
  %v7327 = vadd.f32 %v6650, %v6850
  %v7328 = vadd.f32 %v6651, %v6852
  %v7329 = vadd.f32 %v6652, %v6854
  %v7330 = vadd.f32 %v6653, %v6856
  %v7331 = vadd.f32 %v6654, %v6858
  %v7332 = vadd.f32 %v6655, %v6860
  %v7333 = vadd.f32 %v6656, %v6862
  %v7334 = vadd.f32 %v6657, %v6864
  %v7335 = vadd.f32 %v6658, %v6866
  %v7336 = vadd.f32 %v6659, %v6868
  %v7337 = vadd.f32 %v6660, %v6870
  %v7338 = vadd.f32 %v6661, %v6872
  %v7339 = vadd.f32 %v6662, %v6874
  %v7340 = vadd.f32 %v6663, %v6876
  %v7341 = vadd.f32 %v6664, %v6878
  %v7342 = vadd.f32 %v6665, %v6880
  %v7343 = vadd.f32 %v6666, %v6882
  %v7344 = vadd.f32 %v6667, %v6884
  %v7345 = vadd.f32 %v6668, %v6886
  %v7346 = vadd.f32 %v6669, %v6888
  %v7347 = vadd.f32 %v6670, %v6890
  %v7348 = vadd.f32 %v6671, %v6892
  %v7349 = vadd.f32 %v6672, %v6894
  %v7350 = vadd.f32 %v6673, %v6896
  %v7351 = vadd.f32 %v6674, %v6898
  %v7352 = vadd.f32 %v6675, %v6900
  %v7353 = vadd.f32 %v6676, %v6902
  %v7354 = vadd.f32 %v6677, %v6904
  %v7355 = vadd.f32 %v6678, %v6906
  %v7356 = vadd.f32 %v6679, %v6908
  %v7357 = vadd.f32 %v6680, %v6910
  %v7358 = vadd.f32 %v6681, %v6912
  %v7359 = vadd.f32 %v6682, %v6914
  %v7360 = vadd.f32 %v6683, %v6916
  %v7361 = vadd.f32 %v6684, %v6918
  %v7362 = vadd.f32 %v6685, %v6920
  %v7363 = vadd.f32 %v6686, %v6922
  %v7364 = vadd.f32 %v6687, %v6924
  %v7365 = vadd.f32 %v6688, %v6926
  %v7366 = vadd.f32 %v6689, %v6928
  %v7367 = vadd.f32 %v6690, %v6930
  %v7368 = vadd.f32 %v6691, %v6932
  %v7369 = vadd.f32 %v6692, %v6934
  %v7370 = vadd.f32 %v6693, %v6936
  %v7371 = vadd.f32 %v6694, %v6938
  %v7372 = vadd.f32 %v6695, %v6940
  %v7373 = vadd.f32 %v6696, %v6942
  %v7374 = vadd.f32 %v6697, %v6944
  %v7375 = vadd.f32 %v6698, %v6946
  %v7376 = vadd.f32 %v6699, %v6948
  %v7377 = vadd.f32 %v6700, %v6950
  %v7378 = vadd.f32 %v6701, %v6952
  %v7379 = vadd.f32 %v6702, %v6954
  %v7380 = vadd.f32 %v6703, %v6956
  %v7381 = vadd.f32 %v6704, %v6958
  %v7382 = vadd.f32 %v6705, %v6960
  %v7383 = vadd.f32 %v6706, %v6962
  %v7384 = vadd.f32 %v6707, %v6964
  %v7385 = vadd.f32 %v6708, %v6966
  %v7386 = vadd.f32 %v6709, %v6968
  %v7387 = vadd.f32 %v6710, %v6970
  %v7388 = vadd.f32 %v6711, %v6972
  %v7389 = vadd.f32 %v6712, %v6974
  %v7390 = vadd.f32 %v6713, %v6976
  %v7391 = vadd.f32 %v6714, %v6978
  %v7392 = vadd.f32 %v6715, %v6980
  %v7393 = vadd.f32 %v6716, %v6982
  %v7394 = vadd.f32 %v6717, %v6984
  %v7395 = vadd.f32 %v6718, %v6986
  %v7396 = vadd.f32 %v6719, %v6988
  %v7397 = vadd.f32 %v6720, %v6990
  %v7398 = vadd.f32 %v6721, %v6992
  %v7399 = vadd.f32 %v6722, %v6994
  %v7400 = vadd.f32 %v6723, %v6996
  %v7401 = vadd.f32 %v6724, %v6998
  %v7402 = vadd.f32 %v6725, %v7000
  %v7403 = vadd.f32 %v6726, %v7002
  %v7404 = vadd.f32 %v6727, %v7004
  %v7405 = vadd.f32 %v6728, %v7006
  %v7406 = vadd.f32 %v6729, %v7008
  %v7407 = vadd.f32 %v6730, %v7010
  %v7408 = vadd.f32 %v6731, %v7012
  %v7409 = vadd.f32 %v6732, %v7014
  %v7410 = vadd.f32 %v6733, %v7016
  %v7411 = vadd.f32 %v6734, %v7018
  %v7412 = vadd.f32 %v6735, %v7020
  %v7413 = vadd.f32 %v6736, %v7022
  %v7414 = vadd.f32 %v6737, %v7024
  %v7415 = vadd.f32 %v6738, %v7026
  %v7416 = vadd.f32 %v6739, %v7028
  %v7417 = vadd.f32 %v6740, %v7030
  %v7418 = vadd.f32 %v6741, %v7032
  %v7419 = vadd.f32 %v6742, %v7034
  %v7420 = vadd.f32 %v6743, %v7036
  %v7421 = vadd.f32 %v6744, %v7038
  %v7422 = vadd.f32 %v6745, %v7040
  %v7423 = vadd.f32 %v6746, %v7042
  %v7424 = vadd.f32 %v6747, %v7044
  %v7425 = vadd.f32 %v6748, %v7046
  %v7426 = vadd.f32 %v6749, %v7048
  %v7427 = vadd.f32 %v6750, %v7050
  %v7428 = vadd.f32 %v6751, %v7052
  %v7429 = vadd.f32 %v6752, %v7054
  %v7430 = vadd.f32 %v6753, %v7056
  %v7431 = vadd.f32 %v6754, %v7058
  %v7432 = vadd.f32 %v6755, %v7060
  %v7433 = vadd.f32 %v6756, %v7062
  %v7434 = vadd.f32 %v6757, %v7064
  %v7435 = vadd.f32 %v6758, %v7066
  %v7436 = vadd.f32 %v6759, %v7068
  %v7437 = vadd.f32 %v6760, %v7070
  %v7438 = vadd.f32 %v6761, %v7072
  %v7439 = vadd.f32 %v6762, %v7074
  %v7440 = vadd.f32 %v6763, %v7076
  %v7441 = vadd.f32 %v6764, %v7078
  %v7442 = vadd.f32 %v6765, %v7080
  %v7443 = vadd.f32 %v6766, %v7082
  %v7444 = vadd.f32 %v6767, %v7084
  %v7445 = vadd.f32 %v6768, %v7086
  %v7446 = vadd.f32 %v6769, %v7088
  %v7447 = vadd.f32 %v6770, %v7090
  %v7448 = vadd.f32 %v6771, %v7092
  %v7449 = vadd.f32 %v6772, %v7094
  %v7450 = vadd.f32 %v6773, %v7096
  %v7451 = vadd.f32 %v6774, %v7098
  %v7452 = vadd.f32 %v6775, %v7100
  %v7453 = vadd.f32 %v6776, %v7102
  %v7454 = vadd.f32 %v6777, %v7104
  %v7455 = vadd.f32 %v6778, %v7106
  %v7456 = vadd.f32 %v6779, %v7108
  %v7457 = vadd.f32 %v6780, %v7110
  %v7458 = vadd.f32 %v6781, %v7112
  %v7459 = vadd.f32 %v6782, %v7114
  %v7460 = vadd.f32 %v6783, %v7116
  %v7461 = vadd.f32 %v6784, %v7118
  %v7462 = vadd.f32 %v6785, %v7120
  %v7463 = vadd.f32 %v6786, %v7122
  %v7464 = vadd.f32 %v6787, %v7124
  %v7465 = vadd.f32 %v6788, %v7126
  %v7466 = vadd.f32 %v6789, %v7128
  %v7467 = vadd.f32 %v7298, %v1900
  %v7468 = vadd.f32 %v7299, %v1903
  %v7469 = vadd.f32 %v7300, %v1906
  %v7470 = vadd.f32 %v7301, %v1909
  %v7471 = vadd.f32 %v7302, %v1912
  %v7472 = vadd.f32 %v7303, %v1915
  %v7473 = vadd.f32 %v7304, %v1918
  %v7474 = vadd.f32 %v7305, %v1921
  %v7475 = vadd.f32 %v7306, %v1924
  %v7476 = vadd.f32 %v7307, %v1927
  %v7477 = vadd.f32 %v7308, %v1930
  %v7478 = vadd.f32 %v7309, %v1933
  %v7479 = vadd.f32 %v7310, %v1936
  %v7480 = vadd.f32 %v7311, %v1945
  %v7481 = vadd.f32 %v7312, %v1948
  %v7482 = vadd.f32 %v7313, %v1951
  %v7483 = vadd.f32 %v7314, %v1954
  %v7484 = vadd.f32 %v7315, %v1957
  %v7485 = vadd.f32 %v7316, %v1960
  %v7486 = vadd.f32 %v7317, %v1963
  %v7487 = vadd.f32 %v7318, %v1966
  %v7488 = vadd.f32 %v7319, %v1969
  %v7489 = vadd.f32 %v7320, %v1972
  %v7490 = vadd.f32 %v7321, %v1975
  %v7491 = vadd.f32 %v7322, %v1978
  %v7492 = vadd.f32 %v7323, %v1981
  %v7493 = vadd.f32 %v7324, %v1990
  %v7494 = vadd.f32 %v7325, %v1993
  %v7495 = vadd.f32 %v7326, %v1996
  %v7496 = vadd.f32 %v7327, %v1999
  %v7497 = vadd.f32 %v7328, %v2002
  %v7498 = vadd.f32 %v7329, %v2005
  %v7499 = vadd.f32 %v7330, %v2008
  %v7500 = vadd.f32 %v7331, %v2011
  %v7501 = vadd.f32 %v7332, %v2014
  %v7502 = vadd.f32 %v7333, %v2017
  %v7503 = vadd.f32 %v7334, %v2020
  %v7504 = vadd.f32 %v7335, %v2023
  %v7505 = vadd.f32 %v7336, %v2026
  %v7506 = vadd.f32 %v7337, %v2035
  %v7507 = vadd.f32 %v7338, %v2038
  %v7508 = vadd.f32 %v7339, %v2041
  %v7509 = vadd.f32 %v7340, %v2044
  %v7510 = vadd.f32 %v7341, %v2047
  %v7511 = vadd.f32 %v7342, %v2050
  %v7512 = vadd.f32 %v7343, %v2053
  %v7513 = vadd.f32 %v7344, %v2056
  %v7514 = vadd.f32 %v7345, %v2059
  %v7515 = vadd.f32 %v7346, %v2062
  %v7516 = vadd.f32 %v7347, %v2065
  %v7517 = vadd.f32 %v7348, %v2068
  %v7518 = vadd.f32 %v7349, %v2071
  %v7519 = vadd.f32 %v7350, %v2080
  %v7520 = vadd.f32 %v7351, %v2083
  %v7521 = vadd.f32 %v7352, %v2086
  %v7522 = vadd.f32 %v7353, %v2089
  %v7523 = vadd.f32 %v7354, %v2092
  %v7524 = vadd.f32 %v7355, %v2095
  %v7525 = vadd.f32 %v7356, %v2098
  %v7526 = vadd.f32 %v7357, %v2101
  %v7527 = vadd.f32 %v7358, %v2104
  %v7528 = vadd.f32 %v7359, %v2107
  %v7529 = vadd.f32 %v7360, %v2110
  %v7530 = vadd.f32 %v7361, %v2113
  %v7531 = vadd.f32 %v7362, %v2116
  %v7532 = vadd.f32 %v7363, %v2125
  %v7533 = vadd.f32 %v7364, %v2128
  %v7534 = vadd.f32 %v7365, %v2131
  %v7535 = vadd.f32 %v7366, %v2134
  %v7536 = vadd.f32 %v7367, %v2137
  %v7537 = vadd.f32 %v7368, %v2140
  %v7538 = vadd.f32 %v7369, %v2143
  %v7539 = vadd.f32 %v7370, %v2146
  %v7540 = vadd.f32 %v7371, %v2149
  %v7541 = vadd.f32 %v7372, %v2152
  %v7542 = vadd.f32 %v7373, %v2155
  %v7543 = vadd.f32 %v7374, %v2158
  %v7544 = vadd.f32 %v7375, %v2161
  %v7545 = vadd.f32 %v7376, %v2170
  %v7546 = vadd.f32 %v7377, %v2173
  %v7547 = vadd.f32 %v7378, %v2176
  %v7548 = vadd.f32 %v7379, %v2179
  %v7549 = vadd.f32 %v7380, %v2182
  %v7550 = vadd.f32 %v7381, %v2185
  %v7551 = vadd.f32 %v7382, %v2188
  %v7552 = vadd.f32 %v7383, %v2191
  %v7553 = vadd.f32 %v7384, %v2194
  %v7554 = vadd.f32 %v7385, %v2197
  %v7555 = vadd.f32 %v7386, %v2200
  %v7556 = vadd.f32 %v7387, %v2203
  %v7557 = vadd.f32 %v7388, %v2206
  %v7558 = vadd.f32 %v7389, %v2215
  %v7559 = vadd.f32 %v7390, %v2218
  %v7560 = vadd.f32 %v7391, %v2221
  %v7561 = vadd.f32 %v7392, %v2224
  %v7562 = vadd.f32 %v7393, %v2227
  %v7563 = vadd.f32 %v7394, %v2230
  %v7564 = vadd.f32 %v7395, %v2233
  %v7565 = vadd.f32 %v7396, %v2236
  %v7566 = vadd.f32 %v7397, %v2239
  %v7567 = vadd.f32 %v7398, %v2242
  %v7568 = vadd.f32 %v7399, %v2245
  %v7569 = vadd.f32 %v7400, %v2248
  %v7570 = vadd.f32 %v7401, %v2251
  %v7571 = vadd.f32 %v7402, %v2260
  %v7572 = vadd.f32 %v7403, %v2263
  %v7573 = vadd.f32 %v7404, %v2266
  %v7574 = vadd.f32 %v7405, %v2269
  %v7575 = vadd.f32 %v7406, %v2272
  %v7576 = vadd.f32 %v7407, %v2275
  %v7577 = vadd.f32 %v7408, %v2278
  %v7578 = vadd.f32 %v7409, %v2281
  %v7579 = vadd.f32 %v7410, %v2284
  %v7580 = vadd.f32 %v7411, %v2287
  %v7581 = vadd.f32 %v7412, %v2290
  %v7582 = vadd.f32 %v7413, %v2293
  %v7583 = vadd.f32 %v7414, %v2296
  %v7584 = vadd.f32 %v7415, %v2305
  %v7585 = vadd.f32 %v7416, %v2308
  %v7586 = vadd.f32 %v7417, %v2311
  %v7587 = vadd.f32 %v7418, %v2314
  %v7588 = vadd.f32 %v7419, %v2317
  %v7589 = vadd.f32 %v7420, %v2320
  %v7590 = vadd.f32 %v7421, %v2323
  %v7591 = vadd.f32 %v7422, %v2326
  %v7592 = vadd.f32 %v7423, %v2329
  %v7593 = vadd.f32 %v7424, %v2332
  %v7594 = vadd.f32 %v7425, %v2335
  %v7595 = vadd.f32 %v7426, %v2338
  %v7596 = vadd.f32 %v7427, %v2341
  %v7597 = vadd.f32 %v7428, %v2350
  %v7598 = vadd.f32 %v7429, %v2353
  %v7599 = vadd.f32 %v7430, %v2356
  %v7600 = vadd.f32 %v7431, %v2359
  %v7601 = vadd.f32 %v7432, %v2362
  %v7602 = vadd.f32 %v7433, %v2365
  %v7603 = vadd.f32 %v7434, %v2368
  %v7604 = vadd.f32 %v7435, %v2371
  %v7605 = vadd.f32 %v7436, %v2374
  %v7606 = vadd.f32 %v7437, %v2377
  %v7607 = vadd.f32 %v7438, %v2380
  %v7608 = vadd.f32 %v7439, %v2383
  %v7609 = vadd.f32 %v7440, %v2386
  %v7610 = vadd.f32 %v7441, %v2395
  %v7611 = vadd.f32 %v7442, %v2398
  %v7612 = vadd.f32 %v7443, %v2401
  %v7613 = vadd.f32 %v7444, %v2404
  %v7614 = vadd.f32 %v7445, %v2407
  %v7615 = vadd.f32 %v7446, %v2410
  %v7616 = vadd.f32 %v7447, %v2413
  %v7617 = vadd.f32 %v7448, %v2416
  %v7618 = vadd.f32 %v7449, %v2419
  %v7619 = vadd.f32 %v7450, %v2422
  %v7620 = vadd.f32 %v7451, %v2425
  %v7621 = vadd.f32 %v7452, %v2428
  %v7622 = vadd.f32 %v7453, %v2431
  %v7623 = vadd.f32 %v7454, %v2440
  %v7624 = vadd.f32 %v7455, %v2443
  %v7625 = vadd.f32 %v7456, %v2446
  %v7626 = vadd.f32 %v7457, %v2449
  %v7627 = vadd.f32 %v7458, %v2452
  %v7628 = vadd.f32 %v7459, %v2455
  %v7629 = vadd.f32 %v7460, %v2458
  %v7630 = vadd.f32 %v7461, %v2461
  %v7631 = vadd.f32 %v7462, %v2464
  %v7632 = vadd.f32 %v7463, %v2467
  %v7633 = vadd.f32 %v7464, %v2470
  %v7634 = vadd.f32 %v7465, %v2473
  %v7635 = vadd.f32 %v7466, %v2476
  %v7636 = vld [vmem:[%s2] sm:$0x1]
  %v7638 = vperm.slane %v7636, 0
  %v7640 = vadd.f32 %v7467, %v7638
  %v7641 = vadd.f32 %v7468, %v7638
  %v7642 = vadd.f32 %v7469, %v7638
  %v7643 = vadd.f32 %v7470, %v7638
  %v7644 = vadd.f32 %v7471, %v7638
  %v7645 = vadd.f32 %v7472, %v7638
  %v7646 = vadd.f32 %v7473, %v7638
  %v7647 = vadd.f32 %v7474, %v7638
  %v7648 = vadd.f32 %v7475, %v7638
  %v7649 = vadd.f32 %v7476, %v7638
  %v7650 = vadd.f32 %v7477, %v7638
  %v7651 = vadd.f32 %v7478, %v7638
  %v7652 = vadd.f32 %v7479, %v7638
  %v7653 = vadd.f32 %v7480, %v7638
  %v7654 = vadd.f32 %v7481, %v7638
  %v7655 = vadd.f32 %v7482, %v7638
  %v7656 = vadd.f32 %v7483, %v7638
  %v7657 = vadd.f32 %v7484, %v7638
  %v7658 = vadd.f32 %v7485, %v7638
  %v7659 = vadd.f32 %v7486, %v7638
  %v7660 = vadd.f32 %v7487, %v7638
  %v7661 = vadd.f32 %v7488, %v7638
  %v7662 = vadd.f32 %v7489, %v7638
  %v7663 = vadd.f32 %v7490, %v7638
  %v7664 = vadd.f32 %v7491, %v7638
  %v7665 = vadd.f32 %v7492, %v7638
  %v7666 = vadd.f32 %v7493, %v7638
  %v7667 = vadd.f32 %v7494, %v7638
  %v7668 = vadd.f32 %v7495, %v7638
  %v7669 = vadd.f32 %v7496, %v7638
  %v7670 = vadd.f32 %v7497, %v7638
  %v7671 = vadd.f32 %v7498, %v7638
  %v7672 = vadd.f32 %v7499, %v7638
  %v7673 = vadd.f32 %v7500, %v7638
  %v7674 = vadd.f32 %v7501, %v7638
  %v7675 = vadd.f32 %v7502, %v7638
  %v7676 = vadd.f32 %v7503, %v7638
  %v7677 = vadd.f32 %v7504, %v7638
  %v7678 = vadd.f32 %v7505, %v7638
  %v7679 = vadd.f32 %v7506, %v7638
  %v7680 = vadd.f32 %v7507, %v7638
  %v7681 = vadd.f32 %v7508, %v7638
  %v7682 = vadd.f32 %v7509, %v7638
  %v7683 = vadd.f32 %v7510, %v7638
  %v7684 = vadd.f32 %v7511, %v7638
  %v7685 = vadd.f32 %v7512, %v7638
  %v7686 = vadd.f32 %v7513, %v7638
  %v7687 = vadd.f32 %v7514, %v7638
  %v7688 = vadd.f32 %v7515, %v7638
  %v7689 = vadd.f32 %v7516, %v7638
  %v7690 = vadd.f32 %v7517, %v7638
  %v7691 = vadd.f32 %v7518, %v7638
  %v7692 = vadd.f32 %v7519, %v7638
  %v7693 = vadd.f32 %v7520, %v7638
  %v7694 = vadd.f32 %v7521, %v7638
  %v7695 = vadd.f32 %v7522, %v7638
  %v7696 = vadd.f32 %v7523, %v7638
  %v7697 = vadd.f32 %v7524, %v7638
  %v7698 = vadd.f32 %v7525, %v7638
  %v7699 = vadd.f32 %v7526, %v7638
  %v7700 = vadd.f32 %v7527, %v7638
  %v7701 = vadd.f32 %v7528, %v7638
  %v7702 = vadd.f32 %v7529, %v7638
  %v7703 = vadd.f32 %v7530, %v7638
  %v7704 = vadd.f32 %v7531, %v7638
  %v7705 = vadd.f32 %v7532, %v7638
  %v7706 = vadd.f32 %v7533, %v7638
  %v7707 = vadd.f32 %v7534, %v7638
  %v7708 = vadd.f32 %v7535, %v7638
  %v7709 = vadd.f32 %v7536, %v7638
  %v7710 = vadd.f32 %v7537, %v7638
  %v7711 = vadd.f32 %v7538, %v7638
  %v7712 = vadd.f32 %v7539, %v7638
  %v7713 = vadd.f32 %v7540, %v7638
  %v7714 = vadd.f32 %v7541, %v7638
  %v7715 = vadd.f32 %v7542, %v7638
  %v7716 = vadd.f32 %v7543, %v7638
  %v7717 = vadd.f32 %v7544, %v7638
  %v7718 = vadd.f32 %v7545, %v7638
  %v7719 = vadd.f32 %v7546, %v7638
  %v7720 = vadd.f32 %v7547, %v7638
  %v7721 = vadd.f32 %v7548, %v7638
  %v7722 = vadd.f32 %v7549, %v7638
  %v7723 = vadd.f32 %v7550, %v7638
  %v7724 = vadd.f32 %v7551, %v7638
  %v7725 = vadd.f32 %v7552, %v7638
  %v7726 = vadd.f32 %v7553, %v7638
  %v7727 = vadd.f32 %v7554, %v7638
  %v7728 = vadd.f32 %v7555, %v7638
  %v7729 = vadd.f32 %v7556, %v7638
  %v7730 = vadd.f32 %v7557, %v7638
  %v7731 = vadd.f32 %v7558, %v7638
  %v7732 = vadd.f32 %v7559, %v7638
  %v7733 = vadd.f32 %v7560, %v7638
  %v7734 = vadd.f32 %v7561, %v7638
  %v7735 = vadd.f32 %v7562, %v7638
  %v7736 = vadd.f32 %v7563, %v7638
  %v7737 = vadd.f32 %v7564, %v7638
  %v7738 = vadd.f32 %v7565, %v7638
  %v7739 = vadd.f32 %v7566, %v7638
  %v7740 = vadd.f32 %v7567, %v7638
  %v7741 = vadd.f32 %v7568, %v7638
  %v7742 = vadd.f32 %v7569, %v7638
  %v7743 = vadd.f32 %v7570, %v7638
  %v7744 = vadd.f32 %v7571, %v7638
  %v7745 = vadd.f32 %v7572, %v7638
  %v7746 = vadd.f32 %v7573, %v7638
  %v7747 = vadd.f32 %v7574, %v7638
  %v7748 = vadd.f32 %v7575, %v7638
  %v7749 = vadd.f32 %v7576, %v7638
  %v7750 = vadd.f32 %v7577, %v7638
  %v7751 = vadd.f32 %v7578, %v7638
  %v7752 = vadd.f32 %v7579, %v7638
  %v7753 = vadd.f32 %v7580, %v7638
  %v7754 = vadd.f32 %v7581, %v7638
  %v7755 = vadd.f32 %v7582, %v7638
  %v7756 = vadd.f32 %v7583, %v7638
  %v7757 = vadd.f32 %v7584, %v7638
  %v7758 = vadd.f32 %v7585, %v7638
  %v7759 = vadd.f32 %v7586, %v7638
  %v7760 = vadd.f32 %v7587, %v7638
  %v7761 = vadd.f32 %v7588, %v7638
  %v7762 = vadd.f32 %v7589, %v7638
  %v7763 = vadd.f32 %v7590, %v7638
  %v7764 = vadd.f32 %v7591, %v7638
  %v7765 = vadd.f32 %v7592, %v7638
  %v7766 = vadd.f32 %v7593, %v7638
  %v7767 = vadd.f32 %v7594, %v7638
  %v7768 = vadd.f32 %v7595, %v7638
  %v7769 = vadd.f32 %v7596, %v7638
  %v7770 = vadd.f32 %v7597, %v7638
  %v7771 = vadd.f32 %v7598, %v7638
  %v7772 = vadd.f32 %v7599, %v7638
  %v7773 = vadd.f32 %v7600, %v7638
  %v7774 = vadd.f32 %v7601, %v7638
  %v7775 = vadd.f32 %v7602, %v7638
  %v7776 = vadd.f32 %v7603, %v7638
  %v7777 = vadd.f32 %v7604, %v7638
  %v7778 = vadd.f32 %v7605, %v7638
  %v7779 = vadd.f32 %v7606, %v7638
  %v7780 = vadd.f32 %v7607, %v7638
  %v7781 = vadd.f32 %v7608, %v7638
  %v7782 = vadd.f32 %v7609, %v7638
  %v7783 = vadd.f32 %v7610, %v7638
  %v7784 = vadd.f32 %v7611, %v7638
  %v7785 = vadd.f32 %v7612, %v7638
  %v7786 = vadd.f32 %v7613, %v7638
  %v7787 = vadd.f32 %v7614, %v7638
  %v7788 = vadd.f32 %v7615, %v7638
  %v7789 = vadd.f32 %v7616, %v7638
  %v7790 = vadd.f32 %v7617, %v7638
  %v7791 = vadd.f32 %v7618, %v7638
  %v7792 = vadd.f32 %v7619, %v7638
  %v7793 = vadd.f32 %v7620, %v7638
  %v7794 = vadd.f32 %v7621, %v7638
  %v7795 = vadd.f32 %v7622, %v7638
  %v7796 = vadd.f32 %v7623, %v7638
  %v7797 = vadd.f32 %v7624, %v7638
  %v7798 = vadd.f32 %v7625, %v7638
  %v7799 = vadd.f32 %v7626, %v7638
  %v7800 = vadd.f32 %v7627, %v7638
  %v7801 = vadd.f32 %v7628, %v7638
  %v7802 = vadd.f32 %v7629, %v7638
  %v7803 = vadd.f32 %v7630, %v7638
  %v7804 = vadd.f32 %v7631, %v7638
  %v7805 = vadd.f32 %v7632, %v7638
  %v7806 = vadd.f32 %v7633, %v7638
  %v7807 = vadd.f32 %v7634, %v7638
  %v7808 = vadd.f32 %v7635, %v7638
  %v7809 = vmax.f32 %v7640, 0.0
  %v7810 = vmax.f32 %v7641, 0.0
  %v7811 = vmax.f32 %v7642, 0.0
  %v7812 = vmax.f32 %v7643, 0.0
  %v7813 = vmax.f32 %v7644, 0.0
  %v7814 = vmax.f32 %v7645, 0.0
  %v7815 = vmax.f32 %v7646, 0.0
  %v7816 = vmax.f32 %v7647, 0.0
  %v7817 = vmax.f32 %v7648, 0.0
  %v7818 = vmax.f32 %v7649, 0.0
  %v7819 = vmax.f32 %v7650, 0.0
  %v7820 = vmax.f32 %v7651, 0.0
  %v7821 = vmax.f32 %v7652, 0.0
  %v7822 = vmax.f32 %v7653, 0.0
  %v7823 = vmax.f32 %v7654, 0.0
  %v7824 = vmax.f32 %v7655, 0.0
  %v7825 = vmax.f32 %v7656, 0.0
  %v7826 = vmax.f32 %v7657, 0.0
  %v7827 = vmax.f32 %v7658, 0.0
  %v7828 = vmax.f32 %v7659, 0.0
  %v7829 = vmax.f32 %v7660, 0.0
  %v7830 = vmax.f32 %v7661, 0.0
  %v7831 = vmax.f32 %v7662, 0.0
  %v7832 = vmax.f32 %v7663, 0.0
  %v7833 = vmax.f32 %v7664, 0.0
  %v7834 = vmax.f32 %v7665, 0.0
  %v7835 = vmax.f32 %v7666, 0.0
  %v7836 = vmax.f32 %v7667, 0.0
  %v7837 = vmax.f32 %v7668, 0.0
  %v7838 = vmax.f32 %v7669, 0.0
  %v7839 = vmax.f32 %v7670, 0.0
  %v7840 = vmax.f32 %v7671, 0.0
  %v7841 = vmax.f32 %v7672, 0.0
  %v7842 = vmax.f32 %v7673, 0.0
  %v7843 = vmax.f32 %v7674, 0.0
  %v7844 = vmax.f32 %v7675, 0.0
  %v7845 = vmax.f32 %v7676, 0.0
  %v7846 = vmax.f32 %v7677, 0.0
  %v7847 = vmax.f32 %v7678, 0.0
  %v7848 = vmax.f32 %v7679, 0.0
  %v7849 = vmax.f32 %v7680, 0.0
  %v7850 = vmax.f32 %v7681, 0.0
  %v7851 = vmax.f32 %v7682, 0.0
  %v7852 = vmax.f32 %v7683, 0.0
  %v7853 = vmax.f32 %v7684, 0.0
  %v7854 = vmax.f32 %v7685, 0.0
  %v7855 = vmax.f32 %v7686, 0.0
  %v7856 = vmax.f32 %v7687, 0.0
  %v7857 = vmax.f32 %v7688, 0.0
  %v7858 = vmax.f32 %v7689, 0.0
  %v7859 = vmax.f32 %v7690, 0.0
  %v7860 = vmax.f32 %v7691, 0.0
  %v7861 = vmax.f32 %v7692, 0.0
  %v7862 = vmax.f32 %v7693, 0.0
  %v7863 = vmax.f32 %v7694, 0.0
  %v7864 = vmax.f32 %v7695, 0.0
  %v7865 = vmax.f32 %v7696, 0.0
  %v7866 = vmax.f32 %v7697, 0.0
  %v7867 = vmax.f32 %v7698, 0.0
  %v7868 = vmax.f32 %v7699, 0.0
  %v7869 = vmax.f32 %v7700, 0.0
  %v7870 = vmax.f32 %v7701, 0.0
  %v7871 = vmax.f32 %v7702, 0.0
  %v7872 = vmax.f32 %v7703, 0.0
  %v7873 = vmax.f32 %v7704, 0.0
  %v7874 = vmax.f32 %v7705, 0.0
  %v7875 = vmax.f32 %v7706, 0.0
  %v7876 = vmax.f32 %v7707, 0.0
  %v7877 = vmax.f32 %v7708, 0.0
  %v7878 = vmax.f32 %v7709, 0.0
  %v7879 = vmax.f32 %v7710, 0.0
  %v7880 = vmax.f32 %v7711, 0.0
  %v7881 = vmax.f32 %v7712, 0.0
  %v7882 = vmax.f32 %v7713, 0.0
  %v7883 = vmax.f32 %v7714, 0.0
  %v7884 = vmax.f32 %v7715, 0.0
  %v7885 = vmax.f32 %v7716, 0.0
  %v7886 = vmax.f32 %v7717, 0.0
  %v7887 = vmax.f32 %v7718, 0.0
  %v7888 = vmax.f32 %v7719, 0.0
  %v7889 = vmax.f32 %v7720, 0.0
  %v7890 = vmax.f32 %v7721, 0.0
  %v7891 = vmax.f32 %v7722, 0.0
  %v7892 = vmax.f32 %v7723, 0.0
  %v7893 = vmax.f32 %v7724, 0.0
  %v7894 = vmax.f32 %v7725, 0.0
  %v7895 = vmax.f32 %v7726, 0.0
  %v7896 = vmax.f32 %v7727, 0.0
  %v7897 = vmax.f32 %v7728, 0.0
  %v7898 = vmax.f32 %v7729, 0.0
  %v7899 = vmax.f32 %v7730, 0.0
  %v7900 = vmax.f32 %v7731, 0.0
  %v7901 = vmax.f32 %v7732, 0.0
  %v7902 = vmax.f32 %v7733, 0.0
  %v7903 = vmax.f32 %v7734, 0.0
  %v7904 = vmax.f32 %v7735, 0.0
  %v7905 = vmax.f32 %v7736, 0.0
  %v7906 = vmax.f32 %v7737, 0.0
  %v7907 = vmax.f32 %v7738, 0.0
  %v7908 = vmax.f32 %v7739, 0.0
  %v7909 = vmax.f32 %v7740, 0.0
  %v7910 = vmax.f32 %v7741, 0.0
  %v7911 = vmax.f32 %v7742, 0.0
  %v7912 = vmax.f32 %v7743, 0.0
  %v7913 = vmax.f32 %v7744, 0.0
  %v7914 = vmax.f32 %v7745, 0.0
  %v7915 = vmax.f32 %v7746, 0.0
  %v7916 = vmax.f32 %v7747, 0.0
  %v7917 = vmax.f32 %v7748, 0.0
  %v7918 = vmax.f32 %v7749, 0.0
  %v7919 = vmax.f32 %v7750, 0.0
  %v7920 = vmax.f32 %v7751, 0.0
  %v7921 = vmax.f32 %v7752, 0.0
  %v7922 = vmax.f32 %v7753, 0.0
  %v7923 = vmax.f32 %v7754, 0.0
  %v7924 = vmax.f32 %v7755, 0.0
  %v7925 = vmax.f32 %v7756, 0.0
  %v7926 = vmax.f32 %v7757, 0.0
  %v7927 = vmax.f32 %v7758, 0.0
  %v7928 = vmax.f32 %v7759, 0.0
  %v7929 = vmax.f32 %v7760, 0.0
  %v7930 = vmax.f32 %v7761, 0.0
  %v7931 = vmax.f32 %v7762, 0.0
  %v7932 = vmax.f32 %v7763, 0.0
  %v7933 = vmax.f32 %v7764, 0.0
  %v7934 = vmax.f32 %v7765, 0.0
  %v7935 = vmax.f32 %v7766, 0.0
  %v7936 = vmax.f32 %v7767, 0.0
  %v7937 = vmax.f32 %v7768, 0.0
  %v7938 = vmax.f32 %v7769, 0.0
  %v7939 = vmax.f32 %v7770, 0.0
  %v7940 = vmax.f32 %v7771, 0.0
  %v7941 = vmax.f32 %v7772, 0.0
  %v7942 = vmax.f32 %v7773, 0.0
  %v7943 = vmax.f32 %v7774, 0.0
  %v7944 = vmax.f32 %v7775, 0.0
  %v7945 = vmax.f32 %v7776, 0.0
  %v7946 = vmax.f32 %v7777, 0.0
  %v7947 = vmax.f32 %v7778, 0.0
  %v7948 = vmax.f32 %v7779, 0.0
  %v7949 = vmax.f32 %v7780, 0.0
  %v7950 = vmax.f32 %v7781, 0.0
  %v7951 = vmax.f32 %v7782, 0.0
  %v7952 = vmax.f32 %v7783, 0.0
  %v7953 = vmax.f32 %v7784, 0.0
  %v7954 = vmax.f32 %v7785, 0.0
  %v7955 = vmax.f32 %v7786, 0.0
  %v7956 = vmax.f32 %v7787, 0.0
  %v7957 = vmax.f32 %v7788, 0.0
  %v7958 = vmax.f32 %v7789, 0.0
  %v7959 = vmax.f32 %v7790, 0.0
  %v7960 = vmax.f32 %v7791, 0.0
  %v7961 = vmax.f32 %v7792, 0.0
  %v7962 = vmax.f32 %v7793, 0.0
  %v7963 = vmax.f32 %v7794, 0.0
  %v7964 = vmax.f32 %v7795, 0.0
  %v7965 = vmax.f32 %v7796, 0.0
  %v7966 = vmax.f32 %v7797, 0.0
  %v7967 = vmax.f32 %v7798, 0.0
  %v7968 = vmax.f32 %v7799, 0.0
  %v7969 = vmax.f32 %v7800, 0.0
  %v7970 = vmax.f32 %v7801, 0.0
  %v7971 = vmax.f32 %v7802, 0.0
  %v7972 = vmax.f32 %v7803, 0.0
  %v7973 = vmax.f32 %v7804, 0.0
  %v7974 = vmax.f32 %v7805, 0.0
  %v7975 = vmax.f32 %v7806, 0.0
  %v7976 = vmax.f32 %v7807, 0.0
  %v7977 = vmax.f32 %v7808, 0.0
  %v7978 = vmax.f32 %v7809, %v7810
  %v7979 = vmax.f32 %v7811, %v7812
  %v7980 = vmax.f32 %v7813, %v7814
  %v7981 = vmax.f32 %v7815, %v7816
  %v7982 = vmax.f32 %v7817, %v7818
  %v7983 = vmax.f32 %v7819, %v7820
  %v7984 = vmax.f32 %v7835, %v7836
  %v7985 = vmax.f32 %v7837, %v7838
  %v7986 = vmax.f32 %v7839, %v7840
  %v7987 = vmax.f32 %v7841, %v7842
  %v7988 = vmax.f32 %v7843, %v7844
  %v7989 = vmax.f32 %v7845, %v7846
  %v7990 = vmax.f32 %v7861, %v7862
  %v7991 = vmax.f32 %v7863, %v7864
  %v7992 = vmax.f32 %v7865, %v7866
  %v7993 = vmax.f32 %v7867, %v7868
  %v7994 = vmax.f32 %v7869, %v7870
  %v7995 = vmax.f32 %v7871, %v7872
  %v7996 = vmax.f32 %v7887, %v7888
  %v7997 = vmax.f32 %v7889, %v7890
  %v7998 = vmax.f32 %v7891, %v7892
  %v7999 = vmax.f32 %v7893, %v7894
  %v8000 = vmax.f32 %v7895, %v7896
  %v8001 = vmax.f32 %v7897, %v7898
  %v8002 = vmax.f32 %v7913, %v7914
  %v8003 = vmax.f32 %v7915, %v7916
  %v8004 = vmax.f32 %v7917, %v7918
  %v8005 = vmax.f32 %v7919, %v7920
  %v8006 = vmax.f32 %v7921, %v7922
  %v8007 = vmax.f32 %v7923, %v7924
  %v8008 = vmax.f32 %v7939, %v7940
  %v8009 = vmax.f32 %v7941, %v7942
  %v8010 = vmax.f32 %v7943, %v7944
  %v8011 = vmax.f32 %v7945, %v7946
  %v8012 = vmax.f32 %v7947, %v7948
  %v8013 = vmax.f32 %v7949, %v7950
  %v8014 = vmax.f32 %v7978, %v7811
  %v8015 = vmax.f32 %v7979, %v7813
  %v8016 = vmax.f32 %v7980, %v7815
  %v8017 = vmax.f32 %v7981, %v7817
  %v8018 = vmax.f32 %v7982, %v7819
  %v8019 = vmax.f32 %v7983, %v7821
  %v8020 = vmax.f32 %v7984, %v7837
  %v8021 = vmax.f32 %v7985, %v7839
  %v8022 = vmax.f32 %v7986, %v7841
  %v8023 = vmax.f32 %v7987, %v7843
  %v8024 = vmax.f32 %v7988, %v7845
  %v8025 = vmax.f32 %v7989, %v7847
  %v8026 = vmax.f32 %v7990, %v7863
  %v8027 = vmax.f32 %v7991, %v7865
  %v8028 = vmax.f32 %v7992, %v7867
  %v8029 = vmax.f32 %v7993, %v7869
  %v8030 = vmax.f32 %v7994, %v7871
  %v8031 = vmax.f32 %v7995, %v7873
  %v8032 = vmax.f32 %v7996, %v7889
  %v8033 = vmax.f32 %v7997, %v7891
  %v8034 = vmax.f32 %v7998, %v7893
  %v8035 = vmax.f32 %v7999, %v7895
  %v8036 = vmax.f32 %v8000, %v7897
  %v8037 = vmax.f32 %v8001, %v7899
  %v8038 = vmax.f32 %v8002, %v7915
  %v8039 = vmax.f32 %v8003, %v7917
  %v8040 = vmax.f32 %v8004, %v7919
  %v8041 = vmax.f32 %v8005, %v7921
  %v8042 = vmax.f32 %v8006, %v7923
  %v8043 = vmax.f32 %v8007, %v7925
  %v8044 = vmax.f32 %v8008, %v7941
  %v8045 = vmax.f32 %v8009, %v7943
  %v8046 = vmax.f32 %v8010, %v7945
  %v8047 = vmax.f32 %v8011, %v7947
  %v8048 = vmax.f32 %v8012, %v7949
  %v8049 = vmax.f32 %v8013, %v7951
  %v8050 = vmax.f32 %v8014, %v7822
  %v8051 = vmax.f32 %v8015, %v7824
  %v8052 = vmax.f32 %v8016, %v7826
  %v8053 = vmax.f32 %v8017, %v7828
  %v8054 = vmax.f32 %v8018, %v7830
  %v8055 = vmax.f32 %v8019, %v7832
  %v8056 = vmax.f32 %v8020, %v7848
  %v8057 = vmax.f32 %v8021, %v7850
  %v8058 = vmax.f32 %v8022, %v7852
  %v8059 = vmax.f32 %v8023, %v7854
  %v8060 = vmax.f32 %v8024, %v7856
  %v8061 = vmax.f32 %v8025, %v7858
  %v8062 = vmax.f32 %v8026, %v7874
  %v8063 = vmax.f32 %v8027, %v7876
  %v8064 = vmax.f32 %v8028, %v7878
  %v8065 = vmax.f32 %v8029, %v7880
  %v8066 = vmax.f32 %v8030, %v7882
  %v8067 = vmax.f32 %v8031, %v7884
  %v8068 = vmax.f32 %v8032, %v7900
  %v8069 = vmax.f32 %v8033, %v7902
  %v8070 = vmax.f32 %v8034, %v7904
  %v8071 = vmax.f32 %v8035, %v7906
  %v8072 = vmax.f32 %v8036, %v7908
  %v8073 = vmax.f32 %v8037, %v7910
  %v8074 = vmax.f32 %v8038, %v7926
  %v8075 = vmax.f32 %v8039, %v7928
  %v8076 = vmax.f32 %v8040, %v7930
  %v8077 = vmax.f32 %v8041, %v7932
  %v8078 = vmax.f32 %v8042, %v7934
  %v8079 = vmax.f32 %v8043, %v7936
  %v8080 = vmax.f32 %v8044, %v7952
  %v8081 = vmax.f32 %v8045, %v7954
  %v8082 = vmax.f32 %v8046, %v7956
  %v8083 = vmax.f32 %v8047, %v7958
  %v8084 = vmax.f32 %v8048, %v7960
  %v8085 = vmax.f32 %v8049, %v7962
  %v8086 = vmax.f32 %v8050, %v7823
  %v8087 = vmax.f32 %v8051, %v7825
  %v8088 = vmax.f32 %v8052, %v7827
  %v8089 = vmax.f32 %v8053, %v7829
  %v8090 = vmax.f32 %v8054, %v7831
  %v8091 = vmax.f32 %v8055, %v7833
  %v8092 = vmax.f32 %v8056, %v7849
  %v8093 = vmax.f32 %v8057, %v7851
  %v8094 = vmax.f32 %v8058, %v7853
  %v8095 = vmax.f32 %v8059, %v7855
  %v8096 = vmax.f32 %v8060, %v7857
  %v8097 = vmax.f32 %v8061, %v7859
  %v8098 = vmax.f32 %v8062, %v7875
  %v8099 = vmax.f32 %v8063, %v7877
  %v8100 = vmax.f32 %v8064, %v7879
  %v8101 = vmax.f32 %v8065, %v7881
  %v8102 = vmax.f32 %v8066, %v7883
  %v8103 = vmax.f32 %v8067, %v7885
  %v8104 = vmax.f32 %v8068, %v7901
  %v8105 = vmax.f32 %v8069, %v7903
  %v8106 = vmax.f32 %v8070, %v7905
  %v8107 = vmax.f32 %v8071, %v7907
  %v8108 = vmax.f32 %v8072, %v7909
  %v8109 = vmax.f32 %v8073, %v7911
  %v8110 = vmax.f32 %v8074, %v7927
  %v8111 = vmax.f32 %v8075, %v7929
  %v8112 = vmax.f32 %v8076, %v7931
  %v8113 = vmax.f32 %v8077, %v7933
  %v8114 = vmax.f32 %v8078, %v7935
  %v8115 = vmax.f32 %v8079, %v7937
  %v8116 = vmax.f32 %v8080, %v7953
  %v8117 = vmax.f32 %v8081, %v7955
  %v8118 = vmax.f32 %v8082, %v7957
  %v8119 = vmax.f32 %v8083, %v7959
  %v8120 = vmax.f32 %v8084, %v7961
  %v8121 = vmax.f32 %v8085, %v7963
  %v8122 = vmax.f32 %v8086, %v7824
  %v8123 = vmax.f32 %v8087, %v7826
  %v8124 = vmax.f32 %v8088, %v7828
  %v8125 = vmax.f32 %v8089, %v7830
  %v8126 = vmax.f32 %v8090, %v7832
  %v8127 = vmax.f32 %v8091, %v7834
  %v8128 = vmax.f32 %v8092, %v7850
  %v8129 = vmax.f32 %v8093, %v7852
  %v8130 = vmax.f32 %v8094, %v7854
  %v8131 = vmax.f32 %v8095, %v7856
  %v8132 = vmax.f32 %v8096, %v7858
  %v8133 = vmax.f32 %v8097, %v7860
  %v8134 = vmax.f32 %v8098, %v7876
  %v8135 = vmax.f32 %v8099, %v7878
  %v8136 = vmax.f32 %v8100, %v7880
  %v8137 = vmax.f32 %v8101, %v7882
  %v8138 = vmax.f32 %v8102, %v7884
  %v8139 = vmax.f32 %v8103, %v7886
  %v8140 = vmax.f32 %v8104, %v7902
  %v8141 = vmax.f32 %v8105, %v7904
  %v8142 = vmax.f32 %v8106, %v7906
  %v8143 = vmax.f32 %v8107, %v7908
  %v8144 = vmax.f32 %v8108, %v7910
  %v8145 = vmax.f32 %v8109, %v7912
  %v8146 = vmax.f32 %v8110, %v7928
  %v8147 = vmax.f32 %v8111, %v7930
  %v8148 = vmax.f32 %v8112, %v7932
  %v8149 = vmax.f32 %v8113, %v7934
  %v8150 = vmax.f32 %v8114, %v7936
  %v8151 = vmax.f32 %v8115, %v7938
  %v8152 = vmax.f32 %v8116, %v7954
  %v8153 = vmax.f32 %v8117, %v7956
  %v8154 = vmax.f32 %v8118, %v7958
  %v8155 = vmax.f32 %v8119, %v7960
  %v8156 = vmax.f32 %v8120, %v7962
  %v8157 = vmax.f32 %v8121, %v7964
  %v8158 = vmax.f32 %v8122, %v7835
  %v8159 = vmax.f32 %v8123, %v7837
  %v8160 = vmax.f32 %v8124, %v7839
  %v8161 = vmax.f32 %v8125, %v7841
  %v8162 = vmax.f32 %v8126, %v7843
  %v8163 = vmax.f32 %v8127, %v7845
  %v8164 = vmax.f32 %v8128, %v7861
  %v8165 = vmax.f32 %v8129, %v7863
  %v8166 = vmax.f32 %v8130, %v7865
  %v8167 = vmax.f32 %v8131, %v7867
  %v8168 = vmax.f32 %v8132, %v7869
  %v8169 = vmax.f32 %v8133, %v7871
  %v8170 = vmax.f32 %v8134, %v7887
  %v8171 = vmax.f32 %v8135, %v7889
  %v8172 = vmax.f32 %v8136, %v7891
  %v8173 = vmax.f32 %v8137, %v7893
  %v8174 = vmax.f32 %v8138, %v7895
  %v8175 = vmax.f32 %v8139, %v7897
  %v8176 = vmax.f32 %v8140, %v7913
  %v8177 = vmax.f32 %v8141, %v7915
  %v8178 = vmax.f32 %v8142, %v7917
  %v8179 = vmax.f32 %v8143, %v7919
  %v8180 = vmax.f32 %v8144, %v7921
  %v8181 = vmax.f32 %v8145, %v7923
  %v8182 = vmax.f32 %v8146, %v7939
  %v8183 = vmax.f32 %v8147, %v7941
  %v8184 = vmax.f32 %v8148, %v7943
  %v8185 = vmax.f32 %v8149, %v7945
  %v8186 = vmax.f32 %v8150, %v7947
  %v8187 = vmax.f32 %v8151, %v7949
  %v8188 = vmax.f32 %v8152, %v7965
  %v8189 = vmax.f32 %v8153, %v7967
  %v8190 = vmax.f32 %v8154, %v7969
  %v8191 = vmax.f32 %v8155, %v7971
  %v8192 = vmax.f32 %v8156, %v7973
  %v8193 = vmax.f32 %v8157, %v7975
  %v8194 = vmax.f32 %v8158, %v7836
  %v8195 = vmax.f32 %v8159, %v7838
  %v8196 = vmax.f32 %v8160, %v7840
  %v8197 = vmax.f32 %v8161, %v7842
  %v8198 = vmax.f32 %v8162, %v7844
  %v8199 = vmax.f32 %v8163, %v7846
  %v8200 = vmax.f32 %v8164, %v7862
  %v8201 = vmax.f32 %v8165, %v7864
  %v8202 = vmax.f32 %v8166, %v7866
  %v8203 = vmax.f32 %v8167, %v7868
  %v8204 = vmax.f32 %v8168, %v7870
  %v8205 = vmax.f32 %v8169, %v7872
  %v8206 = vmax.f32 %v8170, %v7888
  %v8207 = vmax.f32 %v8171, %v7890
  %v8208 = vmax.f32 %v8172, %v7892
  %v8209 = vmax.f32 %v8173, %v7894
  %v8210 = vmax.f32 %v8174, %v7896
  %v8211 = vmax.f32 %v8175, %v7898
  %v8212 = vmax.f32 %v8176, %v7914
  %v8213 = vmax.f32 %v8177, %v7916
  %v8214 = vmax.f32 %v8178, %v7918
  %v8215 = vmax.f32 %v8179, %v7920
  %v8216 = vmax.f32 %v8180, %v7922
  %v8217 = vmax.f32 %v8181, %v7924
  %v8218 = vmax.f32 %v8182, %v7940
  %v8219 = vmax.f32 %v8183, %v7942
  %v8220 = vmax.f32 %v8184, %v7944
  %v8221 = vmax.f32 %v8185, %v7946
  %v8222 = vmax.f32 %v8186, %v7948
  %v8223 = vmax.f32 %v8187, %v7950
  %v8224 = vmax.f32 %v8188, %v7966
  %v8225 = vmax.f32 %v8189, %v7968
  %v8226 = vmax.f32 %v8190, %v7970
  %v8227 = vmax.f32 %v8191, %v7972
  %v8228 = vmax.f32 %v8192, %v7974
  %v8229 = vmax.f32 %v8193, %v7976
  %v8230 = vmax.f32 %v8194, %v7837
  %v8231 = vmax.f32 %v8195, %v7839
  %v8232 = vmax.f32 %v8196, %v7841
  %v8233 = vmax.f32 %v8197, %v7843
  %v8234 = vmax.f32 %v8198, %v7845
  %v8235 = vmax.f32 %v8199, %v7847
  %v8236 = vmax.f32 %v8200, %v7863
  %v8237 = vmax.f32 %v8201, %v7865
  %v8238 = vmax.f32 %v8202, %v7867
  %v8239 = vmax.f32 %v8203, %v7869
  %v8240 = vmax.f32 %v8204, %v7871
  %v8241 = vmax.f32 %v8205, %v7873
  %v8242 = vmax.f32 %v8206, %v7889
  %v8243 = vmax.f32 %v8207, %v7891
  %v8244 = vmax.f32 %v8208, %v7893
  %v8245 = vmax.f32 %v8209, %v7895
  %v8246 = vmax.f32 %v8210, %v7897
  %v8247 = vmax.f32 %v8211, %v7899
  %v8248 = vmax.f32 %v8212, %v7915
  %v8249 = vmax.f32 %v8213, %v7917
  %v8250 = vmax.f32 %v8214, %v7919
  %v8251 = vmax.f32 %v8215, %v7921
  %v8252 = vmax.f32 %v8216, %v7923
  %v8253 = vmax.f32 %v8217, %v7925
  %v8254 = vmax.f32 %v8218, %v7941
  %v8255 = vmax.f32 %v8219, %v7943
  %v8256 = vmax.f32 %v8220, %v7945
  %v8257 = vmax.f32 %v8221, %v7947
  %v8258 = vmax.f32 %v8222, %v7949
  %v8259 = vmax.f32 %v8223, %v7951
  %v8260 = vmax.f32 %v8224, %v7967
  %v8261 = vmax.f32 %v8225, %v7969
  %v8262 = vmax.f32 %v8226, %v7971
  %v8263 = vmax.f32 %v8227, %v7973
  %v8264 = vmax.f32 %v8228, %v7975
  %v8265 = vmax.f32 %v8229, %v7977
  %v8266 = vld [vmem:[%s3] sm:$0xff]
  %v8267 = vld [vmem:[%s3 + $0x8] sm:$0xff]
  %v8268 = vld [vmem:[%s3 + $0x10] sm:$0xff]
  %v8269 = vld [vmem:[%s3 + $0x18] sm:$0xff]
  %vm8270 = vcmask 130048
  %v8272 = vsel %vm8270, %v8230, 0
  %v8275 = vsel %vm8270, %v8231, 0
  %v8278 = vsel %vm8270, %v8232, 0
  %v8281 = vsel %vm8270, %v8233, 0
  %v8284 = vsel %vm8270, %v8234, 0
  %v8287 = vsel %vm8270, %v8235, 0
  %v8290 = vsel %vm8270, %v8236, 0
  %v8293 = vsel %vm8270, %v8237, 0
  %v8296 = vsel %vm8270, %v8238, 0
  %v8299 = vsel %vm8270, %v8239, 0
  %v8302 = vsel %vm8270, %v8240, 0
  %v8305 = vsel %vm8270, %v8241, 0
  %v8308 = vsel %vm8270, %v8242, 0
  %v8311 = vsel %vm8270, %v8243, 0
  %v8314 = vsel %vm8270, %v8244, 0
  %v8317 = vsel %vm8270, %v8245, 0
  %v8320 = vsel %vm8270, %v8246, 0
  %v8323 = vsel %vm8270, %v8247, 0
  %v8326 = vsel %vm8270, %v8248, 0
  %v8329 = vsel %vm8270, %v8249, 0
  %v8332 = vsel %vm8270, %v8250, 0
  %v8335 = vsel %vm8270, %v8251, 0
  %v8338 = vsel %vm8270, %v8252, 0
  %v8341 = vsel %vm8270, %v8253, 0
  %v8344 = vsel %vm8270, %v8254, 0
  %v8347 = vsel %vm8270, %v8255, 0
  %v8350 = vsel %vm8270, %v8256, 0
  %v8353 = vsel %vm8270, %v8257, 0
  %v8356 = vsel %vm8270, %v8258, 0
  %v8359 = vsel %vm8270, %v8259, 0
  %v8362 = vsel %vm8270, %v8260, 0
  %v8365 = vsel %vm8270, %v8261, 0
  %v8368 = vsel %vm8270, %v8262, 0
  %v8371 = vsel %vm8270, %v8263, 0
  %v8374 = vsel %vm8270, %v8264, 0
  %v8377 = vsel %vm8270, %v8265, 0
  %8379 = vmatpush.msra.mxu0 0.0
  %8380 = vmatpush.msra.mxu0 0.0
  %8381 = vmatpush.msra.mxu0 0.0
  %8382 = vmatpush.msra.mxu0 0.0
  %8383 = vmatpush.msra.mxu0 0.0
  %8384 = vmatpush.msra.mxu0 0.0
  %8385 = vmatpush.msra.mxu0 0.0
  %8386 = vmatpush.msra.mxu0 0.0
  %8387 = vmatpush.msra.mxu0 0.0
  %8388 = vmatpush.msra.mxu0 0.0
  %8389 = vmatpush.msra.mxu0 0.0
  %8390 = vmatpush.msra.mxu0 0.0
  %8391 = vmatpush.msra.mxu0 0.0
  %8392 = vmatpush.msra.mxu0 0.0
  %8393 = vmatpush.msra.mxu0 %v8268
  %8394 = vmatpush.msra.mxu0 %v8266
  %8395 = vmatmul.f32.gmra.mxu0 %v8272
  %v8396 = vpop.f32.mrf.mxu0
  %v8397 = vadd.f32 0.0, %v8396
  %8398 = vmatmul.f32.gmra.mxu0 %v8275
  %v8399 = vpop.f32.mrf.mxu0
  %v8400 = vadd.f32 0.0, %v8399
  %8401 = vmatmul.f32.gmra.mxu0 %v8278
  %v8402 = vpop.f32.mrf.mxu0
  %v8403 = vadd.f32 0.0, %v8402
  %8404 = vmatmul.f32.gmra.mxu0 %v8281
  %v8405 = vpop.f32.mrf.mxu0
  %v8406 = vadd.f32 0.0, %v8405
  %8407 = vmatmul.f32.gmra.mxu0 %v8284
  %v8408 = vpop.f32.mrf.mxu0
  %v8409 = vadd.f32 0.0, %v8408
  %8410 = vmatmul.f32.gmra.mxu0 %v8287
  %v8411 = vpop.f32.mrf.mxu0
  %v8412 = vadd.f32 0.0, %v8411
  %8413 = vmatmul.f32.gmra.mxu0 %v8290
  %v8414 = vpop.f32.mrf.mxu0
  %v8415 = vadd.f32 0.0, %v8414
  %8416 = vmatmul.f32.gmra.mxu0 %v8293
  %v8417 = vpop.f32.mrf.mxu0
  %v8418 = vadd.f32 0.0, %v8417
  %8419 = vmatmul.f32.gmra.mxu0 %v8296
  %v8420 = vpop.f32.mrf.mxu0
  %v8421 = vadd.f32 0.0, %v8420
  %8422 = vmatmul.f32.gmra.mxu0 %v8299
  %v8423 = vpop.f32.mrf.mxu0
  %v8424 = vadd.f32 0.0, %v8423
  %8425 = vmatmul.f32.gmra.mxu0 %v8302
  %v8426 = vpop.f32.mrf.mxu0
  %v8427 = vadd.f32 0.0, %v8426
  %8428 = vmatmul.f32.gmra.mxu0 %v8305
  %v8429 = vpop.f32.mrf.mxu0
  %v8430 = vadd.f32 0.0, %v8429
  %8431 = vmatmul.f32.gmra.mxu0 %v8308
  %v8432 = vpop.f32.mrf.mxu0
  %v8433 = vadd.f32 0.0, %v8432
  %8434 = vmatmul.f32.gmra.mxu0 %v8311
  %v8435 = vpop.f32.mrf.mxu0
  %v8436 = vadd.f32 0.0, %v8435
  %8437 = vmatmul.f32.gmra.mxu0 %v8314
  %v8438 = vpop.f32.mrf.mxu0
  %v8439 = vadd.f32 0.0, %v8438
  %8440 = vmatmul.f32.gmra.mxu0 %v8317
  %v8441 = vpop.f32.mrf.mxu0
  %v8442 = vadd.f32 0.0, %v8441
  %8443 = vmatmul.f32.gmra.mxu0 %v8320
  %v8444 = vpop.f32.mrf.mxu0
  %v8445 = vadd.f32 0.0, %v8444
  %8446 = vmatmul.f32.gmra.mxu0 %v8323
  %v8447 = vpop.f32.mrf.mxu0
  %v8448 = vadd.f32 0.0, %v8447
  %8449 = vmatmul.f32.gmra.mxu0 %v8326
  %v8450 = vpop.f32.mrf.mxu0
  %v8451 = vadd.f32 0.0, %v8450
  %8452 = vmatmul.f32.gmra.mxu0 %v8329
  %v8453 = vpop.f32.mrf.mxu0
  %v8454 = vadd.f32 0.0, %v8453
  %8455 = vmatmul.f32.gmra.mxu0 %v8332
  %v8456 = vpop.f32.mrf.mxu0
  %v8457 = vadd.f32 0.0, %v8456
  %8458 = vmatmul.f32.gmra.mxu0 %v8335
  %v8459 = vpop.f32.mrf.mxu0
  %v8460 = vadd.f32 0.0, %v8459
  %8461 = vmatmul.f32.gmra.mxu0 %v8338
  %v8462 = vpop.f32.mrf.mxu0
  %v8463 = vadd.f32 0.0, %v8462
  %8464 = vmatmul.f32.gmra.mxu0 %v8341
  %v8465 = vpop.f32.mrf.mxu0
  %v8466 = vadd.f32 0.0, %v8465
  %8467 = vmatmul.f32.gmra.mxu0 %v8344
  %v8468 = vpop.f32.mrf.mxu0
  %8469 = vmatmul.f32.gmra.mxu0 %v8347
  %v8470 = vpop.f32.mrf.mxu0
  %8471 = vmatmul.f32.gmra.mxu0 %v8350
  %v8472 = vpop.f32.mrf.mxu0
  %8473 = vmatmul.f32.gmra.mxu0 %v8353
  %v8474 = vpop.f32.mrf.mxu0
  %8475 = vmatmul.f32.gmra.mxu0 %v8356
  %v8476 = vpop.f32.mrf.mxu0
  %8477 = vmatmul.f32.gmra.mxu0 %v8359
  %v8478 = vpop.f32.mrf.mxu0
  %8479 = vmatmul.f32.gmra.mxu0 %v8362
  %v8480 = vpop.f32.mrf.mxu0
  %8481 = vmatmul.f32.gmra.mxu0 %v8365
  %v8482 = vpop.f32.mrf.mxu0
  %8483 = vmatmul.f32.gmra.mxu0 %v8368
  %v8484 = vpop.f32.mrf.mxu0
  %8485 = vmatmul.f32.gmra.mxu0 %v8371
  %v8486 = vpop.f32.mrf.mxu0
  %8487 = vmatmul.f32.gmra.mxu0 %v8374
  %v8488 = vpop.f32.mrf.mxu0
  %8489 = vmatmul.f32.gmra.mxu0 %v8377
  %v8490 = vpop.f32.mrf.mxu0
  %8491 = vdwg.mxu0
  %8492 = vmatpush.msra.mxu0 0.0
  %8493 = vmatpush.msra.mxu0 0.0
  %8494 = vmatpush.msra.mxu0 0.0
  %8495 = vmatpush.msra.mxu0 0.0
  %8496 = vmatpush.msra.mxu0 0.0
  %8497 = vmatpush.msra.mxu0 0.0
  %8498 = vmatpush.msra.mxu0 0.0
  %8499 = vmatpush.msra.mxu0 0.0
  %8500 = vmatpush.msra.mxu0 0.0
  %8501 = vmatpush.msra.mxu0 0.0
  %8502 = vmatpush.msra.mxu0 0.0
  %8503 = vmatpush.msra.mxu0 0.0
  %8504 = vmatpush.msra.mxu0 0.0
  %8505 = vmatpush.msra.mxu0 0.0
  %8506 = vmatpush.msra.mxu0 %v8269
  %8507 = vmatpush.msra.mxu0 %v8267
  %8508 = vmatmul.f32.gmra.mxu0 %v8272
  %v8509 = vpop.f32.mrf.mxu0
  %8510 = vmatmul.f32.gmra.mxu0 %v8275
  %v8511 = vpop.f32.mrf.mxu0
  %8512 = vmatmul.f32.gmra.mxu0 %v8278
  %v8513 = vpop.f32.mrf.mxu0
  %8514 = vmatmul.f32.gmra.mxu0 %v8281
  %v8515 = vpop.f32.mrf.mxu0
  %8516 = vmatmul.f32.gmra.mxu0 %v8284
  %v8517 = vpop.f32.mrf.mxu0
  %8518 = vmatmul.f32.gmra.mxu0 %v8287
  %v8519 = vpop.f32.mrf.mxu0
  %8520 = vmatmul.f32.gmra.mxu0 %v8290
  %v8521 = vpop.f32.mrf.mxu0
  %8522 = vmatmul.f32.gmra.mxu0 %v8293
  %v8523 = vpop.f32.mrf.mxu0
  %8524 = vmatmul.f32.gmra.mxu0 %v8296
  %v8525 = vpop.f32.mrf.mxu0
  %8526 = vmatmul.f32.gmra.mxu0 %v8299
  %v8527 = vpop.f32.mrf.mxu0
  %8528 = vmatmul.f32.gmra.mxu0 %v8302
  %v8529 = vpop.f32.mrf.mxu0
  %8530 = vmatmul.f32.gmra.mxu0 %v8305
  %v8531 = vpop.f32.mrf.mxu0
  %8532 = vmatmul.f32.gmra.mxu0 %v8308
  %v8533 = vpop.f32.mrf.mxu0
  %v8534 = vadd.f32 0.0, %v8533
  %8535 = vmatmul.f32.gmra.mxu0 %v8311
  %v8536 = vpop.f32.mrf.mxu0
  %v8537 = vadd.f32 0.0, %v8536
  %8538 = vmatmul.f32.gmra.mxu0 %v8314
  %v8539 = vpop.f32.mrf.mxu0
  %v8540 = vadd.f32 0.0, %v8539
  %8541 = vmatmul.f32.gmra.mxu0 %v8317
  %v8542 = vpop.f32.mrf.mxu0
  %v8543 = vadd.f32 0.0, %v8542
  %8544 = vmatmul.f32.gmra.mxu0 %v8320
  %v8545 = vpop.f32.mrf.mxu0
  %v8546 = vadd.f32 0.0, %v8545
  %8547 = vmatmul.f32.gmra.mxu0 %v8323
  %v8548 = vpop.f32.mrf.mxu0
  %v8549 = vadd.f32 0.0, %v8548
  %8550 = vmatmul.f32.gmra.mxu0 %v8326
  %v8551 = vpop.f32.mrf.mxu0
  %v8552 = vadd.f32 0.0, %v8551
  %8553 = vmatmul.f32.gmra.mxu0 %v8329
  %v8554 = vpop.f32.mrf.mxu0
  %v8555 = vadd.f32 0.0, %v8554
  %8556 = vmatmul.f32.gmra.mxu0 %v8332
  %v8557 = vpop.f32.mrf.mxu0
  %v8558 = vadd.f32 0.0, %v8557
  %8559 = vmatmul.f32.gmra.mxu0 %v8335
  %v8560 = vpop.f32.mrf.mxu0
  %v8561 = vadd.f32 0.0, %v8560
  %8562 = vmatmul.f32.gmra.mxu0 %v8338
  %v8563 = vpop.f32.mrf.mxu0
  %v8564 = vadd.f32 0.0, %v8563
  %8565 = vmatmul.f32.gmra.mxu0 %v8341
  %v8566 = vpop.f32.mrf.mxu0
  %v8567 = vadd.f32 0.0, %v8566
  %8568 = vmatmul.f32.gmra.mxu0 %v8344
  %v8569 = vpop.f32.mrf.mxu0
  %v8570 = vadd.f32 0.0, %v8569
  %8571 = vmatmul.f32.gmra.mxu0 %v8347
  %v8572 = vpop.f32.mrf.mxu0
  %v8573 = vadd.f32 0.0, %v8572
  %8574 = vmatmul.f32.gmra.mxu0 %v8350
  %v8575 = vpop.f32.mrf.mxu0
  %v8576 = vadd.f32 0.0, %v8575
  %8577 = vmatmul.f32.gmra.mxu0 %v8353
  %v8578 = vpop.f32.mrf.mxu0
  %v8579 = vadd.f32 0.0, %v8578
  %8580 = vmatmul.f32.gmra.mxu0 %v8356
  %v8581 = vpop.f32.mrf.mxu0
  %v8582 = vadd.f32 0.0, %v8581
  %8583 = vmatmul.f32.gmra.mxu0 %v8359
  %v8584 = vpop.f32.mrf.mxu0
  %v8585 = vadd.f32 0.0, %v8584
  %8586 = vmatmul.f32.gmra.mxu0 %v8362
  %v8587 = vpop.f32.mrf.mxu0
  %v8588 = vadd.f32 0.0, %v8587
  %8589 = vmatmul.f32.gmra.mxu0 %v8365
  %v8590 = vpop.f32.mrf.mxu0
  %v8591 = vadd.f32 0.0, %v8590
  %8592 = vmatmul.f32.gmra.mxu0 %v8368
  %v8593 = vpop.f32.mrf.mxu0
  %v8594 = vadd.f32 0.0, %v8593
  %8595 = vmatmul.f32.gmra.mxu0 %v8371
  %v8596 = vpop.f32.mrf.mxu0
  %v8597 = vadd.f32 0.0, %v8596
  %8598 = vmatmul.f32.gmra.mxu0 %v8374
  %v8599 = vpop.f32.mrf.mxu0
  %v8600 = vadd.f32 0.0, %v8599
  %8601 = vmatmul.f32.gmra.mxu0 %v8377
  %v8602 = vpop.f32.mrf.mxu0
  %v8603 = vadd.f32 0.0, %v8602
  %8604 = vdwg.mxu0
  %8614 = vrot.lane.b32.xlu0 %v8400, 112
  %v8615 = vpop.permute.xlu0 %8614
  %8616 = vrot.lane.b32.xlu0 %v8403, 112
  %v8617 = vpop.permute.xlu0 %8616
  %8618 = vrot.lane.b32.xlu0 %v8406, 112
  %v8619 = vpop.permute.xlu0 %8618
  %8620 = vrot.lane.b32.xlu0 %v8418, 112
  %v8621 = vpop.permute.xlu0 %8620
  %8622 = vrot.lane.b32.xlu0 %v8421, 112
  %v8623 = vpop.permute.xlu0 %8622
  %8624 = vrot.lane.b32.xlu0 %v8424, 112
  %v8625 = vpop.permute.xlu0 %8624
  %8626 = vrot.lane.b32.xlu0 %v8436, 112
  %v8627 = vpop.permute.xlu0 %8626
  %8628 = vrot.lane.b32.xlu0 %v8439, 112
  %v8629 = vpop.permute.xlu0 %8628
  %8630 = vrot.lane.b32.xlu0 %v8442, 112
  %v8631 = vpop.permute.xlu0 %8630
  %v8641 = vadd.f32 %v8397, %v8615
  %v8642 = vadd.f32 %v8400, %v8617
  %v8643 = vadd.f32 %v8403, %v8619
  %v8644 = vadd.f32 %v8415, %v8621
  %v8645 = vadd.f32 %v8418, %v8623
  %v8646 = vadd.f32 %v8421, %v8625
  %v8647 = vadd.f32 %v8433, %v8627
  %v8648 = vadd.f32 %v8436, %v8629
  %v8649 = vadd.f32 %v8439, %v8631
  %8653 = vrot.lane.b32.xlu0 %v8403, 96
  %v8654 = vpop.permute.xlu0 %8653
  %8655 = vrot.lane.b32.xlu0 %v8406, 96
  %v8656 = vpop.permute.xlu0 %8655
  %8657 = vrot.lane.b32.xlu0 %v8409, 96
  %v8658 = vpop.permute.xlu0 %8657
  %8659 = vrot.lane.b32.xlu0 %v8421, 96
  %v8660 = vpop.permute.xlu0 %8659
  %8661 = vrot.lane.b32.xlu0 %v8424, 96
  %v8662 = vpop.permute.xlu0 %8661
  %8663 = vrot.lane.b32.xlu0 %v8427, 96
  %v8664 = vpop.permute.xlu0 %8663
  %8665 = vrot.lane.b32.xlu0 %v8439, 96
  %v8666 = vpop.permute.xlu0 %8665
  %8667 = vrot.lane.b32.xlu0 %v8442, 96
  %v8668 = vpop.permute.xlu0 %8667
  %8669 = vrot.lane.b32.xlu0 %v8445, 96
  %v8670 = vpop.permute.xlu0 %8669
  %v8680 = vadd.f32 %v8641, %v8654
  %v8681 = vadd.f32 %v8642, %v8656
  %v8682 = vadd.f32 %v8643, %v8658
  %v8683 = vadd.f32 %v8644, %v8660
  %v8684 = vadd.f32 %v8645, %v8662
  %v8685 = vadd.f32 %v8646, %v8664
  %v8686 = vadd.f32 %v8647, %v8666
  %v8687 = vadd.f32 %v8648, %v8668
  %v8688 = vadd.f32 %v8649, %v8670
  %8692 = vrot.lane.b32.xlu0 %v8406, 80
  %v8693 = vpop.permute.xlu0 %8692
  %8694 = vrot.lane.b32.xlu0 %v8409, 80
  %v8695 = vpop.permute.xlu0 %8694
  %8696 = vrot.lane.b32.xlu0 %v8412, 80
  %v8697 = vpop.permute.xlu0 %8696
  %8698 = vrot.lane.b32.xlu0 %v8424, 80
  %v8699 = vpop.permute.xlu0 %8698
  %8700 = vrot.lane.b32.xlu0 %v8427, 80
  %v8701 = vpop.permute.xlu0 %8700
  %8702 = vrot.lane.b32.xlu0 %v8430, 80
  %v8703 = vpop.permute.xlu0 %8702
  %8704 = vrot.lane.b32.xlu0 %v8442, 80
  %v8705 = vpop.permute.xlu0 %8704
  %8706 = vrot.lane.b32.xlu0 %v8445, 80
  %v8707 = vpop.permute.xlu0 %8706
  %8708 = vrot.lane.b32.xlu0 %v8448, 80
  %v8709 = vpop.permute.xlu0 %8708
  %v8719 = vadd.f32 %v8680, %v8693
  %v8720 = vadd.f32 %v8681, %v8695
  %v8721 = vadd.f32 %v8682, %v8697
  %v8722 = vadd.f32 %v8683, %v8699
  %v8723 = vadd.f32 %v8684, %v8701
  %v8724 = vadd.f32 %v8685, %v8703
  %v8725 = vadd.f32 %v8686, %v8705
  %v8726 = vadd.f32 %v8687, %v8707
  %v8727 = vadd.f32 %v8688, %v8709
  %8733 = vrot.lane.b32.xlu0 %v8415, 64
  %v8734 = vpop.permute.xlu0 %8733
  %8735 = vrot.lane.b32.xlu0 %v8418, 64
  %v8736 = vpop.permute.xlu0 %8735
  %8737 = vrot.lane.b32.xlu0 %v8421, 64
  %v8738 = vpop.permute.xlu0 %8737
  %8739 = vrot.lane.b32.xlu0 %v8433, 64
  %v8740 = vpop.permute.xlu0 %8739
  %8741 = vrot.lane.b32.xlu0 %v8436, 64
  %v8742 = vpop.permute.xlu0 %8741
  %8743 = vrot.lane.b32.xlu0 %v8439, 64
  %v8744 = vpop.permute.xlu0 %8743
  %8745 = vrot.lane.b32.xlu0 %v8451, 64
  %v8746 = vpop.permute.xlu0 %8745
  %8747 = vrot.lane.b32.xlu0 %v8454, 64
  %v8748 = vpop.permute.xlu0 %8747
  %8749 = vrot.lane.b32.xlu0 %v8457, 64
  %v8750 = vpop.permute.xlu0 %8749
  %v8760 = vadd.f32 %v8719, %v8734
  %v8761 = vadd.f32 %v8720, %v8736
  %v8762 = vadd.f32 %v8721, %v8738
  %v8763 = vadd.f32 %v8722, %v8740
  %v8764 = vadd.f32 %v8723, %v8742
  %v8765 = vadd.f32 %v8724, %v8744
  %v8766 = vadd.f32 %v8725, %v8746
  %v8767 = vadd.f32 %v8726, %v8748
  %v8768 = vadd.f32 %v8727, %v8750
  %8770 = vrot.lane.b32.xlu0 %v8418, 48
  %v8771 = vpop.permute.xlu0 %8770
  %8772 = vrot.lane.b32.xlu0 %v8421, 48
  %v8773 = vpop.permute.xlu0 %8772
  %8774 = vrot.lane.b32.xlu0 %v8424, 48
  %v8775 = vpop.permute.xlu0 %8774
  %8776 = vrot.lane.b32.xlu0 %v8436, 48
  %v8777 = vpop.permute.xlu0 %8776
  %8778 = vrot.lane.b32.xlu0 %v8439, 48
  %v8779 = vpop.permute.xlu0 %8778
  %8780 = vrot.lane.b32.xlu0 %v8442, 48
  %v8781 = vpop.permute.xlu0 %8780
  %8782 = vrot.lane.b32.xlu0 %v8454, 48
  %v8783 = vpop.permute.xlu0 %8782
  %8784 = vrot.lane.b32.xlu0 %v8457, 48
  %v8785 = vpop.permute.xlu0 %8784
  %8786 = vrot.lane.b32.xlu0 %v8460, 48
  %v8787 = vpop.permute.xlu0 %8786
  %v8797 = vadd.f32 %v8760, %v8771
  %v8798 = vadd.f32 %v8761, %v8773
  %v8799 = vadd.f32 %v8762, %v8775
  %v8800 = vadd.f32 %v8763, %v8777
  %v8801 = vadd.f32 %v8764, %v8779
  %v8802 = vadd.f32 %v8765, %v8781
  %v8803 = vadd.f32 %v8766, %v8783
  %v8804 = vadd.f32 %v8767, %v8785
  %v8805 = vadd.f32 %v8768, %v8787
  %8807 = vrot.lane.b32.xlu0 %v8421, 32
  %v8808 = vpop.permute.xlu0 %8807
  %8809 = vrot.lane.b32.xlu0 %v8424, 32
  %v8810 = vpop.permute.xlu0 %8809
  %8811 = vrot.lane.b32.xlu0 %v8427, 32
  %v8812 = vpop.permute.xlu0 %8811
  %8813 = vrot.lane.b32.xlu0 %v8439, 32
  %v8814 = vpop.permute.xlu0 %8813
  %8815 = vrot.lane.b32.xlu0 %v8442, 32
  %v8816 = vpop.permute.xlu0 %8815
  %8817 = vrot.lane.b32.xlu0 %v8445, 32
  %v8818 = vpop.permute.xlu0 %8817
  %8819 = vrot.lane.b32.xlu0 %v8457, 32
  %v8820 = vpop.permute.xlu0 %8819
  %8821 = vrot.lane.b32.xlu0 %v8460, 32
  %v8822 = vpop.permute.xlu0 %8821
  %8823 = vrot.lane.b32.xlu0 %v8463, 32
  %v8824 = vpop.permute.xlu0 %8823
  %v8834 = vadd.f32 %v8797, %v8808
  %v8835 = vadd.f32 %v8798, %v8810
  %v8836 = vadd.f32 %v8799, %v8812
  %v8837 = vadd.f32 %v8800, %v8814
  %v8838 = vadd.f32 %v8801, %v8816
  %v8839 = vadd.f32 %v8802, %v8818
  %v8840 = vadd.f32 %v8803, %v8820
  %v8841 = vadd.f32 %v8804, %v8822
  %v8842 = vadd.f32 %v8805, %v8824
  %8844 = vrot.lane.b32.xlu0 %v8424, 16
  %v8845 = vpop.permute.xlu0 %8844
  %8846 = vrot.lane.b32.xlu0 %v8427, 16
  %v8847 = vpop.permute.xlu0 %8846
  %8848 = vrot.lane.b32.xlu0 %v8430, 16
  %v8849 = vpop.permute.xlu0 %8848
  %8850 = vrot.lane.b32.xlu0 %v8442, 16
  %v8851 = vpop.permute.xlu0 %8850
  %8852 = vrot.lane.b32.xlu0 %v8445, 16
  %v8853 = vpop.permute.xlu0 %8852
  %8854 = vrot.lane.b32.xlu0 %v8448, 16
  %v8855 = vpop.permute.xlu0 %8854
  %8856 = vrot.lane.b32.xlu0 %v8460, 16
  %v8857 = vpop.permute.xlu0 %8856
  %8858 = vrot.lane.b32.xlu0 %v8463, 16
  %v8859 = vpop.permute.xlu0 %8858
  %8860 = vrot.lane.b32.xlu0 %v8466, 16
  %v8861 = vpop.permute.xlu0 %8860
  %v8871 = vadd.f32 %v8834, %v8845
  %v8872 = vadd.f32 %v8835, %v8847
  %v8873 = vadd.f32 %v8836, %v8849
  %v8874 = vadd.f32 %v8837, %v8851
  %v8875 = vadd.f32 %v8838, %v8853
  %v8876 = vadd.f32 %v8839, %v8855
  %v8877 = vadd.f32 %v8840, %v8857
  %v8878 = vadd.f32 %v8841, %v8859
  %v8879 = vadd.f32 %v8842, %v8861
  %v8880 = vadd.f32 %v8871, %v8534
  %v8881 = vadd.f32 %v8872, %v8537
  %v8882 = vadd.f32 %v8873, %v8540
  %v8883 = vadd.f32 %v8874, %v8552
  %v8884 = vadd.f32 %v8875, %v8555
  %v8885 = vadd.f32 %v8876, %v8558
  %v8886 = vadd.f32 %v8877, %v8570
  %v8887 = vadd.f32 %v8878, %v8573
  %v8888 = vadd.f32 %v8879, %v8576
  %8898 = vrot.lane.b32.xlu0 %v8537, 112
  %v8899 = vpop.permute.xlu0 %8898
  %8900 = vrot.lane.b32.xlu0 %v8540, 112
  %v8901 = vpop.permute.xlu0 %8900
  %8902 = vrot.lane.b32.xlu0 %v8543, 112
  %v8903 = vpop.permute.xlu0 %8902
  %8904 = vrot.lane.b32.xlu0 %v8555, 112
  %v8905 = vpop.permute.xlu0 %8904
  %8906 = vrot.lane.b32.xlu0 %v8558, 112
  %v8907 = vpop.permute.xlu0 %8906
  %8908 = vrot.lane.b32.xlu0 %v8561, 112
  %v8909 = vpop.permute.xlu0 %8908
  %8910 = vrot.lane.b32.xlu0 %v8573, 112
  %v8911 = vpop.permute.xlu0 %8910
  %8912 = vrot.lane.b32.xlu0 %v8576, 112
  %v8913 = vpop.permute.xlu0 %8912
  %8914 = vrot.lane.b32.xlu0 %v8579, 112
  %v8915 = vpop.permute.xlu0 %8914
  %v8925 = vadd.f32 %v8880, %v8899
  %v8926 = vadd.f32 %v8881, %v8901
  %v8927 = vadd.f32 %v8882, %v8903
  %v8928 = vadd.f32 %v8883, %v8905
  %v8929 = vadd.f32 %v8884, %v8907
  %v8930 = vadd.f32 %v8885, %v8909
  %v8931 = vadd.f32 %v8886, %v8911
  %v8932 = vadd.f32 %v8887, %v8913
  %v8933 = vadd.f32 %v8888, %v8915
  %8937 = vrot.lane.b32.xlu0 %v8540, 96
  %v8938 = vpop.permute.xlu0 %8937
  %8939 = vrot.lane.b32.xlu0 %v8543, 96
  %v8940 = vpop.permute.xlu0 %8939
  %8941 = vrot.lane.b32.xlu0 %v8546, 96
  %v8942 = vpop.permute.xlu0 %8941
  %8943 = vrot.lane.b32.xlu0 %v8558, 96
  %v8944 = vpop.permute.xlu0 %8943
  %8945 = vrot.lane.b32.xlu0 %v8561, 96
  %v8946 = vpop.permute.xlu0 %8945
  %8947 = vrot.lane.b32.xlu0 %v8564, 96
  %v8948 = vpop.permute.xlu0 %8947
  %8949 = vrot.lane.b32.xlu0 %v8576, 96
  %v8950 = vpop.permute.xlu0 %8949
  %8951 = vrot.lane.b32.xlu0 %v8579, 96
  %v8952 = vpop.permute.xlu0 %8951
  %8953 = vrot.lane.b32.xlu0 %v8582, 96
  %v8954 = vpop.permute.xlu0 %8953
  %v8964 = vadd.f32 %v8925, %v8938
  %v8965 = vadd.f32 %v8926, %v8940
  %v8966 = vadd.f32 %v8927, %v8942
  %v8967 = vadd.f32 %v8928, %v8944
  %v8968 = vadd.f32 %v8929, %v8946
  %v8969 = vadd.f32 %v8930, %v8948
  %v8970 = vadd.f32 %v8931, %v8950
  %v8971 = vadd.f32 %v8932, %v8952
  %v8972 = vadd.f32 %v8933, %v8954
  %8976 = vrot.lane.b32.xlu0 %v8543, 80
  %v8977 = vpop.permute.xlu0 %8976
  %8978 = vrot.lane.b32.xlu0 %v8546, 80
  %v8979 = vpop.permute.xlu0 %8978
  %8980 = vrot.lane.b32.xlu0 %v8549, 80
  %v8981 = vpop.permute.xlu0 %8980
  %8982 = vrot.lane.b32.xlu0 %v8561, 80
  %v8983 = vpop.permute.xlu0 %8982
  %8984 = vrot.lane.b32.xlu0 %v8564, 80
  %v8985 = vpop.permute.xlu0 %8984
  %8986 = vrot.lane.b32.xlu0 %v8567, 80
  %v8987 = vpop.permute.xlu0 %8986
  %8988 = vrot.lane.b32.xlu0 %v8579, 80
  %v8989 = vpop.permute.xlu0 %8988
  %8990 = vrot.lane.b32.xlu0 %v8582, 80
  %v8991 = vpop.permute.xlu0 %8990
  %8992 = vrot.lane.b32.xlu0 %v8585, 80
  %v8993 = vpop.permute.xlu0 %8992
  %v9003 = vadd.f32 %v8964, %v8977
  %v9004 = vadd.f32 %v8965, %v8979
  %v9005 = vadd.f32 %v8966, %v8981
  %v9006 = vadd.f32 %v8967, %v8983
  %v9007 = vadd.f32 %v8968, %v8985
  %v9008 = vadd.f32 %v8969, %v8987
  %v9009 = vadd.f32 %v8970, %v8989
  %v9010 = vadd.f32 %v8971, %v8991
  %v9011 = vadd.f32 %v8972, %v8993
  %9017 = vrot.lane.b32.xlu0 %v8552, 64
  %v9018 = vpop.permute.xlu0 %9017
  %9019 = vrot.lane.b32.xlu0 %v8555, 64
  %v9020 = vpop.permute.xlu0 %9019
  %9021 = vrot.lane.b32.xlu0 %v8558, 64
  %v9022 = vpop.permute.xlu0 %9021
  %9023 = vrot.lane.b32.xlu0 %v8570, 64
  %v9024 = vpop.permute.xlu0 %9023
  %9025 = vrot.lane.b32.xlu0 %v8573, 64
  %v9026 = vpop.permute.xlu0 %9025
  %9027 = vrot.lane.b32.xlu0 %v8576, 64
  %v9028 = vpop.permute.xlu0 %9027
  %9029 = vrot.lane.b32.xlu0 %v8588, 64
  %v9030 = vpop.permute.xlu0 %9029
  %9031 = vrot.lane.b32.xlu0 %v8591, 64
  %v9032 = vpop.permute.xlu0 %9031
  %9033 = vrot.lane.b32.xlu0 %v8594, 64
  %v9034 = vpop.permute.xlu0 %9033
  %v9044 = vadd.f32 %v9003, %v9018
  %v9045 = vadd.f32 %v9004, %v9020
  %v9046 = vadd.f32 %v9005, %v9022
  %v9047 = vadd.f32 %v9006, %v9024
  %v9048 = vadd.f32 %v9007, %v9026
  %v9049 = vadd.f32 %v9008, %v9028
  %v9050 = vadd.f32 %v9009, %v9030
  %v9051 = vadd.f32 %v9010, %v9032
  %v9052 = vadd.f32 %v9011, %v9034
  %9054 = vrot.lane.b32.xlu0 %v8555, 48
  %v9055 = vpop.permute.xlu0 %9054
  %9056 = vrot.lane.b32.xlu0 %v8558, 48
  %v9057 = vpop.permute.xlu0 %9056
  %9058 = vrot.lane.b32.xlu0 %v8561, 48
  %v9059 = vpop.permute.xlu0 %9058
  %9060 = vrot.lane.b32.xlu0 %v8573, 48
  %v9061 = vpop.permute.xlu0 %9060
  %9062 = vrot.lane.b32.xlu0 %v8576, 48
  %v9063 = vpop.permute.xlu0 %9062
  %9064 = vrot.lane.b32.xlu0 %v8579, 48
  %v9065 = vpop.permute.xlu0 %9064
  %9066 = vrot.lane.b32.xlu0 %v8591, 48
  %v9067 = vpop.permute.xlu0 %9066
  %9068 = vrot.lane.b32.xlu0 %v8594, 48
  %v9069 = vpop.permute.xlu0 %9068
  %9070 = vrot.lane.b32.xlu0 %v8597, 48
  %v9071 = vpop.permute.xlu0 %9070
  %v9081 = vadd.f32 %v9044, %v9055
  %v9082 = vadd.f32 %v9045, %v9057
  %v9083 = vadd.f32 %v9046, %v9059
  %v9084 = vadd.f32 %v9047, %v9061
  %v9085 = vadd.f32 %v9048, %v9063
  %v9086 = vadd.f32 %v9049, %v9065
  %v9087 = vadd.f32 %v9050, %v9067
  %v9088 = vadd.f32 %v9051, %v9069
  %v9089 = vadd.f32 %v9052, %v9071
  %9091 = vrot.lane.b32.xlu0 %v8558, 32
  %v9092 = vpop.permute.xlu0 %9091
  %9093 = vrot.lane.b32.xlu0 %v8561, 32
  %v9094 = vpop.permute.xlu0 %9093
  %9095 = vrot.lane.b32.xlu0 %v8564, 32
  %v9096 = vpop.permute.xlu0 %9095
  %9097 = vrot.lane.b32.xlu0 %v8576, 32
  %v9098 = vpop.permute.xlu0 %9097
  %9099 = vrot.lane.b32.xlu0 %v8579, 32
  %v9100 = vpop.permute.xlu0 %9099
  %9101 = vrot.lane.b32.xlu0 %v8582, 32
  %v9102 = vpop.permute.xlu0 %9101
  %9103 = vrot.lane.b32.xlu0 %v8594, 32
  %v9104 = vpop.permute.xlu0 %9103
  %9105 = vrot.lane.b32.xlu0 %v8597, 32
  %v9106 = vpop.permute.xlu0 %9105
  %9107 = vrot.lane.b32.xlu0 %v8600, 32
  %v9108 = vpop.permute.xlu0 %9107
  %v9118 = vadd.f32 %v9081, %v9092
  %v9119 = vadd.f32 %v9082, %v9094
  %v9120 = vadd.f32 %v9083, %v9096
  %v9121 = vadd.f32 %v9084, %v9098
  %v9122 = vadd.f32 %v9085, %v9100
  %v9123 = vadd.f32 %v9086, %v9102
  %v9124 = vadd.f32 %v9087, %v9104
  %v9125 = vadd.f32 %v9088, %v9106
  %v9126 = vadd.f32 %v9089, %v9108
  %9128 = vrot.lane.b32.xlu0 %v8561, 16
  %v9129 = vpop.permute.xlu0 %9128
  %9130 = vrot.lane.b32.xlu0 %v8564, 16
  %v9131 = vpop.permute.xlu0 %9130
  %9132 = vrot.lane.b32.xlu0 %v8567, 16
  %v9133 = vpop.permute.xlu0 %9132
  %9134 = vrot.lane.b32.xlu0 %v8579, 16
  %v9135 = vpop.permute.xlu0 %9134
  %9136 = vrot.lane.b32.xlu0 %v8582, 16
  %v9137 = vpop.permute.xlu0 %9136
  %9138 = vrot.lane.b32.xlu0 %v8585, 16
  %v9139 = vpop.permute.xlu0 %9138
  %9140 = vrot.lane.b32.xlu0 %v8597, 16
  %v9141 = vpop.permute.xlu0 %9140
  %9142 = vrot.lane.b32.xlu0 %v8600, 16
  %v9143 = vpop.permute.xlu0 %9142
  %9144 = vrot.lane.b32.xlu0 %v8603, 16
  %v9145 = vpop.permute.xlu0 %9144
  %v9155 = vadd.f32 %v9118, %v9129
  %v9156 = vadd.f32 %v9119, %v9131
  %v9157 = vadd.f32 %v9120, %v9133
  %v9158 = vadd.f32 %v9121, %v9135
  %v9159 = vadd.f32 %v9122, %v9137
  %v9160 = vadd.f32 %v9123, %v9139
  %v9161 = vadd.f32 %v9124, %v9141
  %v9162 = vadd.f32 %v9125, %v9143
  %v9163 = vadd.f32 %v9126, %v9145
  %v9164 = vld [vmem:[%s4] sm:$0x1]
  %v9166 = vperm.slane %v9164, 0
  %v9168 = vadd.f32 %v9155, %v9166
  %v9169 = vadd.f32 %v9156, %v9166
  %v9170 = vadd.f32 %v9157, %v9166
  %v9171 = vadd.f32 %v9158, %v9166
  %v9172 = vadd.f32 %v9159, %v9166
  %v9173 = vadd.f32 %v9160, %v9166
  %v9174 = vadd.f32 %v9161, %v9166
  %v9175 = vadd.f32 %v9162, %v9166
  %v9176 = vadd.f32 %v9163, %v9166
  %v9177 = vmax.f32 %v9168, 0.0
  %v9178 = vmax.f32 %v9169, 0.0
  %v9179 = vmax.f32 %v9170, 0.0
  %v9180 = vmax.f32 %v9171, 0.0
  %v9181 = vmax.f32 %v9172, 0.0
  %v9182 = vmax.f32 %v9173, 0.0
  %v9183 = vmax.f32 %v9174, 0.0
  %v9184 = vmax.f32 %v9175, 0.0
  %v9185 = vmax.f32 %v9176, 0.0
  %v9186 = vld [vmem:[%s5] sm:$0xff]
  %v9187 = vld [vmem:[%s5 + $0x8] sm:$0xff]
  %v9189 = vsel %vm8270, %v9177, 0
  %v9192 = vsel %vm8270, %v9178, 0
  %v9195 = vsel %vm8270, %v9179, 0
  %v9198 = vsel %vm8270, %v9180, 0
  %v9201 = vsel %vm8270, %v9181, 0
  %v9204 = vsel %vm8270, %v9182, 0
  %v9207 = vsel %vm8270, %v9183, 0
  %v9210 = vsel %vm8270, %v9184, 0
  %v9213 = vsel %vm8270, %v9185, 0
  %9215 = vmatpush.msra.mxu0 0.0
  %9216 = vmatpush.msra.mxu0 0.0
  %9217 = vmatpush.msra.mxu0 0.0
  %9218 = vmatpush.msra.mxu0 0.0
  %9219 = vmatpush.msra.mxu0 0.0
  %9220 = vmatpush.msra.mxu0 0.0
  %9221 = vmatpush.msra.mxu0 0.0
  %9222 = vmatpush.msra.mxu0 0.0
  %9223 = vmatpush.msra.mxu0 0.0
  %9224 = vmatpush.msra.mxu0 0.0
  %9225 = vmatpush.msra.mxu0 0.0
  %9226 = vmatpush.msra.mxu0 0.0
  %9227 = vmatpush.msra.mxu0 0.0
  %9228 = vmatpush.msra.mxu0 0.0
  %9229 = vmatpush.msra.mxu0 %v9187
  %9230 = vmatpush.msra.mxu0 %v9186
  %9231 = vmatmul.f32.gmra.mxu0 %v9189
  %v9232 = vpop.f32.mrf.mxu0
  %v9233 = vadd.f32 0.0, %v9232
  %9234 = vmatmul.f32.gmra.mxu0 %v9192
  %v9235 = vpop.f32.mrf.mxu0
  %v9236 = vadd.f32 0.0, %v9235
  %9237 = vmatmul.f32.gmra.mxu0 %v9195
  %v9238 = vpop.f32.mrf.mxu0
  %v9239 = vadd.f32 0.0, %v9238
  %9240 = vmatmul.f32.gmra.mxu0 %v9198
  %v9241 = vpop.f32.mrf.mxu0
  %v9242 = vadd.f32 0.0, %v9241
  %9243 = vmatmul.f32.gmra.mxu0 %v9201
  %v9244 = vpop.f32.mrf.mxu0
  %v9245 = vadd.f32 0.0, %v9244
  %9246 = vmatmul.f32.gmra.mxu0 %v9204
  %v9247 = vpop.f32.mrf.mxu0
  %v9248 = vadd.f32 0.0, %v9247
  %9249 = vmatmul.f32.gmra.mxu0 %v9207
  %v9250 = vpop.f32.mrf.mxu0
  %v9251 = vadd.f32 0.0, %v9250
  %9252 = vmatmul.f32.gmra.mxu0 %v9210
  %v9253 = vpop.f32.mrf.mxu0
  %v9254 = vadd.f32 0.0, %v9253
  %9255 = vmatmul.f32.gmra.mxu0 %v9213
  %v9256 = vpop.f32.mrf.mxu0
  %v9257 = vadd.f32 0.0, %v9256
  %9258 = vdwg.mxu0
  %v9259 = vld [vmem:[%s6] sm:$0x1]
  %v9261 = vperm.slane %v9259, 0
  %v9263 = vadd.f32 %v9233, %v9261
  %v9264 = vadd.f32 %v9236, %v9261
  %v9265 = vadd.f32 %v9239, %v9261
  %v9266 = vadd.f32 %v9242, %v9261
  %v9267 = vadd.f32 %v9245, %v9261
  %v9268 = vadd.f32 %v9248, %v9261
  %v9269 = vadd.f32 %v9251, %v9261
  %v9270 = vadd.f32 %v9254, %v9261
  %v9271 = vadd.f32 %v9257, %v9261
  %vm9272 = vcmask 15360
  %9273 = vst.msk [vmem:[%s7] sm:$0xff] %vm9272, %v9263
  %9274 = vst.msk [vmem:[%s7 + $0x8] sm:$0xff] %vm9272, %v9264
  %9275 = vst.msk [vmem:[%s7 + $0x10] sm:$0xff] %vm9272, %v9265
  %9276 = vst.msk [vmem:[%s7 + $0x18] sm:$0xff] %vm9272, %v9266
  %9277 = vst.msk [vmem:[%s7 + $0x20] sm:$0xff] %vm9272, %v9267
  %9278 = vst.msk [vmem:[%s7 + $0x28] sm:$0xff] %vm9272, %v9268
  %9279 = vst.msk [vmem:[%s7 + $0x30] sm:$0xff] %vm9272, %v9269
  %9280 = vst.msk [vmem:[%s7 + $0x38] sm:$0xff] %vm9272, %v9270
  %9281 = vst.msk [vmem:[%s7 + $0x40] sm:$0xff] %vm9272, %v9271
  // Predicated region
  $region30: #{net_forward.1} parent=0 // pred_check
    _
  $region31: #{net_forward.1} parent=0 // pred_check_branch
    %9283 = sbr.rel (0) target = $region33
  $region32: #{net_forward.1} parent=0 // pred_region
    _
  $region33: #{net_forward.1} parent=0 // pred_fallthru
    _
  // Predicated region
  $region34: #{net_forward.1} parent=0 // pred_check
    _
  $region35: #{net_forward.1} parent=0 // pred_check_branch
    %9285 = sbr.rel (0) target = $region37
  $region36: #{net_forward.1} parent=0 // pred_region
    _
  $region37: #{net_forward.1} parent=0 // pred_fallthru
    _

</llo_original>
